<compile_context>
chip_gen: v6e
topology: v6e:2x2x1
jax: 0.10.0
libtpu: 0.0.40
codegen_flags: <defaults>
</compile_context>

<pallas_src>
import functools

import jax
import jax.numpy as jnp
from jax.experimental import pallas as pl
from jax.experimental.pallas import tpu as pltpu

LANE = 128
SUBLANE = 8


def _round_up(x, m):
    return (x + m - 1) // m * m


def _pad2d(w, rows, cols, dtype=jnp.float32):
    w = jnp.asarray(w, jnp.float32)
    w = jnp.pad(w, ((0, rows - w.shape[0]), (0, cols - w.shape[1])))
    return w.astype(dtype)


# ---------------------------------------------------------------------------
# Parameter preparation (run ONCE, outside jit): fuse gates, pad to lane
# multiples, cast matmul weights to bf16 (biases stay f32).
# ---------------------------------------------------------------------------
def prepare_params(layer_params, wy, by, in_dim):
    L = len(layer_params)
    H, O = wy.shape
    Ip = _round_up(in_dim, LANE)
    Hp = _round_up(H, LANE)
    Op = _round_up(O, LANE)

    wx_l, whzr_l, whg_l, bzr_l, bg_l = [], [], [], [], []
    for k, (wxz, wxr, wxg, whz, whr, whg_k, bz, br, bg_k) in enumerate(layer_params):
        ik = Ip if k == 0 else Hp
        wx_l.append(jnp.concatenate(
            [_pad2d(wxz, ik, Hp, jnp.bfloat16),
             _pad2d(wxr, ik, Hp, jnp.bfloat16),
             _pad2d(wxg, ik, Hp, jnp.bfloat16)], axis=1))
        whzr_l.append(jnp.concatenate(
            [_pad2d(whz, Hp, Hp, jnp.bfloat16),
             _pad2d(whr, Hp, Hp, jnp.bfloat16)], axis=1))
        whg_l.append(_pad2d(whg_k, Hp, Hp, jnp.bfloat16))
        bzr_l.append(jnp.concatenate(
            [_pad2d(bz, 1, Hp), _pad2d(br, 1, Hp)], axis=1))
        bg_l.append(_pad2d(bg_k, 1, Hp))

    return dict(
        wx=wx_l, whzr=whzr_l, whg=whg_l, bzr=bzr_l, bg=bg_l,
        wy=_pad2d(wy, Hp, Op, jnp.bfloat16), by=_pad2d(by, 1, Op),
        dims=(in_dim, H, O, L, Ip, Hp, Op))


# ---------------------------------------------------------------------------
# Batched dense kernel (no bias): (M, K) @ (K, N), bf16 operands, N-tiled.
# Used only for the hoisted layer-0 input projection (xz/xr/xg have no bias).
# ---------------------------------------------------------------------------
def _dense_kernel(x_ref, w_ref, o_ref):
    o_ref[...] = jnp.dot(x_ref[...], w_ref[...],
                         preferred_element_type=jnp.float32).astype(o_ref.dtype)


def _dense(x2d, w, out_dtype):
    M, K = x2d.shape
    N = w.shape[1]
    TM = min(512, _round_up(M, SUBLANE))
    Mp = _round_up(M, TM)
    TN = next(tn for tn in (512, 384, 256, 128, N) if N % tn == 0)
    xp_ = jnp.pad(x2d, ((0, Mp - M), (0, 0)))

    est = (2 * TM * K * 2 + 2 * K * TN * 2
           + 2 * TM * TN * jnp.dtype(out_dtype).itemsize)
    vmem_limit = int(min(64 << 20, max(32 << 20, 2 * est)))

    out = pl.pallas_call(
        _dense_kernel,
        out_shape=jax.ShapeDtypeStruct((Mp, N), out_dtype),
        grid_spec=pltpu.PrefetchScalarGridSpec(
            num_scalar_prefetch=0,
            grid=(Mp // TM, N // TN),
            in_specs=[
                pl.BlockSpec((TM, K), lambda i, j: (i, 0)),
                pl.BlockSpec((K, TN), lambda i, j: (0, j)),
            ],
            out_specs=pl.BlockSpec((TM, TN), lambda i, j: (i, j)),
        ),
        compiler_params=pltpu.CompilerParams(
            dimension_semantics=("parallel", "parallel"),
            vmem_limit_bytes=vmem_limit),
    )(xp_, w)
    return out[:M]


# ---------------------------------------------------------------------------
# Sequential GRU recurrence kernel.  One grid step = TS timesteps, with the
# output projection fused into the epilogue (M = TS*B matmul).
# ---------------------------------------------------------------------------
def _make_recurrence_kernel(n_layers, ts_block, hp, op, bp, s_real, masked, unroll):
    n_w = 4 * n_layers + (n_layers - 1) + 2   # per-layer (whzr,whg,bzr,bg), wx[1:], wy, by

    def kernel(*refs):
        xp_ref = refs[0]                      # (TS, Bp, 3Hp) bf16, precomputed x @ Wx (layer 0)
        h0_ref = refs[1]                      # (L, Bp, Hp) f32
        w_refs = refs[2:2 + n_w]
        y_ref = refs[2 + n_w]                 # (TS, Bp, Op) f32
        hout_ref = refs[3 + n_w]              # (L, Bp, Hp) f32
        h_sc = refs[4 + n_w]                  # VMEM (L, Bp, Hp) f32 — carried hidden state
        hl_sc = refs[5 + n_w]                 # VMEM (TS, Bp, Hp) f32 — last-layer h per step

        wy_ref = w_refs[-2]
        by_ref = w_refs[-1]
        t = pl.program_id(0)

        @pl.when(t == 0)
        def _():
            h_sc[...] = h0_ref[...]
            if masked:
                hl_sc[...] = jnp.zeros_like(hl_sc)

        def gru_step(ts):
            cur = None
            for k in range(n_layers):
                whzr, whg, bzr, bg = w_refs[4 * k: 4 * k + 4]
                h_prev = h_sc[k]                                    # (Bp, Hp) f32
                if k == 0:
                    gx = xp_ref[ts].astype(jnp.float32)             # (Bp, 3Hp)
                else:
                    wx = w_refs[4 * n_layers + (k - 1)]             # (Hp, 3Hp) bf16
                    gx = jnp.dot(cur.astype(jnp.bfloat16), wx[...],
                                 preferred_element_type=jnp.float32)
                zr = jax.nn.sigmoid(
                    gx[:, :2 * hp]
                    + jnp.dot(h_prev.astype(jnp.bfloat16), whzr[...],
                              preferred_element_type=jnp.float32)
                    + bzr[...])
                z = zr[:, :hp]
                r = zr[:, hp:]
                g = jnp.tanh(
                    gx[:, 2 * hp:]
                    + jnp.dot((r * h_prev).astype(jnp.bfloat16), whg[...],
                              preferred_element_type=jnp.float32)
                    + bg[...])
                h_new = z * h_prev + (1.0 - z) * g
                h_sc[k] = h_new
                cur = h_new                    # dropout p=0 -> identity
            hl_sc[ts] = cur

        def step(ts, carry):
            if masked:
                @pl.when(t * ts_block + ts < s_real)
                def _():
                    gru_step(ts)
            else:
                gru_step(ts)
            return carry

        jax.lax.fori_loop(0, ts_block, step, None, unroll=unroll)

        # Fused output projection for the whole time block (M = TS*Bp).
        hl = hl_sc[...].reshape(ts_block * bp, hp).astype(jnp.bfloat16)
        y = (jnp.dot(hl, wy_ref[...], preferred_element_type=jnp.float32)
             + by_ref[...])
        y_ref[...] = y.reshape(ts_block, bp, op)

        @pl.when(t == pl.num_programs(0) - 1)
        def _():
            hout_ref[...] = h_sc[...]

    return kernel


# ---------------------------------------------------------------------------
# Public wrapper, PyTorch conventions: x (B, S, I), hidden_state (B, L, H).
# `params` comes from prepare_params (pre-fused / pre-padded, bf16 weights).
# ---------------------------------------------------------------------------
def multilayer_gru_forward(x, hidden_state, params, *, time_block=None):
    B, S, I = x.shape
    in_dim, H, O, L, Ip, Hp, Op = params["dims"]
    assert I == in_dim
    Bp = _round_up(max(B, SUBLANE), SUBLANE)

    if hidden_state is None:
        hidden_state = jnp.zeros((B, L, H), jnp.float32)

    # ---- VMEM-budgeted time block ----------------------------------------
    w_bytes = sum(int(w.size) * w.dtype.itemsize
                  for w in (params["wx"][1:] + params["whzr"] + params["whg"]
                            + params["bzr"] + params["bg"]
                            + [params["wy"], params["by"]]))
    bytes_per_ts = (2 * Bp * 3 * Hp * 2      # xp blocks (bf16, double-buffered)
                    + 2 * Bp * Op * 4        # y blocks (f32, double-buffered)
                    + Bp * Hp * 4)           # hlast scratch (f32)
    fixed = w_bytes + 4 * L * Bp * Hp * 4    # h0 + hout blocks + h_sc scratch
    budget = 40 << 20                        # fits v7x's 64 MiB VMEM with headroom
    if time_block is None:
        TS = int(max(1, min(64, (budget - fixed) // bytes_per_ts, S)))
        if S % TS:
            for d in range(TS, max(TS // 2, 1) - 1, -1):   # prefer an exact divisor
                if S % d == 0:
                    TS = d
                    break
    else:
        TS = int(min(time_block, S))
    Sp = _round_up(S, TS)
    masked = Sp != S
    unroll = True if TS <= 16 else 4

    # ---- inputs, time-major, sublane/lane padded --------------------------
    x_t = jnp.transpose(x, (1, 0, 2)).astype(jnp.float32)               # (S, B, I)
    x_t = jnp.pad(x_t, ((0, Sp - S), (0, Bp - B), (0, Ip - I)))         # (Sp, Bp, Ip)
    h0_t = jnp.transpose(hidden_state, (1, 0, 2)).astype(jnp.float32)   # (L, B, H)
    h0_t = jnp.pad(h0_t, ((0, 0), (0, Bp - B), (0, Hp - H)))            # (L, Bp, Hp)

    # ---- 1) layer-0 input projection, batched over all timesteps ----------
    xp2d = _dense(x_t.reshape(Sp * Bp, Ip).astype(jnp.bfloat16),
                  params["wx"][0], out_dtype=jnp.bfloat16)               # (Sp*Bp, 3Hp)
    xp = xp2d.reshape(Sp, Bp, 3 * Hp)

    # ---- 2) sequential recurrence + fused output projection ---------------
    const = dict(pipeline_mode=pl.Buffered(1))   # single-buffer constant-index blocks
    flat_w = []
    in_specs = [
        pl.BlockSpec((TS, Bp, 3 * Hp), lambda t: (t, 0, 0)),     # xp (time-varying)
        pl.BlockSpec((L, Bp, Hp), lambda t: (0, 0, 0), **const),  # h0
    ]
    for k in range(L):
        for w in (params["whzr"][k], params["whg"][k],
                  params["bzr"][k], params["bg"][k]):
            flat_w.append(w)
            in_specs.append(pl.BlockSpec(w.shape, lambda t: (0, 0), **const))
    for k in range(1, L):
        w = params["wx"][k]
        flat_w.append(w)
        in_specs.append(pl.BlockSpec(w.shape, lambda t: (0, 0), **const))
    for w in (params["wy"], params["by"]):
        flat_w.append(w)
        in_specs.append(pl.BlockSpec(w.shape, lambda t: (0, 0), **const))

    est = (2 * TS * Bp * 3 * Hp * 2          # xp
           + 2 * TS * Bp * Op * 4            # y
           + L * Bp * Hp * 4                 # h0 (single-buffered)
           + 2 * L * Bp * Hp * 4             # hout
           + w_bytes                         # single-buffered weights/biases
           + L * Bp * Hp * 4                 # h_sc scratch
           + TS * Bp * Hp * 4)               # hlast scratch
    vmem_limit = int(min(64 << 20, max(32 << 20, est * 3 // 2)))

    y_t, h_final_t = pl.pallas_call(
        _make_recurrence_kernel(L, TS, Hp, Op, Bp, S, masked, unroll),
        out_shape=(jax.ShapeDtypeStruct((Sp, Bp, Op), jnp.float32),
                   jax.ShapeDtypeStruct((L, Bp, Hp), jnp.float32)),
        grid_spec=pltpu.PrefetchScalarGridSpec(
            num_scalar_prefetch=0,
            grid=(Sp // TS,),
            in_specs=in_specs,
            out_specs=[
                pl.BlockSpec((TS, Bp, Op), lambda t: (t, 0, 0)),   # y per time block
                pl.BlockSpec((L, Bp, Hp), lambda t: (0, 0, 0)),    # final hidden state
            ],
            scratch_shapes=[pltpu.VMEM((L, Bp, Hp), jnp.float32),
                            pltpu.VMEM((TS, Bp, Hp), jnp.float32)]),
        compiler_params=pltpu.CompilerParams(
            dimension_semantics=("arbitrary",),   # sequential time recurrence
            vmem_limit_bytes=vmem_limit),
    )(xp, h0_t, *flat_w)

    layer_output = jnp.transpose(y_t[:S, :B, :O], (1, 0, 2))            # (B, S, O)
    hidden_out = jnp.transpose(h_final_t[:, :B, :H], (1, 0, 2))         # (B, L, H)
    return layer_output, hidden_out


# ---------------------------------------------------------------------------
# Pure-JAX mirror of MultilayerGRU.forward (dropout=0) for verification.
# ---------------------------------------------------------------------------
def gru_reference(x, hidden_state, layer_params, wy, by):
    B, S, I = x.shape
    L = len(layer_params)
    h = [hidden_state[:, k, :] for k in range(L)]
    ys = []
    for t in range(S):
        cur = x[:, t, :]
        for k in range(L):
            wxz, wxr, wxg, whz, whr, whg, bz, br, bg = layer_params[k]
            hk = h[k]
            z = jax.nn.sigmoid(cur @ wxz + hk @ whz + bz)
            r = jax.nn.sigmoid(cur @ wxr + hk @ whr + br)
            g = jnp.tanh(cur @ wxg + (r * hk) @ whg + bg)
            h_new = z * hk + (1.0 - z) * g
            h[k] = h_new
            cur = h_new
        ys.append(cur @ wy + by)
    return jnp.stack(ys, axis=1), jnp.stack(h, axis=1)


def init_params(key, in_dim, h_dim, out_dim, n_layers):
    """Deterministic init matching the nn.Linear shapes (stored as (in, out))."""
    layer_params = []
    layer_in = in_dim
    for _ in range(n_layers):
        ks = jax.random.split(key, 10)
        key = ks[0]
        sx = 1.0 / jnp.sqrt(layer_in)
        sh = 1.0 / jnp.sqrt(h_dim)
        wxz = jax.random.uniform(ks[1], (layer_in, h_dim), jnp.float32, -sx, sx)
        wxr = jax.random.uniform(ks[2], (layer_in, h_dim), jnp.float32, -sx, sx)
        wxg = jax.random.uniform(ks[3], (layer_in, h_dim), jnp.float32, -sx, sx)
        whz = jax.random.uniform(ks[4], (h_dim, h_dim), jnp.float32, -sh, sh)
        whr = jax.random.uniform(ks[5], (h_dim, h_dim), jnp.float32, -sh, sh)
        whg = jax.random.uniform(ks[6], (h_dim, h_dim), jnp.float32, -sh, sh)
        bz = jax.random.uniform(ks[7], (1, h_dim), jnp.float32, -sh, sh)
        br = jax.random.uniform(ks[8], (1, h_dim), jnp.float32, -sh, sh)
        bg = jax.random.uniform(ks[9], (1, h_dim), jnp.float32, -sh, sh)
        layer_params.append((wxz, wxr, wxg, whz, whr, whg, bz, br, bg))
        layer_in = h_dim
    k1, k2 = jax.random.split(key)
    sy = 1.0 / jnp.sqrt(h_dim)
    wy = jax.random.uniform(k1, (h_dim, out_dim), jnp.float32, -sy, sy)
    by = jax.random.uniform(k2, (1, out_dim), jnp.float32, -sy, sy)
    return layer_params, wy, by


if __name__ == "__main__":
    B, S = 2, 8
    in_dim, h_dim, out_dim, n_layers = 8, 32, 8, 2

    key = jax.random.PRNGKey(0)
    kx, kh, kp = jax.random.split(key, 3)
    x = jax.random.normal(kx, (B, S, in_dim), jnp.float32)
    h0 = jax.random.normal(kh, (B, n_layers, h_dim), jnp.float32)
    layer_params, wy, by = init_params(kp, in_dim, h_dim, out_dim, n_layers)

    # Pre-fuse / pre-pad / bf16-cast weights ONCE, outside the jitted forward.
    prepared = prepare_params(layer_params, wy, by, in_dim)
    fwd = jax.jit(functools.partial(multilayer_gru_forward, params=prepared))

    y, h_final = fwd(x, h0)
    jax.block_until_ready((y, h_final))

    y_ref, h_ref = gru_reference(x, h0, layer_params, wy, by)
    assert y.shape == (B, S, out_dim) and h_final.shape == (B, n_layers, h_dim)
    # bf16 MXU operands -> relaxed tolerance vs the f32 reference.
    assert jnp.allclose(y, y_ref, atol=5e-2, rtol=5e-2), \
        float(jnp.max(jnp.abs(y - y_ref)))
    assert jnp.allclose(h_final, h_ref, atol=5e-2, rtol=5e-2), \
        float(jnp.max(jnp.abs(h_final - h_ref)))
    print("KERNEL_OK")
</pallas_src>

<mosaic_0001>
module attributes {stable_mosaic.version = 11 : i64} {
  func.func @_dense_kernel(%arg0: i32, %arg1: i32, %arg2: memref<64x128xbf16, #tpu.memory_space<vmem>>, %arg3: memref<128x384xbf16, #tpu.memory_space<vmem>>, %arg4: memref<64x384xbf16, #tpu.memory_space<vmem>>) attributes {dimension_semantics = [#tpu.dimension_semantics<parallel>, #tpu.dimension_semantics<parallel>], iteration_bounds = array<i64: 1, 1>, scalar_prefetch = 0 : i64, scratch_operands = 0 : i64, tpu.core_type = #tpu.core_type<tc>, window_params = [{transform_indices = @transform_0, window_bounds = array<i64: 64, 128>}, {transform_indices = @transform_1, window_bounds = array<i64: 128, 384>}, {transform_indices = @transform_2, window_bounds = array<i64: 64, 384>}]} {
    %c0 = arith.constant 0 : index
    %c0_0 = arith.constant 0 : index
    %0 = vector.load %arg2[%c0, %c0_0] : memref<64x128xbf16, #tpu.memory_space<vmem>>, vector<64x128xbf16>
    %c0_1 = arith.constant 0 : index
    %c0_2 = arith.constant 0 : index
    %1 = vector.load %arg3[%c0_1, %c0_2] : memref<128x384xbf16, #tpu.memory_space<vmem>>, vector<128x384xbf16>
    %cst = arith.constant dense<0.000000e+00> : vector<64x384xf32>
    %2 = tpu.matmul %0, %1, %cst {dimension_numbers = #tpu.dot_dimension_numbers<[1], [0], [0], [1], [0, 0, 1, 1], [], []>} : vector<64x128xbf16>, vector<128x384xbf16>, vector<64x384xf32> -> vector<64x384xf32>
    %3 = arith.truncf %2 : vector<64x384xf32> to vector<64x384xbf16>
    %c0_3 = arith.constant 0 : index
    %c0_4 = arith.constant 0 : index
    %4 = vector.load %arg4[%c0_3, %c0_4] : memref<64x384xbf16, #tpu.memory_space<vmem>>, vector<64x384xbf16>
    tpu.vector_store %arg4[%c0_3, %c0_4], %3 {strides = array<i32>} : memref<64x384xbf16, #tpu.memory_space<vmem>>, vector<64x384xbf16>,
    return
  }
  func.func @transform_0(%arg0: i32, %arg1: i32) -> (i32, i32) {
    %c0_i32 = arith.constant 0 : i32
    %c0_i32_0 = arith.constant 0 : i32
    return %arg0, %c0_i32 : i32, i32
  }
  func.func @transform_1(%arg0: i32, %arg1: i32) -> (i32, i32) {
    %c0_i32 = arith.constant 0 : i32
    %c0_i32_0 = arith.constant 0 : i32
    return %c0_i32, %arg1 : i32, i32
  }
  func.func @transform_2(%arg0: i32, %arg1: i32) -> (i32, i32) {
    %c0_i32 = arith.constant 0 : i32
    return %arg0, %arg1 : i32, i32
  }
}

module attributes {stable_mosaic.version = 11 : i64} {
  func.func @kernel(%arg0: i32, %arg1: memref<8x8x384xbf16, #tpu.memory_space<vmem>>, %arg2: memref<2x8x128xf32, #tpu.memory_space<vmem>>, %arg3: memref<128x256xbf16, #tpu.memory_space<vmem>>, %arg4: memref<128x128xbf16, #tpu.memory_space<vmem>>, %arg5: memref<1x256xf32, #tpu.memory_space<vmem>>, %arg6: memref<1x128xf32, #tpu.memory_space<vmem>>, %arg7: memref<128x256xbf16, #tpu.memory_space<vmem>>, %arg8: memref<128x128xbf16, #tpu.memory_space<vmem>>, %arg9: memref<1x256xf32, #tpu.memory_space<vmem>>, %arg10: memref<1x128xf32, #tpu.memory_space<vmem>>, %arg11: memref<128x384xbf16, #tpu.memory_space<vmem>>, %arg12: memref<128x128xbf16, #tpu.memory_space<vmem>>, %arg13: memref<1x128xf32, #tpu.memory_space<vmem>>, %arg14: memref<8x8x128xf32, #tpu.memory_space<vmem>>, %arg15: memref<2x8x128xf32, #tpu.memory_space<vmem>>, %arg16: memref<2x8x128xf32, #tpu.memory_space<vmem>>, %arg17: memref<8x8x128xf32, #tpu.memory_space<vmem>>) attributes {dimension_semantics = [#tpu.dimension_semantics<arbitrary>], iteration_bounds = array<i64: 1>, scalar_prefetch = 0 : i64, scratch_operands = 2 : i64, tpu.core_type = #tpu.core_type<tc>, window_params = [{transform_indices = @transform_0, window_bounds = array<i64: 8, 8, 384>}, {pipeline_mode = #tpu.pipeline_mode<synchronous>, transform_indices = @transform_1, window_bounds = array<i64: 2, 8, 128>}, {pipeline_mode = #tpu.pipeline_mode<synchronous>, transform_indices = @transform_2, window_bounds = array<i64: 128, 256>}, {pipeline_mode = #tpu.pipeline_mode<synchronous>, transform_indices = @transform_3, window_bounds = array<i64: 128, 128>}, {pipeline_mode = #tpu.pipeline_mode<synchronous>, transform_indices = @transform_4, window_bounds = array<i64: 1, 256>}, {pipeline_mode = #tpu.pipeline_mode<synchronous>, transform_indices = @transform_5, window_bounds = array<i64: 1, 128>}, {pipeline_mode = #tpu.pipeline_mode<synchronous>, transform_indices = @transform_6, window_bounds = array<i64: 128, 256>}, {pipeline_mode = #tpu.pipeline_mode<synchronous>, transform_indices = @transform_7, window_bounds = array<i64: 128, 128>}, {pipeline_mode = #tpu.pipeline_mode<synchronous>, transform_indices = @transform_8, window_bounds = array<i64: 1, 256>}, {pipeline_mode = #tpu.pipeline_mode<synchronous>, transform_indices = @transform_9, window_bounds = array<i64: 1, 128>}, {pipeline_mode = #tpu.pipeline_mode<synchronous>, transform_indices = @transform_10, window_bounds = array<i64: 128, 384>}, {pipeline_mode = #tpu.pipeline_mode<synchronous>, transform_indices = @transform_11, window_bounds = array<i64: 128, 128>}, {pipeline_mode = #tpu.pipeline_mode<synchronous>, transform_indices = @transform_12, window_bounds = array<i64: 1, 128>}, {transform_indices = @transform_13, window_bounds = array<i64: 8, 8, 128>}, {pipeline_mode = #tpu.pipeline_mode<synchronous>, transform_indices = @transform_14, window_bounds = array<i64: 2, 8, 128>}]} {
    %c0_i32 = arith.constant 0 : i32
    %0 = arith.cmpi eq, %arg0, %c0_i32 : i32
    %1 = arith.extui %0 : i1 to i32
    %c0_i32_0 = arith.constant 0 : i32
    %2 = arith.cmpi ne, %1, %c0_i32_0 : i32
    scf.if %2 {
      %c0_356 = arith.constant 0 : index
      %c0_357 = arith.constant 0 : index
      %c0_358 = arith.constant 0 : index
      %664 = vector.load %arg2[%c0_356, %c0_357, %c0_358] : memref<2x8x128xf32, #tpu.memory_space<vmem>>, vector<2x8x128xf32>
      %c0_359 = arith.constant 0 : index
      %c0_360 = arith.constant 0 : index
      %c0_361 = arith.constant 0 : index
      %665 = vector.load %arg16[%c0_359, %c0_360, %c0_361] : memref<2x8x128xf32, #tpu.memory_space<vmem>>, vector<2x8x128xf32>
      tpu.vector_store %arg16[%c0_359, %c0_360, %c0_361], %664 {strides = array<i32>} : memref<2x8x128xf32, #tpu.memory_space<vmem>>, vector<2x8x128xf32>,
    } else {
    }
    %c0_i32_1 = arith.constant 0 : i32
    %c0 = arith.constant 0 : index
    %c0_2 = arith.constant 0 : index
    %c0_3 = arith.constant 0 : index
    %3 = vector.load %arg16[%c0, %c0_2, %c0_3] : memref<2x8x128xf32, #tpu.memory_space<vmem>>, vector<1x8x128xf32>
    %4 = vector.shape_cast %3 : vector<1x8x128xf32> to vector<8x128xf32>
    %5 = arith.index_cast %c0_i32_1 : i32 to index
    %c0_4 = arith.constant 0 : index
    %c0_5 = arith.constant 0 : index
    %6 = vector.load %arg1[%5, %c0_4, %c0_5] : memref<8x8x384xbf16, #tpu.memory_space<vmem>>, vector<1x8x384xbf16>
    %7 = vector.shape_cast %6 : vector<1x8x384xbf16> to vector<8x384xbf16>
    %8 = arith.extf %7 : vector<8x384xbf16> to vector<8x384xf32>
    %9 = vector.extract_strided_slice %8 {offsets = [0, 0], sizes = [8, 256], strides = [1, 1]} : vector<8x384xf32> to vector<8x256xf32>
    %10 = arith.truncf %4 : vector<8x128xf32> to vector<8x128xbf16>
    %c0_6 = arith.constant 0 : index
    %c0_7 = arith.constant 0 : index
    %11 = vector.load %arg3[%c0_6, %c0_7] : memref<128x256xbf16, #tpu.memory_space<vmem>>, vector<128x256xbf16>
    %cst = arith.constant dense<0.000000e+00> : vector<8x256xf32>
    %12 = tpu.matmul %10, %11, %cst {dimension_numbers = #tpu.dot_dimension_numbers<[1], [0], [0], [1], [0, 0, 1, 1], [], []>} : vector<8x128xbf16>, vector<128x256xbf16>, vector<8x256xf32> -> vector<8x256xf32>
    %13 = arith.addf %9, %12 : vector<8x256xf32>
    %c0_8 = arith.constant 0 : index
    %c0_9 = arith.constant 0 : index
    %14 = vector.load %arg5[%c0_8, %c0_9] : memref<1x256xf32, #tpu.memory_space<vmem>>, vector<1x256xf32>
    %15 = vector.broadcast %14 : vector<1x256xf32> to vector<8x256xf32>
    %16 = arith.addf %13, %15 : vector<8x256xf32>
    %17 = arith.negf %16 : vector<8x256xf32>
    %18 = math.exp %17 : vector<8x256xf32>
    %cst_10 = arith.constant 1.000000e+00 : f32
    %19 = vector.broadcast %cst_10 : f32 to vector<8x256xf32>
    %20 = arith.addf %19, %18 : vector<8x256xf32>
    %21 = arith.divf %19, %20 : vector<8x256xf32>
    %22 = vector.extract_strided_slice %21 {offsets = [0, 0], sizes = [8, 128], strides = [1, 1]} : vector<8x256xf32> to vector<8x128xf32>
    %23 = vector.extract_strided_slice %21 {offsets = [0, 128], sizes = [8, 128], strides = [1, 1]} : vector<8x256xf32> to vector<8x128xf32>
    %24 = vector.extract_strided_slice %8 {offsets = [0, 256], sizes = [8, 128], strides = [1, 1]} : vector<8x384xf32> to vector<8x128xf32>
    %25 = arith.mulf %23, %4 : vector<8x128xf32>
    %26 = arith.truncf %25 : vector<8x128xf32> to vector<8x128xbf16>
    %c0_11 = arith.constant 0 : index
    %c0_12 = arith.constant 0 : index
    %27 = vector.load %arg4[%c0_11, %c0_12] : memref<128x128xbf16, #tpu.memory_space<vmem>>, vector<128x128xbf16>
    %cst_13 = arith.constant dense<0.000000e+00> : vector<8x128xf32>
    %28 = tpu.matmul %26, %27, %cst_13 {dimension_numbers = #tpu.dot_dimension_numbers<[1], [0], [0], [1], [0, 0, 1, 1], [], []>} : vector<8x128xbf16>, vector<128x128xbf16>, vector<8x128xf32> -> vector<8x128xf32>
    %29 = arith.addf %24, %28 : vector<8x128xf32>
    %c0_14 = arith.constant 0 : index
    %c0_15 = arith.constant 0 : index
    %30 = vector.load %arg6[%c0_14, %c0_15] : memref<1x128xf32, #tpu.memory_space<vmem>>, vector<1x128xf32>
    %31 = vector.broadcast %30 : vector<1x128xf32> to vector<8x128xf32>
    %32 = arith.addf %29, %31 : vector<8x128xf32>
    %33 = math.tanh %32 : vector<8x128xf32>
    %34 = arith.mulf %22, %4 : vector<8x128xf32>
    %cst_16 = arith.constant 1.000000e+00 : f32
    %35 = vector.broadcast %cst_16 : f32 to vector<8x128xf32>
    %36 = arith.subf %35, %22 : vector<8x128xf32>
    %37 = arith.mulf %36, %33 : vector<8x128xf32>
    %38 = arith.addf %34, %37 : vector<8x128xf32>
    %c0_17 = arith.constant 0 : index
    %c0_18 = arith.constant 0 : index
    %c0_19 = arith.constant 0 : index
    %39 = vector.load %arg16[%c0_17, %c0_18, %c0_19] : memref<2x8x128xf32, #tpu.memory_space<vmem>>, vector<1x8x128xf32>
    %40 = vector.shape_cast %39 : vector<1x8x128xf32> to vector<8x128xf32>
    %41 = vector.shape_cast %38 : vector<8x128xf32> to vector<1x8x128xf32>
    tpu.vector_store %arg16[%c0_17, %c0_18, %c0_19], %41 {strides = array<i32>} : memref<2x8x128xf32, #tpu.memory_space<vmem>>, vector<1x8x128xf32>,
    %c1 = arith.constant 1 : index
    %c0_20 = arith.constant 0 : index
    %c0_21 = arith.constant 0 : index
    %42 = vector.load %arg16[%c1, %c0_20, %c0_21] : memref<2x8x128xf32, #tpu.memory_space<vmem>>, vector<1x8x128xf32>
    %43 = vector.shape_cast %42 : vector<1x8x128xf32> to vector<8x128xf32>
    %44 = arith.truncf %38 : vector<8x128xf32> to vector<8x128xbf16>
    %c0_22 = arith.constant 0 : index
    %c0_23 = arith.constant 0 : index
    %45 = vector.load %arg11[%c0_22, %c0_23] : memref<128x384xbf16, #tpu.memory_space<vmem>>, vector<128x384xbf16>
    %cst_24 = arith.constant dense<0.000000e+00> : vector<8x384xf32>
    %46 = tpu.matmul %44, %45, %cst_24 {dimension_numbers = #tpu.dot_dimension_numbers<[1], [0], [0], [1], [0, 0, 1, 1], [], []>} : vector<8x128xbf16>, vector<128x384xbf16>, vector<8x384xf32> -> vector<8x384xf32>
    %47 = vector.extract_strided_slice %46 {offsets = [0, 0], sizes = [8, 256], strides = [1, 1]} : vector<8x384xf32> to vector<8x256xf32>
    %48 = arith.truncf %43 : vector<8x128xf32> to vector<8x128xbf16>
    %c0_25 = arith.constant 0 : index
    %c0_26 = arith.constant 0 : index
    %49 = vector.load %arg7[%c0_25, %c0_26] : memref<128x256xbf16, #tpu.memory_space<vmem>>, vector<128x256xbf16>
    %cst_27 = arith.constant dense<0.000000e+00> : vector<8x256xf32>
    %50 = tpu.matmul %48, %49, %cst_27 {dimension_numbers = #tpu.dot_dimension_numbers<[1], [0], [0], [1], [0, 0, 1, 1], [], []>} : vector<8x128xbf16>, vector<128x256xbf16>, vector<8x256xf32> -> vector<8x256xf32>
    %51 = arith.addf %47, %50 : vector<8x256xf32>
    %c0_28 = arith.constant 0 : index
    %c0_29 = arith.constant 0 : index
    %52 = vector.load %arg9[%c0_28, %c0_29] : memref<1x256xf32, #tpu.memory_space<vmem>>, vector<1x256xf32>
    %53 = vector.broadcast %52 : vector<1x256xf32> to vector<8x256xf32>
    %54 = arith.addf %51, %53 : vector<8x256xf32>
    %55 = arith.negf %54 : vector<8x256xf32>
    %56 = math.exp %55 : vector<8x256xf32>
    %cst_30 = arith.constant 1.000000e+00 : f32
    %57 = vector.broadcast %cst_30 : f32 to vector<8x256xf32>
    %58 = arith.addf %57, %56 : vector<8x256xf32>
    %59 = arith.divf %57, %58 : vector<8x256xf32>
    %60 = vector.extract_strided_slice %59 {offsets = [0, 0], sizes = [8, 128], strides = [1, 1]} : vector<8x256xf32> to vector<8x128xf32>
    %61 = vector.extract_strided_slice %59 {offsets = [0, 128], sizes = [8, 128], strides = [1, 1]} : vector<8x256xf32> to vector<8x128xf32>
    %62 = vector.extract_strided_slice %46 {offsets = [0, 256], sizes = [8, 128], strides = [1, 1]} : vector<8x384xf32> to vector<8x128xf32>
    %63 = arith.mulf %61, %43 : vector<8x128xf32>
    %64 = arith.truncf %63 : vector<8x128xf32> to vector<8x128xbf16>
    %c0_31 = arith.constant 0 : index
    %c0_32 = arith.constant 0 : index
    %65 = vector.load %arg8[%c0_31, %c0_32] : memref<128x128xbf16, #tpu.memory_space<vmem>>, vector<128x128xbf16>
    %cst_33 = arith.constant dense<0.000000e+00> : vector<8x128xf32>
    %66 = tpu.matmul %64, %65, %cst_33 {dimension_numbers = #tpu.dot_dimension_numbers<[1], [0], [0], [1], [0, 0, 1, 1], [], []>} : vector<8x128xbf16>, vector<128x128xbf16>, vector<8x128xf32> -> vector<8x128xf32>
    %67 = arith.addf %62, %66 : vector<8x128xf32>
    %c0_34 = arith.constant 0 : index
    %c0_35 = arith.constant 0 : index
    %68 = vector.load %arg10[%c0_34, %c0_35] : memref<1x128xf32, #tpu.memory_space<vmem>>, vector<1x128xf32>
    %69 = vector.broadcast %68 : vector<1x128xf32> to vector<8x128xf32>
    %70 = arith.addf %67, %69 : vector<8x128xf32>
    %71 = math.tanh %70 : vector<8x128xf32>
    %72 = arith.mulf %60, %43 : vector<8x128xf32>
    %cst_36 = arith.constant 1.000000e+00 : f32
    %73 = vector.broadcast %cst_36 : f32 to vector<8x128xf32>
    %74 = arith.subf %73, %60 : vector<8x128xf32>
    %75 = arith.mulf %74, %71 : vector<8x128xf32>
    %76 = arith.addf %72, %75 : vector<8x128xf32>
    %c1_37 = arith.constant 1 : index
    %c0_38 = arith.constant 0 : index
    %c0_39 = arith.constant 0 : index
    %77 = vector.load %arg16[%c1_37, %c0_38, %c0_39] : memref<2x8x128xf32, #tpu.memory_space<vmem>>, vector<1x8x128xf32>
    %78 = vector.shape_cast %77 : vector<1x8x128xf32> to vector<8x128xf32>
    %79 = vector.shape_cast %76 : vector<8x128xf32> to vector<1x8x128xf32>
    tpu.vector_store %arg16[%c1_37, %c0_38, %c0_39], %79 {strides = array<i32>} : memref<2x8x128xf32, #tpu.memory_space<vmem>>, vector<1x8x128xf32>,
    %80 = arith.index_cast %c0_i32_1 : i32 to index
    %c0_40 = arith.constant 0 : index
    %c0_41 = arith.constant 0 : index
    %81 = vector.load %arg17[%80, %c0_40, %c0_41] : memref<8x8x128xf32, #tpu.memory_space<vmem>>, vector<1x8x128xf32>
    %82 = vector.shape_cast %81 : vector<1x8x128xf32> to vector<8x128xf32>
    %83 = vector.shape_cast %76 : vector<8x128xf32> to vector<1x8x128xf32>
    tpu.vector_store %arg17[%80, %c0_40, %c0_41], %83 {strides = array<i32>} : memref<8x8x128xf32, #tpu.memory_space<vmem>>, vector<1x8x128xf32>,
    %c1_i32 = arith.constant 1 : i32
    %c0_42 = arith.constant 0 : index
    %c0_43 = arith.constant 0 : index
    %c0_44 = arith.constant 0 : index
    %84 = vector.load %arg16[%c0_42, %c0_43, %c0_44] : memref<2x8x128xf32, #tpu.memory_space<vmem>>, vector<1x8x128xf32>
    %85 = vector.shape_cast %84 : vector<1x8x128xf32> to vector<8x128xf32>
    %86 = arith.index_cast %c1_i32 : i32 to index
    %c0_45 = arith.constant 0 : index
    %c0_46 = arith.constant 0 : index
    %87 = vector.load %arg1[%86, %c0_45, %c0_46] : memref<8x8x384xbf16, #tpu.memory_space<vmem>>, vector<1x8x384xbf16>
    %88 = vector.shape_cast %87 : vector<1x8x384xbf16> to vector<8x384xbf16>
    %89 = arith.extf %88 : vector<8x384xbf16> to vector<8x384xf32>
    %90 = vector.extract_strided_slice %89 {offsets = [0, 0], sizes = [8, 256], strides = [1, 1]} : vector<8x384xf32> to vector<8x256xf32>
    %91 = arith.truncf %85 : vector<8x128xf32> to vector<8x128xbf16>
    %c0_47 = arith.constant 0 : index
    %c0_48 = arith.constant 0 : index
    %92 = vector.load %arg3[%c0_47, %c0_48] : memref<128x256xbf16, #tpu.memory_space<vmem>>, vector<128x256xbf16>
    %cst_49 = arith.constant dense<0.000000e+00> : vector<8x256xf32>
    %93 = tpu.matmul %91, %92, %cst_49 {dimension_numbers = #tpu.dot_dimension_numbers<[1], [0], [0], [1], [0, 0, 1, 1], [], []>} : vector<8x128xbf16>, vector<128x256xbf16>, vector<8x256xf32> -> vector<8x256xf32>
    %94 = arith.addf %90, %93 : vector<8x256xf32>
    %c0_50 = arith.constant 0 : index
    %c0_51 = arith.constant 0 : index
    %95 = vector.load %arg5[%c0_50, %c0_51] : memref<1x256xf32, #tpu.memory_space<vmem>>, vector<1x256xf32>
    %96 = vector.broadcast %95 : vector<1x256xf32> to vector<8x256xf32>
    %97 = arith.addf %94, %96 : vector<8x256xf32>
    %98 = arith.negf %97 : vector<8x256xf32>
    %99 = math.exp %98 : vector<8x256xf32>
    %cst_52 = arith.constant 1.000000e+00 : f32
    %100 = vector.broadcast %cst_52 : f32 to vector<8x256xf32>
    %101 = arith.addf %100, %99 : vector<8x256xf32>
    %102 = arith.divf %100, %101 : vector<8x256xf32>
    %103 = vector.extract_strided_slice %102 {offsets = [0, 0], sizes = [8, 128], strides = [1, 1]} : vector<8x256xf32> to vector<8x128xf32>
    %104 = vector.extract_strided_slice %102 {offsets = [0, 128], sizes = [8, 128], strides = [1, 1]} : vector<8x256xf32> to vector<8x128xf32>
    %105 = vector.extract_strided_slice %89 {offsets = [0, 256], sizes = [8, 128], strides = [1, 1]} : vector<8x384xf32> to vector<8x128xf32>
    %106 = arith.mulf %104, %85 : vector<8x128xf32>
    %107 = arith.truncf %106 : vector<8x128xf32> to vector<8x128xbf16>
    %c0_53 = arith.constant 0 : index
    %c0_54 = arith.constant 0 : index
    %108 = vector.load %arg4[%c0_53, %c0_54] : memref<128x128xbf16, #tpu.memory_space<vmem>>, vector<128x128xbf16>
    %cst_55 = arith.constant dense<0.000000e+00> : vector<8x128xf32>
    %109 = tpu.matmul %107, %108, %cst_55 {dimension_numbers = #tpu.dot_dimension_numbers<[1], [0], [0], [1], [0, 0, 1, 1], [], []>} : vector<8x128xbf16>, vector<128x128xbf16>, vector<8x128xf32> -> vector<8x128xf32>
    %110 = arith.addf %105, %109 : vector<8x128xf32>
    %c0_56 = arith.constant 0 : index
    %c0_57 = arith.constant 0 : index
    %111 = vector.load %arg6[%c0_56, %c0_57] : memref<1x128xf32, #tpu.memory_space<vmem>>, vector<1x128xf32>
    %112 = vector.broadcast %111 : vector<1x128xf32> to vector<8x128xf32>
    %113 = arith.addf %110, %112 : vector<8x128xf32>
    %114 = math.tanh %113 : vector<8x128xf32>
    %115 = arith.mulf %103, %85 : vector<8x128xf32>
    %cst_58 = arith.constant 1.000000e+00 : f32
    %116 = vector.broadcast %cst_58 : f32 to vector<8x128xf32>
    %117 = arith.subf %116, %103 : vector<8x128xf32>
    %118 = arith.mulf %117, %114 : vector<8x128xf32>
    %119 = arith.addf %115, %118 : vector<8x128xf32>
    %c0_59 = arith.constant 0 : index
    %c0_60 = arith.constant 0 : index
    %c0_61 = arith.constant 0 : index
    %120 = vector.load %arg16[%c0_59, %c0_60, %c0_61] : memref<2x8x128xf32, #tpu.memory_space<vmem>>, vector<1x8x128xf32>
    %121 = vector.shape_cast %120 : vector<1x8x128xf32> to vector<8x128xf32>
    %122 = vector.shape_cast %119 : vector<8x128xf32> to vector<1x8x128xf32>
    tpu.vector_store %arg16[%c0_59, %c0_60, %c0_61], %122 {strides = array<i32>} : memref<2x8x128xf32, #tpu.memory_space<vmem>>, vector<1x8x128xf32>,
    %c1_62 = arith.constant 1 : index
    %c0_63 = arith.constant 0 : index
    %c0_64 = arith.constant 0 : index
    %123 = vector.load %arg16[%c1_62, %c0_63, %c0_64] : memref<2x8x128xf32, #tpu.memory_space<vmem>>, vector<1x8x128xf32>
    %124 = vector.shape_cast %123 : vector<1x8x128xf32> to vector<8x128xf32>
    %125 = arith.truncf %119 : vector<8x128xf32> to vector<8x128xbf16>
    %c0_65 = arith.constant 0 : index
    %c0_66 = arith.constant 0 : index
    %126 = vector.load %arg11[%c0_65, %c0_66] : memref<128x384xbf16, #tpu.memory_space<vmem>>, vector<128x384xbf16>
    %cst_67 = arith.constant dense<0.000000e+00> : vector<8x384xf32>
    %127 = tpu.matmul %125, %126, %cst_67 {dimension_numbers = #tpu.dot_dimension_numbers<[1], [0], [0], [1], [0, 0, 1, 1], [], []>} : vector<8x128xbf16>, vector<128x384xbf16>, vector<8x384xf32> -> vector<8x384xf32>
    %128 = vector.extract_strided_slice %127 {offsets = [0, 0], sizes = [8, 256], strides = [1, 1]} : vector<8x384xf32> to vector<8x256xf32>
    %129 = arith.truncf %124 : vector<8x128xf32> to vector<8x128xbf16>
    %c0_68 = arith.constant 0 : index
    %c0_69 = arith.constant 0 : index
    %130 = vector.load %arg7[%c0_68, %c0_69] : memref<128x256xbf16, #tpu.memory_space<vmem>>, vector<128x256xbf16>
    %cst_70 = arith.constant dense<0.000000e+00> : vector<8x256xf32>
    %131 = tpu.matmul %129, %130, %cst_70 {dimension_numbers = #tpu.dot_dimension_numbers<[1], [0], [0], [1], [0, 0, 1, 1], [], []>} : vector<8x128xbf16>, vector<128x256xbf16>, vector<8x256xf32> -> vector<8x256xf32>
    %132 = arith.addf %128, %131 : vector<8x256xf32>
    %c0_71 = arith.constant 0 : index
    %c0_72 = arith.constant 0 : index
    %133 = vector.load %arg9[%c0_71, %c0_72] : memref<1x256xf32, #tpu.memory_space<vmem>>, vector<1x256xf32>
    %134 = vector.broadcast %133 : vector<1x256xf32> to vector<8x256xf32>
    %135 = arith.addf %132, %134 : vector<8x256xf32>
    %136 = arith.negf %135 : vector<8x256xf32>
    %137 = math.exp %136 : vector<8x256xf32>
    %cst_73 = arith.constant 1.000000e+00 : f32
    %138 = vector.broadcast %cst_73 : f32 to vector<8x256xf32>
    %139 = arith.addf %138, %137 : vector<8x256xf32>
    %140 = arith.divf %138, %139 : vector<8x256xf32>
    %141 = vector.extract_strided_slice %140 {offsets = [0, 0], sizes = [8, 128], strides = [1, 1]} : vector<8x256xf32> to vector<8x128xf32>
    %142 = vector.extract_strided_slice %140 {offsets = [0, 128], sizes = [8, 128], strides = [1, 1]} : vector<8x256xf32> to vector<8x128xf32>
    %143 = vector.extract_strided_slice %127 {offsets = [0, 256], sizes = [8, 128], strides = [1, 1]} : vector<8x384xf32> to vector<8x128xf32>
    %144 = arith.mulf %142, %124 : vector<8x128xf32>
    %145 = arith.truncf %144 : vector<8x128xf32> to vector<8x128xbf16>
    %c0_74 = arith.constant 0 : index
    %c0_75 = arith.constant 0 : index
    %146 = vector.load %arg8[%c0_74, %c0_75] : memref<128x128xbf16, #tpu.memory_space<vmem>>, vector<128x128xbf16>
    %cst_76 = arith.constant dense<0.000000e+00> : vector<8x128xf32>
    %147 = tpu.matmul %145, %146, %cst_76 {dimension_numbers = #tpu.dot_dimension_numbers<[1], [0], [0], [1], [0, 0, 1, 1], [], []>} : vector<8x128xbf16>, vector<128x128xbf16>, vector<8x128xf32> -> vector<8x128xf32>
    %148 = arith.addf %143, %147 : vector<8x128xf32>
    %c0_77 = arith.constant 0 : index
    %c0_78 = arith.constant 0 : index
    %149 = vector.load %arg10[%c0_77, %c0_78] : memref<1x128xf32, #tpu.memory_space<vmem>>, vector<1x128xf32>
    %150 = vector.broadcast %149 : vector<1x128xf32> to vector<8x128xf32>
    %151 = arith.addf %148, %150 : vector<8x128xf32>
    %152 = math.tanh %151 : vector<8x128xf32>
    %153 = arith.mulf %141, %124 : vector<8x128xf32>
    %cst_79 = arith.constant 1.000000e+00 : f32
    %154 = vector.broadcast %cst_79 : f32 to vector<8x128xf32>
    %155 = arith.subf %154, %141 : vector<8x128xf32>
    %156 = arith.mulf %155, %152 : vector<8x128xf32>
    %157 = arith.addf %153, %156 : vector<8x128xf32>
    %c1_80 = arith.constant 1 : index
    %c0_81 = arith.constant 0 : index
    %c0_82 = arith.constant 0 : index
    %158 = vector.load %arg16[%c1_80, %c0_81, %c0_82] : memref<2x8x128xf32, #tpu.memory_space<vmem>>, vector<1x8x128xf32>
    %159 = vector.shape_cast %158 : vector<1x8x128xf32> to vector<8x128xf32>
    %160 = vector.shape_cast %157 : vector<8x128xf32> to vector<1x8x128xf32>
    tpu.vector_store %arg16[%c1_80, %c0_81, %c0_82], %160 {strides = array<i32>} : memref<2x8x128xf32, #tpu.memory_space<vmem>>, vector<1x8x128xf32>,
    %161 = arith.index_cast %c1_i32 : i32 to index
    %c0_83 = arith.constant 0 : index
    %c0_84 = arith.constant 0 : index
    %162 = vector.load %arg17[%161, %c0_83, %c0_84] : memref<8x8x128xf32, #tpu.memory_space<vmem>>, vector<1x8x128xf32>
    %163 = vector.shape_cast %162 : vector<1x8x128xf32> to vector<8x128xf32>
    %164 = vector.shape_cast %157 : vector<8x128xf32> to vector<1x8x128xf32>
    tpu.vector_store %arg17[%161, %c0_83, %c0_84], %164 {strides = array<i32>} : memref<8x8x128xf32, #tpu.memory_space<vmem>>, vector<1x8x128xf32>,
    %c2_i32 = arith.constant 2 : i32
    %c0_85 = arith.constant 0 : index
    %c0_86 = arith.constant 0 : index
    %c0_87 = arith.constant 0 : index
    %165 = vector.load %arg16[%c0_85, %c0_86, %c0_87] : memref<2x8x128xf32, #tpu.memory_space<vmem>>, vector<1x8x128xf32>
    %166 = vector.shape_cast %165 : vector<1x8x128xf32> to vector<8x128xf32>
    %167 = arith.index_cast %c2_i32 : i32 to index
    %c0_88 = arith.constant 0 : index
    %c0_89 = arith.constant 0 : index
    %168 = vector.load %arg1[%167, %c0_88, %c0_89] : memref<8x8x384xbf16, #tpu.memory_space<vmem>>, vector<1x8x384xbf16>
    %169 = vector.shape_cast %168 : vector<1x8x384xbf16> to vector<8x384xbf16>
    %170 = arith.extf %169 : vector<8x384xbf16> to vector<8x384xf32>
    %171 = vector.extract_strided_slice %170 {offsets = [0, 0], sizes = [8, 256], strides = [1, 1]} : vector<8x384xf32> to vector<8x256xf32>
    %172 = arith.truncf %166 : vector<8x128xf32> to vector<8x128xbf16>
    %c0_90 = arith.constant 0 : index
    %c0_91 = arith.constant 0 : index
    %173 = vector.load %arg3[%c0_90, %c0_91] : memref<128x256xbf16, #tpu.memory_space<vmem>>, vector<128x256xbf16>
    %cst_92 = arith.constant dense<0.000000e+00> : vector<8x256xf32>
    %174 = tpu.matmul %172, %173, %cst_92 {dimension_numbers = #tpu.dot_dimension_numbers<[1], [0], [0], [1], [0, 0, 1, 1], [], []>} : vector<8x128xbf16>, vector<128x256xbf16>, vector<8x256xf32> -> vector<8x256xf32>
    %175 = arith.addf %171, %174 : vector<8x256xf32>
    %c0_93 = arith.constant 0 : index
    %c0_94 = arith.constant 0 : index
    %176 = vector.load %arg5[%c0_93, %c0_94] : memref<1x256xf32, #tpu.memory_space<vmem>>, vector<1x256xf32>
    %177 = vector.broadcast %176 : vector<1x256xf32> to vector<8x256xf32>
    %178 = arith.addf %175, %177 : vector<8x256xf32>
    %179 = arith.negf %178 : vector<8x256xf32>
    %180 = math.exp %179 : vector<8x256xf32>
    %cst_95 = arith.constant 1.000000e+00 : f32
    %181 = vector.broadcast %cst_95 : f32 to vector<8x256xf32>
    %182 = arith.addf %181, %180 : vector<8x256xf32>
    %183 = arith.divf %181, %182 : vector<8x256xf32>
    %184 = vector.extract_strided_slice %183 {offsets = [0, 0], sizes = [8, 128], strides = [1, 1]} : vector<8x256xf32> to vector<8x128xf32>
    %185 = vector.extract_strided_slice %183 {offsets = [0, 128], sizes = [8, 128], strides = [1, 1]} : vector<8x256xf32> to vector<8x128xf32>
    %186 = vector.extract_strided_slice %170 {offsets = [0, 256], sizes = [8, 128], strides = [1, 1]} : vector<8x384xf32> to vector<8x128xf32>
    %187 = arith.mulf %185, %166 : vector<8x128xf32>
    %188 = arith.truncf %187 : vector<8x128xf32> to vector<8x128xbf16>
    %c0_96 = arith.constant 0 : index
    %c0_97 = arith.constant 0 : index
    %189 = vector.load %arg4[%c0_96, %c0_97] : memref<128x128xbf16, #tpu.memory_space<vmem>>, vector<128x128xbf16>
    %cst_98 = arith.constant dense<0.000000e+00> : vector<8x128xf32>
    %190 = tpu.matmul %188, %189, %cst_98 {dimension_numbers = #tpu.dot_dimension_numbers<[1], [0], [0], [1], [0, 0, 1, 1], [], []>} : vector<8x128xbf16>, vector<128x128xbf16>, vector<8x128xf32> -> vector<8x128xf32>
    %191 = arith.addf %186, %190 : vector<8x128xf32>
    %c0_99 = arith.constant 0 : index
    %c0_100 = arith.constant 0 : index
    %192 = vector.load %arg6[%c0_99, %c0_100] : memref<1x128xf32, #tpu.memory_space<vmem>>, vector<1x128xf32>
    %193 = vector.broadcast %192 : vector<1x128xf32> to vector<8x128xf32>
    %194 = arith.addf %191, %193 : vector<8x128xf32>
    %195 = math.tanh %194 : vector<8x128xf32>
    %196 = arith.mulf %184, %166 : vector<8x128xf32>
    %cst_101 = arith.constant 1.000000e+00 : f32
    %197 = vector.broadcast %cst_101 : f32 to vector<8x128xf32>
    %198 = arith.subf %197, %184 : vector<8x128xf32>
    %199 = arith.mulf %198, %195 : vector<8x128xf32>
    %200 = arith.addf %196, %199 : vector<8x128xf32>
    %c0_102 = arith.constant 0 : index
    %c0_103 = arith.constant 0 : index
    %c0_104 = arith.constant 0 : index
    %201 = vector.load %arg16[%c0_102, %c0_103, %c0_104] : memref<2x8x128xf32, #tpu.memory_space<vmem>>, vector<1x8x128xf32>
    %202 = vector.shape_cast %201 : vector<1x8x128xf32> to vector<8x128xf32>
    %203 = vector.shape_cast %200 : vector<8x128xf32> to vector<1x8x128xf32>
    tpu.vector_store %arg16[%c0_102, %c0_103, %c0_104], %203 {strides = array<i32>} : memref<2x8x128xf32, #tpu.memory_space<vmem>>, vector<1x8x128xf32>,
    %c1_105 = arith.constant 1 : index
    %c0_106 = arith.constant 0 : index
    %c0_107 = arith.constant 0 : index
    %204 = vector.load %arg16[%c1_105, %c0_106, %c0_107] : memref<2x8x128xf32, #tpu.memory_space<vmem>>, vector<1x8x128xf32>
    %205 = vector.shape_cast %204 : vector<1x8x128xf32> to vector<8x128xf32>
    %206 = arith.truncf %200 : vector<8x128xf32> to vector<8x128xbf16>
    %c0_108 = arith.constant 0 : index
    %c0_109 = arith.constant 0 : index
    %207 = vector.load %arg11[%c0_108, %c0_109] : memref<128x384xbf16, #tpu.memory_space<vmem>>, vector<128x384xbf16>
    %cst_110 = arith.constant dense<0.000000e+00> : vector<8x384xf32>
    %208 = tpu.matmul %206, %207, %cst_110 {dimension_numbers = #tpu.dot_dimension_numbers<[1], [0], [0], [1], [0, 0, 1, 1], [], []>} : vector<8x128xbf16>, vector<128x384xbf16>, vector<8x384xf32> -> vector<8x384xf32>
    %209 = vector.extract_strided_slice %208 {offsets = [0, 0], sizes = [8, 256], strides = [1, 1]} : vector<8x384xf32> to vector<8x256xf32>
    %210 = arith.truncf %205 : vector<8x128xf32> to vector<8x128xbf16>
    %c0_111 = arith.constant 0 : index
    %c0_112 = arith.constant 0 : index
    %211 = vector.load %arg7[%c0_111, %c0_112] : memref<128x256xbf16, #tpu.memory_space<vmem>>, vector<128x256xbf16>
    %cst_113 = arith.constant dense<0.000000e+00> : vector<8x256xf32>
    %212 = tpu.matmul %210, %211, %cst_113 {dimension_numbers = #tpu.dot_dimension_numbers<[1], [0], [0], [1], [0, 0, 1, 1], [], []>} : vector<8x128xbf16>, vector<128x256xbf16>, vector<8x256xf32> -> vector<8x256xf32>
    %213 = arith.addf %209, %212 : vector<8x256xf32>
    %c0_114 = arith.constant 0 : index
    %c0_115 = arith.constant 0 : index
    %214 = vector.load %arg9[%c0_114, %c0_115] : memref<1x256xf32, #tpu.memory_space<vmem>>, vector<1x256xf32>
    %215 = vector.broadcast %214 : vector<1x256xf32> to vector<8x256xf32>
    %216 = arith.addf %213, %215 : vector<8x256xf32>
    %217 = arith.negf %216 : vector<8x256xf32>
    %218 = math.exp %217 : vector<8x256xf32>
    %cst_116 = arith.constant 1.000000e+00 : f32
    %219 = vector.broadcast %cst_116 : f32 to vector<8x256xf32>
    %220 = arith.addf %219, %218 : vector<8x256xf32>
    %221 = arith.divf %219, %220 : vector<8x256xf32>
    %222 = vector.extract_strided_slice %221 {offsets = [0, 0], sizes = [8, 128], strides = [1, 1]} : vector<8x256xf32> to vector<8x128xf32>
    %223 = vector.extract_strided_slice %221 {offsets = [0, 128], sizes = [8, 128], strides = [1, 1]} : vector<8x256xf32> to vector<8x128xf32>
    %224 = vector.extract_strided_slice %208 {offsets = [0, 256], sizes = [8, 128], strides = [1, 1]} : vector<8x384xf32> to vector<8x128xf32>
    %225 = arith.mulf %223, %205 : vector<8x128xf32>
    %226 = arith.truncf %225 : vector<8x128xf32> to vector<8x128xbf16>
    %c0_117 = arith.constant 0 : index
    %c0_118 = arith.constant 0 : index
    %227 = vector.load %arg8[%c0_117, %c0_118] : memref<128x128xbf16, #tpu.memory_space<vmem>>, vector<128x128xbf16>
    %cst_119 = arith.constant dense<0.000000e+00> : vector<8x128xf32>
    %228 = tpu.matmul %226, %227, %cst_119 {dimension_numbers = #tpu.dot_dimension_numbers<[1], [0], [0], [1], [0, 0, 1, 1], [], []>} : vector<8x128xbf16>, vector<128x128xbf16>, vector<8x128xf32> -> vector<8x128xf32>
    %229 = arith.addf %224, %228 : vector<8x128xf32>
    %c0_120 = arith.constant 0 : index
    %c0_121 = arith.constant 0 : index
    %230 = vector.load %arg10[%c0_120, %c0_121] : memref<1x128xf32, #tpu.memory_space<vmem>>, vector<1x128xf32>
    %231 = vector.broadcast %230 : vector<1x128xf32> to vector<8x128xf32>
    %232 = arith.addf %229, %231 : vector<8x128xf32>
    %233 = math.tanh %232 : vector<8x128xf32>
    %234 = arith.mulf %222, %205 : vector<8x128xf32>
    %cst_122 = arith.constant 1.000000e+00 : f32
    %235 = vector.broadcast %cst_122 : f32 to vector<8x128xf32>
    %236 = arith.subf %235, %222 : vector<8x128xf32>
    %237 = arith.mulf %236, %233 : vector<8x128xf32>
    %238 = arith.addf %234, %237 : vector<8x128xf32>
    %c1_123 = arith.constant 1 : index
    %c0_124 = arith.constant 0 : index
    %c0_125 = arith.constant 0 : index
    %239 = vector.load %arg16[%c1_123, %c0_124, %c0_125] : memref<2x8x128xf32, #tpu.memory_space<vmem>>, vector<1x8x128xf32>
    %240 = vector.shape_cast %239 : vector<1x8x128xf32> to vector<8x128xf32>
    %241 = vector.shape_cast %238 : vector<8x128xf32> to vector<1x8x128xf32>
    tpu.vector_store %arg16[%c1_123, %c0_124, %c0_125], %241 {strides = array<i32>} : memref<2x8x128xf32, #tpu.memory_space<vmem>>, vector<1x8x128xf32>,
    %242 = arith.index_cast %c2_i32 : i32 to index
    %c0_126 = arith.constant 0 : index
    %c0_127 = arith.constant 0 : index
    %243 = vector.load %arg17[%242, %c0_126, %c0_127] : memref<8x8x128xf32, #tpu.memory_space<vmem>>, vector<1x8x128xf32>
    %244 = vector.shape_cast %243 : vector<1x8x128xf32> to vector<8x128xf32>
    %245 = vector.shape_cast %238 : vector<8x128xf32> to vector<1x8x128xf32>
    tpu.vector_store %arg17[%242, %c0_126, %c0_127], %245 {strides = array<i32>} : memref<8x8x128xf32, #tpu.memory_space<vmem>>, vector<1x8x128xf32>,
    %c3_i32 = arith.constant 3 : i32
    %c0_128 = arith.constant 0 : index
    %c0_129 = arith.constant 0 : index
    %c0_130 = arith.constant 0 : index
    %246 = vector.load %arg16[%c0_128, %c0_129, %c0_130] : memref<2x8x128xf32, #tpu.memory_space<vmem>>, vector<1x8x128xf32>
    %247 = vector.shape_cast %246 : vector<1x8x128xf32> to vector<8x128xf32>
    %248 = arith.index_cast %c3_i32 : i32 to index
    %c0_131 = arith.constant 0 : index
    %c0_132 = arith.constant 0 : index
    %249 = vector.load %arg1[%248, %c0_131, %c0_132] : memref<8x8x384xbf16, #tpu.memory_space<vmem>>, vector<1x8x384xbf16>
    %250 = vector.shape_cast %249 : vector<1x8x384xbf16> to vector<8x384xbf16>
    %251 = arith.extf %250 : vector<8x384xbf16> to vector<8x384xf32>
    %252 = vector.extract_strided_slice %251 {offsets = [0, 0], sizes = [8, 256], strides = [1, 1]} : vector<8x384xf32> to vector<8x256xf32>
    %253 = arith.truncf %247 : vector<8x128xf32> to vector<8x128xbf16>
    %c0_133 = arith.constant 0 : index
    %c0_134 = arith.constant 0 : index
    %254 = vector.load %arg3[%c0_133, %c0_134] : memref<128x256xbf16, #tpu.memory_space<vmem>>, vector<128x256xbf16>
    %cst_135 = arith.constant dense<0.000000e+00> : vector<8x256xf32>
    %255 = tpu.matmul %253, %254, %cst_135 {dimension_numbers = #tpu.dot_dimension_numbers<[1], [0], [0], [1], [0, 0, 1, 1], [], []>} : vector<8x128xbf16>, vector<128x256xbf16>, vector<8x256xf32> -> vector<8x256xf32>
    %256 = arith.addf %252, %255 : vector<8x256xf32>
    %c0_136 = arith.constant 0 : index
    %c0_137 = arith.constant 0 : index
    %257 = vector.load %arg5[%c0_136, %c0_137] : memref<1x256xf32, #tpu.memory_space<vmem>>, vector<1x256xf32>
    %258 = vector.broadcast %257 : vector<1x256xf32> to vector<8x256xf32>
    %259 = arith.addf %256, %258 : vector<8x256xf32>
    %260 = arith.negf %259 : vector<8x256xf32>
    %261 = math.exp %260 : vector<8x256xf32>
    %cst_138 = arith.constant 1.000000e+00 : f32
    %262 = vector.broadcast %cst_138 : f32 to vector<8x256xf32>
    %263 = arith.addf %262, %261 : vector<8x256xf32>
    %264 = arith.divf %262, %263 : vector<8x256xf32>
    %265 = vector.extract_strided_slice %264 {offsets = [0, 0], sizes = [8, 128], strides = [1, 1]} : vector<8x256xf32> to vector<8x128xf32>
    %266 = vector.extract_strided_slice %264 {offsets = [0, 128], sizes = [8, 128], strides = [1, 1]} : vector<8x256xf32> to vector<8x128xf32>
    %267 = vector.extract_strided_slice %251 {offsets = [0, 256], sizes = [8, 128], strides = [1, 1]} : vector<8x384xf32> to vector<8x128xf32>
    %268 = arith.mulf %266, %247 : vector<8x128xf32>
    %269 = arith.truncf %268 : vector<8x128xf32> to vector<8x128xbf16>
    %c0_139 = arith.constant 0 : index
    %c0_140 = arith.constant 0 : index
    %270 = vector.load %arg4[%c0_139, %c0_140] : memref<128x128xbf16, #tpu.memory_space<vmem>>, vector<128x128xbf16>
    %cst_141 = arith.constant dense<0.000000e+00> : vector<8x128xf32>
    %271 = tpu.matmul %269, %270, %cst_141 {dimension_numbers = #tpu.dot_dimension_numbers<[1], [0], [0], [1], [0, 0, 1, 1], [], []>} : vector<8x128xbf16>, vector<128x128xbf16>, vector<8x128xf32> -> vector<8x128xf32>
    %272 = arith.addf %267, %271 : vector<8x128xf32>
    %c0_142 = arith.constant 0 : index
    %c0_143 = arith.constant 0 : index
    %273 = vector.load %arg6[%c0_142, %c0_143] : memref<1x128xf32, #tpu.memory_space<vmem>>, vector<1x128xf32>
    %274 = vector.broadcast %273 : vector<1x128xf32> to vector<8x128xf32>
    %275 = arith.addf %272, %274 : vector<8x128xf32>
    %276 = math.tanh %275 : vector<8x128xf32>
    %277 = arith.mulf %265, %247 : vector<8x128xf32>
    %cst_144 = arith.constant 1.000000e+00 : f32
    %278 = vector.broadcast %cst_144 : f32 to vector<8x128xf32>
    %279 = arith.subf %278, %265 : vector<8x128xf32>
    %280 = arith.mulf %279, %276 : vector<8x128xf32>
    %281 = arith.addf %277, %280 : vector<8x128xf32>
    %c0_145 = arith.constant 0 : index
    %c0_146 = arith.constant 0 : index
    %c0_147 = arith.constant 0 : index
    %282 = vector.load %arg16[%c0_145, %c0_146, %c0_147] : memref<2x8x128xf32, #tpu.memory_space<vmem>>, vector<1x8x128xf32>
    %283 = vector.shape_cast %282 : vector<1x8x128xf32> to vector<8x128xf32>
    %284 = vector.shape_cast %281 : vector<8x128xf32> to vector<1x8x128xf32>
    tpu.vector_store %arg16[%c0_145, %c0_146, %c0_147], %284 {strides = array<i32>} : memref<2x8x128xf32, #tpu.memory_space<vmem>>, vector<1x8x128xf32>,
    %c1_148 = arith.constant 1 : index
    %c0_149 = arith.constant 0 : index
    %c0_150 = arith.constant 0 : index
    %285 = vector.load %arg16[%c1_148, %c0_149, %c0_150] : memref<2x8x128xf32, #tpu.memory_space<vmem>>, vector<1x8x128xf32>
    %286 = vector.shape_cast %285 : vector<1x8x128xf32> to vector<8x128xf32>
    %287 = arith.truncf %281 : vector<8x128xf32> to vector<8x128xbf16>
    %c0_151 = arith.constant 0 : index
    %c0_152 = arith.constant 0 : index
    %288 = vector.load %arg11[%c0_151, %c0_152] : memref<128x384xbf16, #tpu.memory_space<vmem>>, vector<128x384xbf16>
    %cst_153 = arith.constant dense<0.000000e+00> : vector<8x384xf32>
    %289 = tpu.matmul %287, %288, %cst_153 {dimension_numbers = #tpu.dot_dimension_numbers<[1], [0], [0], [1], [0, 0, 1, 1], [], []>} : vector<8x128xbf16>, vector<128x384xbf16>, vector<8x384xf32> -> vector<8x384xf32>
    %290 = vector.extract_strided_slice %289 {offsets = [0, 0], sizes = [8, 256], strides = [1, 1]} : vector<8x384xf32> to vector<8x256xf32>
    %291 = arith.truncf %286 : vector<8x128xf32> to vector<8x128xbf16>
    %c0_154 = arith.constant 0 : index
    %c0_155 = arith.constant 0 : index
    %292 = vector.load %arg7[%c0_154, %c0_155] : memref<128x256xbf16, #tpu.memory_space<vmem>>, vector<128x256xbf16>
    %cst_156 = arith.constant dense<0.000000e+00> : vector<8x256xf32>
    %293 = tpu.matmul %291, %292, %cst_156 {dimension_numbers = #tpu.dot_dimension_numbers<[1], [0], [0], [1], [0, 0, 1, 1], [], []>} : vector<8x128xbf16>, vector<128x256xbf16>, vector<8x256xf32> -> vector<8x256xf32>
    %294 = arith.addf %290, %293 : vector<8x256xf32>
    %c0_157 = arith.constant 0 : index
    %c0_158 = arith.constant 0 : index
    %295 = vector.load %arg9[%c0_157, %c0_158] : memref<1x256xf32, #tpu.memory_space<vmem>>, vector<1x256xf32>
    %296 = vector.broadcast %295 : vector<1x256xf32> to vector<8x256xf32>
    %297 = arith.addf %294, %296 : vector<8x256xf32>
    %298 = arith.negf %297 : vector<8x256xf32>
    %299 = math.exp %298 : vector<8x256xf32>
    %cst_159 = arith.constant 1.000000e+00 : f32
    %300 = vector.broadcast %cst_159 : f32 to vector<8x256xf32>
    %301 = arith.addf %300, %299 : vector<8x256xf32>
    %302 = arith.divf %300, %301 : vector<8x256xf32>
    %303 = vector.extract_strided_slice %302 {offsets = [0, 0], sizes = [8, 128], strides = [1, 1]} : vector<8x256xf32> to vector<8x128xf32>
    %304 = vector.extract_strided_slice %302 {offsets = [0, 128], sizes = [8, 128], strides = [1, 1]} : vector<8x256xf32> to vector<8x128xf32>
    %305 = vector.extract_strided_slice %289 {offsets = [0, 256], sizes = [8, 128], strides = [1, 1]} : vector<8x384xf32> to vector<8x128xf32>
    %306 = arith.mulf %304, %286 : vector<8x128xf32>
    %307 = arith.truncf %306 : vector<8x128xf32> to vector<8x128xbf16>
    %c0_160 = arith.constant 0 : index
    %c0_161 = arith.constant 0 : index
    %308 = vector.load %arg8[%c0_160, %c0_161] : memref<128x128xbf16, #tpu.memory_space<vmem>>, vector<128x128xbf16>
    %cst_162 = arith.constant dense<0.000000e+00> : vector<8x128xf32>
    %309 = tpu.matmul %307, %308, %cst_162 {dimension_numbers = #tpu.dot_dimension_numbers<[1], [0], [0], [1], [0, 0, 1, 1], [], []>} : vector<8x128xbf16>, vector<128x128xbf16>, vector<8x128xf32> -> vector<8x128xf32>
    %310 = arith.addf %305, %309 : vector<8x128xf32>
    %c0_163 = arith.constant 0 : index
    %c0_164 = arith.constant 0 : index
    %311 = vector.load %arg10[%c0_163, %c0_164] : memref<1x128xf32, #tpu.memory_space<vmem>>, vector<1x128xf32>
    %312 = vector.broadcast %311 : vector<1x128xf32> to vector<8x128xf32>
    %313 = arith.addf %310, %312 : vector<8x128xf32>
    %314 = math.tanh %313 : vector<8x128xf32>
    %315 = arith.mulf %303, %286 : vector<8x128xf32>
    %cst_165 = arith.constant 1.000000e+00 : f32
    %316 = vector.broadcast %cst_165 : f32 to vector<8x128xf32>
    %317 = arith.subf %316, %303 : vector<8x128xf32>
    %318 = arith.mulf %317, %314 : vector<8x128xf32>
    %319 = arith.addf %315, %318 : vector<8x128xf32>
    %c1_166 = arith.constant 1 : index
    %c0_167 = arith.constant 0 : index
    %c0_168 = arith.constant 0 : index
    %320 = vector.load %arg16[%c1_166, %c0_167, %c0_168] : memref<2x8x128xf32, #tpu.memory_space<vmem>>, vector<1x8x128xf32>
    %321 = vector.shape_cast %320 : vector<1x8x128xf32> to vector<8x128xf32>
    %322 = vector.shape_cast %319 : vector<8x128xf32> to vector<1x8x128xf32>
    tpu.vector_store %arg16[%c1_166, %c0_167, %c0_168], %322 {strides = array<i32>} : memref<2x8x128xf32, #tpu.memory_space<vmem>>, vector<1x8x128xf32>,
    %323 = arith.index_cast %c3_i32 : i32 to index
    %c0_169 = arith.constant 0 : index
    %c0_170 = arith.constant 0 : index
    %324 = vector.load %arg17[%323, %c0_169, %c0_170] : memref<8x8x128xf32, #tpu.memory_space<vmem>>, vector<1x8x128xf32>
    %325 = vector.shape_cast %324 : vector<1x8x128xf32> to vector<8x128xf32>
    %326 = vector.shape_cast %319 : vector<8x128xf32> to vector<1x8x128xf32>
    tpu.vector_store %arg17[%323, %c0_169, %c0_170], %326 {strides = array<i32>} : memref<8x8x128xf32, #tpu.memory_space<vmem>>, vector<1x8x128xf32>,
    %c4_i32 = arith.constant 4 : i32
    %c0_171 = arith.constant 0 : index
    %c0_172 = arith.constant 0 : index
    %c0_173 = arith.constant 0 : index
    %327 = vector.load %arg16[%c0_171, %c0_172, %c0_173] : memref<2x8x128xf32, #tpu.memory_space<vmem>>, vector<1x8x128xf32>
    %328 = vector.shape_cast %327 : vector<1x8x128xf32> to vector<8x128xf32>
    %329 = arith.index_cast %c4_i32 : i32 to index
    %c0_174 = arith.constant 0 : index
    %c0_175 = arith.constant 0 : index
    %330 = vector.load %arg1[%329, %c0_174, %c0_175] : memref<8x8x384xbf16, #tpu.memory_space<vmem>>, vector<1x8x384xbf16>
    %331 = vector.shape_cast %330 : vector<1x8x384xbf16> to vector<8x384xbf16>
    %332 = arith.extf %331 : vector<8x384xbf16> to vector<8x384xf32>
    %333 = vector.extract_strided_slice %332 {offsets = [0, 0], sizes = [8, 256], strides = [1, 1]} : vector<8x384xf32> to vector<8x256xf32>
    %334 = arith.truncf %328 : vector<8x128xf32> to vector<8x128xbf16>
    %c0_176 = arith.constant 0 : index
    %c0_177 = arith.constant 0 : index
    %335 = vector.load %arg3[%c0_176, %c0_177] : memref<128x256xbf16, #tpu.memory_space<vmem>>, vector<128x256xbf16>
    %cst_178 = arith.constant dense<0.000000e+00> : vector<8x256xf32>
    %336 = tpu.matmul %334, %335, %cst_178 {dimension_numbers = #tpu.dot_dimension_numbers<[1], [0], [0], [1], [0, 0, 1, 1], [], []>} : vector<8x128xbf16>, vector<128x256xbf16>, vector<8x256xf32> -> vector<8x256xf32>
    %337 = arith.addf %333, %336 : vector<8x256xf32>
    %c0_179 = arith.constant 0 : index
    %c0_180 = arith.constant 0 : index
    %338 = vector.load %arg5[%c0_179, %c0_180] : memref<1x256xf32, #tpu.memory_space<vmem>>, vector<1x256xf32>
    %339 = vector.broadcast %338 : vector<1x256xf32> to vector<8x256xf32>
    %340 = arith.addf %337, %339 : vector<8x256xf32>
    %341 = arith.negf %340 : vector<8x256xf32>
    %342 = math.exp %341 : vector<8x256xf32>
    %cst_181 = arith.constant 1.000000e+00 : f32
    %343 = vector.broadcast %cst_181 : f32 to vector<8x256xf32>
    %344 = arith.addf %343, %342 : vector<8x256xf32>
    %345 = arith.divf %343, %344 : vector<8x256xf32>
    %346 = vector.extract_strided_slice %345 {offsets = [0, 0], sizes = [8, 128], strides = [1, 1]} : vector<8x256xf32> to vector<8x128xf32>
    %347 = vector.extract_strided_slice %345 {offsets = [0, 128], sizes = [8, 128], strides = [1, 1]} : vector<8x256xf32> to vector<8x128xf32>
    %348 = vector.extract_strided_slice %332 {offsets = [0, 256], sizes = [8, 128], strides = [1, 1]} : vector<8x384xf32> to vector<8x128xf32>
    %349 = arith.mulf %347, %328 : vector<8x128xf32>
    %350 = arith.truncf %349 : vector<8x128xf32> to vector<8x128xbf16>
    %c0_182 = arith.constant 0 : index
    %c0_183 = arith.constant 0 : index
    %351 = vector.load %arg4[%c0_182, %c0_183] : memref<128x128xbf16, #tpu.memory_space<vmem>>, vector<128x128xbf16>
    %cst_184 = arith.constant dense<0.000000e+00> : vector<8x128xf32>
    %352 = tpu.matmul %350, %351, %cst_184 {dimension_numbers = #tpu.dot_dimension_numbers<[1], [0], [0], [1], [0, 0, 1, 1], [], []>} : vector<8x128xbf16>, vector<128x128xbf16>, vector<8x128xf32> -> vector<8x128xf32>
    %353 = arith.addf %348, %352 : vector<8x128xf32>
    %c0_185 = arith.constant 0 : index
    %c0_186 = arith.constant 0 : index
    %354 = vector.load %arg6[%c0_185, %c0_186] : memref<1x128xf32, #tpu.memory_space<vmem>>, vector<1x128xf32>
    %355 = vector.broadcast %354 : vector<1x128xf32> to vector<8x128xf32>
    %356 = arith.addf %353, %355 : vector<8x128xf32>
    %357 = math.tanh %356 : vector<8x128xf32>
    %358 = arith.mulf %346, %328 : vector<8x128xf32>
    %cst_187 = arith.constant 1.000000e+00 : f32
    %359 = vector.broadcast %cst_187 : f32 to vector<8x128xf32>
    %360 = arith.subf %359, %346 : vector<8x128xf32>
    %361 = arith.mulf %360, %357 : vector<8x128xf32>
    %362 = arith.addf %358, %361 : vector<8x128xf32>
    %c0_188 = arith.constant 0 : index
    %c0_189 = arith.constant 0 : index
    %c0_190 = arith.constant 0 : index
    %363 = vector.load %arg16[%c0_188, %c0_189, %c0_190] : memref<2x8x128xf32, #tpu.memory_space<vmem>>, vector<1x8x128xf32>
    %364 = vector.shape_cast %363 : vector<1x8x128xf32> to vector<8x128xf32>
    %365 = vector.shape_cast %362 : vector<8x128xf32> to vector<1x8x128xf32>
    tpu.vector_store %arg16[%c0_188, %c0_189, %c0_190], %365 {strides = array<i32>} : memref<2x8x128xf32, #tpu.memory_space<vmem>>, vector<1x8x128xf32>,
    %c1_191 = arith.constant 1 : index
    %c0_192 = arith.constant 0 : index
    %c0_193 = arith.constant 0 : index
    %366 = vector.load %arg16[%c1_191, %c0_192, %c0_193] : memref<2x8x128xf32, #tpu.memory_space<vmem>>, vector<1x8x128xf32>
    %367 = vector.shape_cast %366 : vector<1x8x128xf32> to vector<8x128xf32>
    %368 = arith.truncf %362 : vector<8x128xf32> to vector<8x128xbf16>
    %c0_194 = arith.constant 0 : index
    %c0_195 = arith.constant 0 : index
    %369 = vector.load %arg11[%c0_194, %c0_195] : memref<128x384xbf16, #tpu.memory_space<vmem>>, vector<128x384xbf16>
    %cst_196 = arith.constant dense<0.000000e+00> : vector<8x384xf32>
    %370 = tpu.matmul %368, %369, %cst_196 {dimension_numbers = #tpu.dot_dimension_numbers<[1], [0], [0], [1], [0, 0, 1, 1], [], []>} : vector<8x128xbf16>, vector<128x384xbf16>, vector<8x384xf32> -> vector<8x384xf32>
    %371 = vector.extract_strided_slice %370 {offsets = [0, 0], sizes = [8, 256], strides = [1, 1]} : vector<8x384xf32> to vector<8x256xf32>
    %372 = arith.truncf %367 : vector<8x128xf32> to vector<8x128xbf16>
    %c0_197 = arith.constant 0 : index
    %c0_198 = arith.constant 0 : index
    %373 = vector.load %arg7[%c0_197, %c0_198] : memref<128x256xbf16, #tpu.memory_space<vmem>>, vector<128x256xbf16>
    %cst_199 = arith.constant dense<0.000000e+00> : vector<8x256xf32>
    %374 = tpu.matmul %372, %373, %cst_199 {dimension_numbers = #tpu.dot_dimension_numbers<[1], [0], [0], [1], [0, 0, 1, 1], [], []>} : vector<8x128xbf16>, vector<128x256xbf16>, vector<8x256xf32> -> vector<8x256xf32>
    %375 = arith.addf %371, %374 : vector<8x256xf32>
    %c0_200 = arith.constant 0 : index
    %c0_201 = arith.constant 0 : index
    %376 = vector.load %arg9[%c0_200, %c0_201] : memref<1x256xf32, #tpu.memory_space<vmem>>, vector<1x256xf32>
    %377 = vector.broadcast %376 : vector<1x256xf32> to vector<8x256xf32>
    %378 = arith.addf %375, %377 : vector<8x256xf32>
    %379 = arith.negf %378 : vector<8x256xf32>
    %380 = math.exp %379 : vector<8x256xf32>
    %cst_202 = arith.constant 1.000000e+00 : f32
    %381 = vector.broadcast %cst_202 : f32 to vector<8x256xf32>
    %382 = arith.addf %381, %380 : vector<8x256xf32>
    %383 = arith.divf %381, %382 : vector<8x256xf32>
    %384 = vector.extract_strided_slice %383 {offsets = [0, 0], sizes = [8, 128], strides = [1, 1]} : vector<8x256xf32> to vector<8x128xf32>
    %385 = vector.extract_strided_slice %383 {offsets = [0, 128], sizes = [8, 128], strides = [1, 1]} : vector<8x256xf32> to vector<8x128xf32>
    %386 = vector.extract_strided_slice %370 {offsets = [0, 256], sizes = [8, 128], strides = [1, 1]} : vector<8x384xf32> to vector<8x128xf32>
    %387 = arith.mulf %385, %367 : vector<8x128xf32>
    %388 = arith.truncf %387 : vector<8x128xf32> to vector<8x128xbf16>
    %c0_203 = arith.constant 0 : index
    %c0_204 = arith.constant 0 : index
    %389 = vector.load %arg8[%c0_203, %c0_204] : memref<128x128xbf16, #tpu.memory_space<vmem>>, vector<128x128xbf16>
    %cst_205 = arith.constant dense<0.000000e+00> : vector<8x128xf32>
    %390 = tpu.matmul %388, %389, %cst_205 {dimension_numbers = #tpu.dot_dimension_numbers<[1], [0], [0], [1], [0, 0, 1, 1], [], []>} : vector<8x128xbf16>, vector<128x128xbf16>, vector<8x128xf32> -> vector<8x128xf32>
    %391 = arith.addf %386, %390 : vector<8x128xf32>
    %c0_206 = arith.constant 0 : index
    %c0_207 = arith.constant 0 : index
    %392 = vector.load %arg10[%c0_206, %c0_207] : memref<1x128xf32, #tpu.memory_space<vmem>>, vector<1x128xf32>
    %393 = vector.broadcast %392 : vector<1x128xf32> to vector<8x128xf32>
    %394 = arith.addf %391, %393 : vector<8x128xf32>
    %395 = math.tanh %394 : vector<8x128xf32>
    %396 = arith.mulf %384, %367 : vector<8x128xf32>
    %cst_208 = arith.constant 1.000000e+00 : f32
    %397 = vector.broadcast %cst_208 : f32 to vector<8x128xf32>
    %398 = arith.subf %397, %384 : vector<8x128xf32>
    %399 = arith.mulf %398, %395 : vector<8x128xf32>
    %400 = arith.addf %396, %399 : vector<8x128xf32>
    %c1_209 = arith.constant 1 : index
    %c0_210 = arith.constant 0 : index
    %c0_211 = arith.constant 0 : index
    %401 = vector.load %arg16[%c1_209, %c0_210, %c0_211] : memref<2x8x128xf32, #tpu.memory_space<vmem>>, vector<1x8x128xf32>
    %402 = vector.shape_cast %401 : vector<1x8x128xf32> to vector<8x128xf32>
    %403 = vector.shape_cast %400 : vector<8x128xf32> to vector<1x8x128xf32>
    tpu.vector_store %arg16[%c1_209, %c0_210, %c0_211], %403 {strides = array<i32>} : memref<2x8x128xf32, #tpu.memory_space<vmem>>, vector<1x8x128xf32>,
    %404 = arith.index_cast %c4_i32 : i32 to index
    %c0_212 = arith.constant 0 : index
    %c0_213 = arith.constant 0 : index
    %405 = vector.load %arg17[%404, %c0_212, %c0_213] : memref<8x8x128xf32, #tpu.memory_space<vmem>>, vector<1x8x128xf32>
    %406 = vector.shape_cast %405 : vector<1x8x128xf32> to vector<8x128xf32>
    %407 = vector.shape_cast %400 : vector<8x128xf32> to vector<1x8x128xf32>
    tpu.vector_store %arg17[%404, %c0_212, %c0_213], %407 {strides = array<i32>} : memref<8x8x128xf32, #tpu.memory_space<vmem>>, vector<1x8x128xf32>,
    %c5_i32 = arith.constant 5 : i32
    %c0_214 = arith.constant 0 : index
    %c0_215 = arith.constant 0 : index
    %c0_216 = arith.constant 0 : index
    %408 = vector.load %arg16[%c0_214, %c0_215, %c0_216] : memref<2x8x128xf32, #tpu.memory_space<vmem>>, vector<1x8x128xf32>
    %409 = vector.shape_cast %408 : vector<1x8x128xf32> to vector<8x128xf32>
    %410 = arith.index_cast %c5_i32 : i32 to index
    %c0_217 = arith.constant 0 : index
    %c0_218 = arith.constant 0 : index
    %411 = vector.load %arg1[%410, %c0_217, %c0_218] : memref<8x8x384xbf16, #tpu.memory_space<vmem>>, vector<1x8x384xbf16>
    %412 = vector.shape_cast %411 : vector<1x8x384xbf16> to vector<8x384xbf16>
    %413 = arith.extf %412 : vector<8x384xbf16> to vector<8x384xf32>
    %414 = vector.extract_strided_slice %413 {offsets = [0, 0], sizes = [8, 256], strides = [1, 1]} : vector<8x384xf32> to vector<8x256xf32>
    %415 = arith.truncf %409 : vector<8x128xf32> to vector<8x128xbf16>
    %c0_219 = arith.constant 0 : index
    %c0_220 = arith.constant 0 : index
    %416 = vector.load %arg3[%c0_219, %c0_220] : memref<128x256xbf16, #tpu.memory_space<vmem>>, vector<128x256xbf16>
    %cst_221 = arith.constant dense<0.000000e+00> : vector<8x256xf32>
    %417 = tpu.matmul %415, %416, %cst_221 {dimension_numbers = #tpu.dot_dimension_numbers<[1], [0], [0], [1], [0, 0, 1, 1], [], []>} : vector<8x128xbf16>, vector<128x256xbf16>, vector<8x256xf32> -> vector<8x256xf32>
    %418 = arith.addf %414, %417 : vector<8x256xf32>
    %c0_222 = arith.constant 0 : index
    %c0_223 = arith.constant 0 : index
    %419 = vector.load %arg5[%c0_222, %c0_223] : memref<1x256xf32, #tpu.memory_space<vmem>>, vector<1x256xf32>
    %420 = vector.broadcast %419 : vector<1x256xf32> to vector<8x256xf32>
    %421 = arith.addf %418, %420 : vector<8x256xf32>
    %422 = arith.negf %421 : vector<8x256xf32>
    %423 = math.exp %422 : vector<8x256xf32>
    %cst_224 = arith.constant 1.000000e+00 : f32
    %424 = vector.broadcast %cst_224 : f32 to vector<8x256xf32>
    %425 = arith.addf %424, %423 : vector<8x256xf32>
    %426 = arith.divf %424, %425 : vector<8x256xf32>
    %427 = vector.extract_strided_slice %426 {offsets = [0, 0], sizes = [8, 128], strides = [1, 1]} : vector<8x256xf32> to vector<8x128xf32>
    %428 = vector.extract_strided_slice %426 {offsets = [0, 128], sizes = [8, 128], strides = [1, 1]} : vector<8x256xf32> to vector<8x128xf32>
    %429 = vector.extract_strided_slice %413 {offsets = [0, 256], sizes = [8, 128], strides = [1, 1]} : vector<8x384xf32> to vector<8x128xf32>
    %430 = arith.mulf %428, %409 : vector<8x128xf32>
    %431 = arith.truncf %430 : vector<8x128xf32> to vector<8x128xbf16>
    %c0_225 = arith.constant 0 : index
    %c0_226 = arith.constant 0 : index
    %432 = vector.load %arg4[%c0_225, %c0_226] : memref<128x128xbf16, #tpu.memory_space<vmem>>, vector<128x128xbf16>
    %cst_227 = arith.constant dense<0.000000e+00> : vector<8x128xf32>
    %433 = tpu.matmul %431, %432, %cst_227 {dimension_numbers = #tpu.dot_dimension_numbers<[1], [0], [0], [1], [0, 0, 1, 1], [], []>} : vector<8x128xbf16>, vector<128x128xbf16>, vector<8x128xf32> -> vector<8x128xf32>
    %434 = arith.addf %429, %433 : vector<8x128xf32>
    %c0_228 = arith.constant 0 : index
    %c0_229 = arith.constant 0 : index
    %435 = vector.load %arg6[%c0_228, %c0_229] : memref<1x128xf32, #tpu.memory_space<vmem>>, vector<1x128xf32>
    %436 = vector.broadcast %435 : vector<1x128xf32> to vector<8x128xf32>
    %437 = arith.addf %434, %436 : vector<8x128xf32>
    %438 = math.tanh %437 : vector<8x128xf32>
    %439 = arith.mulf %427, %409 : vector<8x128xf32>
    %cst_230 = arith.constant 1.000000e+00 : f32
    %440 = vector.broadcast %cst_230 : f32 to vector<8x128xf32>
    %441 = arith.subf %440, %427 : vector<8x128xf32>
    %442 = arith.mulf %441, %438 : vector<8x128xf32>
    %443 = arith.addf %439, %442 : vector<8x128xf32>
    %c0_231 = arith.constant 0 : index
    %c0_232 = arith.constant 0 : index
    %c0_233 = arith.constant 0 : index
    %444 = vector.load %arg16[%c0_231, %c0_232, %c0_233] : memref<2x8x128xf32, #tpu.memory_space<vmem>>, vector<1x8x128xf32>
    %445 = vector.shape_cast %444 : vector<1x8x128xf32> to vector<8x128xf32>
    %446 = vector.shape_cast %443 : vector<8x128xf32> to vector<1x8x128xf32>
    tpu.vector_store %arg16[%c0_231, %c0_232, %c0_233], %446 {strides = array<i32>} : memref<2x8x128xf32, #tpu.memory_space<vmem>>, vector<1x8x128xf32>,
    %c1_234 = arith.constant 1 : index
    %c0_235 = arith.constant 0 : index
    %c0_236 = arith.constant 0 : index
    %447 = vector.load %arg16[%c1_234, %c0_235, %c0_236] : memref<2x8x128xf32, #tpu.memory_space<vmem>>, vector<1x8x128xf32>
    %448 = vector.shape_cast %447 : vector<1x8x128xf32> to vector<8x128xf32>
    %449 = arith.truncf %443 : vector<8x128xf32> to vector<8x128xbf16>
    %c0_237 = arith.constant 0 : index
    %c0_238 = arith.constant 0 : index
    %450 = vector.load %arg11[%c0_237, %c0_238] : memref<128x384xbf16, #tpu.memory_space<vmem>>, vector<128x384xbf16>
    %cst_239 = arith.constant dense<0.000000e+00> : vector<8x384xf32>
    %451 = tpu.matmul %449, %450, %cst_239 {dimension_numbers = #tpu.dot_dimension_numbers<[1], [0], [0], [1], [0, 0, 1, 1], [], []>} : vector<8x128xbf16>, vector<128x384xbf16>, vector<8x384xf32> -> vector<8x384xf32>
    %452 = vector.extract_strided_slice %451 {offsets = [0, 0], sizes = [8, 256], strides = [1, 1]} : vector<8x384xf32> to vector<8x256xf32>
    %453 = arith.truncf %448 : vector<8x128xf32> to vector<8x128xbf16>
    %c0_240 = arith.constant 0 : index
    %c0_241 = arith.constant 0 : index
    %454 = vector.load %arg7[%c0_240, %c0_241] : memref<128x256xbf16, #tpu.memory_space<vmem>>, vector<128x256xbf16>
    %cst_242 = arith.constant dense<0.000000e+00> : vector<8x256xf32>
    %455 = tpu.matmul %453, %454, %cst_242 {dimension_numbers = #tpu.dot_dimension_numbers<[1], [0], [0], [1], [0, 0, 1, 1], [], []>} : vector<8x128xbf16>, vector<128x256xbf16>, vector<8x256xf32> -> vector<8x256xf32>
    %456 = arith.addf %452, %455 : vector<8x256xf32>
    %c0_243 = arith.constant 0 : index
    %c0_244 = arith.constant 0 : index
    %457 = vector.load %arg9[%c0_243, %c0_244] : memref<1x256xf32, #tpu.memory_space<vmem>>, vector<1x256xf32>
    %458 = vector.broadcast %457 : vector<1x256xf32> to vector<8x256xf32>
    %459 = arith.addf %456, %458 : vector<8x256xf32>
    %460 = arith.negf %459 : vector<8x256xf32>
    %461 = math.exp %460 : vector<8x256xf32>
    %cst_245 = arith.constant 1.000000e+00 : f32
    %462 = vector.broadcast %cst_245 : f32 to vector<8x256xf32>
    %463 = arith.addf %462, %461 : vector<8x256xf32>
    %464 = arith.divf %462, %463 : vector<8x256xf32>
    %465 = vector.extract_strided_slice %464 {offsets = [0, 0], sizes = [8, 128], strides = [1, 1]} : vector<8x256xf32> to vector<8x128xf32>
    %466 = vector.extract_strided_slice %464 {offsets = [0, 128], sizes = [8, 128], strides = [1, 1]} : vector<8x256xf32> to vector<8x128xf32>
    %467 = vector.extract_strided_slice %451 {offsets = [0, 256], sizes = [8, 128], strides = [1, 1]} : vector<8x384xf32> to vector<8x128xf32>
    %468 = arith.mulf %466, %448 : vector<8x128xf32>
    %469 = arith.truncf %468 : vector<8x128xf32> to vector<8x128xbf16>
    %c0_246 = arith.constant 0 : index
    %c0_247 = arith.constant 0 : index
    %470 = vector.load %arg8[%c0_246, %c0_247] : memref<128x128xbf16, #tpu.memory_space<vmem>>, vector<128x128xbf16>
    %cst_248 = arith.constant dense<0.000000e+00> : vector<8x128xf32>
    %471 = tpu.matmul %469, %470, %cst_248 {dimension_numbers = #tpu.dot_dimension_numbers<[1], [0], [0], [1], [0, 0, 1, 1], [], []>} : vector<8x128xbf16>, vector<128x128xbf16>, vector<8x128xf32> -> vector<8x128xf32>
    %472 = arith.addf %467, %471 : vector<8x128xf32>
    %c0_249 = arith.constant 0 : index
    %c0_250 = arith.constant 0 : index
    %473 = vector.load %arg10[%c0_249, %c0_250] : memref<1x128xf32, #tpu.memory_space<vmem>>, vector<1x128xf32>
    %474 = vector.broadcast %473 : vector<1x128xf32> to vector<8x128xf32>
    %475 = arith.addf %472, %474 : vector<8x128xf32>
    %476 = math.tanh %475 : vector<8x128xf32>
    %477 = arith.mulf %465, %448 : vector<8x128xf32>
    %cst_251 = arith.constant 1.000000e+00 : f32
    %478 = vector.broadcast %cst_251 : f32 to vector<8x128xf32>
    %479 = arith.subf %478, %465 : vector<8x128xf32>
    %480 = arith.mulf %479, %476 : vector<8x128xf32>
    %481 = arith.addf %477, %480 : vector<8x128xf32>
    %c1_252 = arith.constant 1 : index
    %c0_253 = arith.constant 0 : index
    %c0_254 = arith.constant 0 : index
    %482 = vector.load %arg16[%c1_252, %c0_253, %c0_254] : memref<2x8x128xf32, #tpu.memory_space<vmem>>, vector<1x8x128xf32>
    %483 = vector.shape_cast %482 : vector<1x8x128xf32> to vector<8x128xf32>
    %484 = vector.shape_cast %481 : vector<8x128xf32> to vector<1x8x128xf32>
    tpu.vector_store %arg16[%c1_252, %c0_253, %c0_254], %484 {strides = array<i32>} : memref<2x8x128xf32, #tpu.memory_space<vmem>>, vector<1x8x128xf32>,
    %485 = arith.index_cast %c5_i32 : i32 to index
    %c0_255 = arith.constant 0 : index
    %c0_256 = arith.constant 0 : index
    %486 = vector.load %arg17[%485, %c0_255, %c0_256] : memref<8x8x128xf32, #tpu.memory_space<vmem>>, vector<1x8x128xf32>
    %487 = vector.shape_cast %486 : vector<1x8x128xf32> to vector<8x128xf32>
    %488 = vector.shape_cast %481 : vector<8x128xf32> to vector<1x8x128xf32>
    tpu.vector_store %arg17[%485, %c0_255, %c0_256], %488 {strides = array<i32>} : memref<8x8x128xf32, #tpu.memory_space<vmem>>, vector<1x8x128xf32>,
    %c6_i32 = arith.constant 6 : i32
    %c0_257 = arith.constant 0 : index
    %c0_258 = arith.constant 0 : index
    %c0_259 = arith.constant 0 : index
    %489 = vector.load %arg16[%c0_257, %c0_258, %c0_259] : memref<2x8x128xf32, #tpu.memory_space<vmem>>, vector<1x8x128xf32>
    %490 = vector.shape_cast %489 : vector<1x8x128xf32> to vector<8x128xf32>
    %491 = arith.index_cast %c6_i32 : i32 to index
    %c0_260 = arith.constant 0 : index
    %c0_261 = arith.constant 0 : index
    %492 = vector.load %arg1[%491, %c0_260, %c0_261] : memref<8x8x384xbf16, #tpu.memory_space<vmem>>, vector<1x8x384xbf16>
    %493 = vector.shape_cast %492 : vector<1x8x384xbf16> to vector<8x384xbf16>
    %494 = arith.extf %493 : vector<8x384xbf16> to vector<8x384xf32>
    %495 = vector.extract_strided_slice %494 {offsets = [0, 0], sizes = [8, 256], strides = [1, 1]} : vector<8x384xf32> to vector<8x256xf32>
    %496 = arith.truncf %490 : vector<8x128xf32> to vector<8x128xbf16>
    %c0_262 = arith.constant 0 : index
    %c0_263 = arith.constant 0 : index
    %497 = vector.load %arg3[%c0_262, %c0_263] : memref<128x256xbf16, #tpu.memory_space<vmem>>, vector<128x256xbf16>
    %cst_264 = arith.constant dense<0.000000e+00> : vector<8x256xf32>
    %498 = tpu.matmul %496, %497, %cst_264 {dimension_numbers = #tpu.dot_dimension_numbers<[1], [0], [0], [1], [0, 0, 1, 1], [], []>} : vector<8x128xbf16>, vector<128x256xbf16>, vector<8x256xf32> -> vector<8x256xf32>
    %499 = arith.addf %495, %498 : vector<8x256xf32>
    %c0_265 = arith.constant 0 : index
    %c0_266 = arith.constant 0 : index
    %500 = vector.load %arg5[%c0_265, %c0_266] : memref<1x256xf32, #tpu.memory_space<vmem>>, vector<1x256xf32>
    %501 = vector.broadcast %500 : vector<1x256xf32> to vector<8x256xf32>
    %502 = arith.addf %499, %501 : vector<8x256xf32>
    %503 = arith.negf %502 : vector<8x256xf32>
    %504 = math.exp %503 : vector<8x256xf32>
    %cst_267 = arith.constant 1.000000e+00 : f32
    %505 = vector.broadcast %cst_267 : f32 to vector<8x256xf32>
    %506 = arith.addf %505, %504 : vector<8x256xf32>
    %507 = arith.divf %505, %506 : vector<8x256xf32>
    %508 = vector.extract_strided_slice %507 {offsets = [0, 0], sizes = [8, 128], strides = [1, 1]} : vector<8x256xf32> to vector<8x128xf32>
    %509 = vector.extract_strided_slice %507 {offsets = [0, 128], sizes = [8, 128], strides = [1, 1]} : vector<8x256xf32> to vector<8x128xf32>
    %510 = vector.extract_strided_slice %494 {offsets = [0, 256], sizes = [8, 128], strides = [1, 1]} : vector<8x384xf32> to vector<8x128xf32>
    %511 = arith.mulf %509, %490 : vector<8x128xf32>
    %512 = arith.truncf %511 : vector<8x128xf32> to vector<8x128xbf16>
    %c0_268 = arith.constant 0 : index
    %c0_269 = arith.constant 0 : index
    %513 = vector.load %arg4[%c0_268, %c0_269] : memref<128x128xbf16, #tpu.memory_space<vmem>>, vector<128x128xbf16>
    %cst_270 = arith.constant dense<0.000000e+00> : vector<8x128xf32>
    %514 = tpu.matmul %512, %513, %cst_270 {dimension_numbers = #tpu.dot_dimension_numbers<[1], [0], [0], [1], [0, 0, 1, 1], [], []>} : vector<8x128xbf16>, vector<128x128xbf16>, vector<8x128xf32> -> vector<8x128xf32>
    %515 = arith.addf %510, %514 : vector<8x128xf32>
    %c0_271 = arith.constant 0 : index
    %c0_272 = arith.constant 0 : index
    %516 = vector.load %arg6[%c0_271, %c0_272] : memref<1x128xf32, #tpu.memory_space<vmem>>, vector<1x128xf32>
    %517 = vector.broadcast %516 : vector<1x128xf32> to vector<8x128xf32>
    %518 = arith.addf %515, %517 : vector<8x128xf32>
    %519 = math.tanh %518 : vector<8x128xf32>
    %520 = arith.mulf %508, %490 : vector<8x128xf32>
    %cst_273 = arith.constant 1.000000e+00 : f32
    %521 = vector.broadcast %cst_273 : f32 to vector<8x128xf32>
    %522 = arith.subf %521, %508 : vector<8x128xf32>
    %523 = arith.mulf %522, %519 : vector<8x128xf32>
    %524 = arith.addf %520, %523 : vector<8x128xf32>
    %c0_274 = arith.constant 0 : index
    %c0_275 = arith.constant 0 : index
    %c0_276 = arith.constant 0 : index
    %525 = vector.load %arg16[%c0_274, %c0_275, %c0_276] : memref<2x8x128xf32, #tpu.memory_space<vmem>>, vector<1x8x128xf32>
    %526 = vector.shape_cast %525 : vector<1x8x128xf32> to vector<8x128xf32>
    %527 = vector.shape_cast %524 : vector<8x128xf32> to vector<1x8x128xf32>
    tpu.vector_store %arg16[%c0_274, %c0_275, %c0_276], %527 {strides = array<i32>} : memref<2x8x128xf32, #tpu.memory_space<vmem>>, vector<1x8x128xf32>,
    %c1_277 = arith.constant 1 : index
    %c0_278 = arith.constant 0 : index
    %c0_279 = arith.constant 0 : index
    %528 = vector.load %arg16[%c1_277, %c0_278, %c0_279] : memref<2x8x128xf32, #tpu.memory_space<vmem>>, vector<1x8x128xf32>
    %529 = vector.shape_cast %528 : vector<1x8x128xf32> to vector<8x128xf32>
    %530 = arith.truncf %524 : vector<8x128xf32> to vector<8x128xbf16>
    %c0_280 = arith.constant 0 : index
    %c0_281 = arith.constant 0 : index
    %531 = vector.load %arg11[%c0_280, %c0_281] : memref<128x384xbf16, #tpu.memory_space<vmem>>, vector<128x384xbf16>
    %cst_282 = arith.constant dense<0.000000e+00> : vector<8x384xf32>
    %532 = tpu.matmul %530, %531, %cst_282 {dimension_numbers = #tpu.dot_dimension_numbers<[1], [0], [0], [1], [0, 0, 1, 1], [], []>} : vector<8x128xbf16>, vector<128x384xbf16>, vector<8x384xf32> -> vector<8x384xf32>
    %533 = vector.extract_strided_slice %532 {offsets = [0, 0], sizes = [8, 256], strides = [1, 1]} : vector<8x384xf32> to vector<8x256xf32>
    %534 = arith.truncf %529 : vector<8x128xf32> to vector<8x128xbf16>
    %c0_283 = arith.constant 0 : index
    %c0_284 = arith.constant 0 : index
    %535 = vector.load %arg7[%c0_283, %c0_284] : memref<128x256xbf16, #tpu.memory_space<vmem>>, vector<128x256xbf16>
    %cst_285 = arith.constant dense<0.000000e+00> : vector<8x256xf32>
    %536 = tpu.matmul %534, %535, %cst_285 {dimension_numbers = #tpu.dot_dimension_numbers<[1], [0], [0], [1], [0, 0, 1, 1], [], []>} : vector<8x128xbf16>, vector<128x256xbf16>, vector<8x256xf32> -> vector<8x256xf32>
    %537 = arith.addf %533, %536 : vector<8x256xf32>
    %c0_286 = arith.constant 0 : index
    %c0_287 = arith.constant 0 : index
    %538 = vector.load %arg9[%c0_286, %c0_287] : memref<1x256xf32, #tpu.memory_space<vmem>>, vector<1x256xf32>
    %539 = vector.broadcast %538 : vector<1x256xf32> to vector<8x256xf32>
    %540 = arith.addf %537, %539 : vector<8x256xf32>
    %541 = arith.negf %540 : vector<8x256xf32>
    %542 = math.exp %541 : vector<8x256xf32>
    %cst_288 = arith.constant 1.000000e+00 : f32
    %543 = vector.broadcast %cst_288 : f32 to vector<8x256xf32>
    %544 = arith.addf %543, %542 : vector<8x256xf32>
    %545 = arith.divf %543, %544 : vector<8x256xf32>
    %546 = vector.extract_strided_slice %545 {offsets = [0, 0], sizes = [8, 128], strides = [1, 1]} : vector<8x256xf32> to vector<8x128xf32>
    %547 = vector.extract_strided_slice %545 {offsets = [0, 128], sizes = [8, 128], strides = [1, 1]} : vector<8x256xf32> to vector<8x128xf32>
    %548 = vector.extract_strided_slice %532 {offsets = [0, 256], sizes = [8, 128], strides = [1, 1]} : vector<8x384xf32> to vector<8x128xf32>
    %549 = arith.mulf %547, %529 : vector<8x128xf32>
    %550 = arith.truncf %549 : vector<8x128xf32> to vector<8x128xbf16>
    %c0_289 = arith.constant 0 : index
    %c0_290 = arith.constant 0 : index
    %551 = vector.load %arg8[%c0_289, %c0_290] : memref<128x128xbf16, #tpu.memory_space<vmem>>, vector<128x128xbf16>
    %cst_291 = arith.constant dense<0.000000e+00> : vector<8x128xf32>
    %552 = tpu.matmul %550, %551, %cst_291 {dimension_numbers = #tpu.dot_dimension_numbers<[1], [0], [0], [1], [0, 0, 1, 1], [], []>} : vector<8x128xbf16>, vector<128x128xbf16>, vector<8x128xf32> -> vector<8x128xf32>
    %553 = arith.addf %548, %552 : vector<8x128xf32>
    %c0_292 = arith.constant 0 : index
    %c0_293 = arith.constant 0 : index
    %554 = vector.load %arg10[%c0_292, %c0_293] : memref<1x128xf32, #tpu.memory_space<vmem>>, vector<1x128xf32>
    %555 = vector.broadcast %554 : vector<1x128xf32> to vector<8x128xf32>
    %556 = arith.addf %553, %555 : vector<8x128xf32>
    %557 = math.tanh %556 : vector<8x128xf32>
    %558 = arith.mulf %546, %529 : vector<8x128xf32>
    %cst_294 = arith.constant 1.000000e+00 : f32
    %559 = vector.broadcast %cst_294 : f32 to vector<8x128xf32>
    %560 = arith.subf %559, %546 : vector<8x128xf32>
    %561 = arith.mulf %560, %557 : vector<8x128xf32>
    %562 = arith.addf %558, %561 : vector<8x128xf32>
    %c1_295 = arith.constant 1 : index
    %c0_296 = arith.constant 0 : index
    %c0_297 = arith.constant 0 : index
    %563 = vector.load %arg16[%c1_295, %c0_296, %c0_297] : memref<2x8x128xf32, #tpu.memory_space<vmem>>, vector<1x8x128xf32>
    %564 = vector.shape_cast %563 : vector<1x8x128xf32> to vector<8x128xf32>
    %565 = vector.shape_cast %562 : vector<8x128xf32> to vector<1x8x128xf32>
    tpu.vector_store %arg16[%c1_295, %c0_296, %c0_297], %565 {strides = array<i32>} : memref<2x8x128xf32, #tpu.memory_space<vmem>>, vector<1x8x128xf32>,
    %566 = arith.index_cast %c6_i32 : i32 to index
    %c0_298 = arith.constant 0 : index
    %c0_299 = arith.constant 0 : index
    %567 = vector.load %arg17[%566, %c0_298, %c0_299] : memref<8x8x128xf32, #tpu.memory_space<vmem>>, vector<1x8x128xf32>
    %568 = vector.shape_cast %567 : vector<1x8x128xf32> to vector<8x128xf32>
    %569 = vector.shape_cast %562 : vector<8x128xf32> to vector<1x8x128xf32>
    tpu.vector_store %arg17[%566, %c0_298, %c0_299], %569 {strides = array<i32>} : memref<8x8x128xf32, #tpu.memory_space<vmem>>, vector<1x8x128xf32>,
    %c7_i32 = arith.constant 7 : i32
    %c0_300 = arith.constant 0 : index
    %c0_301 = arith.constant 0 : index
    %c0_302 = arith.constant 0 : index
    %570 = vector.load %arg16[%c0_300, %c0_301, %c0_302] : memref<2x8x128xf32, #tpu.memory_space<vmem>>, vector<1x8x128xf32>
    %571 = vector.shape_cast %570 : vector<1x8x128xf32> to vector<8x128xf32>
    %572 = arith.index_cast %c7_i32 : i32 to index
    %c0_303 = arith.constant 0 : index
    %c0_304 = arith.constant 0 : index
    %573 = vector.load %arg1[%572, %c0_303, %c0_304] : memref<8x8x384xbf16, #tpu.memory_space<vmem>>, vector<1x8x384xbf16>
    %574 = vector.shape_cast %573 : vector<1x8x384xbf16> to vector<8x384xbf16>
    %575 = arith.extf %574 : vector<8x384xbf16> to vector<8x384xf32>
    %576 = vector.extract_strided_slice %575 {offsets = [0, 0], sizes = [8, 256], strides = [1, 1]} : vector<8x384xf32> to vector<8x256xf32>
    %577 = arith.truncf %571 : vector<8x128xf32> to vector<8x128xbf16>
    %c0_305 = arith.constant 0 : index
    %c0_306 = arith.constant 0 : index
    %578 = vector.load %arg3[%c0_305, %c0_306] : memref<128x256xbf16, #tpu.memory_space<vmem>>, vector<128x256xbf16>
    %cst_307 = arith.constant dense<0.000000e+00> : vector<8x256xf32>
    %579 = tpu.matmul %577, %578, %cst_307 {dimension_numbers = #tpu.dot_dimension_numbers<[1], [0], [0], [1], [0, 0, 1, 1], [], []>} : vector<8x128xbf16>, vector<128x256xbf16>, vector<8x256xf32> -> vector<8x256xf32>
    %580 = arith.addf %576, %579 : vector<8x256xf32>
    %c0_308 = arith.constant 0 : index
    %c0_309 = arith.constant 0 : index
    %581 = vector.load %arg5[%c0_308, %c0_309] : memref<1x256xf32, #tpu.memory_space<vmem>>, vector<1x256xf32>
    %582 = vector.broadcast %581 : vector<1x256xf32> to vector<8x256xf32>
    %583 = arith.addf %580, %582 : vector<8x256xf32>
    %584 = arith.negf %583 : vector<8x256xf32>
    %585 = math.exp %584 : vector<8x256xf32>
    %cst_310 = arith.constant 1.000000e+00 : f32
    %586 = vector.broadcast %cst_310 : f32 to vector<8x256xf32>
    %587 = arith.addf %586, %585 : vector<8x256xf32>
    %588 = arith.divf %586, %587 : vector<8x256xf32>
    %589 = vector.extract_strided_slice %588 {offsets = [0, 0], sizes = [8, 128], strides = [1, 1]} : vector<8x256xf32> to vector<8x128xf32>
    %590 = vector.extract_strided_slice %588 {offsets = [0, 128], sizes = [8, 128], strides = [1, 1]} : vector<8x256xf32> to vector<8x128xf32>
    %591 = vector.extract_strided_slice %575 {offsets = [0, 256], sizes = [8, 128], strides = [1, 1]} : vector<8x384xf32> to vector<8x128xf32>
    %592 = arith.mulf %590, %571 : vector<8x128xf32>
    %593 = arith.truncf %592 : vector<8x128xf32> to vector<8x128xbf16>
    %c0_311 = arith.constant 0 : index
    %c0_312 = arith.constant 0 : index
    %594 = vector.load %arg4[%c0_311, %c0_312] : memref<128x128xbf16, #tpu.memory_space<vmem>>, vector<128x128xbf16>
    %cst_313 = arith.constant dense<0.000000e+00> : vector<8x128xf32>
    %595 = tpu.matmul %593, %594, %cst_313 {dimension_numbers = #tpu.dot_dimension_numbers<[1], [0], [0], [1], [0, 0, 1, 1], [], []>} : vector<8x128xbf16>, vector<128x128xbf16>, vector<8x128xf32> -> vector<8x128xf32>
    %596 = arith.addf %591, %595 : vector<8x128xf32>
    %c0_314 = arith.constant 0 : index
    %c0_315 = arith.constant 0 : index
    %597 = vector.load %arg6[%c0_314, %c0_315] : memref<1x128xf32, #tpu.memory_space<vmem>>, vector<1x128xf32>
    %598 = vector.broadcast %597 : vector<1x128xf32> to vector<8x128xf32>
    %599 = arith.addf %596, %598 : vector<8x128xf32>
    %600 = math.tanh %599 : vector<8x128xf32>
    %601 = arith.mulf %589, %571 : vector<8x128xf32>
    %cst_316 = arith.constant 1.000000e+00 : f32
    %602 = vector.broadcast %cst_316 : f32 to vector<8x128xf32>
    %603 = arith.subf %602, %589 : vector<8x128xf32>
    %604 = arith.mulf %603, %600 : vector<8x128xf32>
    %605 = arith.addf %601, %604 : vector<8x128xf32>
    %c0_317 = arith.constant 0 : index
    %c0_318 = arith.constant 0 : index
    %c0_319 = arith.constant 0 : index
    %606 = vector.load %arg16[%c0_317, %c0_318, %c0_319] : memref<2x8x128xf32, #tpu.memory_space<vmem>>, vector<1x8x128xf32>
    %607 = vector.shape_cast %606 : vector<1x8x128xf32> to vector<8x128xf32>
    %608 = vector.shape_cast %605 : vector<8x128xf32> to vector<1x8x128xf32>
    tpu.vector_store %arg16[%c0_317, %c0_318, %c0_319], %608 {strides = array<i32>} : memref<2x8x128xf32, #tpu.memory_space<vmem>>, vector<1x8x128xf32>,
    %c1_320 = arith.constant 1 : index
    %c0_321 = arith.constant 0 : index
    %c0_322 = arith.constant 0 : index
    %609 = vector.load %arg16[%c1_320, %c0_321, %c0_322] : memref<2x8x128xf32, #tpu.memory_space<vmem>>, vector<1x8x128xf32>
    %610 = vector.shape_cast %609 : vector<1x8x128xf32> to vector<8x128xf32>
    %611 = arith.truncf %605 : vector<8x128xf32> to vector<8x128xbf16>
    %c0_323 = arith.constant 0 : index
    %c0_324 = arith.constant 0 : index
    %612 = vector.load %arg11[%c0_323, %c0_324] : memref<128x384xbf16, #tpu.memory_space<vmem>>, vector<128x384xbf16>
    %cst_325 = arith.constant dense<0.000000e+00> : vector<8x384xf32>
    %613 = tpu.matmul %611, %612, %cst_325 {dimension_numbers = #tpu.dot_dimension_numbers<[1], [0], [0], [1], [0, 0, 1, 1], [], []>} : vector<8x128xbf16>, vector<128x384xbf16>, vector<8x384xf32> -> vector<8x384xf32>
    %614 = vector.extract_strided_slice %613 {offsets = [0, 0], sizes = [8, 256], strides = [1, 1]} : vector<8x384xf32> to vector<8x256xf32>
    %615 = arith.truncf %610 : vector<8x128xf32> to vector<8x128xbf16>
    %c0_326 = arith.constant 0 : index
    %c0_327 = arith.constant 0 : index
    %616 = vector.load %arg7[%c0_326, %c0_327] : memref<128x256xbf16, #tpu.memory_space<vmem>>, vector<128x256xbf16>
    %cst_328 = arith.constant dense<0.000000e+00> : vector<8x256xf32>
    %617 = tpu.matmul %615, %616, %cst_328 {dimension_numbers = #tpu.dot_dimension_numbers<[1], [0], [0], [1], [0, 0, 1, 1], [], []>} : vector<8x128xbf16>, vector<128x256xbf16>, vector<8x256xf32> -> vector<8x256xf32>
    %618 = arith.addf %614, %617 : vector<8x256xf32>
    %c0_329 = arith.constant 0 : index
    %c0_330 = arith.constant 0 : index
    %619 = vector.load %arg9[%c0_329, %c0_330] : memref<1x256xf32, #tpu.memory_space<vmem>>, vector<1x256xf32>
    %620 = vector.broadcast %619 : vector<1x256xf32> to vector<8x256xf32>
    %621 = arith.addf %618, %620 : vector<8x256xf32>
    %622 = arith.negf %621 : vector<8x256xf32>
    %623 = math.exp %622 : vector<8x256xf32>
    %cst_331 = arith.constant 1.000000e+00 : f32
    %624 = vector.broadcast %cst_331 : f32 to vector<8x256xf32>
    %625 = arith.addf %624, %623 : vector<8x256xf32>
    %626 = arith.divf %624, %625 : vector<8x256xf32>
    %627 = vector.extract_strided_slice %626 {offsets = [0, 0], sizes = [8, 128], strides = [1, 1]} : vector<8x256xf32> to vector<8x128xf32>
    %628 = vector.extract_strided_slice %626 {offsets = [0, 128], sizes = [8, 128], strides = [1, 1]} : vector<8x256xf32> to vector<8x128xf32>
    %629 = vector.extract_strided_slice %613 {offsets = [0, 256], sizes = [8, 128], strides = [1, 1]} : vector<8x384xf32> to vector<8x128xf32>
    %630 = arith.mulf %628, %610 : vector<8x128xf32>
    %631 = arith.truncf %630 : vector<8x128xf32> to vector<8x128xbf16>
    %c0_332 = arith.constant 0 : index
    %c0_333 = arith.constant 0 : index
    %632 = vector.load %arg8[%c0_332, %c0_333] : memref<128x128xbf16, #tpu.memory_space<vmem>>, vector<128x128xbf16>
    %cst_334 = arith.constant dense<0.000000e+00> : vector<8x128xf32>
    %633 = tpu.matmul %631, %632, %cst_334 {dimension_numbers = #tpu.dot_dimension_numbers<[1], [0], [0], [1], [0, 0, 1, 1], [], []>} : vector<8x128xbf16>, vector<128x128xbf16>, vector<8x128xf32> -> vector<8x128xf32>
    %634 = arith.addf %629, %633 : vector<8x128xf32>
    %c0_335 = arith.constant 0 : index
    %c0_336 = arith.constant 0 : index
    %635 = vector.load %arg10[%c0_335, %c0_336] : memref<1x128xf32, #tpu.memory_space<vmem>>, vector<1x128xf32>
    %636 = vector.broadcast %635 : vector<1x128xf32> to vector<8x128xf32>
    %637 = arith.addf %634, %636 : vector<8x128xf32>
    %638 = math.tanh %637 : vector<8x128xf32>
    %639 = arith.mulf %627, %610 : vector<8x128xf32>
    %cst_337 = arith.constant 1.000000e+00 : f32
    %640 = vector.broadcast %cst_337 : f32 to vector<8x128xf32>
    %641 = arith.subf %640, %627 : vector<8x128xf32>
    %642 = arith.mulf %641, %638 : vector<8x128xf32>
    %643 = arith.addf %639, %642 : vector<8x128xf32>
    %c1_338 = arith.constant 1 : index
    %c0_339 = arith.constant 0 : index
    %c0_340 = arith.constant 0 : index
    %644 = vector.load %arg16[%c1_338, %c0_339, %c0_340] : memref<2x8x128xf32, #tpu.memory_space<vmem>>, vector<1x8x128xf32>
    %645 = vector.shape_cast %644 : vector<1x8x128xf32> to vector<8x128xf32>
    %646 = vector.shape_cast %643 : vector<8x128xf32> to vector<1x8x128xf32>
    tpu.vector_store %arg16[%c1_338, %c0_339, %c0_340], %646 {strides = array<i32>} : memref<2x8x128xf32, #tpu.memory_space<vmem>>, vector<1x8x128xf32>,
    %647 = arith.index_cast %c7_i32 : i32 to index
    %c0_341 = arith.constant 0 : index
    %c0_342 = arith.constant 0 : index
    %648 = vector.load %arg17[%647, %c0_341, %c0_342] : memref<8x8x128xf32, #tpu.memory_space<vmem>>, vector<1x8x128xf32>
    %649 = vector.shape_cast %648 : vector<1x8x128xf32> to vector<8x128xf32>
    %650 = vector.shape_cast %643 : vector<8x128xf32> to vector<1x8x128xf32>
    tpu.vector_store %arg17[%647, %c0_341, %c0_342], %650 {strides = array<i32>} : memref<8x8x128xf32, #tpu.memory_space<vmem>>, vector<1x8x128xf32>,
    %c8_i32 = arith.constant 8 : i32
    %c0_343 = arith.constant 0 : index
    %c0_344 = arith.constant 0 : index
    %c0_345 = arith.constant 0 : index
    %651 = vector.load %arg17[%c0_343, %c0_344, %c0_345] : memref<8x8x128xf32, #tpu.memory_space<vmem>>, vector<8x8x128xf32>
    %652 = vector.shape_cast %651 : vector<8x8x128xf32> to vector<64x128xf32>
    %653 = arith.truncf %652 : vector<64x128xf32> to vector<64x128xbf16>
    %c0_346 = arith.constant 0 : index
    %c0_347 = arith.constant 0 : index
    %654 = vector.load %arg12[%c0_346, %c0_347] : memref<128x128xbf16, #tpu.memory_space<vmem>>, vector<128x128xbf16>
    %cst_348 = arith.constant dense<0.000000e+00> : vector<64x128xf32>
    %655 = tpu.matmul %653, %654, %cst_348 {dimension_numbers = #tpu.dot_dimension_numbers<[1], [0], [0], [1], [0, 0, 1, 1], [], []>} : vector<64x128xbf16>, vector<128x128xbf16>, vector<64x128xf32> -> vector<64x128xf32>
    %c0_349 = arith.constant 0 : index
    %c0_350 = arith.constant 0 : index
    %656 = vector.load %arg13[%c0_349, %c0_350] : memref<1x128xf32, #tpu.memory_space<vmem>>, vector<1x128xf32>
    %657 = vector.broadcast %656 : vector<1x128xf32> to vector<64x128xf32>
    %658 = arith.addf %655, %657 : vector<64x128xf32>
    %659 = vector.shape_cast %658 : vector<64x128xf32> to vector<8x8x128xf32>
    %c0_351 = arith.constant 0 : index
    %c0_352 = arith.constant 0 : index
    %c0_353 = arith.constant 0 : index
    %660 = vector.load %arg14[%c0_351, %c0_352, %c0_353] : memref<8x8x128xf32, #tpu.memory_space<vmem>>, vector<8x8x128xf32>
    tpu.vector_store %arg14[%c0_351, %c0_352, %c0_353], %659 {strides = array<i32>} : memref<8x8x128xf32, #tpu.memory_space<vmem>>, vector<8x8x128xf32>,
    %c0_i32_354 = arith.constant 0 : i32
    %661 = arith.cmpi eq, %arg0, %c0_i32_354 : i32
    %662 = arith.extui %661 : i1 to i32
    %c0_i32_355 = arith.constant 0 : i32
    %663 = arith.cmpi ne, %662, %c0_i32_355 : i32
    scf.if %663 {
      %c0_356 = arith.constant 0 : index
      %c0_357 = arith.constant 0 : index
      %c0_358 = arith.constant 0 : index
      %664 = vector.load %arg16[%c0_356, %c0_357, %c0_358] : memref<2x8x128xf32, #tpu.memory_space<vmem>>, vector<2x8x128xf32>
      %c0_359 = arith.constant 0 : index
      %c0_360 = arith.constant 0 : index
      %c0_361 = arith.constant 0 : index
      %665 = vector.load %arg15[%c0_359, %c0_360, %c0_361] : memref<2x8x128xf32, #tpu.memory_space<vmem>>, vector<2x8x128xf32>
      tpu.vector_store %arg15[%c0_359, %c0_360, %c0_361], %664 {strides = array<i32>} : memref<2x8x128xf32, #tpu.memory_space<vmem>>, vector<2x8x128xf32>,
    } else {
    }
    return
  }
  func.func @transform_0(%arg0: i32) -> (i32, i32, i32) {
    %c0_i32 = arith.constant 0 : i32
    %c0_i32_0 = arith.constant 0 : i32
    %c0_i32_1 = arith.constant 0 : i32
    return %arg0, %c0_i32, %c0_i32_0 : i32, i32, i32
  }
  func.func @transform_1(%arg0: i32) -> (i32, i32, i32) {
    %c0_i32 = arith.constant 0 : i32
    %c0_i32_0 = arith.constant 0 : i32
    %c0_i32_1 = arith.constant 0 : i32
    %c0_i32_2 = arith.constant 0 : i32
    return %c0_i32, %c0_i32_0, %c0_i32_1 : i32, i32, i32
  }
  func.func @transform_2(%arg0: i32) -> (i32, i32) {
    %c0_i32 = arith.constant 0 : i32
    %c0_i32_0 = arith.constant 0 : i32
    %c0_i32_1 = arith.constant 0 : i32
    return %c0_i32, %c0_i32_0 : i32, i32
  }
  func.func @transform_3(%arg0: i32) -> (i32, i32) {
    %c0_i32 = arith.constant 0 : i32
    %c0_i32_0 = arith.constant 0 : i32
    %c0_i32_1 = arith.constant 0 : i32
    return %c0_i32, %c0_i32_0 : i32, i32
  }
  func.func @transform_4(%arg0: i32) -> (i32, i32) {
    %c0_i32 = arith.constant 0 : i32
    %c0_i32_0 = arith.constant 0 : i32
    %c0_i32_1 = arith.constant 0 : i32
    return %c0_i32, %c0_i32_0 : i32, i32
  }
  func.func @transform_5(%arg0: i32) -> (i32, i32) {
    %c0_i32 = arith.constant 0 : i32
    %c0_i32_0 = arith.constant 0 : i32
    %c0_i32_1 = arith.constant 0 : i32
    return %c0_i32, %c0_i32_0 : i32, i32
  }
  func.func @transform_6(%arg0: i32) -> (i32, i32) {
    %c0_i32 = arith.constant 0 : i32
    %c0_i32_0 = arith.constant 0 : i32
    %c0_i32_1 = arith.constant 0 : i32
    return %c0_i32, %c0_i32_0 : i32, i32
  }
  func.func @transform_7(%arg0: i32) -> (i32, i32) {
    %c0_i32 = arith.constant 0 : i32
    %c0_i32_0 = arith.constant 0 : i32
    %c0_i32_1 = arith.constant 0 : i32
    return %c0_i32, %c0_i32_0 : i32, i32
  }
  func.func @transform_8(%arg0: i32) -> (i32, i32) {
    %c0_i32 = arith.constant 0 : i32
    %c0_i32_0 = arith.constant 0 : i32
    %c0_i32_1 = arith.constant 0 : i32
    return %c0_i32, %c0_i32_0 : i32, i32
  }
  func.func @transform_9(%arg0: i32) -> (i32, i32) {
    %c0_i32 = arith.constant 0 : i32
    %c0_i32_0 = arith.constant 0 : i32
    %c0_i32_1 = arith.constant 0 : i32
    return %c0_i32, %c0_i32_0 : i32, i32
  }
  func.func @transform_10(%arg0: i32) -> (i32, i32) {
    %c0_i32 = arith.constant 0 : i32
    %c0_i32_0 = arith.constant 0 : i32
    %c0_i32_1 = arith.constant 0 : i32
    return %c0_i32, %c0_i32_0 : i32, i32
  }
  func.func @transform_11(%arg0: i32) -> (i32, i32) {
    %c0_i32 = arith.constant 0 : i32
    %c0_i32_0 = arith.constant 0 : i32
    %c0_i32_1 = arith.constant 0 : i32
    return %c0_i32, %c0_i32_0 : i32, i32
  }
  func.func @transform_12(%arg0: i32) -> (i32, i32) {
    %c0_i32 = arith.constant 0 : i32
    %c0_i32_0 = arith.constant 0 : i32
    %c0_i32_1 = arith.constant 0 : i32
    return %c0_i32, %c0_i32_0 : i32, i32
  }
  func.func @transform_13(%arg0: i32) -> (i32, i32, i32) {
    %c0_i32 = arith.constant 0 : i32
    %c0_i32_0 = arith.constant 0 : i32
    %c0_i32_1 = arith.constant 0 : i32
    return %arg0, %c0_i32, %c0_i32_0 : i32, i32, i32
  }
  func.func @transform_14(%arg0: i32) -> (i32, i32, i32) {
    %c0_i32 = arith.constant 0 : i32
    %c0_i32_0 = arith.constant 0 : i32
    %c0_i32_1 = arith.constant 0 : i32
    %c0_i32_2 = arith.constant 0 : i32
    return %c0_i32, %c0_i32_0, %c0_i32_1 : i32, i32, i32
  }
}

</mosaic_0001>

<llo_original>
// kernel: multilayer_gru_forward.2
$region0: #{multilayer_gru_forward.2}
  #allocation0 [shape = 'u32[]', space=smem, size = 0x4, offset = 0x4, fixed_abs, tag = 'smem constant byte address 0x4 - core index']
  #allocation1 [shape = 'u32[144,128]{1,0:T(1,128)}', space=vmem, size = 0x12000, scoped, tag = 'internal scratch']
  %s0 = inlined_call_operand.vmem [shape: bf16[64,128], index: 0, kind: input, shape index: {}]
  %s1 = inlined_call_operand.hbm [shape: bf16[128,384], index: 1, kind: input, shape index: {}]
  %s2 = inlined_call_operand.vmem [shape: bf16[64,384], index: 2, kind: output, shape index: {}]
  %s3 = sld [smem:[#allocation0]]
  $region22: #{multilayer_gru_forward.2} parent=0
    _
  %s5 = ssub.s32 1, %s3
  %s6 = scalar_select 0, %s5, %s3
  $region1: #{multilayer_gru_forward.2} parent=0
    #allocation2 [shape = 'u8[98304]{0}', space=vmem, size = 0x18000, scoped, tag = 'input window, operand 1, single buffered']
    #allocation3 [shape = 's32[1]{0}', space=sflag, size = 0x4, scoped, tag = 'scoped memory for multilayer_gru_forward.2']
    %7 = vsyncpa [#allocation3], 0
    // Predicated region
    $region2: #{multilayer_gru_forward.2} parent=1 // pred_check
      _
    $region3: #{multilayer_gru_forward.2} parent=1 // pred_check_branch
      %9 = sbr.rel (0) target = $region5
    $region4: #{multilayer_gru_forward.2} parent=1 // pred_region
      _
    $region5: #{multilayer_gru_forward.2} parent=1 // pred_fallthru
      _
    // Predicated region
    $region6: #{multilayer_gru_forward.2} parent=1 // pred_check
      _
    $region7: #{multilayer_gru_forward.2} parent=1 // pred_check_branch
      %11 = sbr.rel (0) target = $region9
    $region8: #{multilayer_gru_forward.2} parent=1 // pred_region
      %s13 = ssub.s32 3072, 3072
      %14 = vsyncadd [#allocation3], %s13
      %s15 = sshll.u32 [#allocation2], 4
      %s16 = int_to_ptr.vmem [resolvable:$true] %s15
      %21 = dma.hbm_to_vmem [thread:$0]  %s1, 3072, %s16, [#allocation3], 192, 192, 12
    $region9: #{multilayer_gru_forward.2} parent=1 // pred_fallthru
      _
    // Predicated region
    $region10: #{multilayer_gru_forward.2} parent=1 // pred_check
      _
    $region11: #{multilayer_gru_forward.2} parent=1 // pred_check_branch
      %23 = sbr.rel (0) target = $region13
    $region12: #{multilayer_gru_forward.2} parent=1 // pred_region
      %24 = dma.done [#allocation3], 3072
    $region13: #{multilayer_gru_forward.2} parent=1 // pred_fallthru
      _
    %v26 = vld [vmem:[%s0] sm:$0xf]
    %v27 = vld [vmem:[%s0 + $0x4] sm:$0xf]
    %v28 = vld [vmem:[%s0 + $0x8] sm:$0xf]
    %v29 = vld [vmem:[%s0 + $0xc] sm:$0xf]
    %v30 = vld [vmem:[%s0 + $0x10] sm:$0xf]
    %v31 = vld [vmem:[%s0 + $0x14] sm:$0xf]
    %v32 = vld [vmem:[%s0 + $0x18] sm:$0xf]
    %v33 = vld [vmem:[%s0 + $0x1c] sm:$0xf]
    %v34 = vld [vmem:[#allocation2] sm:$0xff]
    %v35 = vld [vmem:[#allocation2 + $0x8] sm:$0xf]
    %v36 = vld [vmem:[#allocation2 + $0xc] sm:$0xff]
    %v37 = vld [vmem:[#allocation2 + $0x14] sm:$0xf]
    %v38 = vld [vmem:[#allocation2 + $0x18] sm:$0xff]
    %v39 = vld [vmem:[#allocation2 + $0x20] sm:$0xf]
    %v40 = vld [vmem:[#allocation2 + $0x24] sm:$0xff]
    %v41 = vld [vmem:[#allocation2 + $0x2c] sm:$0xf]
    %v42 = vld [vmem:[#allocation2 + $0x30] sm:$0xff]
    %v43 = vld [vmem:[#allocation2 + $0x38] sm:$0xf]
    %v44 = vld [vmem:[#allocation2 + $0x3c] sm:$0xff]
    %v45 = vld [vmem:[#allocation2 + $0x44] sm:$0xf]
    %v46 = vld [vmem:[#allocation2 + $0x48] sm:$0xff]
    %v47 = vld [vmem:[#allocation2 + $0x50] sm:$0xf]
    %v48 = vld [vmem:[#allocation2 + $0x54] sm:$0xff]
    %v49 = vld [vmem:[#allocation2 + $0x5c] sm:$0xf]
    %v50 = vld [vmem:[#allocation2 + $0x60] sm:$0xff]
    %v51 = vld [vmem:[#allocation2 + $0x68] sm:$0xf]
    %v52 = vld [vmem:[#allocation2 + $0x6c] sm:$0xff]
    %v53 = vld [vmem:[#allocation2 + $0x74] sm:$0xf]
    %v54 = vld [vmem:[#allocation2 + $0x78] sm:$0xff]
    %v55 = vld [vmem:[#allocation2 + $0x80] sm:$0xf]
    %v56 = vld [vmem:[#allocation2 + $0x84] sm:$0xff]
    %v57 = vld [vmem:[#allocation2 + $0x8c] sm:$0xf]
    %v58 = vld [vmem:[#allocation2 + $0x90] sm:$0xff]
    %v59 = vld [vmem:[#allocation2 + $0x98] sm:$0xf]
    %v60 = vld [vmem:[#allocation2 + $0x9c] sm:$0xff]
    %v61 = vld [vmem:[#allocation2 + $0xa4] sm:$0xf]
    %v62 = vld [vmem:[#allocation2 + $0xa8] sm:$0xff]
    %v63 = vld [vmem:[#allocation2 + $0xb0] sm:$0xf]
    %v64 = vld [vmem:[#allocation2 + $0xb4] sm:$0xff]
    %v65 = vld [vmem:[#allocation2 + $0xbc] sm:$0xf]
    %v74 = vunpack.c.l.b16 %v26
    %v75 = vunpack.c.l.b16 %v27
    %v76 = vunpack.c.l.b16 %v28
    %v77 = vunpack.c.l.b16 %v29
    %v78 = vunpack.c.l.b16 %v30
    %v79 = vunpack.c.l.b16 %v31
    %v80 = vunpack.c.l.b16 %v32
    %v81 = vunpack.c.l.b16 %v33
    %v82 = vpack.c.b16 %v75, %v74
    %v83 = vpack.c.b16 %v77, %v76
    %v84 = vpack.c.b16 %v79, %v78
    %v85 = vpack.c.b16 %v81, %v80
    %v122 = vunpack.c.l.b16 %v34
    %v123 = vunpack.c.h.b16 %v34
    %v124 = vunpack.c.l.b16 %v35
    %v125 = vunpack.c.l.b16 %v36
    %v126 = vunpack.c.h.b16 %v36
    %v127 = vunpack.c.l.b16 %v37
    %v128 = vunpack.c.l.b16 %v38
    %v129 = vunpack.c.h.b16 %v38
    %v130 = vunpack.c.l.b16 %v39
    %v131 = vunpack.c.l.b16 %v40
    %v132 = vunpack.c.h.b16 %v40
    %v133 = vunpack.c.l.b16 %v41
    %v134 = vunpack.c.l.b16 %v42
    %v135 = vunpack.c.h.b16 %v42
    %v136 = vunpack.c.l.b16 %v43
    %v137 = vunpack.c.l.b16 %v44
    %v138 = vunpack.c.h.b16 %v44
    %v139 = vunpack.c.l.b16 %v45
    %v140 = vunpack.c.l.b16 %v46
    %v141 = vunpack.c.h.b16 %v46
    %v142 = vunpack.c.l.b16 %v47
    %v143 = vunpack.c.l.b16 %v48
    %v144 = vunpack.c.h.b16 %v48
    %v145 = vunpack.c.l.b16 %v49
    %v146 = vunpack.c.l.b16 %v50
    %v147 = vunpack.c.h.b16 %v50
    %v148 = vunpack.c.l.b16 %v51
    %v149 = vunpack.c.l.b16 %v52
    %v150 = vunpack.c.h.b16 %v52
    %v151 = vunpack.c.l.b16 %v53
    %v152 = vunpack.c.l.b16 %v54
    %v153 = vunpack.c.h.b16 %v54
    %v154 = vunpack.c.l.b16 %v55
    %v155 = vunpack.c.l.b16 %v56
    %v156 = vunpack.c.h.b16 %v56
    %v157 = vunpack.c.l.b16 %v57
    %v158 = vunpack.c.l.b16 %v58
    %v159 = vunpack.c.h.b16 %v58
    %v160 = vunpack.c.l.b16 %v59
    %v161 = vunpack.c.l.b16 %v60
    %v162 = vunpack.c.h.b16 %v60
    %v163 = vunpack.c.l.b16 %v61
    %v164 = vunpack.c.l.b16 %v62
    %v165 = vunpack.c.h.b16 %v62
    %v166 = vunpack.c.l.b16 %v63
    %v167 = vunpack.c.l.b16 %v64
    %v168 = vunpack.c.h.b16 %v64
    %v169 = vunpack.c.l.b16 %v65
    %v170 = vpack.c.b16 %v125, %v122
    %v171 = vpack.c.b16 %v126, %v123
    %v172 = vpack.c.b16 %v127, %v124
    %v173 = vpack.c.b16 %v131, %v128
    %v174 = vpack.c.b16 %v132, %v129
    %v175 = vpack.c.b16 %v133, %v130
    %v176 = vpack.c.b16 %v137, %v134
    %v177 = vpack.c.b16 %v138, %v135
    %v178 = vpack.c.b16 %v139, %v136
    %v179 = vpack.c.b16 %v143, %v140
    %v180 = vpack.c.b16 %v144, %v141
    %v181 = vpack.c.b16 %v145, %v142
    %v182 = vpack.c.b16 %v149, %v146
    %v183 = vpack.c.b16 %v150, %v147
    %v184 = vpack.c.b16 %v151, %v148
    %v185 = vpack.c.b16 %v155, %v152
    %v186 = vpack.c.b16 %v156, %v153
    %v187 = vpack.c.b16 %v157, %v154
    %v188 = vpack.c.b16 %v161, %v158
    %v189 = vpack.c.b16 %v162, %v159
    %v190 = vpack.c.b16 %v163, %v160
    %v191 = vpack.c.b16 %v167, %v164
    %v192 = vpack.c.b16 %v168, %v165
    %v193 = vpack.c.b16 %v169, %v166
    %218 = vmatprep.subr.bf16.mxu0 %v192
    %219 = vmatpush1.bf16.msra.mxu0 %v191
    %220 = vmatprep.subr.bf16.mxu0 %v189
    %221 = vmatpush1.bf16.msra.mxu0 %v188
    %222 = vmatprep.subr.bf16.mxu0 %v186
    %223 = vmatpush1.bf16.msra.mxu0 %v185
    %224 = vmatprep.subr.bf16.mxu0 %v183
    %225 = vmatpush1.bf16.msra.mxu0 %v182
    %226 = vmatprep.subr.bf16.mxu0 %v180
    %227 = vmatpush1.bf16.msra.mxu0 %v179
    %228 = vmatprep.subr.bf16.mxu0 %v177
    %229 = vmatpush1.bf16.msra.mxu0 %v176
    %230 = vmatprep.subr.bf16.mxu0 %v174
    %231 = vmatpush1.bf16.msra.mxu0 %v173
    %232 = vmatprep.subr.bf16.mxu0 %v171
    %233 = vmatpush1.bf16.msra.mxu0 %v170
    %234 = vmatprep.subr.bf16.mxu0 0
    %235 = vmatpush2.bf16.msra.mxu0 0
    %236 = vmatprep.subr.bf16.mxu0 0
    %237 = vmatpush2.bf16.msra.mxu0 0
    %238 = vmatprep.subr.bf16.mxu0 0
    %239 = vmatpush2.bf16.msra.mxu0 0
    %240 = vmatprep.subr.bf16.mxu0 0
    %241 = vmatpush2.bf16.msra.mxu0 0
    %242 = vmatprep.subr.bf16.mxu0 0
    %243 = vmatpush2.bf16.msra.mxu0 0
    %244 = vmatprep.subr.bf16.mxu0 0
    %245 = vmatpush2.bf16.msra.mxu0 0
    %246 = vmatprep.subr.bf16.mxu0 0
    %247 = vmatpush2.bf16.msra.mxu0 0
    %248 = vmatprep.subr.bf16.mxu0 0
    %249 = vmatpush2.bf16.msra.mxu0 0
    %250 = vmatprep.mubr.bf16.mxu0 0
    %251 = vmatmul.mubr.bf16.gmra.mxu0 %v82
    %v252 = vpop.f32.mrf.mxu0
    %v253 = vadd.f32 0.0, %v252
    %v254 = vpop.f32.mrf.mxu0
    %v255 = vadd.f32 0.0, %v254
    %v256 = vpop.f32.mrf.mxu0
    %v257 = vadd.f32 0.0, %v256
    %v258 = vpop.f32.mrf.mxu0
    %v259 = vadd.f32 0.0, %v258
    %260 = vmatprep.mubr.bf16.mxu0 0
    %261 = vmatmul.mubr.bf16.gmra.mxu0 %v83
    %v262 = vpop.f32.mrf.mxu0
    %v263 = vadd.f32 0.0, %v262
    %v264 = vpop.f32.mrf.mxu0
    %v265 = vadd.f32 0.0, %v264
    %v266 = vpop.f32.mrf.mxu0
    %v267 = vadd.f32 0.0, %v266
    %v268 = vpop.f32.mrf.mxu0
    %v269 = vadd.f32 0.0, %v268
    %270 = vmatprep.mubr.bf16.mxu0 0
    %271 = vmatmul.mubr.bf16.gmra.mxu0 %v84
    %v272 = vpop.f32.mrf.mxu0
    %v273 = vadd.f32 0.0, %v272
    %v274 = vpop.f32.mrf.mxu0
    %v275 = vadd.f32 0.0, %v274
    %v276 = vpop.f32.mrf.mxu0
    %v277 = vadd.f32 0.0, %v276
    %v278 = vpop.f32.mrf.mxu0
    %v279 = vadd.f32 0.0, %v278
    %280 = vmatprep.mubr.bf16.mxu0 0
    %281 = vmatmul.mubr.bf16.gmra.mxu0 %v85
    %v282 = vpop.f32.mrf.mxu0
    %v283 = vadd.f32 0.0, %v282
    %v284 = vpop.f32.mrf.mxu0
    %v285 = vadd.f32 0.0, %v284
    %v286 = vpop.f32.mrf.mxu0
    %v287 = vadd.f32 0.0, %v286
    %v288 = vpop.f32.mrf.mxu0
    %v289 = vadd.f32 0.0, %v288
    %290 = vdwg.mxu0
    %291 = vmatprep.subr.bf16.mxu0 0
    %292 = vmatpush1.bf16.msra.mxu0 %v193
    %293 = vmatprep.subr.bf16.mxu0 0
    %294 = vmatpush1.bf16.msra.mxu0 %v190
    %295 = vmatprep.subr.bf16.mxu0 0
    %296 = vmatpush1.bf16.msra.mxu0 %v187
    %297 = vmatprep.subr.bf16.mxu0 0
    %298 = vmatpush1.bf16.msra.mxu0 %v184
    %299 = vmatprep.subr.bf16.mxu0 0
    %300 = vmatpush1.bf16.msra.mxu0 %v181
    %301 = vmatprep.subr.bf16.mxu0 0
    %302 = vmatpush1.bf16.msra.mxu0 %v178
    %303 = vmatprep.subr.bf16.mxu0 0
    %304 = vmatpush1.bf16.msra.mxu0 %v175
    %305 = vmatprep.subr.bf16.mxu0 0
    %306 = vmatpush1.bf16.msra.mxu0 %v172
    %307 = vmatprep.subr.bf16.mxu0 0
    %308 = vmatpush2.bf16.msra.mxu0 0
    %309 = vmatprep.subr.bf16.mxu0 0
    %310 = vmatpush2.bf16.msra.mxu0 0
    %311 = vmatprep.subr.bf16.mxu0 0
    %312 = vmatpush2.bf16.msra.mxu0 0
    %313 = vmatprep.subr.bf16.mxu0 0
    %314 = vmatpush2.bf16.msra.mxu0 0
    %315 = vmatprep.subr.bf16.mxu0 0
    %316 = vmatpush2.bf16.msra.mxu0 0
    %317 = vmatprep.subr.bf16.mxu0 0
    %318 = vmatpush2.bf16.msra.mxu0 0
    %319 = vmatprep.subr.bf16.mxu0 0
    %320 = vmatpush2.bf16.msra.mxu0 0
    %321 = vmatprep.subr.bf16.mxu0 0
    %322 = vmatpush2.bf16.msra.mxu0 0
    %323 = vmatprep.mubr.bf16.mxu0 0
    %324 = vmatmul.mubr.bf16.gmra.mxu0 %v82
    %v325 = vpop.f32.mrf.mxu0
    %v326 = vadd.f32 0.0, %v325
    %v327 = vpop.f32.mrf.mxu0
    %v328 = vpop.f32.mrf.mxu0
    %v329 = vadd.f32 0.0, %v328
    %v330 = vpop.f32.mrf.mxu0
    %331 = vmatprep.mubr.bf16.mxu0 0
    %332 = vmatmul.mubr.bf16.gmra.mxu0 %v83
    %v333 = vpop.f32.mrf.mxu0
    %v334 = vadd.f32 0.0, %v333
    %v335 = vpop.f32.mrf.mxu0
    %v336 = vpop.f32.mrf.mxu0
    %v337 = vadd.f32 0.0, %v336
    %v338 = vpop.f32.mrf.mxu0
    %339 = vmatprep.mubr.bf16.mxu0 0
    %340 = vmatmul.mubr.bf16.gmra.mxu0 %v84
    %v341 = vpop.f32.mrf.mxu0
    %v342 = vadd.f32 0.0, %v341
    %v343 = vpop.f32.mrf.mxu0
    %v344 = vpop.f32.mrf.mxu0
    %v345 = vadd.f32 0.0, %v344
    %v346 = vpop.f32.mrf.mxu0
    %347 = vmatprep.mubr.bf16.mxu0 0
    %348 = vmatmul.mubr.bf16.gmra.mxu0 %v85
    %v349 = vpop.f32.mrf.mxu0
    %v350 = vadd.f32 0.0, %v349
    %v351 = vpop.f32.mrf.mxu0
    %v352 = vpop.f32.mrf.mxu0
    %v353 = vadd.f32 0.0, %v352
    %v354 = vpop.f32.mrf.mxu0
    %355 = vdwg.mxu0
    %v356 = vpack.c.bf16 %v257, %v253
    %v357 = vpack.c.bf16 %v259, %v255
    %v358 = vpack.c.bf16 %v329, %v326
    %v359 = vpack.c.bf16 %v267, %v263
    %v360 = vpack.c.bf16 %v269, %v265
    %v361 = vpack.c.bf16 %v337, %v334
    %v362 = vpack.c.bf16 %v277, %v273
    %v363 = vpack.c.bf16 %v279, %v275
    %v364 = vpack.c.bf16 %v345, %v342
    %v365 = vpack.c.bf16 %v287, %v283
    %v366 = vpack.c.bf16 %v289, %v285
    %v367 = vpack.c.bf16 %v353, %v350
    %v380 = vunpack.c.l.b16 %v356
    %v381 = vunpack.c.l.b16 %v357
    %v382 = vunpack.c.l.b16 %v358
    %v383 = vunpack.c.h.b16 %v356
    %v384 = vunpack.c.h.b16 %v357
    %v385 = vunpack.c.h.b16 %v358
    %v386 = vunpack.c.l.b16 %v359
    %v387 = vunpack.c.l.b16 %v360
    %v388 = vunpack.c.l.b16 %v361
    %v389 = vunpack.c.h.b16 %v359
    %v390 = vunpack.c.h.b16 %v360
    %v391 = vunpack.c.h.b16 %v361
    %v392 = vunpack.c.l.b16 %v362
    %v393 = vunpack.c.l.b16 %v363
    %v394 = vunpack.c.l.b16 %v364
    %v395 = vunpack.c.h.b16 %v362
    %v396 = vunpack.c.h.b16 %v363
    %v397 = vunpack.c.h.b16 %v364
    %v398 = vunpack.c.l.b16 %v365
    %v399 = vunpack.c.l.b16 %v366
    %v400 = vunpack.c.l.b16 %v367
    %v401 = vunpack.c.h.b16 %v365
    %v402 = vunpack.c.h.b16 %v366
    %v403 = vunpack.c.h.b16 %v367
    %v404 = vpack.c.b16 %v381, %v380
    %v405 = vpack.c.b16 %v382, %v382
    %v406 = vpack.c.b16 %v384, %v383
    %v407 = vpack.c.b16 %v385, %v385
    %v408 = vpack.c.b16 %v387, %v386
    %v409 = vpack.c.b16 %v388, %v388
    %v410 = vpack.c.b16 %v390, %v389
    %v411 = vpack.c.b16 %v391, %v391
    %v412 = vpack.c.b16 %v393, %v392
    %v413 = vpack.c.b16 %v394, %v394
    %v414 = vpack.c.b16 %v396, %v395
    %v415 = vpack.c.b16 %v397, %v397
    %v416 = vpack.c.b16 %v399, %v398
    %v417 = vpack.c.b16 %v400, %v400
    %v418 = vpack.c.b16 %v402, %v401
    %v419 = vpack.c.b16 %v403, %v403
    %436 = vst [vmem:[%s2] sm:$0xff] %v404
    %437 = vst [vmem:[%s2 + $0x8] sm:$0xf] %v405
    %438 = vst [vmem:[%s2 + $0xc] sm:$0xff] %v406
    %439 = vst [vmem:[%s2 + $0x14] sm:$0xf] %v407
    %440 = vst [vmem:[%s2 + $0x18] sm:$0xff] %v408
    %441 = vst [vmem:[%s2 + $0x20] sm:$0xf] %v409
    %442 = vst [vmem:[%s2 + $0x24] sm:$0xff] %v410
    %443 = vst [vmem:[%s2 + $0x2c] sm:$0xf] %v411
    %444 = vst [vmem:[%s2 + $0x30] sm:$0xff] %v412
    %445 = vst [vmem:[%s2 + $0x38] sm:$0xf] %v413
    %446 = vst [vmem:[%s2 + $0x3c] sm:$0xff] %v414
    %447 = vst [vmem:[%s2 + $0x44] sm:$0xf] %v415
    %448 = vst [vmem:[%s2 + $0x48] sm:$0xff] %v416
    %449 = vst [vmem:[%s2 + $0x50] sm:$0xf] %v417
    %450 = vst [vmem:[%s2 + $0x54] sm:$0xff] %v418
    %451 = vst [vmem:[%s2 + $0x5c] sm:$0xf] %v419
    // Predicated region
    $region14: #{multilayer_gru_forward.2} parent=1 // pred_check
      _
    $region15: #{multilayer_gru_forward.2} parent=1 // pred_check_branch
      %453 = sbr.rel (0) target = $region17
    $region16: #{multilayer_gru_forward.2} parent=1 // pred_region
      _
    $region17: #{multilayer_gru_forward.2} parent=1 // pred_fallthru
      _
    // Predicated region
    $region18: #{multilayer_gru_forward.2} parent=1 // pred_check
      _
    $region19: #{multilayer_gru_forward.2} parent=1 // pred_check_branch
      %455 = sbr.rel (0) target = $region21
    $region20: #{multilayer_gru_forward.2} parent=1 // pred_region
      _
    $region21: #{multilayer_gru_forward.2} parent=1 // pred_fallthru
      _
    %456 = vsyncpa [#allocation3], 1

// kernel: multilayer_gru_forward.3
$region0: #{multilayer_gru_forward.3}
  #allocation0 [shape = 'u32[]', space=smem, size = 0x4, offset = 0x4, fixed_abs, tag = 'smem constant byte address 0x4 - core index']
  #allocation1 [shape = 'u32[144,128]{1,0:T(1,128)}', space=vmem, size = 0x12000, scoped, tag = 'internal scratch']
  #allocation2 [shape = 'f32[2,8,128]{2,1,0:T(8,128)}', space=vmem, size = 0x2000, scoped, tag = 'scratch operand']
  #allocation3 [shape = 'f32[8,8,128]{2,1,0:T(8,128)}', space=vmem, size = 0x8000, scoped, tag = 'scratch operand']
  %s0 = inlined_call_operand.vmem [shape: bf16[8,8,384], index: 0, kind: input, shape index: {}]
  %s1 = inlined_call_operand.vmem [shape: f32[2,8,128], index: 1, kind: input, shape index: {}]
  %s2 = inlined_call_operand.hbm [shape: bf16[128,256], index: 2, kind: input, shape index: {}]
  %s3 = inlined_call_operand.hbm [shape: bf16[128,128], index: 3, kind: input, shape index: {}]
  %s4 = inlined_call_operand.vmem [shape: f32[1,256], index: 4, kind: input, shape index: {}]
  %s5 = inlined_call_operand.vmem [shape: f32[1,128], index: 5, kind: input, shape index: {}]
  %s6 = inlined_call_operand.vmem [shape: bf16[128,256], index: 6, kind: input, shape index: {}]
  %s7 = inlined_call_operand.hbm [shape: bf16[128,128], index: 7, kind: input, shape index: {}]
  %s8 = inlined_call_operand.vmem [shape: f32[1,256], index: 8, kind: input, shape index: {}]
  %s9 = inlined_call_operand.vmem [shape: f32[1,128], index: 9, kind: input, shape index: {}]
  %s10 = inlined_call_operand.vmem [shape: bf16[128,384], index: 10, kind: input, shape index: {}]
  %s11 = inlined_call_operand.vmem [shape: bf16[128,128], index: 11, kind: input, shape index: {}]
  %s12 = inlined_call_operand.vmem [shape: f32[1,128], index: 12, kind: input, shape index: {}]
  %s13 = inlined_call_operand.vmem [shape: f32[8,8,128], index: 13, kind: output, shape index: {0}]
  %s14 = inlined_call_operand.vmem [shape: f32[2,8,128], index: 14, kind: output, shape index: {1}]
  %15 = xla_tuple %s13, %s14
  %s16 = sld [smem:[#allocation0]]
  $region90: #{multilayer_gru_forward.3} parent=0
    _
  %s18 = ssub.s32 1, %s16
  %s19 = scalar_select 0, %s18, %s16
  $region1: #{multilayer_gru_forward.3} parent=0
    #allocation4 [shape = 'u8[65536]{0}', space=vmem, size = 0x10000, scoped, tag = 'input window, operand 2, single buffered']
    #allocation5 [shape = 's32[1]{0}', space=sflag, size = 0x4, scoped, tag = 'scoped memory for multilayer_gru_forward.3']
    #allocation6 [shape = 'u8[32768]{0}', space=vmem, size = 0x8000, scoped, tag = 'input window, operand 3, single buffered']
    #allocation7 [shape = 's32[1]{0}', space=sflag, size = 0x4, scoped, tag = 'scoped memory for multilayer_gru_forward.3']
    #allocation8 [shape = 'u8[32768]{0}', space=vmem, size = 0x8000, scoped, tag = 'input window, operand 7, single buffered']
    %20 = vsyncpa [#allocation5], 0
    %21 = vsyncpa [#allocation7], 0
    // Predicated region
    $region2: #{multilayer_gru_forward.3} parent=1 // pred_check
      _
    $region3: #{multilayer_gru_forward.3} parent=1 // pred_check_branch
      %23 = sbr.rel (0) target = $region5
    $region4: #{multilayer_gru_forward.3} parent=1 // pred_region
      _
    $region5: #{multilayer_gru_forward.3} parent=1 // pred_fallthru
      _
    // Predicated region
    $region6: #{multilayer_gru_forward.3} parent=1 // pred_check
      _
    $region7: #{multilayer_gru_forward.3} parent=1 // pred_check_branch
      %25 = sbr.rel (0) target = $region9
    $region8: #{multilayer_gru_forward.3} parent=1 // pred_region
      _
    $region9: #{multilayer_gru_forward.3} parent=1 // pred_fallthru
      _
    // Predicated region
    $region10: #{multilayer_gru_forward.3} parent=1 // pred_check
      _
    $region11: #{multilayer_gru_forward.3} parent=1 // pred_check_branch
      %27 = sbr.rel (0) target = $region13
    $region12: #{multilayer_gru_forward.3} parent=1 // pred_region
      %s29 = ssub.s32 2048, 2048
      %30 = vsyncadd [#allocation5], %s29
      %s31 = sshll.u32 [#allocation4], 4
      %s32 = int_to_ptr.vmem [resolvable:$true] %s31
      %37 = dma.hbm_to_vmem [thread:$0]  %s2, 2048, %s32, [#allocation5], 128, 128, 8
    $region13: #{multilayer_gru_forward.3} parent=1 // pred_fallthru
      _
    // Predicated region
    $region14: #{multilayer_gru_forward.3} parent=1 // pred_check
      _
    $region15: #{multilayer_gru_forward.3} parent=1 // pred_check_branch
      %39 = sbr.rel (0) target = $region17
    $region16: #{multilayer_gru_forward.3} parent=1 // pred_region
      %s41 = ssub.s32 1024, 1024
      %42 = vsyncadd [#allocation7], %s41
      %s43 = sshll.u32 [#allocation6], 4
      %s44 = int_to_ptr.vmem [resolvable:$true] %s43
      %49 = dma.hbm_to_vmem [thread:$0]  %s3, 1024, %s44, [#allocation7], 64, 64, 4
    $region17: #{multilayer_gru_forward.3} parent=1 // pred_fallthru
      _
    // Predicated region
    $region18: #{multilayer_gru_forward.3} parent=1 // pred_check
      _
    $region19: #{multilayer_gru_forward.3} parent=1 // pred_check_branch
      %51 = sbr.rel (0) target = $region21
    $region20: #{multilayer_gru_forward.3} parent=1 // pred_region
      _
    $region21: #{multilayer_gru_forward.3} parent=1 // pred_fallthru
      _
    // Predicated region
    $region22: #{multilayer_gru_forward.3} parent=1 // pred_check
      _
    $region23: #{multilayer_gru_forward.3} parent=1 // pred_check_branch
      %53 = sbr.rel (0) target = $region25
    $region24: #{multilayer_gru_forward.3} parent=1 // pred_region
      _
    $region25: #{multilayer_gru_forward.3} parent=1 // pred_fallthru
      _
    // Predicated region
    $region26: #{multilayer_gru_forward.3} parent=1 // pred_check
      _
    $region27: #{multilayer_gru_forward.3} parent=1 // pred_check_branch
      %55 = sbr.rel (0) target = $region29
    $region28: #{multilayer_gru_forward.3} parent=1 // pred_region
      _
    $region29: #{multilayer_gru_forward.3} parent=1 // pred_fallthru
      _
    // Predicated region
    $region30: #{multilayer_gru_forward.3} parent=1 // pred_check
      _
    $region31: #{multilayer_gru_forward.3} parent=1 // pred_check_branch
      %57 = sbr.rel (0) target = $region33
    $region32: #{multilayer_gru_forward.3} parent=1 // pred_region
      %s59 = ssub.s32 1024, 1024
      %60 = vsyncadd [#allocation7], %s59
      %s61 = sshll.u32 [#allocation8], 4
      %s62 = int_to_ptr.vmem [resolvable:$true] %s61
      %67 = dma.hbm_to_vmem [thread:$0]  %s7, 1024, %s62, [#allocation7], 64, 64, 4
    $region33: #{multilayer_gru_forward.3} parent=1 // pred_fallthru
      _
    // Predicated region
    $region34: #{multilayer_gru_forward.3} parent=1 // pred_check
      _
    $region35: #{multilayer_gru_forward.3} parent=1 // pred_check_branch
      %69 = sbr.rel (0) target = $region37
    $region36: #{multilayer_gru_forward.3} parent=1 // pred_region
      _
    $region37: #{multilayer_gru_forward.3} parent=1 // pred_fallthru
      _
    // Predicated region
    $region38: #{multilayer_gru_forward.3} parent=1 // pred_check
      _
    $region39: #{multilayer_gru_forward.3} parent=1 // pred_check_branch
      %71 = sbr.rel (0) target = $region41
    $region40: #{multilayer_gru_forward.3} parent=1 // pred_region
      _
    $region41: #{multilayer_gru_forward.3} parent=1 // pred_fallthru
      _
    // Predicated region
    $region42: #{multilayer_gru_forward.3} parent=1 // pred_check
      _
    $region43: #{multilayer_gru_forward.3} parent=1 // pred_check_branch
      %73 = sbr.rel (0) target = $region45
    $region44: #{multilayer_gru_forward.3} parent=1 // pred_region
      _
    $region45: #{multilayer_gru_forward.3} parent=1 // pred_fallthru
      _
    // Predicated region
    $region46: #{multilayer_gru_forward.3} parent=1 // pred_check
      _
    $region47: #{multilayer_gru_forward.3} parent=1 // pred_check_branch
      %75 = sbr.rel (0) target = $region49
    $region48: #{multilayer_gru_forward.3} parent=1 // pred_region
      _
    $region49: #{multilayer_gru_forward.3} parent=1 // pred_fallthru
      _
    // Predicated region
    $region50: #{multilayer_gru_forward.3} parent=1 // pred_check
      _
    $region51: #{multilayer_gru_forward.3} parent=1 // pred_check_branch
      %77 = sbr.rel (0) target = $region53
    $region52: #{multilayer_gru_forward.3} parent=1 // pred_region
      _
    $region53: #{multilayer_gru_forward.3} parent=1 // pred_fallthru
      _
    // Predicated region
    $region54: #{multilayer_gru_forward.3} parent=1 // pred_check
      _
    $region55: #{multilayer_gru_forward.3} parent=1 // pred_check_branch
      %79 = sbr.rel (0) target = $region57
    $region56: #{multilayer_gru_forward.3} parent=1 // pred_region
      %80 = dma.done [#allocation5], 2048
    $region57: #{multilayer_gru_forward.3} parent=1 // pred_fallthru
      _
    // Predicated region
    $region58: #{multilayer_gru_forward.3} parent=1 // pred_check
      _
    $region59: #{multilayer_gru_forward.3} parent=1 // pred_check_branch
      %82 = sbr.rel (0) target = $region61
    $region60: #{multilayer_gru_forward.3} parent=1 // pred_region
      %83 = dma.done [#allocation7], 1024
    $region61: #{multilayer_gru_forward.3} parent=1 // pred_fallthru
      _
    // Predicated region
    $region62: #{multilayer_gru_forward.3} parent=1 // pred_check
      _
    $region63: #{multilayer_gru_forward.3} parent=1 // pred_check_branch
      %85 = sbr.rel (0) target = $region65
    $region64: #{multilayer_gru_forward.3} parent=1 // pred_region
      %86 = dma.done [#allocation7], 1024
    $region65: #{multilayer_gru_forward.3} parent=1 // pred_fallthru
      _
    %p88 = scmp.eq.s32.totalorder 0, 0
    // Predicated region
    $region66: #{multilayer_gru_forward.3} parent=1 // pred_check
      %p89 = pneg %p88
    $region67: #{multilayer_gru_forward.3} parent=1 // pred_check_branch
      %91 = sbr.rel (%p89) target = $region69
    $region68: #{multilayer_gru_forward.3} parent=1 // pred_region
      %v92 = vld [vmem:[%s1] sm:$0xff]
      %v93 = vld [vmem:[%s1 + $0x8] sm:$0xff]
      %94 = vst [vmem:[#allocation2] sm:$0xff] %v92
      %95 = vst [vmem:[#allocation2 + $0x8] sm:$0xff] %v93
    $region69: #{multilayer_gru_forward.3} parent=1 // pred_fallthru
      _
    %v96 = vld [vmem:[#allocation2] sm:$0xff]
    %v97 = vld [vmem:[%s0] sm:$0xff]
    %v98 = vld [vmem:[%s0 + $0x8] sm:$0xf]
    %v99 = vunpack.c.l.bf16 %v97
    %v100 = vunpack.c.h.bf16 %v97
    %v101 = vunpack.c.l.bf16 %v98
    %v102 = vpack.c.bf16 %v96, %v96
    %v103 = vld [vmem:[#allocation4] sm:$0xff]
    %v104 = vld [vmem:[#allocation4 + $0x8] sm:$0xff]
    %v105 = vld [vmem:[#allocation4 + $0x10] sm:$0xff]
    %v106 = vld [vmem:[#allocation4 + $0x18] sm:$0xff]
    %v107 = vld [vmem:[#allocation4 + $0x20] sm:$0xff]
    %v108 = vld [vmem:[#allocation4 + $0x28] sm:$0xff]
    %v109 = vld [vmem:[#allocation4 + $0x30] sm:$0xff]
    %v110 = vld [vmem:[#allocation4 + $0x38] sm:$0xff]
    %v111 = vld [vmem:[#allocation4 + $0x40] sm:$0xff]
    %v112 = vld [vmem:[#allocation4 + $0x48] sm:$0xff]
    %v113 = vld [vmem:[#allocation4 + $0x50] sm:$0xff]
    %v114 = vld [vmem:[#allocation4 + $0x58] sm:$0xff]
    %v115 = vld [vmem:[#allocation4 + $0x60] sm:$0xff]
    %v116 = vld [vmem:[#allocation4 + $0x68] sm:$0xff]
    %v117 = vld [vmem:[#allocation4 + $0x70] sm:$0xff]
    %v118 = vld [vmem:[#allocation4 + $0x78] sm:$0xff]
    %v135 = vunpack.c.l.b16 %v103
    %v136 = vunpack.c.h.b16 %v103
    %v137 = vunpack.c.l.b16 %v104
    %v138 = vunpack.c.h.b16 %v104
    %v139 = vunpack.c.l.b16 %v105
    %v140 = vunpack.c.h.b16 %v105
    %v141 = vunpack.c.l.b16 %v106
    %v142 = vunpack.c.h.b16 %v106
    %v143 = vunpack.c.l.b16 %v107
    %v144 = vunpack.c.h.b16 %v107
    %v145 = vunpack.c.l.b16 %v108
    %v146 = vunpack.c.h.b16 %v108
    %v147 = vunpack.c.l.b16 %v109
    %v148 = vunpack.c.h.b16 %v109
    %v149 = vunpack.c.l.b16 %v110
    %v150 = vunpack.c.h.b16 %v110
    %v151 = vunpack.c.l.b16 %v111
    %v152 = vunpack.c.h.b16 %v111
    %v153 = vunpack.c.l.b16 %v112
    %v154 = vunpack.c.h.b16 %v112
    %v155 = vunpack.c.l.b16 %v113
    %v156 = vunpack.c.h.b16 %v113
    %v157 = vunpack.c.l.b16 %v114
    %v158 = vunpack.c.h.b16 %v114
    %v159 = vunpack.c.l.b16 %v115
    %v160 = vunpack.c.h.b16 %v115
    %v161 = vunpack.c.l.b16 %v116
    %v162 = vunpack.c.h.b16 %v116
    %v163 = vunpack.c.l.b16 %v117
    %v164 = vunpack.c.h.b16 %v117
    %v165 = vunpack.c.l.b16 %v118
    %v166 = vunpack.c.h.b16 %v118
    %v167 = vpack.c.b16 %v137, %v135
    %v168 = vpack.c.b16 %v138, %v136
    %v169 = vpack.c.b16 %v141, %v139
    %v170 = vpack.c.b16 %v142, %v140
    %v171 = vpack.c.b16 %v145, %v143
    %v172 = vpack.c.b16 %v146, %v144
    %v173 = vpack.c.b16 %v149, %v147
    %v174 = vpack.c.b16 %v150, %v148
    %v175 = vpack.c.b16 %v153, %v151
    %v176 = vpack.c.b16 %v154, %v152
    %v177 = vpack.c.b16 %v157, %v155
    %v178 = vpack.c.b16 %v158, %v156
    %v179 = vpack.c.b16 %v161, %v159
    %v180 = vpack.c.b16 %v162, %v160
    %v181 = vpack.c.b16 %v165, %v163
    %v182 = vpack.c.b16 %v166, %v164
    %199 = vmatprep.subr.bf16.mxu0 %v182
    %200 = vmatpush1.bf16.msra.mxu0 %v181
    %201 = vmatprep.subr.bf16.mxu0 %v180
    %202 = vmatpush1.bf16.msra.mxu0 %v179
    %203 = vmatprep.subr.bf16.mxu0 %v178
    %204 = vmatpush1.bf16.msra.mxu0 %v177
    %205 = vmatprep.subr.bf16.mxu0 %v176
    %206 = vmatpush1.bf16.msra.mxu0 %v175
    %207 = vmatprep.subr.bf16.mxu0 %v174
    %208 = vmatpush1.bf16.msra.mxu0 %v173
    %209 = vmatprep.subr.bf16.mxu0 %v172
    %210 = vmatpush1.bf16.msra.mxu0 %v171
    %211 = vmatprep.subr.bf16.mxu0 %v170
    %212 = vmatpush1.bf16.msra.mxu0 %v169
    %213 = vmatprep.subr.bf16.mxu0 %v168
    %214 = vmatpush1.bf16.msra.mxu0 %v167
    %215 = vmatprep.subr.bf16.mxu0 0
    %216 = vmatpush2.bf16.msra.mxu0 0
    %217 = vmatprep.subr.bf16.mxu0 0
    %218 = vmatpush2.bf16.msra.mxu0 0
    %219 = vmatprep.subr.bf16.mxu0 0
    %220 = vmatpush2.bf16.msra.mxu0 0
    %221 = vmatprep.subr.bf16.mxu0 0
    %222 = vmatpush2.bf16.msra.mxu0 0
    %223 = vmatprep.subr.bf16.mxu0 0
    %224 = vmatpush2.bf16.msra.mxu0 0
    %225 = vmatprep.subr.bf16.mxu0 0
    %226 = vmatpush2.bf16.msra.mxu0 0
    %227 = vmatprep.subr.bf16.mxu0 0
    %228 = vmatpush2.bf16.msra.mxu0 0
    %229 = vmatprep.subr.bf16.mxu0 0
    %230 = vmatpush2.bf16.msra.mxu0 0
    %231 = vmatprep.mubr.bf16.mxu0 0
    %232 = vmatmul.mubr.bf16.gmra.mxu0 %v102
    %v233 = vpop.f32.mrf.mxu0
    %v234 = vadd.f32 0.0, %v233
    %v235 = vpop.f32.mrf.mxu0
    %v236 = vadd.f32 0.0, %v235
    %v237 = vpop.f32.mrf.mxu0
    %v238 = vpop.f32.mrf.mxu0
    %239 = vdwg.mxu0
    %v240 = vadd.f32 %v99, %v234
    %v241 = vadd.f32 %v100, %v236
    %v242 = vld [vmem:[%s4] sm:$0x3]
    %v244 = vlaneseq
    %v245 = vshrl.u32 %v244, 7
    %v246 = vsub.s32 0, %v245
    %v247 = vrot.slane %v242, %v246
    %v248 = vlaneseq
    %v249 = vshrl.u32 %v248, 7
    %v250 = vsub.s32 1, %v249
    %v251 = vrot.slane %v242, %v250
    %v254 = vadd.f32 %v240, %v247
    %v255 = vadd.f32 %v241, %v251
    %v256 = vxor.u32 %v254, 2147483648
    %v257 = vxor.u32 %v255, 2147483648
    %v258 = vmul.f32 %v256, 1.442695
    %v259 = vpow.pop %v258
    %v260 = vmul.f32 %v257, 1.442695
    %v261 = vpow.pop %v260
    %v262 = vadd.f32 %v259, 1.0
    %v263 = vadd.f32 %v261, 1.0
    %v264 = vrcp.pop %v262
    %v265 = vmul.f32 1.0, %v264
    %v266 = vrcp.pop %v263
    %v267 = vmul.f32 1.0, %v266
    %v268 = vmul.f32 %v267, %v96
    %v269 = vpack.c.bf16 %v268, %v268
    %v270 = vld [vmem:[#allocation6] sm:$0xf]
    %v271 = vld [vmem:[#allocation6 + $0x4] sm:$0xf]
    %v272 = vld [vmem:[#allocation6 + $0x8] sm:$0xf]
    %v273 = vld [vmem:[#allocation6 + $0xc] sm:$0xf]
    %v274 = vld [vmem:[#allocation6 + $0x10] sm:$0xf]
    %v275 = vld [vmem:[#allocation6 + $0x14] sm:$0xf]
    %v276 = vld [vmem:[#allocation6 + $0x18] sm:$0xf]
    %v277 = vld [vmem:[#allocation6 + $0x1c] sm:$0xf]
    %v278 = vld [vmem:[#allocation6 + $0x20] sm:$0xf]
    %v279 = vld [vmem:[#allocation6 + $0x24] sm:$0xf]
    %v280 = vld [vmem:[#allocation6 + $0x28] sm:$0xf]
    %v281 = vld [vmem:[#allocation6 + $0x2c] sm:$0xf]
    %v282 = vld [vmem:[#allocation6 + $0x30] sm:$0xf]
    %v283 = vld [vmem:[#allocation6 + $0x34] sm:$0xf]
    %v284 = vld [vmem:[#allocation6 + $0x38] sm:$0xf]
    %v285 = vld [vmem:[#allocation6 + $0x3c] sm:$0xf]
    %v302 = vunpack.c.l.b16 %v270
    %v303 = vunpack.c.l.b16 %v271
    %v304 = vunpack.c.l.b16 %v272
    %v305 = vunpack.c.l.b16 %v273
    %v306 = vunpack.c.l.b16 %v274
    %v307 = vunpack.c.l.b16 %v275
    %v308 = vunpack.c.l.b16 %v276
    %v309 = vunpack.c.l.b16 %v277
    %v310 = vunpack.c.l.b16 %v278
    %v311 = vunpack.c.l.b16 %v279
    %v312 = vunpack.c.l.b16 %v280
    %v313 = vunpack.c.l.b16 %v281
    %v314 = vunpack.c.l.b16 %v282
    %v315 = vunpack.c.l.b16 %v283
    %v316 = vunpack.c.l.b16 %v284
    %v317 = vunpack.c.l.b16 %v285
    %v318 = vpack.c.b16 %v303, %v302
    %v319 = vpack.c.b16 %v305, %v304
    %v320 = vpack.c.b16 %v307, %v306
    %v321 = vpack.c.b16 %v309, %v308
    %v322 = vpack.c.b16 %v311, %v310
    %v323 = vpack.c.b16 %v313, %v312
    %v324 = vpack.c.b16 %v315, %v314
    %v325 = vpack.c.b16 %v317, %v316
    %334 = vmatprep.subr.bf16.mxu0 0
    %335 = vmatpush1.bf16.msra.mxu0 %v325
    %336 = vmatprep.subr.bf16.mxu0 0
    %337 = vmatpush1.bf16.msra.mxu0 %v324
    %338 = vmatprep.subr.bf16.mxu0 0
    %339 = vmatpush1.bf16.msra.mxu0 %v323
    %340 = vmatprep.subr.bf16.mxu0 0
    %341 = vmatpush1.bf16.msra.mxu0 %v322
    %342 = vmatprep.subr.bf16.mxu0 0
    %343 = vmatpush1.bf16.msra.mxu0 %v321
    %344 = vmatprep.subr.bf16.mxu0 0
    %345 = vmatpush1.bf16.msra.mxu0 %v320
    %346 = vmatprep.subr.bf16.mxu0 0
    %347 = vmatpush1.bf16.msra.mxu0 %v319
    %348 = vmatprep.subr.bf16.mxu0 0
    %349 = vmatpush1.bf16.msra.mxu0 %v318
    %350 = vmatprep.subr.bf16.mxu0 0
    %351 = vmatpush2.bf16.msra.mxu0 0
    %352 = vmatprep.subr.bf16.mxu0 0
    %353 = vmatpush2.bf16.msra.mxu0 0
    %354 = vmatprep.subr.bf16.mxu0 0
    %355 = vmatpush2.bf16.msra.mxu0 0
    %356 = vmatprep.subr.bf16.mxu0 0
    %357 = vmatpush2.bf16.msra.mxu0 0
    %358 = vmatprep.subr.bf16.mxu0 0
    %359 = vmatpush2.bf16.msra.mxu0 0
    %360 = vmatprep.subr.bf16.mxu0 0
    %361 = vmatpush2.bf16.msra.mxu0 0
    %362 = vmatprep.subr.bf16.mxu0 0
    %363 = vmatpush2.bf16.msra.mxu0 0
    %364 = vmatprep.subr.bf16.mxu0 0
    %365 = vmatpush2.bf16.msra.mxu0 0
    %366 = vmatprep.mubr.bf16.mxu0 0
    %367 = vmatmul.mubr.bf16.gmra.mxu0 %v269
    %v368 = vpop.f32.mrf.mxu0
    %v369 = vadd.f32 0.0, %v368
    %v370 = vpop.f32.mrf.mxu0
    %v371 = vpop.f32.mrf.mxu0
    %v372 = vpop.f32.mrf.mxu0
    %373 = vdwg.mxu0
    %v374 = vadd.f32 %v101, %v369
    %v375 = vld [vmem:[%s5] sm:$0x1]
    %v377 = vlaneseq
    %v378 = vshrl.u32 %v377, 7
    %v379 = vsub.s32 0, %v378
    %v380 = vrot.slane %v375, %v379
    %v382 = vadd.f32 %v374, %v380
    %v383 = vtanh.pop %v382
    %v384 = vmul.f32 %v265, %v96
    %v385 = vsub.f32 1.0, %v265
    %v386 = vmul.f32 %v385, %v383
    %v387 = vadd.f32 %v384, %v386
    %388 = vst [vmem:[#allocation2] sm:$0xff] %v387
    %s389 = scalar_lea.vmem [#allocation2], 8
    %v390 = vld [vmem:[%s389] sm:$0xff]
    %v391 = vpack.c.bf16 %v387, %v387
    %v392 = vld [vmem:[%s10] sm:$0xff]
    %v393 = vld [vmem:[%s10 + $0x8] sm:$0xf]
    %v394 = vld [vmem:[%s10 + $0xc] sm:$0xff]
    %v395 = vld [vmem:[%s10 + $0x14] sm:$0xf]
    %v396 = vld [vmem:[%s10 + $0x18] sm:$0xff]
    %v397 = vld [vmem:[%s10 + $0x20] sm:$0xf]
    %v398 = vld [vmem:[%s10 + $0x24] sm:$0xff]
    %v399 = vld [vmem:[%s10 + $0x2c] sm:$0xf]
    %v400 = vld [vmem:[%s10 + $0x30] sm:$0xff]
    %v401 = vld [vmem:[%s10 + $0x38] sm:$0xf]
    %v402 = vld [vmem:[%s10 + $0x3c] sm:$0xff]
    %v403 = vld [vmem:[%s10 + $0x44] sm:$0xf]
    %v404 = vld [vmem:[%s10 + $0x48] sm:$0xff]
    %v405 = vld [vmem:[%s10 + $0x50] sm:$0xf]
    %v406 = vld [vmem:[%s10 + $0x54] sm:$0xff]
    %v407 = vld [vmem:[%s10 + $0x5c] sm:$0xf]
    %v408 = vld [vmem:[%s10 + $0x60] sm:$0xff]
    %v409 = vld [vmem:[%s10 + $0x68] sm:$0xf]
    %v410 = vld [vmem:[%s10 + $0x6c] sm:$0xff]
    %v411 = vld [vmem:[%s10 + $0x74] sm:$0xf]
    %v412 = vld [vmem:[%s10 + $0x78] sm:$0xff]
    %v413 = vld [vmem:[%s10 + $0x80] sm:$0xf]
    %v414 = vld [vmem:[%s10 + $0x84] sm:$0xff]
    %v415 = vld [vmem:[%s10 + $0x8c] sm:$0xf]
    %v416 = vld [vmem:[%s10 + $0x90] sm:$0xff]
    %v417 = vld [vmem:[%s10 + $0x98] sm:$0xf]
    %v418 = vld [vmem:[%s10 + $0x9c] sm:$0xff]
    %v419 = vld [vmem:[%s10 + $0xa4] sm:$0xf]
    %v420 = vld [vmem:[%s10 + $0xa8] sm:$0xff]
    %v421 = vld [vmem:[%s10 + $0xb0] sm:$0xf]
    %v422 = vld [vmem:[%s10 + $0xb4] sm:$0xff]
    %v423 = vld [vmem:[%s10 + $0xbc] sm:$0xf]
    %v456 = vunpack.c.l.b16 %v392
    %v457 = vunpack.c.h.b16 %v392
    %v458 = vunpack.c.l.b16 %v393
    %v459 = vunpack.c.l.b16 %v394
    %v460 = vunpack.c.h.b16 %v394
    %v461 = vunpack.c.l.b16 %v395
    %v462 = vunpack.c.l.b16 %v396
    %v463 = vunpack.c.h.b16 %v396
    %v464 = vunpack.c.l.b16 %v397
    %v465 = vunpack.c.l.b16 %v398
    %v466 = vunpack.c.h.b16 %v398
    %v467 = vunpack.c.l.b16 %v399
    %v468 = vunpack.c.l.b16 %v400
    %v469 = vunpack.c.h.b16 %v400
    %v470 = vunpack.c.l.b16 %v401
    %v471 = vunpack.c.l.b16 %v402
    %v472 = vunpack.c.h.b16 %v402
    %v473 = vunpack.c.l.b16 %v403
    %v474 = vunpack.c.l.b16 %v404
    %v475 = vunpack.c.h.b16 %v404
    %v476 = vunpack.c.l.b16 %v405
    %v477 = vunpack.c.l.b16 %v406
    %v478 = vunpack.c.h.b16 %v406
    %v479 = vunpack.c.l.b16 %v407
    %v480 = vunpack.c.l.b16 %v408
    %v481 = vunpack.c.h.b16 %v408
    %v482 = vunpack.c.l.b16 %v409
    %v483 = vunpack.c.l.b16 %v410
    %v484 = vunpack.c.h.b16 %v410
    %v485 = vunpack.c.l.b16 %v411
    %v486 = vunpack.c.l.b16 %v412
    %v487 = vunpack.c.h.b16 %v412
    %v488 = vunpack.c.l.b16 %v413
    %v489 = vunpack.c.l.b16 %v414
    %v490 = vunpack.c.h.b16 %v414
    %v491 = vunpack.c.l.b16 %v415
    %v492 = vunpack.c.l.b16 %v416
    %v493 = vunpack.c.h.b16 %v416
    %v494 = vunpack.c.l.b16 %v417
    %v495 = vunpack.c.l.b16 %v418
    %v496 = vunpack.c.h.b16 %v418
    %v497 = vunpack.c.l.b16 %v419
    %v498 = vunpack.c.l.b16 %v420
    %v499 = vunpack.c.h.b16 %v420
    %v500 = vunpack.c.l.b16 %v421
    %v501 = vunpack.c.l.b16 %v422
    %v502 = vunpack.c.h.b16 %v422
    %v503 = vunpack.c.l.b16 %v423
    %v504 = vpack.c.b16 %v459, %v456
    %v505 = vpack.c.b16 %v460, %v457
    %v506 = vpack.c.b16 %v461, %v458
    %v507 = vpack.c.b16 %v465, %v462
    %v508 = vpack.c.b16 %v466, %v463
    %v509 = vpack.c.b16 %v467, %v464
    %v510 = vpack.c.b16 %v471, %v468
    %v511 = vpack.c.b16 %v472, %v469
    %v512 = vpack.c.b16 %v473, %v470
    %v513 = vpack.c.b16 %v477, %v474
    %v514 = vpack.c.b16 %v478, %v475
    %v515 = vpack.c.b16 %v479, %v476
    %v516 = vpack.c.b16 %v483, %v480
    %v517 = vpack.c.b16 %v484, %v481
    %v518 = vpack.c.b16 %v485, %v482
    %v519 = vpack.c.b16 %v489, %v486
    %v520 = vpack.c.b16 %v490, %v487
    %v521 = vpack.c.b16 %v491, %v488
    %v522 = vpack.c.b16 %v495, %v492
    %v523 = vpack.c.b16 %v496, %v493
    %v524 = vpack.c.b16 %v497, %v494
    %v525 = vpack.c.b16 %v501, %v498
    %v526 = vpack.c.b16 %v502, %v499
    %v527 = vpack.c.b16 %v503, %v500
    %552 = vmatprep.subr.bf16.mxu0 %v526
    %553 = vmatpush1.bf16.msra.mxu0 %v525
    %554 = vmatprep.subr.bf16.mxu0 %v523
    %555 = vmatpush1.bf16.msra.mxu0 %v522
    %556 = vmatprep.subr.bf16.mxu0 %v520
    %557 = vmatpush1.bf16.msra.mxu0 %v519
    %558 = vmatprep.subr.bf16.mxu0 %v517
    %559 = vmatpush1.bf16.msra.mxu0 %v516
    %560 = vmatprep.subr.bf16.mxu0 %v514
    %561 = vmatpush1.bf16.msra.mxu0 %v513
    %562 = vmatprep.subr.bf16.mxu0 %v511
    %563 = vmatpush1.bf16.msra.mxu0 %v510
    %564 = vmatprep.subr.bf16.mxu0 %v508
    %565 = vmatpush1.bf16.msra.mxu0 %v507
    %566 = vmatprep.subr.bf16.mxu0 %v505
    %567 = vmatpush1.bf16.msra.mxu0 %v504
    %568 = vmatprep.subr.bf16.mxu0 0
    %569 = vmatpush2.bf16.msra.mxu0 0
    %570 = vmatprep.subr.bf16.mxu0 0
    %571 = vmatpush2.bf16.msra.mxu0 0
    %572 = vmatprep.subr.bf16.mxu0 0
    %573 = vmatpush2.bf16.msra.mxu0 0
    %574 = vmatprep.subr.bf16.mxu0 0
    %575 = vmatpush2.bf16.msra.mxu0 0
    %576 = vmatprep.subr.bf16.mxu0 0
    %577 = vmatpush2.bf16.msra.mxu0 0
    %578 = vmatprep.subr.bf16.mxu0 0
    %579 = vmatpush2.bf16.msra.mxu0 0
    %580 = vmatprep.subr.bf16.mxu0 0
    %581 = vmatpush2.bf16.msra.mxu0 0
    %582 = vmatprep.subr.bf16.mxu0 0
    %583 = vmatpush2.bf16.msra.mxu0 0
    %584 = vmatprep.mubr.bf16.mxu0 0
    %585 = vmatmul.mubr.bf16.gmra.mxu0 %v391
    %v586 = vpop.f32.mrf.mxu0
    %v587 = vadd.f32 0.0, %v586
    %v588 = vpop.f32.mrf.mxu0
    %v589 = vadd.f32 0.0, %v588
    %v590 = vpop.f32.mrf.mxu0
    %v591 = vpop.f32.mrf.mxu0
    %592 = vdwg.mxu0
    %593 = vmatprep.subr.bf16.mxu0 0
    %594 = vmatpush1.bf16.msra.mxu0 %v527
    %595 = vmatprep.subr.bf16.mxu0 0
    %596 = vmatpush1.bf16.msra.mxu0 %v524
    %597 = vmatprep.subr.bf16.mxu0 0
    %598 = vmatpush1.bf16.msra.mxu0 %v521
    %599 = vmatprep.subr.bf16.mxu0 0
    %600 = vmatpush1.bf16.msra.mxu0 %v518
    %601 = vmatprep.subr.bf16.mxu0 0
    %602 = vmatpush1.bf16.msra.mxu0 %v515
    %603 = vmatprep.subr.bf16.mxu0 0
    %604 = vmatpush1.bf16.msra.mxu0 %v512
    %605 = vmatprep.subr.bf16.mxu0 0
    %606 = vmatpush1.bf16.msra.mxu0 %v509
    %607 = vmatprep.subr.bf16.mxu0 0
    %608 = vmatpush1.bf16.msra.mxu0 %v506
    %609 = vmatprep.subr.bf16.mxu0 0
    %610 = vmatpush2.bf16.msra.mxu0 0
    %611 = vmatprep.subr.bf16.mxu0 0
    %612 = vmatpush2.bf16.msra.mxu0 0
    %613 = vmatprep.subr.bf16.mxu0 0
    %614 = vmatpush2.bf16.msra.mxu0 0
    %615 = vmatprep.subr.bf16.mxu0 0
    %616 = vmatpush2.bf16.msra.mxu0 0
    %617 = vmatprep.subr.bf16.mxu0 0
    %618 = vmatpush2.bf16.msra.mxu0 0
    %619 = vmatprep.subr.bf16.mxu0 0
    %620 = vmatpush2.bf16.msra.mxu0 0
    %621 = vmatprep.subr.bf16.mxu0 0
    %622 = vmatpush2.bf16.msra.mxu0 0
    %623 = vmatprep.subr.bf16.mxu0 0
    %624 = vmatpush2.bf16.msra.mxu0 0
    %625 = vmatprep.mubr.bf16.mxu0 0
    %626 = vmatmul.mubr.bf16.gmra.mxu0 %v391
    %v627 = vpop.f32.mrf.mxu0
    %v628 = vadd.f32 0.0, %v627
    %v629 = vpop.f32.mrf.mxu0
    %v630 = vpop.f32.mrf.mxu0
    %v631 = vpop.f32.mrf.mxu0
    %632 = vdwg.mxu0
    %v633 = vpack.c.bf16 %v390, %v390
    %v634 = vld [vmem:[%s6] sm:$0xff]
    %v635 = vld [vmem:[%s6 + $0x8] sm:$0xff]
    %v636 = vld [vmem:[%s6 + $0x10] sm:$0xff]
    %v637 = vld [vmem:[%s6 + $0x18] sm:$0xff]
    %v638 = vld [vmem:[%s6 + $0x20] sm:$0xff]
    %v639 = vld [vmem:[%s6 + $0x28] sm:$0xff]
    %v640 = vld [vmem:[%s6 + $0x30] sm:$0xff]
    %v641 = vld [vmem:[%s6 + $0x38] sm:$0xff]
    %v642 = vld [vmem:[%s6 + $0x40] sm:$0xff]
    %v643 = vld [vmem:[%s6 + $0x48] sm:$0xff]
    %v644 = vld [vmem:[%s6 + $0x50] sm:$0xff]
    %v645 = vld [vmem:[%s6 + $0x58] sm:$0xff]
    %v646 = vld [vmem:[%s6 + $0x60] sm:$0xff]
    %v647 = vld [vmem:[%s6 + $0x68] sm:$0xff]
    %v648 = vld [vmem:[%s6 + $0x70] sm:$0xff]
    %v649 = vld [vmem:[%s6 + $0x78] sm:$0xff]
    %v666 = vunpack.c.l.b16 %v634
    %v667 = vunpack.c.h.b16 %v634
    %v668 = vunpack.c.l.b16 %v635
    %v669 = vunpack.c.h.b16 %v635
    %v670 = vunpack.c.l.b16 %v636
    %v671 = vunpack.c.h.b16 %v636
    %v672 = vunpack.c.l.b16 %v637
    %v673 = vunpack.c.h.b16 %v637
    %v674 = vunpack.c.l.b16 %v638
    %v675 = vunpack.c.h.b16 %v638
    %v676 = vunpack.c.l.b16 %v639
    %v677 = vunpack.c.h.b16 %v639
    %v678 = vunpack.c.l.b16 %v640
    %v679 = vunpack.c.h.b16 %v640
    %v680 = vunpack.c.l.b16 %v641
    %v681 = vunpack.c.h.b16 %v641
    %v682 = vunpack.c.l.b16 %v642
    %v683 = vunpack.c.h.b16 %v642
    %v684 = vunpack.c.l.b16 %v643
    %v685 = vunpack.c.h.b16 %v643
    %v686 = vunpack.c.l.b16 %v644
    %v687 = vunpack.c.h.b16 %v644
    %v688 = vunpack.c.l.b16 %v645
    %v689 = vunpack.c.h.b16 %v645
    %v690 = vunpack.c.l.b16 %v646
    %v691 = vunpack.c.h.b16 %v646
    %v692 = vunpack.c.l.b16 %v647
    %v693 = vunpack.c.h.b16 %v647
    %v694 = vunpack.c.l.b16 %v648
    %v695 = vunpack.c.h.b16 %v648
    %v696 = vunpack.c.l.b16 %v649
    %v697 = vunpack.c.h.b16 %v649
    %v698 = vpack.c.b16 %v668, %v666
    %v699 = vpack.c.b16 %v669, %v667
    %v700 = vpack.c.b16 %v672, %v670
    %v701 = vpack.c.b16 %v673, %v671
    %v702 = vpack.c.b16 %v676, %v674
    %v703 = vpack.c.b16 %v677, %v675
    %v704 = vpack.c.b16 %v680, %v678
    %v705 = vpack.c.b16 %v681, %v679
    %v706 = vpack.c.b16 %v684, %v682
    %v707 = vpack.c.b16 %v685, %v683
    %v708 = vpack.c.b16 %v688, %v686
    %v709 = vpack.c.b16 %v689, %v687
    %v710 = vpack.c.b16 %v692, %v690
    %v711 = vpack.c.b16 %v693, %v691
    %v712 = vpack.c.b16 %v696, %v694
    %v713 = vpack.c.b16 %v697, %v695
    %730 = vmatprep.subr.bf16.mxu0 %v713
    %731 = vmatpush1.bf16.msra.mxu0 %v712
    %732 = vmatprep.subr.bf16.mxu0 %v711
    %733 = vmatpush1.bf16.msra.mxu0 %v710
    %734 = vmatprep.subr.bf16.mxu0 %v709
    %735 = vmatpush1.bf16.msra.mxu0 %v708
    %736 = vmatprep.subr.bf16.mxu0 %v707
    %737 = vmatpush1.bf16.msra.mxu0 %v706
    %738 = vmatprep.subr.bf16.mxu0 %v705
    %739 = vmatpush1.bf16.msra.mxu0 %v704
    %740 = vmatprep.subr.bf16.mxu0 %v703
    %741 = vmatpush1.bf16.msra.mxu0 %v702
    %742 = vmatprep.subr.bf16.mxu0 %v701
    %743 = vmatpush1.bf16.msra.mxu0 %v700
    %744 = vmatprep.subr.bf16.mxu0 %v699
    %745 = vmatpush1.bf16.msra.mxu0 %v698
    %746 = vmatprep.subr.bf16.mxu0 0
    %747 = vmatpush2.bf16.msra.mxu0 0
    %748 = vmatprep.subr.bf16.mxu0 0
    %749 = vmatpush2.bf16.msra.mxu0 0
    %750 = vmatprep.subr.bf16.mxu0 0
    %751 = vmatpush2.bf16.msra.mxu0 0
    %752 = vmatprep.subr.bf16.mxu0 0
    %753 = vmatpush2.bf16.msra.mxu0 0
    %754 = vmatprep.subr.bf16.mxu0 0
    %755 = vmatpush2.bf16.msra.mxu0 0
    %756 = vmatprep.subr.bf16.mxu0 0
    %757 = vmatpush2.bf16.msra.mxu0 0
    %758 = vmatprep.subr.bf16.mxu0 0
    %759 = vmatpush2.bf16.msra.mxu0 0
    %760 = vmatprep.subr.bf16.mxu0 0
    %761 = vmatpush2.bf16.msra.mxu0 0
    %762 = vmatprep.mubr.bf16.mxu0 0
    %763 = vmatmul.mubr.bf16.gmra.mxu0 %v633
    %v764 = vpop.f32.mrf.mxu0
    %v765 = vadd.f32 0.0, %v764
    %v766 = vpop.f32.mrf.mxu0
    %v767 = vadd.f32 0.0, %v766
    %v768 = vpop.f32.mrf.mxu0
    %v769 = vpop.f32.mrf.mxu0
    %770 = vdwg.mxu0
    %v771 = vadd.f32 %v587, %v765
    %v772 = vadd.f32 %v589, %v767
    %v773 = vld [vmem:[%s8] sm:$0x3]
    %v775 = vlaneseq
    %v776 = vshrl.u32 %v775, 7
    %v777 = vsub.s32 0, %v776
    %v778 = vrot.slane %v773, %v777
    %v779 = vlaneseq
    %v780 = vshrl.u32 %v779, 7
    %v781 = vsub.s32 1, %v780
    %v782 = vrot.slane %v773, %v781
    %v785 = vadd.f32 %v771, %v778
    %v786 = vadd.f32 %v772, %v782
    %v787 = vxor.u32 %v785, 2147483648
    %v788 = vxor.u32 %v786, 2147483648
    %v789 = vmul.f32 %v787, 1.442695
    %v790 = vpow.pop %v789
    %v791 = vmul.f32 %v788, 1.442695
    %v792 = vpow.pop %v791
    %v793 = vadd.f32 %v790, 1.0
    %v794 = vadd.f32 %v792, 1.0
    %v795 = vrcp.pop %v793
    %v796 = vmul.f32 1.0, %v795
    %v797 = vrcp.pop %v794
    %v798 = vmul.f32 1.0, %v797
    %v799 = vmul.f32 %v798, %v390
    %v800 = vpack.c.bf16 %v799, %v799
    %v801 = vld [vmem:[#allocation8] sm:$0xf]
    %v802 = vld [vmem:[#allocation8 + $0x4] sm:$0xf]
    %v803 = vld [vmem:[#allocation8 + $0x8] sm:$0xf]
    %v804 = vld [vmem:[#allocation8 + $0xc] sm:$0xf]
    %v805 = vld [vmem:[#allocation8 + $0x10] sm:$0xf]
    %v806 = vld [vmem:[#allocation8 + $0x14] sm:$0xf]
    %v807 = vld [vmem:[#allocation8 + $0x18] sm:$0xf]
    %v808 = vld [vmem:[#allocation8 + $0x1c] sm:$0xf]
    %v809 = vld [vmem:[#allocation8 + $0x20] sm:$0xf]
    %v810 = vld [vmem:[#allocation8 + $0x24] sm:$0xf]
    %v811 = vld [vmem:[#allocation8 + $0x28] sm:$0xf]
    %v812 = vld [vmem:[#allocation8 + $0x2c] sm:$0xf]
    %v813 = vld [vmem:[#allocation8 + $0x30] sm:$0xf]
    %v814 = vld [vmem:[#allocation8 + $0x34] sm:$0xf]
    %v815 = vld [vmem:[#allocation8 + $0x38] sm:$0xf]
    %v816 = vld [vmem:[#allocation8 + $0x3c] sm:$0xf]
    %v833 = vunpack.c.l.b16 %v801
    %v834 = vunpack.c.l.b16 %v802
    %v835 = vunpack.c.l.b16 %v803
    %v836 = vunpack.c.l.b16 %v804
    %v837 = vunpack.c.l.b16 %v805
    %v838 = vunpack.c.l.b16 %v806
    %v839 = vunpack.c.l.b16 %v807
    %v840 = vunpack.c.l.b16 %v808
    %v841 = vunpack.c.l.b16 %v809
    %v842 = vunpack.c.l.b16 %v810
    %v843 = vunpack.c.l.b16 %v811
    %v844 = vunpack.c.l.b16 %v812
    %v845 = vunpack.c.l.b16 %v813
    %v846 = vunpack.c.l.b16 %v814
    %v847 = vunpack.c.l.b16 %v815
    %v848 = vunpack.c.l.b16 %v816
    %v849 = vpack.c.b16 %v834, %v833
    %v850 = vpack.c.b16 %v836, %v835
    %v851 = vpack.c.b16 %v838, %v837
    %v852 = vpack.c.b16 %v840, %v839
    %v853 = vpack.c.b16 %v842, %v841
    %v854 = vpack.c.b16 %v844, %v843
    %v855 = vpack.c.b16 %v846, %v845
    %v856 = vpack.c.b16 %v848, %v847
    %865 = vmatprep.subr.bf16.mxu0 0
    %866 = vmatpush1.bf16.msra.mxu0 %v856
    %867 = vmatprep.subr.bf16.mxu0 0
    %868 = vmatpush1.bf16.msra.mxu0 %v855
    %869 = vmatprep.subr.bf16.mxu0 0
    %870 = vmatpush1.bf16.msra.mxu0 %v854
    %871 = vmatprep.subr.bf16.mxu0 0
    %872 = vmatpush1.bf16.msra.mxu0 %v853
    %873 = vmatprep.subr.bf16.mxu0 0
    %874 = vmatpush1.bf16.msra.mxu0 %v852
    %875 = vmatprep.subr.bf16.mxu0 0
    %876 = vmatpush1.bf16.msra.mxu0 %v851
    %877 = vmatprep.subr.bf16.mxu0 0
    %878 = vmatpush1.bf16.msra.mxu0 %v850
    %879 = vmatprep.subr.bf16.mxu0 0
    %880 = vmatpush1.bf16.msra.mxu0 %v849
    %881 = vmatprep.subr.bf16.mxu0 0
    %882 = vmatpush2.bf16.msra.mxu0 0
    %883 = vmatprep.subr.bf16.mxu0 0
    %884 = vmatpush2.bf16.msra.mxu0 0
    %885 = vmatprep.subr.bf16.mxu0 0
    %886 = vmatpush2.bf16.msra.mxu0 0
    %887 = vmatprep.subr.bf16.mxu0 0
    %888 = vmatpush2.bf16.msra.mxu0 0
    %889 = vmatprep.subr.bf16.mxu0 0
    %890 = vmatpush2.bf16.msra.mxu0 0
    %891 = vmatprep.subr.bf16.mxu0 0
    %892 = vmatpush2.bf16.msra.mxu0 0
    %893 = vmatprep.subr.bf16.mxu0 0
    %894 = vmatpush2.bf16.msra.mxu0 0
    %895 = vmatprep.subr.bf16.mxu0 0
    %896 = vmatpush2.bf16.msra.mxu0 0
    %897 = vmatprep.mubr.bf16.mxu0 0
    %898 = vmatmul.mubr.bf16.gmra.mxu0 %v800
    %v899 = vpop.f32.mrf.mxu0
    %v900 = vadd.f32 0.0, %v899
    %v901 = vpop.f32.mrf.mxu0
    %v902 = vpop.f32.mrf.mxu0
    %v903 = vpop.f32.mrf.mxu0
    %904 = vdwg.mxu0
    %v905 = vadd.f32 %v628, %v900
    %v906 = vld [vmem:[%s9] sm:$0x1]
    %v908 = vlaneseq
    %v909 = vshrl.u32 %v908, 7
    %v910 = vsub.s32 0, %v909
    %v911 = vrot.slane %v906, %v910
    %v913 = vadd.f32 %v905, %v911
    %v914 = vtanh.pop %v913
    %v915 = vmul.f32 %v796, %v390
    %v916 = vsub.f32 1.0, %v796
    %v917 = vmul.f32 %v916, %v914
    %v918 = vadd.f32 %v915, %v917
    %919 = vst [vmem:[%s389] sm:$0xff] %v918
    %920 = vst [vmem:[#allocation3] sm:$0xff] %v918
    %v921 = vld [vmem:[#allocation2] sm:$0xff]
    %s922 = scalar_lea.vmem %s0, 12
    %v923 = vld [vmem:[%s922] sm:$0xff]
    %v924 = vld [vmem:[%s922 + $0x8] sm:$0xf]
    %v925 = vunpack.c.l.bf16 %v923
    %v926 = vunpack.c.h.bf16 %v923
    %v927 = vunpack.c.l.bf16 %v924
    %v928 = vpack.c.bf16 %v921, %v921
    %v929 = vld [vmem:[#allocation4] sm:$0xff]
    %v930 = vld [vmem:[#allocation4 + $0x8] sm:$0xff]
    %v931 = vld [vmem:[#allocation4 + $0x10] sm:$0xff]
    %v932 = vld [vmem:[#allocation4 + $0x18] sm:$0xff]
    %v933 = vld [vmem:[#allocation4 + $0x20] sm:$0xff]
    %v934 = vld [vmem:[#allocation4 + $0x28] sm:$0xff]
    %v935 = vld [vmem:[#allocation4 + $0x30] sm:$0xff]
    %v936 = vld [vmem:[#allocation4 + $0x38] sm:$0xff]
    %v937 = vld [vmem:[#allocation4 + $0x40] sm:$0xff]
    %v938 = vld [vmem:[#allocation4 + $0x48] sm:$0xff]
    %v939 = vld [vmem:[#allocation4 + $0x50] sm:$0xff]
    %v940 = vld [vmem:[#allocation4 + $0x58] sm:$0xff]
    %v941 = vld [vmem:[#allocation4 + $0x60] sm:$0xff]
    %v942 = vld [vmem:[#allocation4 + $0x68] sm:$0xff]
    %v943 = vld [vmem:[#allocation4 + $0x70] sm:$0xff]
    %v944 = vld [vmem:[#allocation4 + $0x78] sm:$0xff]
    %v961 = vunpack.c.l.b16 %v929
    %v962 = vunpack.c.h.b16 %v929
    %v963 = vunpack.c.l.b16 %v930
    %v964 = vunpack.c.h.b16 %v930
    %v965 = vunpack.c.l.b16 %v931
    %v966 = vunpack.c.h.b16 %v931
    %v967 = vunpack.c.l.b16 %v932
    %v968 = vunpack.c.h.b16 %v932
    %v969 = vunpack.c.l.b16 %v933
    %v970 = vunpack.c.h.b16 %v933
    %v971 = vunpack.c.l.b16 %v934
    %v972 = vunpack.c.h.b16 %v934
    %v973 = vunpack.c.l.b16 %v935
    %v974 = vunpack.c.h.b16 %v935
    %v975 = vunpack.c.l.b16 %v936
    %v976 = vunpack.c.h.b16 %v936
    %v977 = vunpack.c.l.b16 %v937
    %v978 = vunpack.c.h.b16 %v937
    %v979 = vunpack.c.l.b16 %v938
    %v980 = vunpack.c.h.b16 %v938
    %v981 = vunpack.c.l.b16 %v939
    %v982 = vunpack.c.h.b16 %v939
    %v983 = vunpack.c.l.b16 %v940
    %v984 = vunpack.c.h.b16 %v940
    %v985 = vunpack.c.l.b16 %v941
    %v986 = vunpack.c.h.b16 %v941
    %v987 = vunpack.c.l.b16 %v942
    %v988 = vunpack.c.h.b16 %v942
    %v989 = vunpack.c.l.b16 %v943
    %v990 = vunpack.c.h.b16 %v943
    %v991 = vunpack.c.l.b16 %v944
    %v992 = vunpack.c.h.b16 %v944
    %v993 = vpack.c.b16 %v963, %v961
    %v994 = vpack.c.b16 %v964, %v962
    %v995 = vpack.c.b16 %v967, %v965
    %v996 = vpack.c.b16 %v968, %v966
    %v997 = vpack.c.b16 %v971, %v969
    %v998 = vpack.c.b16 %v972, %v970
    %v999 = vpack.c.b16 %v975, %v973
    %v1000 = vpack.c.b16 %v976, %v974
    %v1001 = vpack.c.b16 %v979, %v977
    %v1002 = vpack.c.b16 %v980, %v978
    %v1003 = vpack.c.b16 %v983, %v981
    %v1004 = vpack.c.b16 %v984, %v982
    %v1005 = vpack.c.b16 %v987, %v985
    %v1006 = vpack.c.b16 %v988, %v986
    %v1007 = vpack.c.b16 %v991, %v989
    %v1008 = vpack.c.b16 %v992, %v990
    %1025 = vmatprep.subr.bf16.mxu0 %v1008
    %1026 = vmatpush1.bf16.msra.mxu0 %v1007
    %1027 = vmatprep.subr.bf16.mxu0 %v1006
    %1028 = vmatpush1.bf16.msra.mxu0 %v1005
    %1029 = vmatprep.subr.bf16.mxu0 %v1004
    %1030 = vmatpush1.bf16.msra.mxu0 %v1003
    %1031 = vmatprep.subr.bf16.mxu0 %v1002
    %1032 = vmatpush1.bf16.msra.mxu0 %v1001
    %1033 = vmatprep.subr.bf16.mxu0 %v1000
    %1034 = vmatpush1.bf16.msra.mxu0 %v999
    %1035 = vmatprep.subr.bf16.mxu0 %v998
    %1036 = vmatpush1.bf16.msra.mxu0 %v997
    %1037 = vmatprep.subr.bf16.mxu0 %v996
    %1038 = vmatpush1.bf16.msra.mxu0 %v995
    %1039 = vmatprep.subr.bf16.mxu0 %v994
    %1040 = vmatpush1.bf16.msra.mxu0 %v993
    %1041 = vmatprep.subr.bf16.mxu0 0
    %1042 = vmatpush2.bf16.msra.mxu0 0
    %1043 = vmatprep.subr.bf16.mxu0 0
    %1044 = vmatpush2.bf16.msra.mxu0 0
    %1045 = vmatprep.subr.bf16.mxu0 0
    %1046 = vmatpush2.bf16.msra.mxu0 0
    %1047 = vmatprep.subr.bf16.mxu0 0
    %1048 = vmatpush2.bf16.msra.mxu0 0
    %1049 = vmatprep.subr.bf16.mxu0 0
    %1050 = vmatpush2.bf16.msra.mxu0 0
    %1051 = vmatprep.subr.bf16.mxu0 0
    %1052 = vmatpush2.bf16.msra.mxu0 0
    %1053 = vmatprep.subr.bf16.mxu0 0
    %1054 = vmatpush2.bf16.msra.mxu0 0
    %1055 = vmatprep.subr.bf16.mxu0 0
    %1056 = vmatpush2.bf16.msra.mxu0 0
    %1057 = vmatprep.mubr.bf16.mxu0 0
    %1058 = vmatmul.mubr.bf16.gmra.mxu0 %v928
    %v1059 = vpop.f32.mrf.mxu0
    %v1060 = vadd.f32 0.0, %v1059
    %v1061 = vpop.f32.mrf.mxu0
    %v1062 = vadd.f32 0.0, %v1061
    %v1063 = vpop.f32.mrf.mxu0
    %v1064 = vpop.f32.mrf.mxu0
    %1065 = vdwg.mxu0
    %v1066 = vadd.f32 %v925, %v1060
    %v1067 = vadd.f32 %v926, %v1062
    %v1068 = vld [vmem:[%s4] sm:$0x3]
    %v1070 = vlaneseq
    %v1071 = vshrl.u32 %v1070, 7
    %v1072 = vsub.s32 0, %v1071
    %v1073 = vrot.slane %v1068, %v1072
    %v1074 = vlaneseq
    %v1075 = vshrl.u32 %v1074, 7
    %v1076 = vsub.s32 1, %v1075
    %v1077 = vrot.slane %v1068, %v1076
    %v1080 = vadd.f32 %v1066, %v1073
    %v1081 = vadd.f32 %v1067, %v1077
    %v1082 = vxor.u32 %v1080, 2147483648
    %v1083 = vxor.u32 %v1081, 2147483648
    %v1084 = vmul.f32 %v1082, 1.442695
    %v1085 = vpow.pop %v1084
    %v1086 = vmul.f32 %v1083, 1.442695
    %v1087 = vpow.pop %v1086
    %v1088 = vadd.f32 %v1085, 1.0
    %v1089 = vadd.f32 %v1087, 1.0
    %v1090 = vrcp.pop %v1088
    %v1091 = vmul.f32 1.0, %v1090
    %v1092 = vrcp.pop %v1089
    %v1093 = vmul.f32 1.0, %v1092
    %v1094 = vmul.f32 %v1093, %v921
    %v1095 = vpack.c.bf16 %v1094, %v1094
    %v1096 = vld [vmem:[#allocation6] sm:$0xf]
    %v1097 = vld [vmem:[#allocation6 + $0x4] sm:$0xf]
    %v1098 = vld [vmem:[#allocation6 + $0x8] sm:$0xf]
    %v1099 = vld [vmem:[#allocation6 + $0xc] sm:$0xf]
    %v1100 = vld [vmem:[#allocation6 + $0x10] sm:$0xf]
    %v1101 = vld [vmem:[#allocation6 + $0x14] sm:$0xf]
    %v1102 = vld [vmem:[#allocation6 + $0x18] sm:$0xf]
    %v1103 = vld [vmem:[#allocation6 + $0x1c] sm:$0xf]
    %v1104 = vld [vmem:[#allocation6 + $0x20] sm:$0xf]
    %v1105 = vld [vmem:[#allocation6 + $0x24] sm:$0xf]
    %v1106 = vld [vmem:[#allocation6 + $0x28] sm:$0xf]
    %v1107 = vld [vmem:[#allocation6 + $0x2c] sm:$0xf]
    %v1108 = vld [vmem:[#allocation6 + $0x30] sm:$0xf]
    %v1109 = vld [vmem:[#allocation6 + $0x34] sm:$0xf]
    %v1110 = vld [vmem:[#allocation6 + $0x38] sm:$0xf]
    %v1111 = vld [vmem:[#allocation6 + $0x3c] sm:$0xf]
    %v1128 = vunpack.c.l.b16 %v1096
    %v1129 = vunpack.c.l.b16 %v1097
    %v1130 = vunpack.c.l.b16 %v1098
    %v1131 = vunpack.c.l.b16 %v1099
    %v1132 = vunpack.c.l.b16 %v1100
    %v1133 = vunpack.c.l.b16 %v1101
    %v1134 = vunpack.c.l.b16 %v1102
    %v1135 = vunpack.c.l.b16 %v1103
    %v1136 = vunpack.c.l.b16 %v1104
    %v1137 = vunpack.c.l.b16 %v1105
    %v1138 = vunpack.c.l.b16 %v1106
    %v1139 = vunpack.c.l.b16 %v1107
    %v1140 = vunpack.c.l.b16 %v1108
    %v1141 = vunpack.c.l.b16 %v1109
    %v1142 = vunpack.c.l.b16 %v1110
    %v1143 = vunpack.c.l.b16 %v1111
    %v1144 = vpack.c.b16 %v1129, %v1128
    %v1145 = vpack.c.b16 %v1131, %v1130
    %v1146 = vpack.c.b16 %v1133, %v1132
    %v1147 = vpack.c.b16 %v1135, %v1134
    %v1148 = vpack.c.b16 %v1137, %v1136
    %v1149 = vpack.c.b16 %v1139, %v1138
    %v1150 = vpack.c.b16 %v1141, %v1140
    %v1151 = vpack.c.b16 %v1143, %v1142
    %1160 = vmatprep.subr.bf16.mxu0 0
    %1161 = vmatpush1.bf16.msra.mxu0 %v1151
    %1162 = vmatprep.subr.bf16.mxu0 0
    %1163 = vmatpush1.bf16.msra.mxu0 %v1150
    %1164 = vmatprep.subr.bf16.mxu0 0
    %1165 = vmatpush1.bf16.msra.mxu0 %v1149
    %1166 = vmatprep.subr.bf16.mxu0 0
    %1167 = vmatpush1.bf16.msra.mxu0 %v1148
    %1168 = vmatprep.subr.bf16.mxu0 0
    %1169 = vmatpush1.bf16.msra.mxu0 %v1147
    %1170 = vmatprep.subr.bf16.mxu0 0
    %1171 = vmatpush1.bf16.msra.mxu0 %v1146
    %1172 = vmatprep.subr.bf16.mxu0 0
    %1173 = vmatpush1.bf16.msra.mxu0 %v1145
    %1174 = vmatprep.subr.bf16.mxu0 0
    %1175 = vmatpush1.bf16.msra.mxu0 %v1144
    %1176 = vmatprep.subr.bf16.mxu0 0
    %1177 = vmatpush2.bf16.msra.mxu0 0
    %1178 = vmatprep.subr.bf16.mxu0 0
    %1179 = vmatpush2.bf16.msra.mxu0 0
    %1180 = vmatprep.subr.bf16.mxu0 0
    %1181 = vmatpush2.bf16.msra.mxu0 0
    %1182 = vmatprep.subr.bf16.mxu0 0
    %1183 = vmatpush2.bf16.msra.mxu0 0
    %1184 = vmatprep.subr.bf16.mxu0 0
    %1185 = vmatpush2.bf16.msra.mxu0 0
    %1186 = vmatprep.subr.bf16.mxu0 0
    %1187 = vmatpush2.bf16.msra.mxu0 0
    %1188 = vmatprep.subr.bf16.mxu0 0
    %1189 = vmatpush2.bf16.msra.mxu0 0
    %1190 = vmatprep.subr.bf16.mxu0 0
    %1191 = vmatpush2.bf16.msra.mxu0 0
    %1192 = vmatprep.mubr.bf16.mxu0 0
    %1193 = vmatmul.mubr.bf16.gmra.mxu0 %v1095
    %v1194 = vpop.f32.mrf.mxu0
    %v1195 = vadd.f32 0.0, %v1194
    %v1196 = vpop.f32.mrf.mxu0
    %v1197 = vpop.f32.mrf.mxu0
    %v1198 = vpop.f32.mrf.mxu0
    %1199 = vdwg.mxu0
    %v1200 = vadd.f32 %v927, %v1195
    %v1201 = vld [vmem:[%s5] sm:$0x1]
    %v1203 = vlaneseq
    %v1204 = vshrl.u32 %v1203, 7
    %v1205 = vsub.s32 0, %v1204
    %v1206 = vrot.slane %v1201, %v1205
    %v1208 = vadd.f32 %v1200, %v1206
    %v1209 = vtanh.pop %v1208
    %v1210 = vmul.f32 %v1091, %v921
    %v1211 = vsub.f32 1.0, %v1091
    %v1212 = vmul.f32 %v1211, %v1209
    %v1213 = vadd.f32 %v1210, %v1212
    %1214 = vst [vmem:[#allocation2] sm:$0xff] %v1213
    %v1215 = vld [vmem:[%s389] sm:$0xff]
    %v1216 = vpack.c.bf16 %v1213, %v1213
    %v1217 = vld [vmem:[%s10] sm:$0xff]
    %v1218 = vld [vmem:[%s10 + $0x8] sm:$0xf]
    %v1219 = vld [vmem:[%s10 + $0xc] sm:$0xff]
    %v1220 = vld [vmem:[%s10 + $0x14] sm:$0xf]
    %v1221 = vld [vmem:[%s10 + $0x18] sm:$0xff]
    %v1222 = vld [vmem:[%s10 + $0x20] sm:$0xf]
    %v1223 = vld [vmem:[%s10 + $0x24] sm:$0xff]
    %v1224 = vld [vmem:[%s10 + $0x2c] sm:$0xf]
    %v1225 = vld [vmem:[%s10 + $0x30] sm:$0xff]
    %v1226 = vld [vmem:[%s10 + $0x38] sm:$0xf]
    %v1227 = vld [vmem:[%s10 + $0x3c] sm:$0xff]
    %v1228 = vld [vmem:[%s10 + $0x44] sm:$0xf]
    %v1229 = vld [vmem:[%s10 + $0x48] sm:$0xff]
    %v1230 = vld [vmem:[%s10 + $0x50] sm:$0xf]
    %v1231 = vld [vmem:[%s10 + $0x54] sm:$0xff]
    %v1232 = vld [vmem:[%s10 + $0x5c] sm:$0xf]
    %v1233 = vld [vmem:[%s10 + $0x60] sm:$0xff]
    %v1234 = vld [vmem:[%s10 + $0x68] sm:$0xf]
    %v1235 = vld [vmem:[%s10 + $0x6c] sm:$0xff]
    %v1236 = vld [vmem:[%s10 + $0x74] sm:$0xf]
    %v1237 = vld [vmem:[%s10 + $0x78] sm:$0xff]
    %v1238 = vld [vmem:[%s10 + $0x80] sm:$0xf]
    %v1239 = vld [vmem:[%s10 + $0x84] sm:$0xff]
    %v1240 = vld [vmem:[%s10 + $0x8c] sm:$0xf]
    %v1241 = vld [vmem:[%s10 + $0x90] sm:$0xff]
    %v1242 = vld [vmem:[%s10 + $0x98] sm:$0xf]
    %v1243 = vld [vmem:[%s10 + $0x9c] sm:$0xff]
    %v1244 = vld [vmem:[%s10 + $0xa4] sm:$0xf]
    %v1245 = vld [vmem:[%s10 + $0xa8] sm:$0xff]
    %v1246 = vld [vmem:[%s10 + $0xb0] sm:$0xf]
    %v1247 = vld [vmem:[%s10 + $0xb4] sm:$0xff]
    %v1248 = vld [vmem:[%s10 + $0xbc] sm:$0xf]
    %v1281 = vunpack.c.l.b16 %v1217
    %v1282 = vunpack.c.h.b16 %v1217
    %v1283 = vunpack.c.l.b16 %v1218
    %v1284 = vunpack.c.l.b16 %v1219
    %v1285 = vunpack.c.h.b16 %v1219
    %v1286 = vunpack.c.l.b16 %v1220
    %v1287 = vunpack.c.l.b16 %v1221
    %v1288 = vunpack.c.h.b16 %v1221
    %v1289 = vunpack.c.l.b16 %v1222
    %v1290 = vunpack.c.l.b16 %v1223
    %v1291 = vunpack.c.h.b16 %v1223
    %v1292 = vunpack.c.l.b16 %v1224
    %v1293 = vunpack.c.l.b16 %v1225
    %v1294 = vunpack.c.h.b16 %v1225
    %v1295 = vunpack.c.l.b16 %v1226
    %v1296 = vunpack.c.l.b16 %v1227
    %v1297 = vunpack.c.h.b16 %v1227
    %v1298 = vunpack.c.l.b16 %v1228
    %v1299 = vunpack.c.l.b16 %v1229
    %v1300 = vunpack.c.h.b16 %v1229
    %v1301 = vunpack.c.l.b16 %v1230
    %v1302 = vunpack.c.l.b16 %v1231
    %v1303 = vunpack.c.h.b16 %v1231
    %v1304 = vunpack.c.l.b16 %v1232
    %v1305 = vunpack.c.l.b16 %v1233
    %v1306 = vunpack.c.h.b16 %v1233
    %v1307 = vunpack.c.l.b16 %v1234
    %v1308 = vunpack.c.l.b16 %v1235
    %v1309 = vunpack.c.h.b16 %v1235
    %v1310 = vunpack.c.l.b16 %v1236
    %v1311 = vunpack.c.l.b16 %v1237
    %v1312 = vunpack.c.h.b16 %v1237
    %v1313 = vunpack.c.l.b16 %v1238
    %v1314 = vunpack.c.l.b16 %v1239
    %v1315 = vunpack.c.h.b16 %v1239
    %v1316 = vunpack.c.l.b16 %v1240
    %v1317 = vunpack.c.l.b16 %v1241
    %v1318 = vunpack.c.h.b16 %v1241
    %v1319 = vunpack.c.l.b16 %v1242
    %v1320 = vunpack.c.l.b16 %v1243
    %v1321 = vunpack.c.h.b16 %v1243
    %v1322 = vunpack.c.l.b16 %v1244
    %v1323 = vunpack.c.l.b16 %v1245
    %v1324 = vunpack.c.h.b16 %v1245
    %v1325 = vunpack.c.l.b16 %v1246
    %v1326 = vunpack.c.l.b16 %v1247
    %v1327 = vunpack.c.h.b16 %v1247
    %v1328 = vunpack.c.l.b16 %v1248
    %v1329 = vpack.c.b16 %v1284, %v1281
    %v1330 = vpack.c.b16 %v1285, %v1282
    %v1331 = vpack.c.b16 %v1286, %v1283
    %v1332 = vpack.c.b16 %v1290, %v1287
    %v1333 = vpack.c.b16 %v1291, %v1288
    %v1334 = vpack.c.b16 %v1292, %v1289
    %v1335 = vpack.c.b16 %v1296, %v1293
    %v1336 = vpack.c.b16 %v1297, %v1294
    %v1337 = vpack.c.b16 %v1298, %v1295
    %v1338 = vpack.c.b16 %v1302, %v1299
    %v1339 = vpack.c.b16 %v1303, %v1300
    %v1340 = vpack.c.b16 %v1304, %v1301
    %v1341 = vpack.c.b16 %v1308, %v1305
    %v1342 = vpack.c.b16 %v1309, %v1306
    %v1343 = vpack.c.b16 %v1310, %v1307
    %v1344 = vpack.c.b16 %v1314, %v1311
    %v1345 = vpack.c.b16 %v1315, %v1312
    %v1346 = vpack.c.b16 %v1316, %v1313
    %v1347 = vpack.c.b16 %v1320, %v1317
    %v1348 = vpack.c.b16 %v1321, %v1318
    %v1349 = vpack.c.b16 %v1322, %v1319
    %v1350 = vpack.c.b16 %v1326, %v1323
    %v1351 = vpack.c.b16 %v1327, %v1324
    %v1352 = vpack.c.b16 %v1328, %v1325
    %1377 = vmatprep.subr.bf16.mxu0 %v1351
    %1378 = vmatpush1.bf16.msra.mxu0 %v1350
    %1379 = vmatprep.subr.bf16.mxu0 %v1348
    %1380 = vmatpush1.bf16.msra.mxu0 %v1347
    %1381 = vmatprep.subr.bf16.mxu0 %v1345
    %1382 = vmatpush1.bf16.msra.mxu0 %v1344
    %1383 = vmatprep.subr.bf16.mxu0 %v1342
    %1384 = vmatpush1.bf16.msra.mxu0 %v1341
    %1385 = vmatprep.subr.bf16.mxu0 %v1339
    %1386 = vmatpush1.bf16.msra.mxu0 %v1338
    %1387 = vmatprep.subr.bf16.mxu0 %v1336
    %1388 = vmatpush1.bf16.msra.mxu0 %v1335
    %1389 = vmatprep.subr.bf16.mxu0 %v1333
    %1390 = vmatpush1.bf16.msra.mxu0 %v1332
    %1391 = vmatprep.subr.bf16.mxu0 %v1330
    %1392 = vmatpush1.bf16.msra.mxu0 %v1329
    %1393 = vmatprep.subr.bf16.mxu0 0
    %1394 = vmatpush2.bf16.msra.mxu0 0
    %1395 = vmatprep.subr.bf16.mxu0 0
    %1396 = vmatpush2.bf16.msra.mxu0 0
    %1397 = vmatprep.subr.bf16.mxu0 0
    %1398 = vmatpush2.bf16.msra.mxu0 0
    %1399 = vmatprep.subr.bf16.mxu0 0
    %1400 = vmatpush2.bf16.msra.mxu0 0
    %1401 = vmatprep.subr.bf16.mxu0 0
    %1402 = vmatpush2.bf16.msra.mxu0 0
    %1403 = vmatprep.subr.bf16.mxu0 0
    %1404 = vmatpush2.bf16.msra.mxu0 0
    %1405 = vmatprep.subr.bf16.mxu0 0
    %1406 = vmatpush2.bf16.msra.mxu0 0
    %1407 = vmatprep.subr.bf16.mxu0 0
    %1408 = vmatpush2.bf16.msra.mxu0 0
    %1409 = vmatprep.mubr.bf16.mxu0 0
    %1410 = vmatmul.mubr.bf16.gmra.mxu0 %v1216
    %v1411 = vpop.f32.mrf.mxu0
    %v1412 = vadd.f32 0.0, %v1411
    %v1413 = vpop.f32.mrf.mxu0
    %v1414 = vadd.f32 0.0, %v1413
    %v1415 = vpop.f32.mrf.mxu0
    %v1416 = vpop.f32.mrf.mxu0
    %1417 = vdwg.mxu0
    %1418 = vmatprep.subr.bf16.mxu0 0
    %1419 = vmatpush1.bf16.msra.mxu0 %v1352
    %1420 = vmatprep.subr.bf16.mxu0 0
    %1421 = vmatpush1.bf16.msra.mxu0 %v1349
    %1422 = vmatprep.subr.bf16.mxu0 0
    %1423 = vmatpush1.bf16.msra.mxu0 %v1346
    %1424 = vmatprep.subr.bf16.mxu0 0
    %1425 = vmatpush1.bf16.msra.mxu0 %v1343
    %1426 = vmatprep.subr.bf16.mxu0 0
    %1427 = vmatpush1.bf16.msra.mxu0 %v1340
    %1428 = vmatprep.subr.bf16.mxu0 0
    %1429 = vmatpush1.bf16.msra.mxu0 %v1337
    %1430 = vmatprep.subr.bf16.mxu0 0
    %1431 = vmatpush1.bf16.msra.mxu0 %v1334
    %1432 = vmatprep.subr.bf16.mxu0 0
    %1433 = vmatpush1.bf16.msra.mxu0 %v1331
    %1434 = vmatprep.subr.bf16.mxu0 0
    %1435 = vmatpush2.bf16.msra.mxu0 0
    %1436 = vmatprep.subr.bf16.mxu0 0
    %1437 = vmatpush2.bf16.msra.mxu0 0
    %1438 = vmatprep.subr.bf16.mxu0 0
    %1439 = vmatpush2.bf16.msra.mxu0 0
    %1440 = vmatprep.subr.bf16.mxu0 0
    %1441 = vmatpush2.bf16.msra.mxu0 0
    %1442 = vmatprep.subr.bf16.mxu0 0
    %1443 = vmatpush2.bf16.msra.mxu0 0
    %1444 = vmatprep.subr.bf16.mxu0 0
    %1445 = vmatpush2.bf16.msra.mxu0 0
    %1446 = vmatprep.subr.bf16.mxu0 0
    %1447 = vmatpush2.bf16.msra.mxu0 0
    %1448 = vmatprep.subr.bf16.mxu0 0
    %1449 = vmatpush2.bf16.msra.mxu0 0
    %1450 = vmatprep.mubr.bf16.mxu0 0
    %1451 = vmatmul.mubr.bf16.gmra.mxu0 %v1216
    %v1452 = vpop.f32.mrf.mxu0
    %v1453 = vadd.f32 0.0, %v1452
    %v1454 = vpop.f32.mrf.mxu0
    %v1455 = vpop.f32.mrf.mxu0
    %v1456 = vpop.f32.mrf.mxu0
    %1457 = vdwg.mxu0
    %v1458 = vpack.c.bf16 %v1215, %v1215
    %v1459 = vld [vmem:[%s6] sm:$0xff]
    %v1460 = vld [vmem:[%s6 + $0x8] sm:$0xff]
    %v1461 = vld [vmem:[%s6 + $0x10] sm:$0xff]
    %v1462 = vld [vmem:[%s6 + $0x18] sm:$0xff]
    %v1463 = vld [vmem:[%s6 + $0x20] sm:$0xff]
    %v1464 = vld [vmem:[%s6 + $0x28] sm:$0xff]
    %v1465 = vld [vmem:[%s6 + $0x30] sm:$0xff]
    %v1466 = vld [vmem:[%s6 + $0x38] sm:$0xff]
    %v1467 = vld [vmem:[%s6 + $0x40] sm:$0xff]
    %v1468 = vld [vmem:[%s6 + $0x48] sm:$0xff]
    %v1469 = vld [vmem:[%s6 + $0x50] sm:$0xff]
    %v1470 = vld [vmem:[%s6 + $0x58] sm:$0xff]
    %v1471 = vld [vmem:[%s6 + $0x60] sm:$0xff]
    %v1472 = vld [vmem:[%s6 + $0x68] sm:$0xff]
    %v1473 = vld [vmem:[%s6 + $0x70] sm:$0xff]
    %v1474 = vld [vmem:[%s6 + $0x78] sm:$0xff]
    %v1491 = vunpack.c.l.b16 %v1459
    %v1492 = vunpack.c.h.b16 %v1459
    %v1493 = vunpack.c.l.b16 %v1460
    %v1494 = vunpack.c.h.b16 %v1460
    %v1495 = vunpack.c.l.b16 %v1461
    %v1496 = vunpack.c.h.b16 %v1461
    %v1497 = vunpack.c.l.b16 %v1462
    %v1498 = vunpack.c.h.b16 %v1462
    %v1499 = vunpack.c.l.b16 %v1463
    %v1500 = vunpack.c.h.b16 %v1463
    %v1501 = vunpack.c.l.b16 %v1464
    %v1502 = vunpack.c.h.b16 %v1464
    %v1503 = vunpack.c.l.b16 %v1465
    %v1504 = vunpack.c.h.b16 %v1465
    %v1505 = vunpack.c.l.b16 %v1466
    %v1506 = vunpack.c.h.b16 %v1466
    %v1507 = vunpack.c.l.b16 %v1467
    %v1508 = vunpack.c.h.b16 %v1467
    %v1509 = vunpack.c.l.b16 %v1468
    %v1510 = vunpack.c.h.b16 %v1468
    %v1511 = vunpack.c.l.b16 %v1469
    %v1512 = vunpack.c.h.b16 %v1469
    %v1513 = vunpack.c.l.b16 %v1470
    %v1514 = vunpack.c.h.b16 %v1470
    %v1515 = vunpack.c.l.b16 %v1471
    %v1516 = vunpack.c.h.b16 %v1471
    %v1517 = vunpack.c.l.b16 %v1472
    %v1518 = vunpack.c.h.b16 %v1472
    %v1519 = vunpack.c.l.b16 %v1473
    %v1520 = vunpack.c.h.b16 %v1473
    %v1521 = vunpack.c.l.b16 %v1474
    %v1522 = vunpack.c.h.b16 %v1474
    %v1523 = vpack.c.b16 %v1493, %v1491
    %v1524 = vpack.c.b16 %v1494, %v1492
    %v1525 = vpack.c.b16 %v1497, %v1495
    %v1526 = vpack.c.b16 %v1498, %v1496
    %v1527 = vpack.c.b16 %v1501, %v1499
    %v1528 = vpack.c.b16 %v1502, %v1500
    %v1529 = vpack.c.b16 %v1505, %v1503
    %v1530 = vpack.c.b16 %v1506, %v1504
    %v1531 = vpack.c.b16 %v1509, %v1507
    %v1532 = vpack.c.b16 %v1510, %v1508
    %v1533 = vpack.c.b16 %v1513, %v1511
    %v1534 = vpack.c.b16 %v1514, %v1512
    %v1535 = vpack.c.b16 %v1517, %v1515
    %v1536 = vpack.c.b16 %v1518, %v1516
    %v1537 = vpack.c.b16 %v1521, %v1519
    %v1538 = vpack.c.b16 %v1522, %v1520
    %1555 = vmatprep.subr.bf16.mxu0 %v1538
    %1556 = vmatpush1.bf16.msra.mxu0 %v1537
    %1557 = vmatprep.subr.bf16.mxu0 %v1536
    %1558 = vmatpush1.bf16.msra.mxu0 %v1535
    %1559 = vmatprep.subr.bf16.mxu0 %v1534
    %1560 = vmatpush1.bf16.msra.mxu0 %v1533
    %1561 = vmatprep.subr.bf16.mxu0 %v1532
    %1562 = vmatpush1.bf16.msra.mxu0 %v1531
    %1563 = vmatprep.subr.bf16.mxu0 %v1530
    %1564 = vmatpush1.bf16.msra.mxu0 %v1529
    %1565 = vmatprep.subr.bf16.mxu0 %v1528
    %1566 = vmatpush1.bf16.msra.mxu0 %v1527
    %1567 = vmatprep.subr.bf16.mxu0 %v1526
    %1568 = vmatpush1.bf16.msra.mxu0 %v1525
    %1569 = vmatprep.subr.bf16.mxu0 %v1524
    %1570 = vmatpush1.bf16.msra.mxu0 %v1523
    %1571 = vmatprep.subr.bf16.mxu0 0
    %1572 = vmatpush2.bf16.msra.mxu0 0
    %1573 = vmatprep.subr.bf16.mxu0 0
    %1574 = vmatpush2.bf16.msra.mxu0 0
    %1575 = vmatprep.subr.bf16.mxu0 0
    %1576 = vmatpush2.bf16.msra.mxu0 0
    %1577 = vmatprep.subr.bf16.mxu0 0
    %1578 = vmatpush2.bf16.msra.mxu0 0
    %1579 = vmatprep.subr.bf16.mxu0 0
    %1580 = vmatpush2.bf16.msra.mxu0 0
    %1581 = vmatprep.subr.bf16.mxu0 0
    %1582 = vmatpush2.bf16.msra.mxu0 0
    %1583 = vmatprep.subr.bf16.mxu0 0
    %1584 = vmatpush2.bf16.msra.mxu0 0
    %1585 = vmatprep.subr.bf16.mxu0 0
    %1586 = vmatpush2.bf16.msra.mxu0 0
    %1587 = vmatprep.mubr.bf16.mxu0 0
    %1588 = vmatmul.mubr.bf16.gmra.mxu0 %v1458
    %v1589 = vpop.f32.mrf.mxu0
    %v1590 = vadd.f32 0.0, %v1589
    %v1591 = vpop.f32.mrf.mxu0
    %v1592 = vadd.f32 0.0, %v1591
    %v1593 = vpop.f32.mrf.mxu0
    %v1594 = vpop.f32.mrf.mxu0
    %1595 = vdwg.mxu0
    %v1596 = vadd.f32 %v1412, %v1590
    %v1597 = vadd.f32 %v1414, %v1592
    %v1598 = vld [vmem:[%s8] sm:$0x3]
    %v1600 = vlaneseq
    %v1601 = vshrl.u32 %v1600, 7
    %v1602 = vsub.s32 0, %v1601
    %v1603 = vrot.slane %v1598, %v1602
    %v1604 = vlaneseq
    %v1605 = vshrl.u32 %v1604, 7
    %v1606 = vsub.s32 1, %v1605
    %v1607 = vrot.slane %v1598, %v1606
    %v1610 = vadd.f32 %v1596, %v1603
    %v1611 = vadd.f32 %v1597, %v1607
    %v1612 = vxor.u32 %v1610, 2147483648
    %v1613 = vxor.u32 %v1611, 2147483648
    %v1614 = vmul.f32 %v1612, 1.442695
    %v1615 = vpow.pop %v1614
    %v1616 = vmul.f32 %v1613, 1.442695
    %v1617 = vpow.pop %v1616
    %v1618 = vadd.f32 %v1615, 1.0
    %v1619 = vadd.f32 %v1617, 1.0
    %v1620 = vrcp.pop %v1618
    %v1621 = vmul.f32 1.0, %v1620
    %v1622 = vrcp.pop %v1619
    %v1623 = vmul.f32 1.0, %v1622
    %v1624 = vmul.f32 %v1623, %v1215
    %v1625 = vpack.c.bf16 %v1624, %v1624
    %v1626 = vld [vmem:[#allocation8] sm:$0xf]
    %v1627 = vld [vmem:[#allocation8 + $0x4] sm:$0xf]
    %v1628 = vld [vmem:[#allocation8 + $0x8] sm:$0xf]
    %v1629 = vld [vmem:[#allocation8 + $0xc] sm:$0xf]
    %v1630 = vld [vmem:[#allocation8 + $0x10] sm:$0xf]
    %v1631 = vld [vmem:[#allocation8 + $0x14] sm:$0xf]
    %v1632 = vld [vmem:[#allocation8 + $0x18] sm:$0xf]
    %v1633 = vld [vmem:[#allocation8 + $0x1c] sm:$0xf]
    %v1634 = vld [vmem:[#allocation8 + $0x20] sm:$0xf]
    %v1635 = vld [vmem:[#allocation8 + $0x24] sm:$0xf]
    %v1636 = vld [vmem:[#allocation8 + $0x28] sm:$0xf]
    %v1637 = vld [vmem:[#allocation8 + $0x2c] sm:$0xf]
    %v1638 = vld [vmem:[#allocation8 + $0x30] sm:$0xf]
    %v1639 = vld [vmem:[#allocation8 + $0x34] sm:$0xf]
    %v1640 = vld [vmem:[#allocation8 + $0x38] sm:$0xf]
    %v1641 = vld [vmem:[#allocation8 + $0x3c] sm:$0xf]
    %v1658 = vunpack.c.l.b16 %v1626
    %v1659 = vunpack.c.l.b16 %v1627
    %v1660 = vunpack.c.l.b16 %v1628
    %v1661 = vunpack.c.l.b16 %v1629
    %v1662 = vunpack.c.l.b16 %v1630
    %v1663 = vunpack.c.l.b16 %v1631
    %v1664 = vunpack.c.l.b16 %v1632
    %v1665 = vunpack.c.l.b16 %v1633
    %v1666 = vunpack.c.l.b16 %v1634
    %v1667 = vunpack.c.l.b16 %v1635
    %v1668 = vunpack.c.l.b16 %v1636
    %v1669 = vunpack.c.l.b16 %v1637
    %v1670 = vunpack.c.l.b16 %v1638
    %v1671 = vunpack.c.l.b16 %v1639
    %v1672 = vunpack.c.l.b16 %v1640
    %v1673 = vunpack.c.l.b16 %v1641
    %v1674 = vpack.c.b16 %v1659, %v1658
    %v1675 = vpack.c.b16 %v1661, %v1660
    %v1676 = vpack.c.b16 %v1663, %v1662
    %v1677 = vpack.c.b16 %v1665, %v1664
    %v1678 = vpack.c.b16 %v1667, %v1666
    %v1679 = vpack.c.b16 %v1669, %v1668
    %v1680 = vpack.c.b16 %v1671, %v1670
    %v1681 = vpack.c.b16 %v1673, %v1672
    %1690 = vmatprep.subr.bf16.mxu0 0
    %1691 = vmatpush1.bf16.msra.mxu0 %v1681
    %1692 = vmatprep.subr.bf16.mxu0 0
    %1693 = vmatpush1.bf16.msra.mxu0 %v1680
    %1694 = vmatprep.subr.bf16.mxu0 0
    %1695 = vmatpush1.bf16.msra.mxu0 %v1679
    %1696 = vmatprep.subr.bf16.mxu0 0
    %1697 = vmatpush1.bf16.msra.mxu0 %v1678
    %1698 = vmatprep.subr.bf16.mxu0 0
    %1699 = vmatpush1.bf16.msra.mxu0 %v1677
    %1700 = vmatprep.subr.bf16.mxu0 0
    %1701 = vmatpush1.bf16.msra.mxu0 %v1676
    %1702 = vmatprep.subr.bf16.mxu0 0
    %1703 = vmatpush1.bf16.msra.mxu0 %v1675
    %1704 = vmatprep.subr.bf16.mxu0 0
    %1705 = vmatpush1.bf16.msra.mxu0 %v1674
    %1706 = vmatprep.subr.bf16.mxu0 0
    %1707 = vmatpush2.bf16.msra.mxu0 0
    %1708 = vmatprep.subr.bf16.mxu0 0
    %1709 = vmatpush2.bf16.msra.mxu0 0
    %1710 = vmatprep.subr.bf16.mxu0 0
    %1711 = vmatpush2.bf16.msra.mxu0 0
    %1712 = vmatprep.subr.bf16.mxu0 0
    %1713 = vmatpush2.bf16.msra.mxu0 0
    %1714 = vmatprep.subr.bf16.mxu0 0
    %1715 = vmatpush2.bf16.msra.mxu0 0
    %1716 = vmatprep.subr.bf16.mxu0 0
    %1717 = vmatpush2.bf16.msra.mxu0 0
    %1718 = vmatprep.subr.bf16.mxu0 0
    %1719 = vmatpush2.bf16.msra.mxu0 0
    %1720 = vmatprep.subr.bf16.mxu0 0
    %1721 = vmatpush2.bf16.msra.mxu0 0
    %1722 = vmatprep.mubr.bf16.mxu0 0
    %1723 = vmatmul.mubr.bf16.gmra.mxu0 %v1625
    %v1724 = vpop.f32.mrf.mxu0
    %v1725 = vadd.f32 0.0, %v1724
    %v1726 = vpop.f32.mrf.mxu0
    %v1727 = vpop.f32.mrf.mxu0
    %v1728 = vpop.f32.mrf.mxu0
    %1729 = vdwg.mxu0
    %v1730 = vadd.f32 %v1453, %v1725
    %v1731 = vld [vmem:[%s9] sm:$0x1]
    %v1733 = vlaneseq
    %v1734 = vshrl.u32 %v1733, 7
    %v1735 = vsub.s32 0, %v1734
    %v1736 = vrot.slane %v1731, %v1735
    %v1738 = vadd.f32 %v1730, %v1736
    %v1739 = vtanh.pop %v1738
    %v1740 = vmul.f32 %v1621, %v1215
    %v1741 = vsub.f32 1.0, %v1621
    %v1742 = vmul.f32 %v1741, %v1739
    %v1743 = vadd.f32 %v1740, %v1742
    %1744 = vst [vmem:[%s389] sm:$0xff] %v1743
    %s1745 = scalar_lea.vmem [#allocation3], 8
    %1746 = vst [vmem:[%s1745] sm:$0xff] %v1743
    %v1747 = vld [vmem:[#allocation2] sm:$0xff]
    %s1748 = scalar_lea.vmem %s0, 24
    %v1749 = vld [vmem:[%s1748] sm:$0xff]
    %v1750 = vld [vmem:[%s1748 + $0x8] sm:$0xf]
    %v1751 = vunpack.c.l.bf16 %v1749
    %v1752 = vunpack.c.h.bf16 %v1749
    %v1753 = vunpack.c.l.bf16 %v1750
    %v1754 = vpack.c.bf16 %v1747, %v1747
    %v1755 = vld [vmem:[#allocation4] sm:$0xff]
    %v1756 = vld [vmem:[#allocation4 + $0x8] sm:$0xff]
    %v1757 = vld [vmem:[#allocation4 + $0x10] sm:$0xff]
    %v1758 = vld [vmem:[#allocation4 + $0x18] sm:$0xff]
    %v1759 = vld [vmem:[#allocation4 + $0x20] sm:$0xff]
    %v1760 = vld [vmem:[#allocation4 + $0x28] sm:$0xff]
    %v1761 = vld [vmem:[#allocation4 + $0x30] sm:$0xff]
    %v1762 = vld [vmem:[#allocation4 + $0x38] sm:$0xff]
    %v1763 = vld [vmem:[#allocation4 + $0x40] sm:$0xff]
    %v1764 = vld [vmem:[#allocation4 + $0x48] sm:$0xff]
    %v1765 = vld [vmem:[#allocation4 + $0x50] sm:$0xff]
    %v1766 = vld [vmem:[#allocation4 + $0x58] sm:$0xff]
    %v1767 = vld [vmem:[#allocation4 + $0x60] sm:$0xff]
    %v1768 = vld [vmem:[#allocation4 + $0x68] sm:$0xff]
    %v1769 = vld [vmem:[#allocation4 + $0x70] sm:$0xff]
    %v1770 = vld [vmem:[#allocation4 + $0x78] sm:$0xff]
    %v1787 = vunpack.c.l.b16 %v1755
    %v1788 = vunpack.c.h.b16 %v1755
    %v1789 = vunpack.c.l.b16 %v1756
    %v1790 = vunpack.c.h.b16 %v1756
    %v1791 = vunpack.c.l.b16 %v1757
    %v1792 = vunpack.c.h.b16 %v1757
    %v1793 = vunpack.c.l.b16 %v1758
    %v1794 = vunpack.c.h.b16 %v1758
    %v1795 = vunpack.c.l.b16 %v1759
    %v1796 = vunpack.c.h.b16 %v1759
    %v1797 = vunpack.c.l.b16 %v1760
    %v1798 = vunpack.c.h.b16 %v1760
    %v1799 = vunpack.c.l.b16 %v1761
    %v1800 = vunpack.c.h.b16 %v1761
    %v1801 = vunpack.c.l.b16 %v1762
    %v1802 = vunpack.c.h.b16 %v1762
    %v1803 = vunpack.c.l.b16 %v1763
    %v1804 = vunpack.c.h.b16 %v1763
    %v1805 = vunpack.c.l.b16 %v1764
    %v1806 = vunpack.c.h.b16 %v1764
    %v1807 = vunpack.c.l.b16 %v1765
    %v1808 = vunpack.c.h.b16 %v1765
    %v1809 = vunpack.c.l.b16 %v1766
    %v1810 = vunpack.c.h.b16 %v1766
    %v1811 = vunpack.c.l.b16 %v1767
    %v1812 = vunpack.c.h.b16 %v1767
    %v1813 = vunpack.c.l.b16 %v1768
    %v1814 = vunpack.c.h.b16 %v1768
    %v1815 = vunpack.c.l.b16 %v1769
    %v1816 = vunpack.c.h.b16 %v1769
    %v1817 = vunpack.c.l.b16 %v1770
    %v1818 = vunpack.c.h.b16 %v1770
    %v1819 = vpack.c.b16 %v1789, %v1787
    %v1820 = vpack.c.b16 %v1790, %v1788
    %v1821 = vpack.c.b16 %v1793, %v1791
    %v1822 = vpack.c.b16 %v1794, %v1792
    %v1823 = vpack.c.b16 %v1797, %v1795
    %v1824 = vpack.c.b16 %v1798, %v1796
    %v1825 = vpack.c.b16 %v1801, %v1799
    %v1826 = vpack.c.b16 %v1802, %v1800
    %v1827 = vpack.c.b16 %v1805, %v1803
    %v1828 = vpack.c.b16 %v1806, %v1804
    %v1829 = vpack.c.b16 %v1809, %v1807
    %v1830 = vpack.c.b16 %v1810, %v1808
    %v1831 = vpack.c.b16 %v1813, %v1811
    %v1832 = vpack.c.b16 %v1814, %v1812
    %v1833 = vpack.c.b16 %v1817, %v1815
    %v1834 = vpack.c.b16 %v1818, %v1816
    %1851 = vmatprep.subr.bf16.mxu0 %v1834
    %1852 = vmatpush1.bf16.msra.mxu0 %v1833
    %1853 = vmatprep.subr.bf16.mxu0 %v1832
    %1854 = vmatpush1.bf16.msra.mxu0 %v1831
    %1855 = vmatprep.subr.bf16.mxu0 %v1830
    %1856 = vmatpush1.bf16.msra.mxu0 %v1829
    %1857 = vmatprep.subr.bf16.mxu0 %v1828
    %1858 = vmatpush1.bf16.msra.mxu0 %v1827
    %1859 = vmatprep.subr.bf16.mxu0 %v1826
    %1860 = vmatpush1.bf16.msra.mxu0 %v1825
    %1861 = vmatprep.subr.bf16.mxu0 %v1824
    %1862 = vmatpush1.bf16.msra.mxu0 %v1823
    %1863 = vmatprep.subr.bf16.mxu0 %v1822
    %1864 = vmatpush1.bf16.msra.mxu0 %v1821
    %1865 = vmatprep.subr.bf16.mxu0 %v1820
    %1866 = vmatpush1.bf16.msra.mxu0 %v1819
    %1867 = vmatprep.subr.bf16.mxu0 0
    %1868 = vmatpush2.bf16.msra.mxu0 0
    %1869 = vmatprep.subr.bf16.mxu0 0
    %1870 = vmatpush2.bf16.msra.mxu0 0
    %1871 = vmatprep.subr.bf16.mxu0 0
    %1872 = vmatpush2.bf16.msra.mxu0 0
    %1873 = vmatprep.subr.bf16.mxu0 0
    %1874 = vmatpush2.bf16.msra.mxu0 0
    %1875 = vmatprep.subr.bf16.mxu0 0
    %1876 = vmatpush2.bf16.msra.mxu0 0
    %1877 = vmatprep.subr.bf16.mxu0 0
    %1878 = vmatpush2.bf16.msra.mxu0 0
    %1879 = vmatprep.subr.bf16.mxu0 0
    %1880 = vmatpush2.bf16.msra.mxu0 0
    %1881 = vmatprep.subr.bf16.mxu0 0
    %1882 = vmatpush2.bf16.msra.mxu0 0
    %1883 = vmatprep.mubr.bf16.mxu0 0
    %1884 = vmatmul.mubr.bf16.gmra.mxu0 %v1754
    %v1885 = vpop.f32.mrf.mxu0
    %v1886 = vadd.f32 0.0, %v1885
    %v1887 = vpop.f32.mrf.mxu0
    %v1888 = vadd.f32 0.0, %v1887
    %v1889 = vpop.f32.mrf.mxu0
    %v1890 = vpop.f32.mrf.mxu0
    %1891 = vdwg.mxu0
    %v1892 = vadd.f32 %v1751, %v1886
    %v1893 = vadd.f32 %v1752, %v1888
    %v1894 = vld [vmem:[%s4] sm:$0x3]
    %v1896 = vlaneseq
    %v1897 = vshrl.u32 %v1896, 7
    %v1898 = vsub.s32 0, %v1897
    %v1899 = vrot.slane %v1894, %v1898
    %v1900 = vlaneseq
    %v1901 = vshrl.u32 %v1900, 7
    %v1902 = vsub.s32 1, %v1901
    %v1903 = vrot.slane %v1894, %v1902
    %v1906 = vadd.f32 %v1892, %v1899
    %v1907 = vadd.f32 %v1893, %v1903
    %v1908 = vxor.u32 %v1906, 2147483648
    %v1909 = vxor.u32 %v1907, 2147483648
    %v1910 = vmul.f32 %v1908, 1.442695
    %v1911 = vpow.pop %v1910
    %v1912 = vmul.f32 %v1909, 1.442695
    %v1913 = vpow.pop %v1912
    %v1914 = vadd.f32 %v1911, 1.0
    %v1915 = vadd.f32 %v1913, 1.0
    %v1916 = vrcp.pop %v1914
    %v1917 = vmul.f32 1.0, %v1916
    %v1918 = vrcp.pop %v1915
    %v1919 = vmul.f32 1.0, %v1918
    %v1920 = vmul.f32 %v1919, %v1747
    %v1921 = vpack.c.bf16 %v1920, %v1920
    %v1922 = vld [vmem:[#allocation6] sm:$0xf]
    %v1923 = vld [vmem:[#allocation6 + $0x4] sm:$0xf]
    %v1924 = vld [vmem:[#allocation6 + $0x8] sm:$0xf]
    %v1925 = vld [vmem:[#allocation6 + $0xc] sm:$0xf]
    %v1926 = vld [vmem:[#allocation6 + $0x10] sm:$0xf]
    %v1927 = vld [vmem:[#allocation6 + $0x14] sm:$0xf]
    %v1928 = vld [vmem:[#allocation6 + $0x18] sm:$0xf]
    %v1929 = vld [vmem:[#allocation6 + $0x1c] sm:$0xf]
    %v1930 = vld [vmem:[#allocation6 + $0x20] sm:$0xf]
    %v1931 = vld [vmem:[#allocation6 + $0x24] sm:$0xf]
    %v1932 = vld [vmem:[#allocation6 + $0x28] sm:$0xf]
    %v1933 = vld [vmem:[#allocation6 + $0x2c] sm:$0xf]
    %v1934 = vld [vmem:[#allocation6 + $0x30] sm:$0xf]
    %v1935 = vld [vmem:[#allocation6 + $0x34] sm:$0xf]
    %v1936 = vld [vmem:[#allocation6 + $0x38] sm:$0xf]
    %v1937 = vld [vmem:[#allocation6 + $0x3c] sm:$0xf]
    %v1954 = vunpack.c.l.b16 %v1922
    %v1955 = vunpack.c.l.b16 %v1923
    %v1956 = vunpack.c.l.b16 %v1924
    %v1957 = vunpack.c.l.b16 %v1925
    %v1958 = vunpack.c.l.b16 %v1926
    %v1959 = vunpack.c.l.b16 %v1927
    %v1960 = vunpack.c.l.b16 %v1928
    %v1961 = vunpack.c.l.b16 %v1929
    %v1962 = vunpack.c.l.b16 %v1930
    %v1963 = vunpack.c.l.b16 %v1931
    %v1964 = vunpack.c.l.b16 %v1932
    %v1965 = vunpack.c.l.b16 %v1933
    %v1966 = vunpack.c.l.b16 %v1934
    %v1967 = vunpack.c.l.b16 %v1935
    %v1968 = vunpack.c.l.b16 %v1936
    %v1969 = vunpack.c.l.b16 %v1937
    %v1970 = vpack.c.b16 %v1955, %v1954
    %v1971 = vpack.c.b16 %v1957, %v1956
    %v1972 = vpack.c.b16 %v1959, %v1958
    %v1973 = vpack.c.b16 %v1961, %v1960
    %v1974 = vpack.c.b16 %v1963, %v1962
    %v1975 = vpack.c.b16 %v1965, %v1964
    %v1976 = vpack.c.b16 %v1967, %v1966
    %v1977 = vpack.c.b16 %v1969, %v1968
    %1986 = vmatprep.subr.bf16.mxu0 0
    %1987 = vmatpush1.bf16.msra.mxu0 %v1977
    %1988 = vmatprep.subr.bf16.mxu0 0
    %1989 = vmatpush1.bf16.msra.mxu0 %v1976
    %1990 = vmatprep.subr.bf16.mxu0 0
    %1991 = vmatpush1.bf16.msra.mxu0 %v1975
    %1992 = vmatprep.subr.bf16.mxu0 0
    %1993 = vmatpush1.bf16.msra.mxu0 %v1974
    %1994 = vmatprep.subr.bf16.mxu0 0
    %1995 = vmatpush1.bf16.msra.mxu0 %v1973
    %1996 = vmatprep.subr.bf16.mxu0 0
    %1997 = vmatpush1.bf16.msra.mxu0 %v1972
    %1998 = vmatprep.subr.bf16.mxu0 0
    %1999 = vmatpush1.bf16.msra.mxu0 %v1971
    %2000 = vmatprep.subr.bf16.mxu0 0
    %2001 = vmatpush1.bf16.msra.mxu0 %v1970
    %2002 = vmatprep.subr.bf16.mxu0 0
    %2003 = vmatpush2.bf16.msra.mxu0 0
    %2004 = vmatprep.subr.bf16.mxu0 0
    %2005 = vmatpush2.bf16.msra.mxu0 0
    %2006 = vmatprep.subr.bf16.mxu0 0
    %2007 = vmatpush2.bf16.msra.mxu0 0
    %2008 = vmatprep.subr.bf16.mxu0 0
    %2009 = vmatpush2.bf16.msra.mxu0 0
    %2010 = vmatprep.subr.bf16.mxu0 0
    %2011 = vmatpush2.bf16.msra.mxu0 0
    %2012 = vmatprep.subr.bf16.mxu0 0
    %2013 = vmatpush2.bf16.msra.mxu0 0
    %2014 = vmatprep.subr.bf16.mxu0 0
    %2015 = vmatpush2.bf16.msra.mxu0 0
    %2016 = vmatprep.subr.bf16.mxu0 0
    %2017 = vmatpush2.bf16.msra.mxu0 0
    %2018 = vmatprep.mubr.bf16.mxu0 0
    %2019 = vmatmul.mubr.bf16.gmra.mxu0 %v1921
    %v2020 = vpop.f32.mrf.mxu0
    %v2021 = vadd.f32 0.0, %v2020
    %v2022 = vpop.f32.mrf.mxu0
    %v2023 = vpop.f32.mrf.mxu0
    %v2024 = vpop.f32.mrf.mxu0
    %2025 = vdwg.mxu0
    %v2026 = vadd.f32 %v1753, %v2021
    %v2027 = vld [vmem:[%s5] sm:$0x1]
    %v2029 = vlaneseq
    %v2030 = vshrl.u32 %v2029, 7
    %v2031 = vsub.s32 0, %v2030
    %v2032 = vrot.slane %v2027, %v2031
    %v2034 = vadd.f32 %v2026, %v2032
    %v2035 = vtanh.pop %v2034
    %v2036 = vmul.f32 %v1917, %v1747
    %v2037 = vsub.f32 1.0, %v1917
    %v2038 = vmul.f32 %v2037, %v2035
    %v2039 = vadd.f32 %v2036, %v2038
    %2040 = vst [vmem:[#allocation2] sm:$0xff] %v2039
    %v2041 = vld [vmem:[%s389] sm:$0xff]
    %v2042 = vpack.c.bf16 %v2039, %v2039
    %v2043 = vld [vmem:[%s10] sm:$0xff]
    %v2044 = vld [vmem:[%s10 + $0x8] sm:$0xf]
    %v2045 = vld [vmem:[%s10 + $0xc] sm:$0xff]
    %v2046 = vld [vmem:[%s10 + $0x14] sm:$0xf]
    %v2047 = vld [vmem:[%s10 + $0x18] sm:$0xff]
    %v2048 = vld [vmem:[%s10 + $0x20] sm:$0xf]
    %v2049 = vld [vmem:[%s10 + $0x24] sm:$0xff]
    %v2050 = vld [vmem:[%s10 + $0x2c] sm:$0xf]
    %v2051 = vld [vmem:[%s10 + $0x30] sm:$0xff]
    %v2052 = vld [vmem:[%s10 + $0x38] sm:$0xf]
    %v2053 = vld [vmem:[%s10 + $0x3c] sm:$0xff]
    %v2054 = vld [vmem:[%s10 + $0x44] sm:$0xf]
    %v2055 = vld [vmem:[%s10 + $0x48] sm:$0xff]
    %v2056 = vld [vmem:[%s10 + $0x50] sm:$0xf]
    %v2057 = vld [vmem:[%s10 + $0x54] sm:$0xff]
    %v2058 = vld [vmem:[%s10 + $0x5c] sm:$0xf]
    %v2059 = vld [vmem:[%s10 + $0x60] sm:$0xff]
    %v2060 = vld [vmem:[%s10 + $0x68] sm:$0xf]
    %v2061 = vld [vmem:[%s10 + $0x6c] sm:$0xff]
    %v2062 = vld [vmem:[%s10 + $0x74] sm:$0xf]
    %v2063 = vld [vmem:[%s10 + $0x78] sm:$0xff]
    %v2064 = vld [vmem:[%s10 + $0x80] sm:$0xf]
    %v2065 = vld [vmem:[%s10 + $0x84] sm:$0xff]
    %v2066 = vld [vmem:[%s10 + $0x8c] sm:$0xf]
    %v2067 = vld [vmem:[%s10 + $0x90] sm:$0xff]
    %v2068 = vld [vmem:[%s10 + $0x98] sm:$0xf]
    %v2069 = vld [vmem:[%s10 + $0x9c] sm:$0xff]
    %v2070 = vld [vmem:[%s10 + $0xa4] sm:$0xf]
    %v2071 = vld [vmem:[%s10 + $0xa8] sm:$0xff]
    %v2072 = vld [vmem:[%s10 + $0xb0] sm:$0xf]
    %v2073 = vld [vmem:[%s10 + $0xb4] sm:$0xff]
    %v2074 = vld [vmem:[%s10 + $0xbc] sm:$0xf]
    %v2107 = vunpack.c.l.b16 %v2043
    %v2108 = vunpack.c.h.b16 %v2043
    %v2109 = vunpack.c.l.b16 %v2044
    %v2110 = vunpack.c.l.b16 %v2045
    %v2111 = vunpack.c.h.b16 %v2045
    %v2112 = vunpack.c.l.b16 %v2046
    %v2113 = vunpack.c.l.b16 %v2047
    %v2114 = vunpack.c.h.b16 %v2047
    %v2115 = vunpack.c.l.b16 %v2048
    %v2116 = vunpack.c.l.b16 %v2049
    %v2117 = vunpack.c.h.b16 %v2049
    %v2118 = vunpack.c.l.b16 %v2050
    %v2119 = vunpack.c.l.b16 %v2051
    %v2120 = vunpack.c.h.b16 %v2051
    %v2121 = vunpack.c.l.b16 %v2052
    %v2122 = vunpack.c.l.b16 %v2053
    %v2123 = vunpack.c.h.b16 %v2053
    %v2124 = vunpack.c.l.b16 %v2054
    %v2125 = vunpack.c.l.b16 %v2055
    %v2126 = vunpack.c.h.b16 %v2055
    %v2127 = vunpack.c.l.b16 %v2056
    %v2128 = vunpack.c.l.b16 %v2057
    %v2129 = vunpack.c.h.b16 %v2057
    %v2130 = vunpack.c.l.b16 %v2058
    %v2131 = vunpack.c.l.b16 %v2059
    %v2132 = vunpack.c.h.b16 %v2059
    %v2133 = vunpack.c.l.b16 %v2060
    %v2134 = vunpack.c.l.b16 %v2061
    %v2135 = vunpack.c.h.b16 %v2061
    %v2136 = vunpack.c.l.b16 %v2062
    %v2137 = vunpack.c.l.b16 %v2063
    %v2138 = vunpack.c.h.b16 %v2063
    %v2139 = vunpack.c.l.b16 %v2064
    %v2140 = vunpack.c.l.b16 %v2065
    %v2141 = vunpack.c.h.b16 %v2065
    %v2142 = vunpack.c.l.b16 %v2066
    %v2143 = vunpack.c.l.b16 %v2067
    %v2144 = vunpack.c.h.b16 %v2067
    %v2145 = vunpack.c.l.b16 %v2068
    %v2146 = vunpack.c.l.b16 %v2069
    %v2147 = vunpack.c.h.b16 %v2069
    %v2148 = vunpack.c.l.b16 %v2070
    %v2149 = vunpack.c.l.b16 %v2071
    %v2150 = vunpack.c.h.b16 %v2071
    %v2151 = vunpack.c.l.b16 %v2072
    %v2152 = vunpack.c.l.b16 %v2073
    %v2153 = vunpack.c.h.b16 %v2073
    %v2154 = vunpack.c.l.b16 %v2074
    %v2155 = vpack.c.b16 %v2110, %v2107
    %v2156 = vpack.c.b16 %v2111, %v2108
    %v2157 = vpack.c.b16 %v2112, %v2109
    %v2158 = vpack.c.b16 %v2116, %v2113
    %v2159 = vpack.c.b16 %v2117, %v2114
    %v2160 = vpack.c.b16 %v2118, %v2115
    %v2161 = vpack.c.b16 %v2122, %v2119
    %v2162 = vpack.c.b16 %v2123, %v2120
    %v2163 = vpack.c.b16 %v2124, %v2121
    %v2164 = vpack.c.b16 %v2128, %v2125
    %v2165 = vpack.c.b16 %v2129, %v2126
    %v2166 = vpack.c.b16 %v2130, %v2127
    %v2167 = vpack.c.b16 %v2134, %v2131
    %v2168 = vpack.c.b16 %v2135, %v2132
    %v2169 = vpack.c.b16 %v2136, %v2133
    %v2170 = vpack.c.b16 %v2140, %v2137
    %v2171 = vpack.c.b16 %v2141, %v2138
    %v2172 = vpack.c.b16 %v2142, %v2139
    %v2173 = vpack.c.b16 %v2146, %v2143
    %v2174 = vpack.c.b16 %v2147, %v2144
    %v2175 = vpack.c.b16 %v2148, %v2145
    %v2176 = vpack.c.b16 %v2152, %v2149
    %v2177 = vpack.c.b16 %v2153, %v2150
    %v2178 = vpack.c.b16 %v2154, %v2151
    %2203 = vmatprep.subr.bf16.mxu0 %v2177
    %2204 = vmatpush1.bf16.msra.mxu0 %v2176
    %2205 = vmatprep.subr.bf16.mxu0 %v2174
    %2206 = vmatpush1.bf16.msra.mxu0 %v2173
    %2207 = vmatprep.subr.bf16.mxu0 %v2171
    %2208 = vmatpush1.bf16.msra.mxu0 %v2170
    %2209 = vmatprep.subr.bf16.mxu0 %v2168
    %2210 = vmatpush1.bf16.msra.mxu0 %v2167
    %2211 = vmatprep.subr.bf16.mxu0 %v2165
    %2212 = vmatpush1.bf16.msra.mxu0 %v2164
    %2213 = vmatprep.subr.bf16.mxu0 %v2162
    %2214 = vmatpush1.bf16.msra.mxu0 %v2161
    %2215 = vmatprep.subr.bf16.mxu0 %v2159
    %2216 = vmatpush1.bf16.msra.mxu0 %v2158
    %2217 = vmatprep.subr.bf16.mxu0 %v2156
    %2218 = vmatpush1.bf16.msra.mxu0 %v2155
    %2219 = vmatprep.subr.bf16.mxu0 0
    %2220 = vmatpush2.bf16.msra.mxu0 0
    %2221 = vmatprep.subr.bf16.mxu0 0
    %2222 = vmatpush2.bf16.msra.mxu0 0
    %2223 = vmatprep.subr.bf16.mxu0 0
    %2224 = vmatpush2.bf16.msra.mxu0 0
    %2225 = vmatprep.subr.bf16.mxu0 0
    %2226 = vmatpush2.bf16.msra.mxu0 0
    %2227 = vmatprep.subr.bf16.mxu0 0
    %2228 = vmatpush2.bf16.msra.mxu0 0
    %2229 = vmatprep.subr.bf16.mxu0 0
    %2230 = vmatpush2.bf16.msra.mxu0 0
    %2231 = vmatprep.subr.bf16.mxu0 0
    %2232 = vmatpush2.bf16.msra.mxu0 0
    %2233 = vmatprep.subr.bf16.mxu0 0
    %2234 = vmatpush2.bf16.msra.mxu0 0
    %2235 = vmatprep.mubr.bf16.mxu0 0
    %2236 = vmatmul.mubr.bf16.gmra.mxu0 %v2042
    %v2237 = vpop.f32.mrf.mxu0
    %v2238 = vadd.f32 0.0, %v2237
    %v2239 = vpop.f32.mrf.mxu0
    %v2240 = vadd.f32 0.0, %v2239
    %v2241 = vpop.f32.mrf.mxu0
    %v2242 = vpop.f32.mrf.mxu0
    %2243 = vdwg.mxu0
    %2244 = vmatprep.subr.bf16.mxu0 0
    %2245 = vmatpush1.bf16.msra.mxu0 %v2178
    %2246 = vmatprep.subr.bf16.mxu0 0
    %2247 = vmatpush1.bf16.msra.mxu0 %v2175
    %2248 = vmatprep.subr.bf16.mxu0 0
    %2249 = vmatpush1.bf16.msra.mxu0 %v2172
    %2250 = vmatprep.subr.bf16.mxu0 0
    %2251 = vmatpush1.bf16.msra.mxu0 %v2169
    %2252 = vmatprep.subr.bf16.mxu0 0
    %2253 = vmatpush1.bf16.msra.mxu0 %v2166
    %2254 = vmatprep.subr.bf16.mxu0 0
    %2255 = vmatpush1.bf16.msra.mxu0 %v2163
    %2256 = vmatprep.subr.bf16.mxu0 0
    %2257 = vmatpush1.bf16.msra.mxu0 %v2160
    %2258 = vmatprep.subr.bf16.mxu0 0
    %2259 = vmatpush1.bf16.msra.mxu0 %v2157
    %2260 = vmatprep.subr.bf16.mxu0 0
    %2261 = vmatpush2.bf16.msra.mxu0 0
    %2262 = vmatprep.subr.bf16.mxu0 0
    %2263 = vmatpush2.bf16.msra.mxu0 0
    %2264 = vmatprep.subr.bf16.mxu0 0
    %2265 = vmatpush2.bf16.msra.mxu0 0
    %2266 = vmatprep.subr.bf16.mxu0 0
    %2267 = vmatpush2.bf16.msra.mxu0 0
    %2268 = vmatprep.subr.bf16.mxu0 0
    %2269 = vmatpush2.bf16.msra.mxu0 0
    %2270 = vmatprep.subr.bf16.mxu0 0
    %2271 = vmatpush2.bf16.msra.mxu0 0
    %2272 = vmatprep.subr.bf16.mxu0 0
    %2273 = vmatpush2.bf16.msra.mxu0 0
    %2274 = vmatprep.subr.bf16.mxu0 0
    %2275 = vmatpush2.bf16.msra.mxu0 0
    %2276 = vmatprep.mubr.bf16.mxu0 0
    %2277 = vmatmul.mubr.bf16.gmra.mxu0 %v2042
    %v2278 = vpop.f32.mrf.mxu0
    %v2279 = vadd.f32 0.0, %v2278
    %v2280 = vpop.f32.mrf.mxu0
    %v2281 = vpop.f32.mrf.mxu0
    %v2282 = vpop.f32.mrf.mxu0
    %2283 = vdwg.mxu0
    %v2284 = vpack.c.bf16 %v2041, %v2041
    %v2285 = vld [vmem:[%s6] sm:$0xff]
    %v2286 = vld [vmem:[%s6 + $0x8] sm:$0xff]
    %v2287 = vld [vmem:[%s6 + $0x10] sm:$0xff]
    %v2288 = vld [vmem:[%s6 + $0x18] sm:$0xff]
    %v2289 = vld [vmem:[%s6 + $0x20] sm:$0xff]
    %v2290 = vld [vmem:[%s6 + $0x28] sm:$0xff]
    %v2291 = vld [vmem:[%s6 + $0x30] sm:$0xff]
    %v2292 = vld [vmem:[%s6 + $0x38] sm:$0xff]
    %v2293 = vld [vmem:[%s6 + $0x40] sm:$0xff]
    %v2294 = vld [vmem:[%s6 + $0x48] sm:$0xff]
    %v2295 = vld [vmem:[%s6 + $0x50] sm:$0xff]
    %v2296 = vld [vmem:[%s6 + $0x58] sm:$0xff]
    %v2297 = vld [vmem:[%s6 + $0x60] sm:$0xff]
    %v2298 = vld [vmem:[%s6 + $0x68] sm:$0xff]
    %v2299 = vld [vmem:[%s6 + $0x70] sm:$0xff]
    %v2300 = vld [vmem:[%s6 + $0x78] sm:$0xff]
    %v2317 = vunpack.c.l.b16 %v2285
    %v2318 = vunpack.c.h.b16 %v2285
    %v2319 = vunpack.c.l.b16 %v2286
    %v2320 = vunpack.c.h.b16 %v2286
    %v2321 = vunpack.c.l.b16 %v2287
    %v2322 = vunpack.c.h.b16 %v2287
    %v2323 = vunpack.c.l.b16 %v2288
    %v2324 = vunpack.c.h.b16 %v2288
    %v2325 = vunpack.c.l.b16 %v2289
    %v2326 = vunpack.c.h.b16 %v2289
    %v2327 = vunpack.c.l.b16 %v2290
    %v2328 = vunpack.c.h.b16 %v2290
    %v2329 = vunpack.c.l.b16 %v2291
    %v2330 = vunpack.c.h.b16 %v2291
    %v2331 = vunpack.c.l.b16 %v2292
    %v2332 = vunpack.c.h.b16 %v2292
    %v2333 = vunpack.c.l.b16 %v2293
    %v2334 = vunpack.c.h.b16 %v2293
    %v2335 = vunpack.c.l.b16 %v2294
    %v2336 = vunpack.c.h.b16 %v2294
    %v2337 = vunpack.c.l.b16 %v2295
    %v2338 = vunpack.c.h.b16 %v2295
    %v2339 = vunpack.c.l.b16 %v2296
    %v2340 = vunpack.c.h.b16 %v2296
    %v2341 = vunpack.c.l.b16 %v2297
    %v2342 = vunpack.c.h.b16 %v2297
    %v2343 = vunpack.c.l.b16 %v2298
    %v2344 = vunpack.c.h.b16 %v2298
    %v2345 = vunpack.c.l.b16 %v2299
    %v2346 = vunpack.c.h.b16 %v2299
    %v2347 = vunpack.c.l.b16 %v2300
    %v2348 = vunpack.c.h.b16 %v2300
    %v2349 = vpack.c.b16 %v2319, %v2317
    %v2350 = vpack.c.b16 %v2320, %v2318
    %v2351 = vpack.c.b16 %v2323, %v2321
    %v2352 = vpack.c.b16 %v2324, %v2322
    %v2353 = vpack.c.b16 %v2327, %v2325
    %v2354 = vpack.c.b16 %v2328, %v2326
    %v2355 = vpack.c.b16 %v2331, %v2329
    %v2356 = vpack.c.b16 %v2332, %v2330
    %v2357 = vpack.c.b16 %v2335, %v2333
    %v2358 = vpack.c.b16 %v2336, %v2334
    %v2359 = vpack.c.b16 %v2339, %v2337
    %v2360 = vpack.c.b16 %v2340, %v2338
    %v2361 = vpack.c.b16 %v2343, %v2341
    %v2362 = vpack.c.b16 %v2344, %v2342
    %v2363 = vpack.c.b16 %v2347, %v2345
    %v2364 = vpack.c.b16 %v2348, %v2346
    %2381 = vmatprep.subr.bf16.mxu0 %v2364
    %2382 = vmatpush1.bf16.msra.mxu0 %v2363
    %2383 = vmatprep.subr.bf16.mxu0 %v2362
    %2384 = vmatpush1.bf16.msra.mxu0 %v2361
    %2385 = vmatprep.subr.bf16.mxu0 %v2360
    %2386 = vmatpush1.bf16.msra.mxu0 %v2359
    %2387 = vmatprep.subr.bf16.mxu0 %v2358
    %2388 = vmatpush1.bf16.msra.mxu0 %v2357
    %2389 = vmatprep.subr.bf16.mxu0 %v2356
    %2390 = vmatpush1.bf16.msra.mxu0 %v2355
    %2391 = vmatprep.subr.bf16.mxu0 %v2354
    %2392 = vmatpush1.bf16.msra.mxu0 %v2353
    %2393 = vmatprep.subr.bf16.mxu0 %v2352
    %2394 = vmatpush1.bf16.msra.mxu0 %v2351
    %2395 = vmatprep.subr.bf16.mxu0 %v2350
    %2396 = vmatpush1.bf16.msra.mxu0 %v2349
    %2397 = vmatprep.subr.bf16.mxu0 0
    %2398 = vmatpush2.bf16.msra.mxu0 0
    %2399 = vmatprep.subr.bf16.mxu0 0
    %2400 = vmatpush2.bf16.msra.mxu0 0
    %2401 = vmatprep.subr.bf16.mxu0 0
    %2402 = vmatpush2.bf16.msra.mxu0 0
    %2403 = vmatprep.subr.bf16.mxu0 0
    %2404 = vmatpush2.bf16.msra.mxu0 0
    %2405 = vmatprep.subr.bf16.mxu0 0
    %2406 = vmatpush2.bf16.msra.mxu0 0
    %2407 = vmatprep.subr.bf16.mxu0 0
    %2408 = vmatpush2.bf16.msra.mxu0 0
    %2409 = vmatprep.subr.bf16.mxu0 0
    %2410 = vmatpush2.bf16.msra.mxu0 0
    %2411 = vmatprep.subr.bf16.mxu0 0
    %2412 = vmatpush2.bf16.msra.mxu0 0
    %2413 = vmatprep.mubr.bf16.mxu0 0
    %2414 = vmatmul.mubr.bf16.gmra.mxu0 %v2284
    %v2415 = vpop.f32.mrf.mxu0
    %v2416 = vadd.f32 0.0, %v2415
    %v2417 = vpop.f32.mrf.mxu0
    %v2418 = vadd.f32 0.0, %v2417
    %v2419 = vpop.f32.mrf.mxu0
    %v2420 = vpop.f32.mrf.mxu0
    %2421 = vdwg.mxu0
    %v2422 = vadd.f32 %v2238, %v2416
    %v2423 = vadd.f32 %v2240, %v2418
    %v2424 = vld [vmem:[%s8] sm:$0x3]
    %v2426 = vlaneseq
    %v2427 = vshrl.u32 %v2426, 7
    %v2428 = vsub.s32 0, %v2427
    %v2429 = vrot.slane %v2424, %v2428
    %v2430 = vlaneseq
    %v2431 = vshrl.u32 %v2430, 7
    %v2432 = vsub.s32 1, %v2431
    %v2433 = vrot.slane %v2424, %v2432
    %v2436 = vadd.f32 %v2422, %v2429
    %v2437 = vadd.f32 %v2423, %v2433
    %v2438 = vxor.u32 %v2436, 2147483648
    %v2439 = vxor.u32 %v2437, 2147483648
    %v2440 = vmul.f32 %v2438, 1.442695
    %v2441 = vpow.pop %v2440
    %v2442 = vmul.f32 %v2439, 1.442695
    %v2443 = vpow.pop %v2442
    %v2444 = vadd.f32 %v2441, 1.0
    %v2445 = vadd.f32 %v2443, 1.0
    %v2446 = vrcp.pop %v2444
    %v2447 = vmul.f32 1.0, %v2446
    %v2448 = vrcp.pop %v2445
    %v2449 = vmul.f32 1.0, %v2448
    %v2450 = vmul.f32 %v2449, %v2041
    %v2451 = vpack.c.bf16 %v2450, %v2450
    %v2452 = vld [vmem:[#allocation8] sm:$0xf]
    %v2453 = vld [vmem:[#allocation8 + $0x4] sm:$0xf]
    %v2454 = vld [vmem:[#allocation8 + $0x8] sm:$0xf]
    %v2455 = vld [vmem:[#allocation8 + $0xc] sm:$0xf]
    %v2456 = vld [vmem:[#allocation8 + $0x10] sm:$0xf]
    %v2457 = vld [vmem:[#allocation8 + $0x14] sm:$0xf]
    %v2458 = vld [vmem:[#allocation8 + $0x18] sm:$0xf]
    %v2459 = vld [vmem:[#allocation8 + $0x1c] sm:$0xf]
    %v2460 = vld [vmem:[#allocation8 + $0x20] sm:$0xf]
    %v2461 = vld [vmem:[#allocation8 + $0x24] sm:$0xf]
    %v2462 = vld [vmem:[#allocation8 + $0x28] sm:$0xf]
    %v2463 = vld [vmem:[#allocation8 + $0x2c] sm:$0xf]
    %v2464 = vld [vmem:[#allocation8 + $0x30] sm:$0xf]
    %v2465 = vld [vmem:[#allocation8 + $0x34] sm:$0xf]
    %v2466 = vld [vmem:[#allocation8 + $0x38] sm:$0xf]
    %v2467 = vld [vmem:[#allocation8 + $0x3c] sm:$0xf]
    %v2484 = vunpack.c.l.b16 %v2452
    %v2485 = vunpack.c.l.b16 %v2453
    %v2486 = vunpack.c.l.b16 %v2454
    %v2487 = vunpack.c.l.b16 %v2455
    %v2488 = vunpack.c.l.b16 %v2456
    %v2489 = vunpack.c.l.b16 %v2457
    %v2490 = vunpack.c.l.b16 %v2458
    %v2491 = vunpack.c.l.b16 %v2459
    %v2492 = vunpack.c.l.b16 %v2460
    %v2493 = vunpack.c.l.b16 %v2461
    %v2494 = vunpack.c.l.b16 %v2462
    %v2495 = vunpack.c.l.b16 %v2463
    %v2496 = vunpack.c.l.b16 %v2464
    %v2497 = vunpack.c.l.b16 %v2465
    %v2498 = vunpack.c.l.b16 %v2466
    %v2499 = vunpack.c.l.b16 %v2467
    %v2500 = vpack.c.b16 %v2485, %v2484
    %v2501 = vpack.c.b16 %v2487, %v2486
    %v2502 = vpack.c.b16 %v2489, %v2488
    %v2503 = vpack.c.b16 %v2491, %v2490
    %v2504 = vpack.c.b16 %v2493, %v2492
    %v2505 = vpack.c.b16 %v2495, %v2494
    %v2506 = vpack.c.b16 %v2497, %v2496
    %v2507 = vpack.c.b16 %v2499, %v2498
    %2516 = vmatprep.subr.bf16.mxu0 0
    %2517 = vmatpush1.bf16.msra.mxu0 %v2507
    %2518 = vmatprep.subr.bf16.mxu0 0
    %2519 = vmatpush1.bf16.msra.mxu0 %v2506
    %2520 = vmatprep.subr.bf16.mxu0 0
    %2521 = vmatpush1.bf16.msra.mxu0 %v2505
    %2522 = vmatprep.subr.bf16.mxu0 0
    %2523 = vmatpush1.bf16.msra.mxu0 %v2504
    %2524 = vmatprep.subr.bf16.mxu0 0
    %2525 = vmatpush1.bf16.msra.mxu0 %v2503
    %2526 = vmatprep.subr.bf16.mxu0 0
    %2527 = vmatpush1.bf16.msra.mxu0 %v2502
    %2528 = vmatprep.subr.bf16.mxu0 0
    %2529 = vmatpush1.bf16.msra.mxu0 %v2501
    %2530 = vmatprep.subr.bf16.mxu0 0
    %2531 = vmatpush1.bf16.msra.mxu0 %v2500
    %2532 = vmatprep.subr.bf16.mxu0 0
    %2533 = vmatpush2.bf16.msra.mxu0 0
    %2534 = vmatprep.subr.bf16.mxu0 0
    %2535 = vmatpush2.bf16.msra.mxu0 0
    %2536 = vmatprep.subr.bf16.mxu0 0
    %2537 = vmatpush2.bf16.msra.mxu0 0
    %2538 = vmatprep.subr.bf16.mxu0 0
    %2539 = vmatpush2.bf16.msra.mxu0 0
    %2540 = vmatprep.subr.bf16.mxu0 0
    %2541 = vmatpush2.bf16.msra.mxu0 0
    %2542 = vmatprep.subr.bf16.mxu0 0
    %2543 = vmatpush2.bf16.msra.mxu0 0
    %2544 = vmatprep.subr.bf16.mxu0 0
    %2545 = vmatpush2.bf16.msra.mxu0 0
    %2546 = vmatprep.subr.bf16.mxu0 0
    %2547 = vmatpush2.bf16.msra.mxu0 0
    %2548 = vmatprep.mubr.bf16.mxu0 0
    %2549 = vmatmul.mubr.bf16.gmra.mxu0 %v2451
    %v2550 = vpop.f32.mrf.mxu0
    %v2551 = vadd.f32 0.0, %v2550
    %v2552 = vpop.f32.mrf.mxu0
    %v2553 = vpop.f32.mrf.mxu0
    %v2554 = vpop.f32.mrf.mxu0
    %2555 = vdwg.mxu0
    %v2556 = vadd.f32 %v2279, %v2551
    %v2557 = vld [vmem:[%s9] sm:$0x1]
    %v2559 = vlaneseq
    %v2560 = vshrl.u32 %v2559, 7
    %v2561 = vsub.s32 0, %v2560
    %v2562 = vrot.slane %v2557, %v2561
    %v2564 = vadd.f32 %v2556, %v2562
    %v2565 = vtanh.pop %v2564
    %v2566 = vmul.f32 %v2447, %v2041
    %v2567 = vsub.f32 1.0, %v2447
    %v2568 = vmul.f32 %v2567, %v2565
    %v2569 = vadd.f32 %v2566, %v2568
    %2570 = vst [vmem:[%s389] sm:$0xff] %v2569
    %s2571 = scalar_lea.vmem [#allocation3], 16
    %2572 = vst [vmem:[%s2571] sm:$0xff] %v2569
    %v2573 = vld [vmem:[#allocation2] sm:$0xff]
    %s2574 = scalar_lea.vmem %s0, 36
    %v2575 = vld [vmem:[%s2574] sm:$0xff]
    %v2576 = vld [vmem:[%s2574 + $0x8] sm:$0xf]
    %v2577 = vunpack.c.l.bf16 %v2575
    %v2578 = vunpack.c.h.bf16 %v2575
    %v2579 = vunpack.c.l.bf16 %v2576
    %v2580 = vpack.c.bf16 %v2573, %v2573
    %v2581 = vld [vmem:[#allocation4] sm:$0xff]
    %v2582 = vld [vmem:[#allocation4 + $0x8] sm:$0xff]
    %v2583 = vld [vmem:[#allocation4 + $0x10] sm:$0xff]
    %v2584 = vld [vmem:[#allocation4 + $0x18] sm:$0xff]
    %v2585 = vld [vmem:[#allocation4 + $0x20] sm:$0xff]
    %v2586 = vld [vmem:[#allocation4 + $0x28] sm:$0xff]
    %v2587 = vld [vmem:[#allocation4 + $0x30] sm:$0xff]
    %v2588 = vld [vmem:[#allocation4 + $0x38] sm:$0xff]
    %v2589 = vld [vmem:[#allocation4 + $0x40] sm:$0xff]
    %v2590 = vld [vmem:[#allocation4 + $0x48] sm:$0xff]
    %v2591 = vld [vmem:[#allocation4 + $0x50] sm:$0xff]
    %v2592 = vld [vmem:[#allocation4 + $0x58] sm:$0xff]
    %v2593 = vld [vmem:[#allocation4 + $0x60] sm:$0xff]
    %v2594 = vld [vmem:[#allocation4 + $0x68] sm:$0xff]
    %v2595 = vld [vmem:[#allocation4 + $0x70] sm:$0xff]
    %v2596 = vld [vmem:[#allocation4 + $0x78] sm:$0xff]
    %v2613 = vunpack.c.l.b16 %v2581
    %v2614 = vunpack.c.h.b16 %v2581
    %v2615 = vunpack.c.l.b16 %v2582
    %v2616 = vunpack.c.h.b16 %v2582
    %v2617 = vunpack.c.l.b16 %v2583
    %v2618 = vunpack.c.h.b16 %v2583
    %v2619 = vunpack.c.l.b16 %v2584
    %v2620 = vunpack.c.h.b16 %v2584
    %v2621 = vunpack.c.l.b16 %v2585
    %v2622 = vunpack.c.h.b16 %v2585
    %v2623 = vunpack.c.l.b16 %v2586
    %v2624 = vunpack.c.h.b16 %v2586
    %v2625 = vunpack.c.l.b16 %v2587
    %v2626 = vunpack.c.h.b16 %v2587
    %v2627 = vunpack.c.l.b16 %v2588
    %v2628 = vunpack.c.h.b16 %v2588
    %v2629 = vunpack.c.l.b16 %v2589
    %v2630 = vunpack.c.h.b16 %v2589
    %v2631 = vunpack.c.l.b16 %v2590
    %v2632 = vunpack.c.h.b16 %v2590
    %v2633 = vunpack.c.l.b16 %v2591
    %v2634 = vunpack.c.h.b16 %v2591
    %v2635 = vunpack.c.l.b16 %v2592
    %v2636 = vunpack.c.h.b16 %v2592
    %v2637 = vunpack.c.l.b16 %v2593
    %v2638 = vunpack.c.h.b16 %v2593
    %v2639 = vunpack.c.l.b16 %v2594
    %v2640 = vunpack.c.h.b16 %v2594
    %v2641 = vunpack.c.l.b16 %v2595
    %v2642 = vunpack.c.h.b16 %v2595
    %v2643 = vunpack.c.l.b16 %v2596
    %v2644 = vunpack.c.h.b16 %v2596
    %v2645 = vpack.c.b16 %v2615, %v2613
    %v2646 = vpack.c.b16 %v2616, %v2614
    %v2647 = vpack.c.b16 %v2619, %v2617
    %v2648 = vpack.c.b16 %v2620, %v2618
    %v2649 = vpack.c.b16 %v2623, %v2621
    %v2650 = vpack.c.b16 %v2624, %v2622
    %v2651 = vpack.c.b16 %v2627, %v2625
    %v2652 = vpack.c.b16 %v2628, %v2626
    %v2653 = vpack.c.b16 %v2631, %v2629
    %v2654 = vpack.c.b16 %v2632, %v2630
    %v2655 = vpack.c.b16 %v2635, %v2633
    %v2656 = vpack.c.b16 %v2636, %v2634
    %v2657 = vpack.c.b16 %v2639, %v2637
    %v2658 = vpack.c.b16 %v2640, %v2638
    %v2659 = vpack.c.b16 %v2643, %v2641
    %v2660 = vpack.c.b16 %v2644, %v2642
    %2677 = vmatprep.subr.bf16.mxu0 %v2660
    %2678 = vmatpush1.bf16.msra.mxu0 %v2659
    %2679 = vmatprep.subr.bf16.mxu0 %v2658
    %2680 = vmatpush1.bf16.msra.mxu0 %v2657
    %2681 = vmatprep.subr.bf16.mxu0 %v2656
    %2682 = vmatpush1.bf16.msra.mxu0 %v2655
    %2683 = vmatprep.subr.bf16.mxu0 %v2654
    %2684 = vmatpush1.bf16.msra.mxu0 %v2653
    %2685 = vmatprep.subr.bf16.mxu0 %v2652
    %2686 = vmatpush1.bf16.msra.mxu0 %v2651
    %2687 = vmatprep.subr.bf16.mxu0 %v2650
    %2688 = vmatpush1.bf16.msra.mxu0 %v2649
    %2689 = vmatprep.subr.bf16.mxu0 %v2648
    %2690 = vmatpush1.bf16.msra.mxu0 %v2647
    %2691 = vmatprep.subr.bf16.mxu0 %v2646
    %2692 = vmatpush1.bf16.msra.mxu0 %v2645
    %2693 = vmatprep.subr.bf16.mxu0 0
    %2694 = vmatpush2.bf16.msra.mxu0 0
    %2695 = vmatprep.subr.bf16.mxu0 0
    %2696 = vmatpush2.bf16.msra.mxu0 0
    %2697 = vmatprep.subr.bf16.mxu0 0
    %2698 = vmatpush2.bf16.msra.mxu0 0
    %2699 = vmatprep.subr.bf16.mxu0 0
    %2700 = vmatpush2.bf16.msra.mxu0 0
    %2701 = vmatprep.subr.bf16.mxu0 0
    %2702 = vmatpush2.bf16.msra.mxu0 0
    %2703 = vmatprep.subr.bf16.mxu0 0
    %2704 = vmatpush2.bf16.msra.mxu0 0
    %2705 = vmatprep.subr.bf16.mxu0 0
    %2706 = vmatpush2.bf16.msra.mxu0 0
    %2707 = vmatprep.subr.bf16.mxu0 0
    %2708 = vmatpush2.bf16.msra.mxu0 0
    %2709 = vmatprep.mubr.bf16.mxu0 0
    %2710 = vmatmul.mubr.bf16.gmra.mxu0 %v2580
    %v2711 = vpop.f32.mrf.mxu0
    %v2712 = vadd.f32 0.0, %v2711
    %v2713 = vpop.f32.mrf.mxu0
    %v2714 = vadd.f32 0.0, %v2713
    %v2715 = vpop.f32.mrf.mxu0
    %v2716 = vpop.f32.mrf.mxu0
    %2717 = vdwg.mxu0
    %v2718 = vadd.f32 %v2577, %v2712
    %v2719 = vadd.f32 %v2578, %v2714
    %v2720 = vld [vmem:[%s4] sm:$0x3]
    %v2722 = vlaneseq
    %v2723 = vshrl.u32 %v2722, 7
    %v2724 = vsub.s32 0, %v2723
    %v2725 = vrot.slane %v2720, %v2724
    %v2726 = vlaneseq
    %v2727 = vshrl.u32 %v2726, 7
    %v2728 = vsub.s32 1, %v2727
    %v2729 = vrot.slane %v2720, %v2728
    %v2732 = vadd.f32 %v2718, %v2725
    %v2733 = vadd.f32 %v2719, %v2729
    %v2734 = vxor.u32 %v2732, 2147483648
    %v2735 = vxor.u32 %v2733, 2147483648
    %v2736 = vmul.f32 %v2734, 1.442695
    %v2737 = vpow.pop %v2736
    %v2738 = vmul.f32 %v2735, 1.442695
    %v2739 = vpow.pop %v2738
    %v2740 = vadd.f32 %v2737, 1.0
    %v2741 = vadd.f32 %v2739, 1.0
    %v2742 = vrcp.pop %v2740
    %v2743 = vmul.f32 1.0, %v2742
    %v2744 = vrcp.pop %v2741
    %v2745 = vmul.f32 1.0, %v2744
    %v2746 = vmul.f32 %v2745, %v2573
    %v2747 = vpack.c.bf16 %v2746, %v2746
    %v2748 = vld [vmem:[#allocation6] sm:$0xf]
    %v2749 = vld [vmem:[#allocation6 + $0x4] sm:$0xf]
    %v2750 = vld [vmem:[#allocation6 + $0x8] sm:$0xf]
    %v2751 = vld [vmem:[#allocation6 + $0xc] sm:$0xf]
    %v2752 = vld [vmem:[#allocation6 + $0x10] sm:$0xf]
    %v2753 = vld [vmem:[#allocation6 + $0x14] sm:$0xf]
    %v2754 = vld [vmem:[#allocation6 + $0x18] sm:$0xf]
    %v2755 = vld [vmem:[#allocation6 + $0x1c] sm:$0xf]
    %v2756 = vld [vmem:[#allocation6 + $0x20] sm:$0xf]
    %v2757 = vld [vmem:[#allocation6 + $0x24] sm:$0xf]
    %v2758 = vld [vmem:[#allocation6 + $0x28] sm:$0xf]
    %v2759 = vld [vmem:[#allocation6 + $0x2c] sm:$0xf]
    %v2760 = vld [vmem:[#allocation6 + $0x30] sm:$0xf]
    %v2761 = vld [vmem:[#allocation6 + $0x34] sm:$0xf]
    %v2762 = vld [vmem:[#allocation6 + $0x38] sm:$0xf]
    %v2763 = vld [vmem:[#allocation6 + $0x3c] sm:$0xf]
    %v2780 = vunpack.c.l.b16 %v2748
    %v2781 = vunpack.c.l.b16 %v2749
    %v2782 = vunpack.c.l.b16 %v2750
    %v2783 = vunpack.c.l.b16 %v2751
    %v2784 = vunpack.c.l.b16 %v2752
    %v2785 = vunpack.c.l.b16 %v2753
    %v2786 = vunpack.c.l.b16 %v2754
    %v2787 = vunpack.c.l.b16 %v2755
    %v2788 = vunpack.c.l.b16 %v2756
    %v2789 = vunpack.c.l.b16 %v2757
    %v2790 = vunpack.c.l.b16 %v2758
    %v2791 = vunpack.c.l.b16 %v2759
    %v2792 = vunpack.c.l.b16 %v2760
    %v2793 = vunpack.c.l.b16 %v2761
    %v2794 = vunpack.c.l.b16 %v2762
    %v2795 = vunpack.c.l.b16 %v2763
    %v2796 = vpack.c.b16 %v2781, %v2780
    %v2797 = vpack.c.b16 %v2783, %v2782
    %v2798 = vpack.c.b16 %v2785, %v2784
    %v2799 = vpack.c.b16 %v2787, %v2786
    %v2800 = vpack.c.b16 %v2789, %v2788
    %v2801 = vpack.c.b16 %v2791, %v2790
    %v2802 = vpack.c.b16 %v2793, %v2792
    %v2803 = vpack.c.b16 %v2795, %v2794
    %2812 = vmatprep.subr.bf16.mxu0 0
    %2813 = vmatpush1.bf16.msra.mxu0 %v2803
    %2814 = vmatprep.subr.bf16.mxu0 0
    %2815 = vmatpush1.bf16.msra.mxu0 %v2802
    %2816 = vmatprep.subr.bf16.mxu0 0
    %2817 = vmatpush1.bf16.msra.mxu0 %v2801
    %2818 = vmatprep.subr.bf16.mxu0 0
    %2819 = vmatpush1.bf16.msra.mxu0 %v2800
    %2820 = vmatprep.subr.bf16.mxu0 0
    %2821 = vmatpush1.bf16.msra.mxu0 %v2799
    %2822 = vmatprep.subr.bf16.mxu0 0
    %2823 = vmatpush1.bf16.msra.mxu0 %v2798
    %2824 = vmatprep.subr.bf16.mxu0 0
    %2825 = vmatpush1.bf16.msra.mxu0 %v2797
    %2826 = vmatprep.subr.bf16.mxu0 0
    %2827 = vmatpush1.bf16.msra.mxu0 %v2796
    %2828 = vmatprep.subr.bf16.mxu0 0
    %2829 = vmatpush2.bf16.msra.mxu0 0
    %2830 = vmatprep.subr.bf16.mxu0 0
    %2831 = vmatpush2.bf16.msra.mxu0 0
    %2832 = vmatprep.subr.bf16.mxu0 0
    %2833 = vmatpush2.bf16.msra.mxu0 0
    %2834 = vmatprep.subr.bf16.mxu0 0
    %2835 = vmatpush2.bf16.msra.mxu0 0
    %2836 = vmatprep.subr.bf16.mxu0 0
    %2837 = vmatpush2.bf16.msra.mxu0 0
    %2838 = vmatprep.subr.bf16.mxu0 0
    %2839 = vmatpush2.bf16.msra.mxu0 0
    %2840 = vmatprep.subr.bf16.mxu0 0
    %2841 = vmatpush2.bf16.msra.mxu0 0
    %2842 = vmatprep.subr.bf16.mxu0 0
    %2843 = vmatpush2.bf16.msra.mxu0 0
    %2844 = vmatprep.mubr.bf16.mxu0 0
    %2845 = vmatmul.mubr.bf16.gmra.mxu0 %v2747
    %v2846 = vpop.f32.mrf.mxu0
    %v2847 = vadd.f32 0.0, %v2846
    %v2848 = vpop.f32.mrf.mxu0
    %v2849 = vpop.f32.mrf.mxu0
    %v2850 = vpop.f32.mrf.mxu0
    %2851 = vdwg.mxu0
    %v2852 = vadd.f32 %v2579, %v2847
    %v2853 = vld [vmem:[%s5] sm:$0x1]
    %v2855 = vlaneseq
    %v2856 = vshrl.u32 %v2855, 7
    %v2857 = vsub.s32 0, %v2856
    %v2858 = vrot.slane %v2853, %v2857
    %v2860 = vadd.f32 %v2852, %v2858
    %v2861 = vtanh.pop %v2860
    %v2862 = vmul.f32 %v2743, %v2573
    %v2863 = vsub.f32 1.0, %v2743
    %v2864 = vmul.f32 %v2863, %v2861
    %v2865 = vadd.f32 %v2862, %v2864
    %2866 = vst [vmem:[#allocation2] sm:$0xff] %v2865
    %v2867 = vld [vmem:[%s389] sm:$0xff]
    %v2868 = vpack.c.bf16 %v2865, %v2865
    %v2869 = vld [vmem:[%s10] sm:$0xff]
    %v2870 = vld [vmem:[%s10 + $0x8] sm:$0xf]
    %v2871 = vld [vmem:[%s10 + $0xc] sm:$0xff]
    %v2872 = vld [vmem:[%s10 + $0x14] sm:$0xf]
    %v2873 = vld [vmem:[%s10 + $0x18] sm:$0xff]
    %v2874 = vld [vmem:[%s10 + $0x20] sm:$0xf]
    %v2875 = vld [vmem:[%s10 + $0x24] sm:$0xff]
    %v2876 = vld [vmem:[%s10 + $0x2c] sm:$0xf]
    %v2877 = vld [vmem:[%s10 + $0x30] sm:$0xff]
    %v2878 = vld [vmem:[%s10 + $0x38] sm:$0xf]
    %v2879 = vld [vmem:[%s10 + $0x3c] sm:$0xff]
    %v2880 = vld [vmem:[%s10 + $0x44] sm:$0xf]
    %v2881 = vld [vmem:[%s10 + $0x48] sm:$0xff]
    %v2882 = vld [vmem:[%s10 + $0x50] sm:$0xf]
    %v2883 = vld [vmem:[%s10 + $0x54] sm:$0xff]
    %v2884 = vld [vmem:[%s10 + $0x5c] sm:$0xf]
    %v2885 = vld [vmem:[%s10 + $0x60] sm:$0xff]
    %v2886 = vld [vmem:[%s10 + $0x68] sm:$0xf]
    %v2887 = vld [vmem:[%s10 + $0x6c] sm:$0xff]
    %v2888 = vld [vmem:[%s10 + $0x74] sm:$0xf]
    %v2889 = vld [vmem:[%s10 + $0x78] sm:$0xff]
    %v2890 = vld [vmem:[%s10 + $0x80] sm:$0xf]
    %v2891 = vld [vmem:[%s10 + $0x84] sm:$0xff]
    %v2892 = vld [vmem:[%s10 + $0x8c] sm:$0xf]
    %v2893 = vld [vmem:[%s10 + $0x90] sm:$0xff]
    %v2894 = vld [vmem:[%s10 + $0x98] sm:$0xf]
    %v2895 = vld [vmem:[%s10 + $0x9c] sm:$0xff]
    %v2896 = vld [vmem:[%s10 + $0xa4] sm:$0xf]
    %v2897 = vld [vmem:[%s10 + $0xa8] sm:$0xff]
    %v2898 = vld [vmem:[%s10 + $0xb0] sm:$0xf]
    %v2899 = vld [vmem:[%s10 + $0xb4] sm:$0xff]
    %v2900 = vld [vmem:[%s10 + $0xbc] sm:$0xf]
    %v2933 = vunpack.c.l.b16 %v2869
    %v2934 = vunpack.c.h.b16 %v2869
    %v2935 = vunpack.c.l.b16 %v2870
    %v2936 = vunpack.c.l.b16 %v2871
    %v2937 = vunpack.c.h.b16 %v2871
    %v2938 = vunpack.c.l.b16 %v2872
    %v2939 = vunpack.c.l.b16 %v2873
    %v2940 = vunpack.c.h.b16 %v2873
    %v2941 = vunpack.c.l.b16 %v2874
    %v2942 = vunpack.c.l.b16 %v2875
    %v2943 = vunpack.c.h.b16 %v2875
    %v2944 = vunpack.c.l.b16 %v2876
    %v2945 = vunpack.c.l.b16 %v2877
    %v2946 = vunpack.c.h.b16 %v2877
    %v2947 = vunpack.c.l.b16 %v2878
    %v2948 = vunpack.c.l.b16 %v2879
    %v2949 = vunpack.c.h.b16 %v2879
    %v2950 = vunpack.c.l.b16 %v2880
    %v2951 = vunpack.c.l.b16 %v2881
    %v2952 = vunpack.c.h.b16 %v2881
    %v2953 = vunpack.c.l.b16 %v2882
    %v2954 = vunpack.c.l.b16 %v2883
    %v2955 = vunpack.c.h.b16 %v2883
    %v2956 = vunpack.c.l.b16 %v2884
    %v2957 = vunpack.c.l.b16 %v2885
    %v2958 = vunpack.c.h.b16 %v2885
    %v2959 = vunpack.c.l.b16 %v2886
    %v2960 = vunpack.c.l.b16 %v2887
    %v2961 = vunpack.c.h.b16 %v2887
    %v2962 = vunpack.c.l.b16 %v2888
    %v2963 = vunpack.c.l.b16 %v2889
    %v2964 = vunpack.c.h.b16 %v2889
    %v2965 = vunpack.c.l.b16 %v2890
    %v2966 = vunpack.c.l.b16 %v2891
    %v2967 = vunpack.c.h.b16 %v2891
    %v2968 = vunpack.c.l.b16 %v2892
    %v2969 = vunpack.c.l.b16 %v2893
    %v2970 = vunpack.c.h.b16 %v2893
    %v2971 = vunpack.c.l.b16 %v2894
    %v2972 = vunpack.c.l.b16 %v2895
    %v2973 = vunpack.c.h.b16 %v2895
    %v2974 = vunpack.c.l.b16 %v2896
    %v2975 = vunpack.c.l.b16 %v2897
    %v2976 = vunpack.c.h.b16 %v2897
    %v2977 = vunpack.c.l.b16 %v2898
    %v2978 = vunpack.c.l.b16 %v2899
    %v2979 = vunpack.c.h.b16 %v2899
    %v2980 = vunpack.c.l.b16 %v2900
    %v2981 = vpack.c.b16 %v2936, %v2933
    %v2982 = vpack.c.b16 %v2937, %v2934
    %v2983 = vpack.c.b16 %v2938, %v2935
    %v2984 = vpack.c.b16 %v2942, %v2939
    %v2985 = vpack.c.b16 %v2943, %v2940
    %v2986 = vpack.c.b16 %v2944, %v2941
    %v2987 = vpack.c.b16 %v2948, %v2945
    %v2988 = vpack.c.b16 %v2949, %v2946
    %v2989 = vpack.c.b16 %v2950, %v2947
    %v2990 = vpack.c.b16 %v2954, %v2951
    %v2991 = vpack.c.b16 %v2955, %v2952
    %v2992 = vpack.c.b16 %v2956, %v2953
    %v2993 = vpack.c.b16 %v2960, %v2957
    %v2994 = vpack.c.b16 %v2961, %v2958
    %v2995 = vpack.c.b16 %v2962, %v2959
    %v2996 = vpack.c.b16 %v2966, %v2963
    %v2997 = vpack.c.b16 %v2967, %v2964
    %v2998 = vpack.c.b16 %v2968, %v2965
    %v2999 = vpack.c.b16 %v2972, %v2969
    %v3000 = vpack.c.b16 %v2973, %v2970
    %v3001 = vpack.c.b16 %v2974, %v2971
    %v3002 = vpack.c.b16 %v2978, %v2975
    %v3003 = vpack.c.b16 %v2979, %v2976
    %v3004 = vpack.c.b16 %v2980, %v2977
    %3029 = vmatprep.subr.bf16.mxu0 %v3003
    %3030 = vmatpush1.bf16.msra.mxu0 %v3002
    %3031 = vmatprep.subr.bf16.mxu0 %v3000
    %3032 = vmatpush1.bf16.msra.mxu0 %v2999
    %3033 = vmatprep.subr.bf16.mxu0 %v2997
    %3034 = vmatpush1.bf16.msra.mxu0 %v2996
    %3035 = vmatprep.subr.bf16.mxu0 %v2994
    %3036 = vmatpush1.bf16.msra.mxu0 %v2993
    %3037 = vmatprep.subr.bf16.mxu0 %v2991
    %3038 = vmatpush1.bf16.msra.mxu0 %v2990
    %3039 = vmatprep.subr.bf16.mxu0 %v2988
    %3040 = vmatpush1.bf16.msra.mxu0 %v2987
    %3041 = vmatprep.subr.bf16.mxu0 %v2985
    %3042 = vmatpush1.bf16.msra.mxu0 %v2984
    %3043 = vmatprep.subr.bf16.mxu0 %v2982
    %3044 = vmatpush1.bf16.msra.mxu0 %v2981
    %3045 = vmatprep.subr.bf16.mxu0 0
    %3046 = vmatpush2.bf16.msra.mxu0 0
    %3047 = vmatprep.subr.bf16.mxu0 0
    %3048 = vmatpush2.bf16.msra.mxu0 0
    %3049 = vmatprep.subr.bf16.mxu0 0
    %3050 = vmatpush2.bf16.msra.mxu0 0
    %3051 = vmatprep.subr.bf16.mxu0 0
    %3052 = vmatpush2.bf16.msra.mxu0 0
    %3053 = vmatprep.subr.bf16.mxu0 0
    %3054 = vmatpush2.bf16.msra.mxu0 0
    %3055 = vmatprep.subr.bf16.mxu0 0
    %3056 = vmatpush2.bf16.msra.mxu0 0
    %3057 = vmatprep.subr.bf16.mxu0 0
    %3058 = vmatpush2.bf16.msra.mxu0 0
    %3059 = vmatprep.subr.bf16.mxu0 0
    %3060 = vmatpush2.bf16.msra.mxu0 0
    %3061 = vmatprep.mubr.bf16.mxu0 0
    %3062 = vmatmul.mubr.bf16.gmra.mxu0 %v2868
    %v3063 = vpop.f32.mrf.mxu0
    %v3064 = vadd.f32 0.0, %v3063
    %v3065 = vpop.f32.mrf.mxu0
    %v3066 = vadd.f32 0.0, %v3065
    %v3067 = vpop.f32.mrf.mxu0
    %v3068 = vpop.f32.mrf.mxu0
    %3069 = vdwg.mxu0
    %3070 = vmatprep.subr.bf16.mxu0 0
    %3071 = vmatpush1.bf16.msra.mxu0 %v3004
    %3072 = vmatprep.subr.bf16.mxu0 0
    %3073 = vmatpush1.bf16.msra.mxu0 %v3001
    %3074 = vmatprep.subr.bf16.mxu0 0
    %3075 = vmatpush1.bf16.msra.mxu0 %v2998
    %3076 = vmatprep.subr.bf16.mxu0 0
    %3077 = vmatpush1.bf16.msra.mxu0 %v2995
    %3078 = vmatprep.subr.bf16.mxu0 0
    %3079 = vmatpush1.bf16.msra.mxu0 %v2992
    %3080 = vmatprep.subr.bf16.mxu0 0
    %3081 = vmatpush1.bf16.msra.mxu0 %v2989
    %3082 = vmatprep.subr.bf16.mxu0 0
    %3083 = vmatpush1.bf16.msra.mxu0 %v2986
    %3084 = vmatprep.subr.bf16.mxu0 0
    %3085 = vmatpush1.bf16.msra.mxu0 %v2983
    %3086 = vmatprep.subr.bf16.mxu0 0
    %3087 = vmatpush2.bf16.msra.mxu0 0
    %3088 = vmatprep.subr.bf16.mxu0 0
    %3089 = vmatpush2.bf16.msra.mxu0 0
    %3090 = vmatprep.subr.bf16.mxu0 0
    %3091 = vmatpush2.bf16.msra.mxu0 0
    %3092 = vmatprep.subr.bf16.mxu0 0
    %3093 = vmatpush2.bf16.msra.mxu0 0
    %3094 = vmatprep.subr.bf16.mxu0 0
    %3095 = vmatpush2.bf16.msra.mxu0 0
    %3096 = vmatprep.subr.bf16.mxu0 0
    %3097 = vmatpush2.bf16.msra.mxu0 0
    %3098 = vmatprep.subr.bf16.mxu0 0
    %3099 = vmatpush2.bf16.msra.mxu0 0
    %3100 = vmatprep.subr.bf16.mxu0 0
    %3101 = vmatpush2.bf16.msra.mxu0 0
    %3102 = vmatprep.mubr.bf16.mxu0 0
    %3103 = vmatmul.mubr.bf16.gmra.mxu0 %v2868
    %v3104 = vpop.f32.mrf.mxu0
    %v3105 = vadd.f32 0.0, %v3104
    %v3106 = vpop.f32.mrf.mxu0
    %v3107 = vpop.f32.mrf.mxu0
    %v3108 = vpop.f32.mrf.mxu0
    %3109 = vdwg.mxu0
    %v3110 = vpack.c.bf16 %v2867, %v2867
    %v3111 = vld [vmem:[%s6] sm:$0xff]
    %v3112 = vld [vmem:[%s6 + $0x8] sm:$0xff]
    %v3113 = vld [vmem:[%s6 + $0x10] sm:$0xff]
    %v3114 = vld [vmem:[%s6 + $0x18] sm:$0xff]
    %v3115 = vld [vmem:[%s6 + $0x20] sm:$0xff]
    %v3116 = vld [vmem:[%s6 + $0x28] sm:$0xff]
    %v3117 = vld [vmem:[%s6 + $0x30] sm:$0xff]
    %v3118 = vld [vmem:[%s6 + $0x38] sm:$0xff]
    %v3119 = vld [vmem:[%s6 + $0x40] sm:$0xff]
    %v3120 = vld [vmem:[%s6 + $0x48] sm:$0xff]
    %v3121 = vld [vmem:[%s6 + $0x50] sm:$0xff]
    %v3122 = vld [vmem:[%s6 + $0x58] sm:$0xff]
    %v3123 = vld [vmem:[%s6 + $0x60] sm:$0xff]
    %v3124 = vld [vmem:[%s6 + $0x68] sm:$0xff]
    %v3125 = vld [vmem:[%s6 + $0x70] sm:$0xff]
    %v3126 = vld [vmem:[%s6 + $0x78] sm:$0xff]
    %v3143 = vunpack.c.l.b16 %v3111
    %v3144 = vunpack.c.h.b16 %v3111
    %v3145 = vunpack.c.l.b16 %v3112
    %v3146 = vunpack.c.h.b16 %v3112
    %v3147 = vunpack.c.l.b16 %v3113
    %v3148 = vunpack.c.h.b16 %v3113
    %v3149 = vunpack.c.l.b16 %v3114
    %v3150 = vunpack.c.h.b16 %v3114
    %v3151 = vunpack.c.l.b16 %v3115
    %v3152 = vunpack.c.h.b16 %v3115
    %v3153 = vunpack.c.l.b16 %v3116
    %v3154 = vunpack.c.h.b16 %v3116
    %v3155 = vunpack.c.l.b16 %v3117
    %v3156 = vunpack.c.h.b16 %v3117
    %v3157 = vunpack.c.l.b16 %v3118
    %v3158 = vunpack.c.h.b16 %v3118
    %v3159 = vunpack.c.l.b16 %v3119
    %v3160 = vunpack.c.h.b16 %v3119
    %v3161 = vunpack.c.l.b16 %v3120
    %v3162 = vunpack.c.h.b16 %v3120
    %v3163 = vunpack.c.l.b16 %v3121
    %v3164 = vunpack.c.h.b16 %v3121
    %v3165 = vunpack.c.l.b16 %v3122
    %v3166 = vunpack.c.h.b16 %v3122
    %v3167 = vunpack.c.l.b16 %v3123
    %v3168 = vunpack.c.h.b16 %v3123
    %v3169 = vunpack.c.l.b16 %v3124
    %v3170 = vunpack.c.h.b16 %v3124
    %v3171 = vunpack.c.l.b16 %v3125
    %v3172 = vunpack.c.h.b16 %v3125
    %v3173 = vunpack.c.l.b16 %v3126
    %v3174 = vunpack.c.h.b16 %v3126
    %v3175 = vpack.c.b16 %v3145, %v3143
    %v3176 = vpack.c.b16 %v3146, %v3144
    %v3177 = vpack.c.b16 %v3149, %v3147
    %v3178 = vpack.c.b16 %v3150, %v3148
    %v3179 = vpack.c.b16 %v3153, %v3151
    %v3180 = vpack.c.b16 %v3154, %v3152
    %v3181 = vpack.c.b16 %v3157, %v3155
    %v3182 = vpack.c.b16 %v3158, %v3156
    %v3183 = vpack.c.b16 %v3161, %v3159
    %v3184 = vpack.c.b16 %v3162, %v3160
    %v3185 = vpack.c.b16 %v3165, %v3163
    %v3186 = vpack.c.b16 %v3166, %v3164
    %v3187 = vpack.c.b16 %v3169, %v3167
    %v3188 = vpack.c.b16 %v3170, %v3168
    %v3189 = vpack.c.b16 %v3173, %v3171
    %v3190 = vpack.c.b16 %v3174, %v3172
    %3207 = vmatprep.subr.bf16.mxu0 %v3190
    %3208 = vmatpush1.bf16.msra.mxu0 %v3189
    %3209 = vmatprep.subr.bf16.mxu0 %v3188
    %3210 = vmatpush1.bf16.msra.mxu0 %v3187
    %3211 = vmatprep.subr.bf16.mxu0 %v3186
    %3212 = vmatpush1.bf16.msra.mxu0 %v3185
    %3213 = vmatprep.subr.bf16.mxu0 %v3184
    %3214 = vmatpush1.bf16.msra.mxu0 %v3183
    %3215 = vmatprep.subr.bf16.mxu0 %v3182
    %3216 = vmatpush1.bf16.msra.mxu0 %v3181
    %3217 = vmatprep.subr.bf16.mxu0 %v3180
    %3218 = vmatpush1.bf16.msra.mxu0 %v3179
    %3219 = vmatprep.subr.bf16.mxu0 %v3178
    %3220 = vmatpush1.bf16.msra.mxu0 %v3177
    %3221 = vmatprep.subr.bf16.mxu0 %v3176
    %3222 = vmatpush1.bf16.msra.mxu0 %v3175
    %3223 = vmatprep.subr.bf16.mxu0 0
    %3224 = vmatpush2.bf16.msra.mxu0 0
    %3225 = vmatprep.subr.bf16.mxu0 0
    %3226 = vmatpush2.bf16.msra.mxu0 0
    %3227 = vmatprep.subr.bf16.mxu0 0
    %3228 = vmatpush2.bf16.msra.mxu0 0
    %3229 = vmatprep.subr.bf16.mxu0 0
    %3230 = vmatpush2.bf16.msra.mxu0 0
    %3231 = vmatprep.subr.bf16.mxu0 0
    %3232 = vmatpush2.bf16.msra.mxu0 0
    %3233 = vmatprep.subr.bf16.mxu0 0
    %3234 = vmatpush2.bf16.msra.mxu0 0
    %3235 = vmatprep.subr.bf16.mxu0 0
    %3236 = vmatpush2.bf16.msra.mxu0 0
    %3237 = vmatprep.subr.bf16.mxu0 0
    %3238 = vmatpush2.bf16.msra.mxu0 0
    %3239 = vmatprep.mubr.bf16.mxu0 0
    %3240 = vmatmul.mubr.bf16.gmra.mxu0 %v3110
    %v3241 = vpop.f32.mrf.mxu0
    %v3242 = vadd.f32 0.0, %v3241
    %v3243 = vpop.f32.mrf.mxu0
    %v3244 = vadd.f32 0.0, %v3243
    %v3245 = vpop.f32.mrf.mxu0
    %v3246 = vpop.f32.mrf.mxu0
    %3247 = vdwg.mxu0
    %v3248 = vadd.f32 %v3064, %v3242
    %v3249 = vadd.f32 %v3066, %v3244
    %v3250 = vld [vmem:[%s8] sm:$0x3]
    %v3252 = vlaneseq
    %v3253 = vshrl.u32 %v3252, 7
    %v3254 = vsub.s32 0, %v3253
    %v3255 = vrot.slane %v3250, %v3254
    %v3256 = vlaneseq
    %v3257 = vshrl.u32 %v3256, 7
    %v3258 = vsub.s32 1, %v3257
    %v3259 = vrot.slane %v3250, %v3258
    %v3262 = vadd.f32 %v3248, %v3255
    %v3263 = vadd.f32 %v3249, %v3259
    %v3264 = vxor.u32 %v3262, 2147483648
    %v3265 = vxor.u32 %v3263, 2147483648
    %v3266 = vmul.f32 %v3264, 1.442695
    %v3267 = vpow.pop %v3266
    %v3268 = vmul.f32 %v3265, 1.442695
    %v3269 = vpow.pop %v3268
    %v3270 = vadd.f32 %v3267, 1.0
    %v3271 = vadd.f32 %v3269, 1.0
    %v3272 = vrcp.pop %v3270
    %v3273 = vmul.f32 1.0, %v3272
    %v3274 = vrcp.pop %v3271
    %v3275 = vmul.f32 1.0, %v3274
    %v3276 = vmul.f32 %v3275, %v2867
    %v3277 = vpack.c.bf16 %v3276, %v3276
    %v3278 = vld [vmem:[#allocation8] sm:$0xf]
    %v3279 = vld [vmem:[#allocation8 + $0x4] sm:$0xf]
    %v3280 = vld [vmem:[#allocation8 + $0x8] sm:$0xf]
    %v3281 = vld [vmem:[#allocation8 + $0xc] sm:$0xf]
    %v3282 = vld [vmem:[#allocation8 + $0x10] sm:$0xf]
    %v3283 = vld [vmem:[#allocation8 + $0x14] sm:$0xf]
    %v3284 = vld [vmem:[#allocation8 + $0x18] sm:$0xf]
    %v3285 = vld [vmem:[#allocation8 + $0x1c] sm:$0xf]
    %v3286 = vld [vmem:[#allocation8 + $0x20] sm:$0xf]
    %v3287 = vld [vmem:[#allocation8 + $0x24] sm:$0xf]
    %v3288 = vld [vmem:[#allocation8 + $0x28] sm:$0xf]
    %v3289 = vld [vmem:[#allocation8 + $0x2c] sm:$0xf]
    %v3290 = vld [vmem:[#allocation8 + $0x30] sm:$0xf]
    %v3291 = vld [vmem:[#allocation8 + $0x34] sm:$0xf]
    %v3292 = vld [vmem:[#allocation8 + $0x38] sm:$0xf]
    %v3293 = vld [vmem:[#allocation8 + $0x3c] sm:$0xf]
    %v3310 = vunpack.c.l.b16 %v3278
    %v3311 = vunpack.c.l.b16 %v3279
    %v3312 = vunpack.c.l.b16 %v3280
    %v3313 = vunpack.c.l.b16 %v3281
    %v3314 = vunpack.c.l.b16 %v3282
    %v3315 = vunpack.c.l.b16 %v3283
    %v3316 = vunpack.c.l.b16 %v3284
    %v3317 = vunpack.c.l.b16 %v3285
    %v3318 = vunpack.c.l.b16 %v3286
    %v3319 = vunpack.c.l.b16 %v3287
    %v3320 = vunpack.c.l.b16 %v3288
    %v3321 = vunpack.c.l.b16 %v3289
    %v3322 = vunpack.c.l.b16 %v3290
    %v3323 = vunpack.c.l.b16 %v3291
    %v3324 = vunpack.c.l.b16 %v3292
    %v3325 = vunpack.c.l.b16 %v3293
    %v3326 = vpack.c.b16 %v3311, %v3310
    %v3327 = vpack.c.b16 %v3313, %v3312
    %v3328 = vpack.c.b16 %v3315, %v3314
    %v3329 = vpack.c.b16 %v3317, %v3316
    %v3330 = vpack.c.b16 %v3319, %v3318
    %v3331 = vpack.c.b16 %v3321, %v3320
    %v3332 = vpack.c.b16 %v3323, %v3322
    %v3333 = vpack.c.b16 %v3325, %v3324
    %3342 = vmatprep.subr.bf16.mxu0 0
    %3343 = vmatpush1.bf16.msra.mxu0 %v3333
    %3344 = vmatprep.subr.bf16.mxu0 0
    %3345 = vmatpush1.bf16.msra.mxu0 %v3332
    %3346 = vmatprep.subr.bf16.mxu0 0
    %3347 = vmatpush1.bf16.msra.mxu0 %v3331
    %3348 = vmatprep.subr.bf16.mxu0 0
    %3349 = vmatpush1.bf16.msra.mxu0 %v3330
    %3350 = vmatprep.subr.bf16.mxu0 0
    %3351 = vmatpush1.bf16.msra.mxu0 %v3329
    %3352 = vmatprep.subr.bf16.mxu0 0
    %3353 = vmatpush1.bf16.msra.mxu0 %v3328
    %3354 = vmatprep.subr.bf16.mxu0 0
    %3355 = vmatpush1.bf16.msra.mxu0 %v3327
    %3356 = vmatprep.subr.bf16.mxu0 0
    %3357 = vmatpush1.bf16.msra.mxu0 %v3326
    %3358 = vmatprep.subr.bf16.mxu0 0
    %3359 = vmatpush2.bf16.msra.mxu0 0
    %3360 = vmatprep.subr.bf16.mxu0 0
    %3361 = vmatpush2.bf16.msra.mxu0 0
    %3362 = vmatprep.subr.bf16.mxu0 0
    %3363 = vmatpush2.bf16.msra.mxu0 0
    %3364 = vmatprep.subr.bf16.mxu0 0
    %3365 = vmatpush2.bf16.msra.mxu0 0
    %3366 = vmatprep.subr.bf16.mxu0 0
    %3367 = vmatpush2.bf16.msra.mxu0 0
    %3368 = vmatprep.subr.bf16.mxu0 0
    %3369 = vmatpush2.bf16.msra.mxu0 0
    %3370 = vmatprep.subr.bf16.mxu0 0
    %3371 = vmatpush2.bf16.msra.mxu0 0
    %3372 = vmatprep.subr.bf16.mxu0 0
    %3373 = vmatpush2.bf16.msra.mxu0 0
    %3374 = vmatprep.mubr.bf16.mxu0 0
    %3375 = vmatmul.mubr.bf16.gmra.mxu0 %v3277
    %v3376 = vpop.f32.mrf.mxu0
    %v3377 = vadd.f32 0.0, %v3376
    %v3378 = vpop.f32.mrf.mxu0
    %v3379 = vpop.f32.mrf.mxu0
    %v3380 = vpop.f32.mrf.mxu0
    %3381 = vdwg.mxu0
    %v3382 = vadd.f32 %v3105, %v3377
    %v3383 = vld [vmem:[%s9] sm:$0x1]
    %v3385 = vlaneseq
    %v3386 = vshrl.u32 %v3385, 7
    %v3387 = vsub.s32 0, %v3386
    %v3388 = vrot.slane %v3383, %v3387
    %v3390 = vadd.f32 %v3382, %v3388
    %v3391 = vtanh.pop %v3390
    %v3392 = vmul.f32 %v3273, %v2867
    %v3393 = vsub.f32 1.0, %v3273
    %v3394 = vmul.f32 %v3393, %v3391
    %v3395 = vadd.f32 %v3392, %v3394
    %3396 = vst [vmem:[%s389] sm:$0xff] %v3395
    %s3397 = scalar_lea.vmem [#allocation3], 24
    %3398 = vst [vmem:[%s3397] sm:$0xff] %v3395
    %v3399 = vld [vmem:[#allocation2] sm:$0xff]
    %s3400 = scalar_lea.vmem %s0, 48
    %v3401 = vld [vmem:[%s3400] sm:$0xff]
    %v3402 = vld [vmem:[%s3400 + $0x8] sm:$0xf]
    %v3403 = vunpack.c.l.bf16 %v3401
    %v3404 = vunpack.c.h.bf16 %v3401
    %v3405 = vunpack.c.l.bf16 %v3402
    %v3406 = vpack.c.bf16 %v3399, %v3399
    %v3407 = vld [vmem:[#allocation4] sm:$0xff]
    %v3408 = vld [vmem:[#allocation4 + $0x8] sm:$0xff]
    %v3409 = vld [vmem:[#allocation4 + $0x10] sm:$0xff]
    %v3410 = vld [vmem:[#allocation4 + $0x18] sm:$0xff]
    %v3411 = vld [vmem:[#allocation4 + $0x20] sm:$0xff]
    %v3412 = vld [vmem:[#allocation4 + $0x28] sm:$0xff]
    %v3413 = vld [vmem:[#allocation4 + $0x30] sm:$0xff]
    %v3414 = vld [vmem:[#allocation4 + $0x38] sm:$0xff]
    %v3415 = vld [vmem:[#allocation4 + $0x40] sm:$0xff]
    %v3416 = vld [vmem:[#allocation4 + $0x48] sm:$0xff]
    %v3417 = vld [vmem:[#allocation4 + $0x50] sm:$0xff]
    %v3418 = vld [vmem:[#allocation4 + $0x58] sm:$0xff]
    %v3419 = vld [vmem:[#allocation4 + $0x60] sm:$0xff]
    %v3420 = vld [vmem:[#allocation4 + $0x68] sm:$0xff]
    %v3421 = vld [vmem:[#allocation4 + $0x70] sm:$0xff]
    %v3422 = vld [vmem:[#allocation4 + $0x78] sm:$0xff]
    %v3439 = vunpack.c.l.b16 %v3407
    %v3440 = vunpack.c.h.b16 %v3407
    %v3441 = vunpack.c.l.b16 %v3408
    %v3442 = vunpack.c.h.b16 %v3408
    %v3443 = vunpack.c.l.b16 %v3409
    %v3444 = vunpack.c.h.b16 %v3409
    %v3445 = vunpack.c.l.b16 %v3410
    %v3446 = vunpack.c.h.b16 %v3410
    %v3447 = vunpack.c.l.b16 %v3411
    %v3448 = vunpack.c.h.b16 %v3411
    %v3449 = vunpack.c.l.b16 %v3412
    %v3450 = vunpack.c.h.b16 %v3412
    %v3451 = vunpack.c.l.b16 %v3413
    %v3452 = vunpack.c.h.b16 %v3413
    %v3453 = vunpack.c.l.b16 %v3414
    %v3454 = vunpack.c.h.b16 %v3414
    %v3455 = vunpack.c.l.b16 %v3415
    %v3456 = vunpack.c.h.b16 %v3415
    %v3457 = vunpack.c.l.b16 %v3416
    %v3458 = vunpack.c.h.b16 %v3416
    %v3459 = vunpack.c.l.b16 %v3417
    %v3460 = vunpack.c.h.b16 %v3417
    %v3461 = vunpack.c.l.b16 %v3418
    %v3462 = vunpack.c.h.b16 %v3418
    %v3463 = vunpack.c.l.b16 %v3419
    %v3464 = vunpack.c.h.b16 %v3419
    %v3465 = vunpack.c.l.b16 %v3420
    %v3466 = vunpack.c.h.b16 %v3420
    %v3467 = vunpack.c.l.b16 %v3421
    %v3468 = vunpack.c.h.b16 %v3421
    %v3469 = vunpack.c.l.b16 %v3422
    %v3470 = vunpack.c.h.b16 %v3422
    %v3471 = vpack.c.b16 %v3441, %v3439
    %v3472 = vpack.c.b16 %v3442, %v3440
    %v3473 = vpack.c.b16 %v3445, %v3443
    %v3474 = vpack.c.b16 %v3446, %v3444
    %v3475 = vpack.c.b16 %v3449, %v3447
    %v3476 = vpack.c.b16 %v3450, %v3448
    %v3477 = vpack.c.b16 %v3453, %v3451
    %v3478 = vpack.c.b16 %v3454, %v3452
    %v3479 = vpack.c.b16 %v3457, %v3455
    %v3480 = vpack.c.b16 %v3458, %v3456
    %v3481 = vpack.c.b16 %v3461, %v3459
    %v3482 = vpack.c.b16 %v3462, %v3460
    %v3483 = vpack.c.b16 %v3465, %v3463
    %v3484 = vpack.c.b16 %v3466, %v3464
    %v3485 = vpack.c.b16 %v3469, %v3467
    %v3486 = vpack.c.b16 %v3470, %v3468
    %3503 = vmatprep.subr.bf16.mxu0 %v3486
    %3504 = vmatpush1.bf16.msra.mxu0 %v3485
    %3505 = vmatprep.subr.bf16.mxu0 %v3484
    %3506 = vmatpush1.bf16.msra.mxu0 %v3483
    %3507 = vmatprep.subr.bf16.mxu0 %v3482
    %3508 = vmatpush1.bf16.msra.mxu0 %v3481
    %3509 = vmatprep.subr.bf16.mxu0 %v3480
    %3510 = vmatpush1.bf16.msra.mxu0 %v3479
    %3511 = vmatprep.subr.bf16.mxu0 %v3478
    %3512 = vmatpush1.bf16.msra.mxu0 %v3477
    %3513 = vmatprep.subr.bf16.mxu0 %v3476
    %3514 = vmatpush1.bf16.msra.mxu0 %v3475
    %3515 = vmatprep.subr.bf16.mxu0 %v3474
    %3516 = vmatpush1.bf16.msra.mxu0 %v3473
    %3517 = vmatprep.subr.bf16.mxu0 %v3472
    %3518 = vmatpush1.bf16.msra.mxu0 %v3471
    %3519 = vmatprep.subr.bf16.mxu0 0
    %3520 = vmatpush2.bf16.msra.mxu0 0
    %3521 = vmatprep.subr.bf16.mxu0 0
    %3522 = vmatpush2.bf16.msra.mxu0 0
    %3523 = vmatprep.subr.bf16.mxu0 0
    %3524 = vmatpush2.bf16.msra.mxu0 0
    %3525 = vmatprep.subr.bf16.mxu0 0
    %3526 = vmatpush2.bf16.msra.mxu0 0
    %3527 = vmatprep.subr.bf16.mxu0 0
    %3528 = vmatpush2.bf16.msra.mxu0 0
    %3529 = vmatprep.subr.bf16.mxu0 0
    %3530 = vmatpush2.bf16.msra.mxu0 0
    %3531 = vmatprep.subr.bf16.mxu0 0
    %3532 = vmatpush2.bf16.msra.mxu0 0
    %3533 = vmatprep.subr.bf16.mxu0 0
    %3534 = vmatpush2.bf16.msra.mxu0 0
    %3535 = vmatprep.mubr.bf16.mxu0 0
    %3536 = vmatmul.mubr.bf16.gmra.mxu0 %v3406
    %v3537 = vpop.f32.mrf.mxu0
    %v3538 = vadd.f32 0.0, %v3537
    %v3539 = vpop.f32.mrf.mxu0
    %v3540 = vadd.f32 0.0, %v3539
    %v3541 = vpop.f32.mrf.mxu0
    %v3542 = vpop.f32.mrf.mxu0
    %3543 = vdwg.mxu0
    %v3544 = vadd.f32 %v3403, %v3538
    %v3545 = vadd.f32 %v3404, %v3540
    %v3546 = vld [vmem:[%s4] sm:$0x3]
    %v3548 = vlaneseq
    %v3549 = vshrl.u32 %v3548, 7
    %v3550 = vsub.s32 0, %v3549
    %v3551 = vrot.slane %v3546, %v3550
    %v3552 = vlaneseq
    %v3553 = vshrl.u32 %v3552, 7
    %v3554 = vsub.s32 1, %v3553
    %v3555 = vrot.slane %v3546, %v3554
    %v3558 = vadd.f32 %v3544, %v3551
    %v3559 = vadd.f32 %v3545, %v3555
    %v3560 = vxor.u32 %v3558, 2147483648
    %v3561 = vxor.u32 %v3559, 2147483648
    %v3562 = vmul.f32 %v3560, 1.442695
    %v3563 = vpow.pop %v3562
    %v3564 = vmul.f32 %v3561, 1.442695
    %v3565 = vpow.pop %v3564
    %v3566 = vadd.f32 %v3563, 1.0
    %v3567 = vadd.f32 %v3565, 1.0
    %v3568 = vrcp.pop %v3566
    %v3569 = vmul.f32 1.0, %v3568
    %v3570 = vrcp.pop %v3567
    %v3571 = vmul.f32 1.0, %v3570
    %v3572 = vmul.f32 %v3571, %v3399
    %v3573 = vpack.c.bf16 %v3572, %v3572
    %v3574 = vld [vmem:[#allocation6] sm:$0xf]
    %v3575 = vld [vmem:[#allocation6 + $0x4] sm:$0xf]
    %v3576 = vld [vmem:[#allocation6 + $0x8] sm:$0xf]
    %v3577 = vld [vmem:[#allocation6 + $0xc] sm:$0xf]
    %v3578 = vld [vmem:[#allocation6 + $0x10] sm:$0xf]
    %v3579 = vld [vmem:[#allocation6 + $0x14] sm:$0xf]
    %v3580 = vld [vmem:[#allocation6 + $0x18] sm:$0xf]
    %v3581 = vld [vmem:[#allocation6 + $0x1c] sm:$0xf]
    %v3582 = vld [vmem:[#allocation6 + $0x20] sm:$0xf]
    %v3583 = vld [vmem:[#allocation6 + $0x24] sm:$0xf]
    %v3584 = vld [vmem:[#allocation6 + $0x28] sm:$0xf]
    %v3585 = vld [vmem:[#allocation6 + $0x2c] sm:$0xf]
    %v3586 = vld [vmem:[#allocation6 + $0x30] sm:$0xf]
    %v3587 = vld [vmem:[#allocation6 + $0x34] sm:$0xf]
    %v3588 = vld [vmem:[#allocation6 + $0x38] sm:$0xf]
    %v3589 = vld [vmem:[#allocation6 + $0x3c] sm:$0xf]
    %v3606 = vunpack.c.l.b16 %v3574
    %v3607 = vunpack.c.l.b16 %v3575
    %v3608 = vunpack.c.l.b16 %v3576
    %v3609 = vunpack.c.l.b16 %v3577
    %v3610 = vunpack.c.l.b16 %v3578
    %v3611 = vunpack.c.l.b16 %v3579
    %v3612 = vunpack.c.l.b16 %v3580
    %v3613 = vunpack.c.l.b16 %v3581
    %v3614 = vunpack.c.l.b16 %v3582
    %v3615 = vunpack.c.l.b16 %v3583
    %v3616 = vunpack.c.l.b16 %v3584
    %v3617 = vunpack.c.l.b16 %v3585
    %v3618 = vunpack.c.l.b16 %v3586
    %v3619 = vunpack.c.l.b16 %v3587
    %v3620 = vunpack.c.l.b16 %v3588
    %v3621 = vunpack.c.l.b16 %v3589
    %v3622 = vpack.c.b16 %v3607, %v3606
    %v3623 = vpack.c.b16 %v3609, %v3608
    %v3624 = vpack.c.b16 %v3611, %v3610
    %v3625 = vpack.c.b16 %v3613, %v3612
    %v3626 = vpack.c.b16 %v3615, %v3614
    %v3627 = vpack.c.b16 %v3617, %v3616
    %v3628 = vpack.c.b16 %v3619, %v3618
    %v3629 = vpack.c.b16 %v3621, %v3620
    %3638 = vmatprep.subr.bf16.mxu0 0
    %3639 = vmatpush1.bf16.msra.mxu0 %v3629
    %3640 = vmatprep.subr.bf16.mxu0 0
    %3641 = vmatpush1.bf16.msra.mxu0 %v3628
    %3642 = vmatprep.subr.bf16.mxu0 0
    %3643 = vmatpush1.bf16.msra.mxu0 %v3627
    %3644 = vmatprep.subr.bf16.mxu0 0
    %3645 = vmatpush1.bf16.msra.mxu0 %v3626
    %3646 = vmatprep.subr.bf16.mxu0 0
    %3647 = vmatpush1.bf16.msra.mxu0 %v3625
    %3648 = vmatprep.subr.bf16.mxu0 0
    %3649 = vmatpush1.bf16.msra.mxu0 %v3624
    %3650 = vmatprep.subr.bf16.mxu0 0
    %3651 = vmatpush1.bf16.msra.mxu0 %v3623
    %3652 = vmatprep.subr.bf16.mxu0 0
    %3653 = vmatpush1.bf16.msra.mxu0 %v3622
    %3654 = vmatprep.subr.bf16.mxu0 0
    %3655 = vmatpush2.bf16.msra.mxu0 0
    %3656 = vmatprep.subr.bf16.mxu0 0
    %3657 = vmatpush2.bf16.msra.mxu0 0
    %3658 = vmatprep.subr.bf16.mxu0 0
    %3659 = vmatpush2.bf16.msra.mxu0 0
    %3660 = vmatprep.subr.bf16.mxu0 0
    %3661 = vmatpush2.bf16.msra.mxu0 0
    %3662 = vmatprep.subr.bf16.mxu0 0
    %3663 = vmatpush2.bf16.msra.mxu0 0
    %3664 = vmatprep.subr.bf16.mxu0 0
    %3665 = vmatpush2.bf16.msra.mxu0 0
    %3666 = vmatprep.subr.bf16.mxu0 0
    %3667 = vmatpush2.bf16.msra.mxu0 0
    %3668 = vmatprep.subr.bf16.mxu0 0
    %3669 = vmatpush2.bf16.msra.mxu0 0
    %3670 = vmatprep.mubr.bf16.mxu0 0
    %3671 = vmatmul.mubr.bf16.gmra.mxu0 %v3573
    %v3672 = vpop.f32.mrf.mxu0
    %v3673 = vadd.f32 0.0, %v3672
    %v3674 = vpop.f32.mrf.mxu0
    %v3675 = vpop.f32.mrf.mxu0
    %v3676 = vpop.f32.mrf.mxu0
    %3677 = vdwg.mxu0
    %v3678 = vadd.f32 %v3405, %v3673
    %v3679 = vld [vmem:[%s5] sm:$0x1]
    %v3681 = vlaneseq
    %v3682 = vshrl.u32 %v3681, 7
    %v3683 = vsub.s32 0, %v3682
    %v3684 = vrot.slane %v3679, %v3683
    %v3686 = vadd.f32 %v3678, %v3684
    %v3687 = vtanh.pop %v3686
    %v3688 = vmul.f32 %v3569, %v3399
    %v3689 = vsub.f32 1.0, %v3569
    %v3690 = vmul.f32 %v3689, %v3687
    %v3691 = vadd.f32 %v3688, %v3690
    %3692 = vst [vmem:[#allocation2] sm:$0xff] %v3691
    %v3693 = vld [vmem:[%s389] sm:$0xff]
    %v3694 = vpack.c.bf16 %v3691, %v3691
    %v3695 = vld [vmem:[%s10] sm:$0xff]
    %v3696 = vld [vmem:[%s10 + $0x8] sm:$0xf]
    %v3697 = vld [vmem:[%s10 + $0xc] sm:$0xff]
    %v3698 = vld [vmem:[%s10 + $0x14] sm:$0xf]
    %v3699 = vld [vmem:[%s10 + $0x18] sm:$0xff]
    %v3700 = vld [vmem:[%s10 + $0x20] sm:$0xf]
    %v3701 = vld [vmem:[%s10 + $0x24] sm:$0xff]
    %v3702 = vld [vmem:[%s10 + $0x2c] sm:$0xf]
    %v3703 = vld [vmem:[%s10 + $0x30] sm:$0xff]
    %v3704 = vld [vmem:[%s10 + $0x38] sm:$0xf]
    %v3705 = vld [vmem:[%s10 + $0x3c] sm:$0xff]
    %v3706 = vld [vmem:[%s10 + $0x44] sm:$0xf]
    %v3707 = vld [vmem:[%s10 + $0x48] sm:$0xff]
    %v3708 = vld [vmem:[%s10 + $0x50] sm:$0xf]
    %v3709 = vld [vmem:[%s10 + $0x54] sm:$0xff]
    %v3710 = vld [vmem:[%s10 + $0x5c] sm:$0xf]
    %v3711 = vld [vmem:[%s10 + $0x60] sm:$0xff]
    %v3712 = vld [vmem:[%s10 + $0x68] sm:$0xf]
    %v3713 = vld [vmem:[%s10 + $0x6c] sm:$0xff]
    %v3714 = vld [vmem:[%s10 + $0x74] sm:$0xf]
    %v3715 = vld [vmem:[%s10 + $0x78] sm:$0xff]
    %v3716 = vld [vmem:[%s10 + $0x80] sm:$0xf]
    %v3717 = vld [vmem:[%s10 + $0x84] sm:$0xff]
    %v3718 = vld [vmem:[%s10 + $0x8c] sm:$0xf]
    %v3719 = vld [vmem:[%s10 + $0x90] sm:$0xff]
    %v3720 = vld [vmem:[%s10 + $0x98] sm:$0xf]
    %v3721 = vld [vmem:[%s10 + $0x9c] sm:$0xff]
    %v3722 = vld [vmem:[%s10 + $0xa4] sm:$0xf]
    %v3723 = vld [vmem:[%s10 + $0xa8] sm:$0xff]
    %v3724 = vld [vmem:[%s10 + $0xb0] sm:$0xf]
    %v3725 = vld [vmem:[%s10 + $0xb4] sm:$0xff]
    %v3726 = vld [vmem:[%s10 + $0xbc] sm:$0xf]
    %v3759 = vunpack.c.l.b16 %v3695
    %v3760 = vunpack.c.h.b16 %v3695
    %v3761 = vunpack.c.l.b16 %v3696
    %v3762 = vunpack.c.l.b16 %v3697
    %v3763 = vunpack.c.h.b16 %v3697
    %v3764 = vunpack.c.l.b16 %v3698
    %v3765 = vunpack.c.l.b16 %v3699
    %v3766 = vunpack.c.h.b16 %v3699
    %v3767 = vunpack.c.l.b16 %v3700
    %v3768 = vunpack.c.l.b16 %v3701
    %v3769 = vunpack.c.h.b16 %v3701
    %v3770 = vunpack.c.l.b16 %v3702
    %v3771 = vunpack.c.l.b16 %v3703
    %v3772 = vunpack.c.h.b16 %v3703
    %v3773 = vunpack.c.l.b16 %v3704
    %v3774 = vunpack.c.l.b16 %v3705
    %v3775 = vunpack.c.h.b16 %v3705
    %v3776 = vunpack.c.l.b16 %v3706
    %v3777 = vunpack.c.l.b16 %v3707
    %v3778 = vunpack.c.h.b16 %v3707
    %v3779 = vunpack.c.l.b16 %v3708
    %v3780 = vunpack.c.l.b16 %v3709
    %v3781 = vunpack.c.h.b16 %v3709
    %v3782 = vunpack.c.l.b16 %v3710
    %v3783 = vunpack.c.l.b16 %v3711
    %v3784 = vunpack.c.h.b16 %v3711
    %v3785 = vunpack.c.l.b16 %v3712
    %v3786 = vunpack.c.l.b16 %v3713
    %v3787 = vunpack.c.h.b16 %v3713
    %v3788 = vunpack.c.l.b16 %v3714
    %v3789 = vunpack.c.l.b16 %v3715
    %v3790 = vunpack.c.h.b16 %v3715
    %v3791 = vunpack.c.l.b16 %v3716
    %v3792 = vunpack.c.l.b16 %v3717
    %v3793 = vunpack.c.h.b16 %v3717
    %v3794 = vunpack.c.l.b16 %v3718
    %v3795 = vunpack.c.l.b16 %v3719
    %v3796 = vunpack.c.h.b16 %v3719
    %v3797 = vunpack.c.l.b16 %v3720
    %v3798 = vunpack.c.l.b16 %v3721
    %v3799 = vunpack.c.h.b16 %v3721
    %v3800 = vunpack.c.l.b16 %v3722
    %v3801 = vunpack.c.l.b16 %v3723
    %v3802 = vunpack.c.h.b16 %v3723
    %v3803 = vunpack.c.l.b16 %v3724
    %v3804 = vunpack.c.l.b16 %v3725
    %v3805 = vunpack.c.h.b16 %v3725
    %v3806 = vunpack.c.l.b16 %v3726
    %v3807 = vpack.c.b16 %v3762, %v3759
    %v3808 = vpack.c.b16 %v3763, %v3760
    %v3809 = vpack.c.b16 %v3764, %v3761
    %v3810 = vpack.c.b16 %v3768, %v3765
    %v3811 = vpack.c.b16 %v3769, %v3766
    %v3812 = vpack.c.b16 %v3770, %v3767
    %v3813 = vpack.c.b16 %v3774, %v3771
    %v3814 = vpack.c.b16 %v3775, %v3772
    %v3815 = vpack.c.b16 %v3776, %v3773
    %v3816 = vpack.c.b16 %v3780, %v3777
    %v3817 = vpack.c.b16 %v3781, %v3778
    %v3818 = vpack.c.b16 %v3782, %v3779
    %v3819 = vpack.c.b16 %v3786, %v3783
    %v3820 = vpack.c.b16 %v3787, %v3784
    %v3821 = vpack.c.b16 %v3788, %v3785
    %v3822 = vpack.c.b16 %v3792, %v3789
    %v3823 = vpack.c.b16 %v3793, %v3790
    %v3824 = vpack.c.b16 %v3794, %v3791
    %v3825 = vpack.c.b16 %v3798, %v3795
    %v3826 = vpack.c.b16 %v3799, %v3796
    %v3827 = vpack.c.b16 %v3800, %v3797
    %v3828 = vpack.c.b16 %v3804, %v3801
    %v3829 = vpack.c.b16 %v3805, %v3802
    %v3830 = vpack.c.b16 %v3806, %v3803
    %3855 = vmatprep.subr.bf16.mxu0 %v3829
    %3856 = vmatpush1.bf16.msra.mxu0 %v3828
    %3857 = vmatprep.subr.bf16.mxu0 %v3826
    %3858 = vmatpush1.bf16.msra.mxu0 %v3825
    %3859 = vmatprep.subr.bf16.mxu0 %v3823
    %3860 = vmatpush1.bf16.msra.mxu0 %v3822
    %3861 = vmatprep.subr.bf16.mxu0 %v3820
    %3862 = vmatpush1.bf16.msra.mxu0 %v3819
    %3863 = vmatprep.subr.bf16.mxu0 %v3817
    %3864 = vmatpush1.bf16.msra.mxu0 %v3816
    %3865 = vmatprep.subr.bf16.mxu0 %v3814
    %3866 = vmatpush1.bf16.msra.mxu0 %v3813
    %3867 = vmatprep.subr.bf16.mxu0 %v3811
    %3868 = vmatpush1.bf16.msra.mxu0 %v3810
    %3869 = vmatprep.subr.bf16.mxu0 %v3808
    %3870 = vmatpush1.bf16.msra.mxu0 %v3807
    %3871 = vmatprep.subr.bf16.mxu0 0
    %3872 = vmatpush2.bf16.msra.mxu0 0
    %3873 = vmatprep.subr.bf16.mxu0 0
    %3874 = vmatpush2.bf16.msra.mxu0 0
    %3875 = vmatprep.subr.bf16.mxu0 0
    %3876 = vmatpush2.bf16.msra.mxu0 0
    %3877 = vmatprep.subr.bf16.mxu0 0
    %3878 = vmatpush2.bf16.msra.mxu0 0
    %3879 = vmatprep.subr.bf16.mxu0 0
    %3880 = vmatpush2.bf16.msra.mxu0 0
    %3881 = vmatprep.subr.bf16.mxu0 0
    %3882 = vmatpush2.bf16.msra.mxu0 0
    %3883 = vmatprep.subr.bf16.mxu0 0
    %3884 = vmatpush2.bf16.msra.mxu0 0
    %3885 = vmatprep.subr.bf16.mxu0 0
    %3886 = vmatpush2.bf16.msra.mxu0 0
    %3887 = vmatprep.mubr.bf16.mxu0 0
    %3888 = vmatmul.mubr.bf16.gmra.mxu0 %v3694
    %v3889 = vpop.f32.mrf.mxu0
    %v3890 = vadd.f32 0.0, %v3889
    %v3891 = vpop.f32.mrf.mxu0
    %v3892 = vadd.f32 0.0, %v3891
    %v3893 = vpop.f32.mrf.mxu0
    %v3894 = vpop.f32.mrf.mxu0
    %3895 = vdwg.mxu0
    %3896 = vmatprep.subr.bf16.mxu0 0
    %3897 = vmatpush1.bf16.msra.mxu0 %v3830
    %3898 = vmatprep.subr.bf16.mxu0 0
    %3899 = vmatpush1.bf16.msra.mxu0 %v3827
    %3900 = vmatprep.subr.bf16.mxu0 0
    %3901 = vmatpush1.bf16.msra.mxu0 %v3824
    %3902 = vmatprep.subr.bf16.mxu0 0
    %3903 = vmatpush1.bf16.msra.mxu0 %v3821
    %3904 = vmatprep.subr.bf16.mxu0 0
    %3905 = vmatpush1.bf16.msra.mxu0 %v3818
    %3906 = vmatprep.subr.bf16.mxu0 0
    %3907 = vmatpush1.bf16.msra.mxu0 %v3815
    %3908 = vmatprep.subr.bf16.mxu0 0
    %3909 = vmatpush1.bf16.msra.mxu0 %v3812
    %3910 = vmatprep.subr.bf16.mxu0 0
    %3911 = vmatpush1.bf16.msra.mxu0 %v3809
    %3912 = vmatprep.subr.bf16.mxu0 0
    %3913 = vmatpush2.bf16.msra.mxu0 0
    %3914 = vmatprep.subr.bf16.mxu0 0
    %3915 = vmatpush2.bf16.msra.mxu0 0
    %3916 = vmatprep.subr.bf16.mxu0 0
    %3917 = vmatpush2.bf16.msra.mxu0 0
    %3918 = vmatprep.subr.bf16.mxu0 0
    %3919 = vmatpush2.bf16.msra.mxu0 0
    %3920 = vmatprep.subr.bf16.mxu0 0
    %3921 = vmatpush2.bf16.msra.mxu0 0
    %3922 = vmatprep.subr.bf16.mxu0 0
    %3923 = vmatpush2.bf16.msra.mxu0 0
    %3924 = vmatprep.subr.bf16.mxu0 0
    %3925 = vmatpush2.bf16.msra.mxu0 0
    %3926 = vmatprep.subr.bf16.mxu0 0
    %3927 = vmatpush2.bf16.msra.mxu0 0
    %3928 = vmatprep.mubr.bf16.mxu0 0
    %3929 = vmatmul.mubr.bf16.gmra.mxu0 %v3694
    %v3930 = vpop.f32.mrf.mxu0
    %v3931 = vadd.f32 0.0, %v3930
    %v3932 = vpop.f32.mrf.mxu0
    %v3933 = vpop.f32.mrf.mxu0
    %v3934 = vpop.f32.mrf.mxu0
    %3935 = vdwg.mxu0
    %v3936 = vpack.c.bf16 %v3693, %v3693
    %v3937 = vld [vmem:[%s6] sm:$0xff]
    %v3938 = vld [vmem:[%s6 + $0x8] sm:$0xff]
    %v3939 = vld [vmem:[%s6 + $0x10] sm:$0xff]
    %v3940 = vld [vmem:[%s6 + $0x18] sm:$0xff]
    %v3941 = vld [vmem:[%s6 + $0x20] sm:$0xff]
    %v3942 = vld [vmem:[%s6 + $0x28] sm:$0xff]
    %v3943 = vld [vmem:[%s6 + $0x30] sm:$0xff]
    %v3944 = vld [vmem:[%s6 + $0x38] sm:$0xff]
    %v3945 = vld [vmem:[%s6 + $0x40] sm:$0xff]
    %v3946 = vld [vmem:[%s6 + $0x48] sm:$0xff]
    %v3947 = vld [vmem:[%s6 + $0x50] sm:$0xff]
    %v3948 = vld [vmem:[%s6 + $0x58] sm:$0xff]
    %v3949 = vld [vmem:[%s6 + $0x60] sm:$0xff]
    %v3950 = vld [vmem:[%s6 + $0x68] sm:$0xff]
    %v3951 = vld [vmem:[%s6 + $0x70] sm:$0xff]
    %v3952 = vld [vmem:[%s6 + $0x78] sm:$0xff]
    %v3969 = vunpack.c.l.b16 %v3937
    %v3970 = vunpack.c.h.b16 %v3937
    %v3971 = vunpack.c.l.b16 %v3938
    %v3972 = vunpack.c.h.b16 %v3938
    %v3973 = vunpack.c.l.b16 %v3939
    %v3974 = vunpack.c.h.b16 %v3939
    %v3975 = vunpack.c.l.b16 %v3940
    %v3976 = vunpack.c.h.b16 %v3940
    %v3977 = vunpack.c.l.b16 %v3941
    %v3978 = vunpack.c.h.b16 %v3941
    %v3979 = vunpack.c.l.b16 %v3942
    %v3980 = vunpack.c.h.b16 %v3942
    %v3981 = vunpack.c.l.b16 %v3943
    %v3982 = vunpack.c.h.b16 %v3943
    %v3983 = vunpack.c.l.b16 %v3944
    %v3984 = vunpack.c.h.b16 %v3944
    %v3985 = vunpack.c.l.b16 %v3945
    %v3986 = vunpack.c.h.b16 %v3945
    %v3987 = vunpack.c.l.b16 %v3946
    %v3988 = vunpack.c.h.b16 %v3946
    %v3989 = vunpack.c.l.b16 %v3947
    %v3990 = vunpack.c.h.b16 %v3947
    %v3991 = vunpack.c.l.b16 %v3948
    %v3992 = vunpack.c.h.b16 %v3948
    %v3993 = vunpack.c.l.b16 %v3949
    %v3994 = vunpack.c.h.b16 %v3949
    %v3995 = vunpack.c.l.b16 %v3950
    %v3996 = vunpack.c.h.b16 %v3950
    %v3997 = vunpack.c.l.b16 %v3951
    %v3998 = vunpack.c.h.b16 %v3951
    %v3999 = vunpack.c.l.b16 %v3952
    %v4000 = vunpack.c.h.b16 %v3952
    %v4001 = vpack.c.b16 %v3971, %v3969
    %v4002 = vpack.c.b16 %v3972, %v3970
    %v4003 = vpack.c.b16 %v3975, %v3973
    %v4004 = vpack.c.b16 %v3976, %v3974
    %v4005 = vpack.c.b16 %v3979, %v3977
    %v4006 = vpack.c.b16 %v3980, %v3978
    %v4007 = vpack.c.b16 %v3983, %v3981
    %v4008 = vpack.c.b16 %v3984, %v3982
    %v4009 = vpack.c.b16 %v3987, %v3985
    %v4010 = vpack.c.b16 %v3988, %v3986
    %v4011 = vpack.c.b16 %v3991, %v3989
    %v4012 = vpack.c.b16 %v3992, %v3990
    %v4013 = vpack.c.b16 %v3995, %v3993
    %v4014 = vpack.c.b16 %v3996, %v3994
    %v4015 = vpack.c.b16 %v3999, %v3997
    %v4016 = vpack.c.b16 %v4000, %v3998
    %4033 = vmatprep.subr.bf16.mxu0 %v4016
    %4034 = vmatpush1.bf16.msra.mxu0 %v4015
    %4035 = vmatprep.subr.bf16.mxu0 %v4014
    %4036 = vmatpush1.bf16.msra.mxu0 %v4013
    %4037 = vmatprep.subr.bf16.mxu0 %v4012
    %4038 = vmatpush1.bf16.msra.mxu0 %v4011
    %4039 = vmatprep.subr.bf16.mxu0 %v4010
    %4040 = vmatpush1.bf16.msra.mxu0 %v4009
    %4041 = vmatprep.subr.bf16.mxu0 %v4008
    %4042 = vmatpush1.bf16.msra.mxu0 %v4007
    %4043 = vmatprep.subr.bf16.mxu0 %v4006
    %4044 = vmatpush1.bf16.msra.mxu0 %v4005
    %4045 = vmatprep.subr.bf16.mxu0 %v4004
    %4046 = vmatpush1.bf16.msra.mxu0 %v4003
    %4047 = vmatprep.subr.bf16.mxu0 %v4002
    %4048 = vmatpush1.bf16.msra.mxu0 %v4001
    %4049 = vmatprep.subr.bf16.mxu0 0
    %4050 = vmatpush2.bf16.msra.mxu0 0
    %4051 = vmatprep.subr.bf16.mxu0 0
    %4052 = vmatpush2.bf16.msra.mxu0 0
    %4053 = vmatprep.subr.bf16.mxu0 0
    %4054 = vmatpush2.bf16.msra.mxu0 0
    %4055 = vmatprep.subr.bf16.mxu0 0
    %4056 = vmatpush2.bf16.msra.mxu0 0
    %4057 = vmatprep.subr.bf16.mxu0 0
    %4058 = vmatpush2.bf16.msra.mxu0 0
    %4059 = vmatprep.subr.bf16.mxu0 0
    %4060 = vmatpush2.bf16.msra.mxu0 0
    %4061 = vmatprep.subr.bf16.mxu0 0
    %4062 = vmatpush2.bf16.msra.mxu0 0
    %4063 = vmatprep.subr.bf16.mxu0 0
    %4064 = vmatpush2.bf16.msra.mxu0 0
    %4065 = vmatprep.mubr.bf16.mxu0 0
    %4066 = vmatmul.mubr.bf16.gmra.mxu0 %v3936
    %v4067 = vpop.f32.mrf.mxu0
    %v4068 = vadd.f32 0.0, %v4067
    %v4069 = vpop.f32.mrf.mxu0
    %v4070 = vadd.f32 0.0, %v4069
    %v4071 = vpop.f32.mrf.mxu0
    %v4072 = vpop.f32.mrf.mxu0
    %4073 = vdwg.mxu0
    %v4074 = vadd.f32 %v3890, %v4068
    %v4075 = vadd.f32 %v3892, %v4070
    %v4076 = vld [vmem:[%s8] sm:$0x3]
    %v4078 = vlaneseq
    %v4079 = vshrl.u32 %v4078, 7
    %v4080 = vsub.s32 0, %v4079
    %v4081 = vrot.slane %v4076, %v4080
    %v4082 = vlaneseq
    %v4083 = vshrl.u32 %v4082, 7
    %v4084 = vsub.s32 1, %v4083
    %v4085 = vrot.slane %v4076, %v4084
    %v4088 = vadd.f32 %v4074, %v4081
    %v4089 = vadd.f32 %v4075, %v4085
    %v4090 = vxor.u32 %v4088, 2147483648
    %v4091 = vxor.u32 %v4089, 2147483648
    %v4092 = vmul.f32 %v4090, 1.442695
    %v4093 = vpow.pop %v4092
    %v4094 = vmul.f32 %v4091, 1.442695
    %v4095 = vpow.pop %v4094
    %v4096 = vadd.f32 %v4093, 1.0
    %v4097 = vadd.f32 %v4095, 1.0
    %v4098 = vrcp.pop %v4096
    %v4099 = vmul.f32 1.0, %v4098
    %v4100 = vrcp.pop %v4097
    %v4101 = vmul.f32 1.0, %v4100
    %v4102 = vmul.f32 %v4101, %v3693
    %v4103 = vpack.c.bf16 %v4102, %v4102
    %v4104 = vld [vmem:[#allocation8] sm:$0xf]
    %v4105 = vld [vmem:[#allocation8 + $0x4] sm:$0xf]
    %v4106 = vld [vmem:[#allocation8 + $0x8] sm:$0xf]
    %v4107 = vld [vmem:[#allocation8 + $0xc] sm:$0xf]
    %v4108 = vld [vmem:[#allocation8 + $0x10] sm:$0xf]
    %v4109 = vld [vmem:[#allocation8 + $0x14] sm:$0xf]
    %v4110 = vld [vmem:[#allocation8 + $0x18] sm:$0xf]
    %v4111 = vld [vmem:[#allocation8 + $0x1c] sm:$0xf]
    %v4112 = vld [vmem:[#allocation8 + $0x20] sm:$0xf]
    %v4113 = vld [vmem:[#allocation8 + $0x24] sm:$0xf]
    %v4114 = vld [vmem:[#allocation8 + $0x28] sm:$0xf]
    %v4115 = vld [vmem:[#allocation8 + $0x2c] sm:$0xf]
    %v4116 = vld [vmem:[#allocation8 + $0x30] sm:$0xf]
    %v4117 = vld [vmem:[#allocation8 + $0x34] sm:$0xf]
    %v4118 = vld [vmem:[#allocation8 + $0x38] sm:$0xf]
    %v4119 = vld [vmem:[#allocation8 + $0x3c] sm:$0xf]
    %v4136 = vunpack.c.l.b16 %v4104
    %v4137 = vunpack.c.l.b16 %v4105
    %v4138 = vunpack.c.l.b16 %v4106
    %v4139 = vunpack.c.l.b16 %v4107
    %v4140 = vunpack.c.l.b16 %v4108
    %v4141 = vunpack.c.l.b16 %v4109
    %v4142 = vunpack.c.l.b16 %v4110
    %v4143 = vunpack.c.l.b16 %v4111
    %v4144 = vunpack.c.l.b16 %v4112
    %v4145 = vunpack.c.l.b16 %v4113
    %v4146 = vunpack.c.l.b16 %v4114
    %v4147 = vunpack.c.l.b16 %v4115
    %v4148 = vunpack.c.l.b16 %v4116
    %v4149 = vunpack.c.l.b16 %v4117
    %v4150 = vunpack.c.l.b16 %v4118
    %v4151 = vunpack.c.l.b16 %v4119
    %v4152 = vpack.c.b16 %v4137, %v4136
    %v4153 = vpack.c.b16 %v4139, %v4138
    %v4154 = vpack.c.b16 %v4141, %v4140
    %v4155 = vpack.c.b16 %v4143, %v4142
    %v4156 = vpack.c.b16 %v4145, %v4144
    %v4157 = vpack.c.b16 %v4147, %v4146
    %v4158 = vpack.c.b16 %v4149, %v4148
    %v4159 = vpack.c.b16 %v4151, %v4150
    %4168 = vmatprep.subr.bf16.mxu0 0
    %4169 = vmatpush1.bf16.msra.mxu0 %v4159
    %4170 = vmatprep.subr.bf16.mxu0 0
    %4171 = vmatpush1.bf16.msra.mxu0 %v4158
    %4172 = vmatprep.subr.bf16.mxu0 0
    %4173 = vmatpush1.bf16.msra.mxu0 %v4157
    %4174 = vmatprep.subr.bf16.mxu0 0
    %4175 = vmatpush1.bf16.msra.mxu0 %v4156
    %4176 = vmatprep.subr.bf16.mxu0 0
    %4177 = vmatpush1.bf16.msra.mxu0 %v4155
    %4178 = vmatprep.subr.bf16.mxu0 0
    %4179 = vmatpush1.bf16.msra.mxu0 %v4154
    %4180 = vmatprep.subr.bf16.mxu0 0
    %4181 = vmatpush1.bf16.msra.mxu0 %v4153
    %4182 = vmatprep.subr.bf16.mxu0 0
    %4183 = vmatpush1.bf16.msra.mxu0 %v4152
    %4184 = vmatprep.subr.bf16.mxu0 0
    %4185 = vmatpush2.bf16.msra.mxu0 0
    %4186 = vmatprep.subr.bf16.mxu0 0
    %4187 = vmatpush2.bf16.msra.mxu0 0
    %4188 = vmatprep.subr.bf16.mxu0 0
    %4189 = vmatpush2.bf16.msra.mxu0 0
    %4190 = vmatprep.subr.bf16.mxu0 0
    %4191 = vmatpush2.bf16.msra.mxu0 0
    %4192 = vmatprep.subr.bf16.mxu0 0
    %4193 = vmatpush2.bf16.msra.mxu0 0
    %4194 = vmatprep.subr.bf16.mxu0 0
    %4195 = vmatpush2.bf16.msra.mxu0 0
    %4196 = vmatprep.subr.bf16.mxu0 0
    %4197 = vmatpush2.bf16.msra.mxu0 0
    %4198 = vmatprep.subr.bf16.mxu0 0
    %4199 = vmatpush2.bf16.msra.mxu0 0
    %4200 = vmatprep.mubr.bf16.mxu0 0
    %4201 = vmatmul.mubr.bf16.gmra.mxu0 %v4103
    %v4202 = vpop.f32.mrf.mxu0
    %v4203 = vadd.f32 0.0, %v4202
    %v4204 = vpop.f32.mrf.mxu0
    %v4205 = vpop.f32.mrf.mxu0
    %v4206 = vpop.f32.mrf.mxu0
    %4207 = vdwg.mxu0
    %v4208 = vadd.f32 %v3931, %v4203
    %v4209 = vld [vmem:[%s9] sm:$0x1]
    %v4211 = vlaneseq
    %v4212 = vshrl.u32 %v4211, 7
    %v4213 = vsub.s32 0, %v4212
    %v4214 = vrot.slane %v4209, %v4213
    %v4216 = vadd.f32 %v4208, %v4214
    %v4217 = vtanh.pop %v4216
    %v4218 = vmul.f32 %v4099, %v3693
    %v4219 = vsub.f32 1.0, %v4099
    %v4220 = vmul.f32 %v4219, %v4217
    %v4221 = vadd.f32 %v4218, %v4220
    %4222 = vst [vmem:[%s389] sm:$0xff] %v4221
    %s4223 = scalar_lea.vmem [#allocation3], 32
    %4224 = vst [vmem:[%s4223] sm:$0xff] %v4221
    %v4225 = vld [vmem:[#allocation2] sm:$0xff]
    %s4226 = scalar_lea.vmem %s0, 60
    %v4227 = vld [vmem:[%s4226] sm:$0xff]
    %v4228 = vld [vmem:[%s4226 + $0x8] sm:$0xf]
    %v4229 = vunpack.c.l.bf16 %v4227
    %v4230 = vunpack.c.h.bf16 %v4227
    %v4231 = vunpack.c.l.bf16 %v4228
    %v4232 = vpack.c.bf16 %v4225, %v4225
    %v4233 = vld [vmem:[#allocation4] sm:$0xff]
    %v4234 = vld [vmem:[#allocation4 + $0x8] sm:$0xff]
    %v4235 = vld [vmem:[#allocation4 + $0x10] sm:$0xff]
    %v4236 = vld [vmem:[#allocation4 + $0x18] sm:$0xff]
    %v4237 = vld [vmem:[#allocation4 + $0x20] sm:$0xff]
    %v4238 = vld [vmem:[#allocation4 + $0x28] sm:$0xff]
    %v4239 = vld [vmem:[#allocation4 + $0x30] sm:$0xff]
    %v4240 = vld [vmem:[#allocation4 + $0x38] sm:$0xff]
    %v4241 = vld [vmem:[#allocation4 + $0x40] sm:$0xff]
    %v4242 = vld [vmem:[#allocation4 + $0x48] sm:$0xff]
    %v4243 = vld [vmem:[#allocation4 + $0x50] sm:$0xff]
    %v4244 = vld [vmem:[#allocation4 + $0x58] sm:$0xff]
    %v4245 = vld [vmem:[#allocation4 + $0x60] sm:$0xff]
    %v4246 = vld [vmem:[#allocation4 + $0x68] sm:$0xff]
    %v4247 = vld [vmem:[#allocation4 + $0x70] sm:$0xff]
    %v4248 = vld [vmem:[#allocation4 + $0x78] sm:$0xff]
    %v4265 = vunpack.c.l.b16 %v4233
    %v4266 = vunpack.c.h.b16 %v4233
    %v4267 = vunpack.c.l.b16 %v4234
    %v4268 = vunpack.c.h.b16 %v4234
    %v4269 = vunpack.c.l.b16 %v4235
    %v4270 = vunpack.c.h.b16 %v4235
    %v4271 = vunpack.c.l.b16 %v4236
    %v4272 = vunpack.c.h.b16 %v4236
    %v4273 = vunpack.c.l.b16 %v4237
    %v4274 = vunpack.c.h.b16 %v4237
    %v4275 = vunpack.c.l.b16 %v4238
    %v4276 = vunpack.c.h.b16 %v4238
    %v4277 = vunpack.c.l.b16 %v4239
    %v4278 = vunpack.c.h.b16 %v4239
    %v4279 = vunpack.c.l.b16 %v4240
    %v4280 = vunpack.c.h.b16 %v4240
    %v4281 = vunpack.c.l.b16 %v4241
    %v4282 = vunpack.c.h.b16 %v4241
    %v4283 = vunpack.c.l.b16 %v4242
    %v4284 = vunpack.c.h.b16 %v4242
    %v4285 = vunpack.c.l.b16 %v4243
    %v4286 = vunpack.c.h.b16 %v4243
    %v4287 = vunpack.c.l.b16 %v4244
    %v4288 = vunpack.c.h.b16 %v4244
    %v4289 = vunpack.c.l.b16 %v4245
    %v4290 = vunpack.c.h.b16 %v4245
    %v4291 = vunpack.c.l.b16 %v4246
    %v4292 = vunpack.c.h.b16 %v4246
    %v4293 = vunpack.c.l.b16 %v4247
    %v4294 = vunpack.c.h.b16 %v4247
    %v4295 = vunpack.c.l.b16 %v4248
    %v4296 = vunpack.c.h.b16 %v4248
    %v4297 = vpack.c.b16 %v4267, %v4265
    %v4298 = vpack.c.b16 %v4268, %v4266
    %v4299 = vpack.c.b16 %v4271, %v4269
    %v4300 = vpack.c.b16 %v4272, %v4270
    %v4301 = vpack.c.b16 %v4275, %v4273
    %v4302 = vpack.c.b16 %v4276, %v4274
    %v4303 = vpack.c.b16 %v4279, %v4277
    %v4304 = vpack.c.b16 %v4280, %v4278
    %v4305 = vpack.c.b16 %v4283, %v4281
    %v4306 = vpack.c.b16 %v4284, %v4282
    %v4307 = vpack.c.b16 %v4287, %v4285
    %v4308 = vpack.c.b16 %v4288, %v4286
    %v4309 = vpack.c.b16 %v4291, %v4289
    %v4310 = vpack.c.b16 %v4292, %v4290
    %v4311 = vpack.c.b16 %v4295, %v4293
    %v4312 = vpack.c.b16 %v4296, %v4294
    %4329 = vmatprep.subr.bf16.mxu0 %v4312
    %4330 = vmatpush1.bf16.msra.mxu0 %v4311
    %4331 = vmatprep.subr.bf16.mxu0 %v4310
    %4332 = vmatpush1.bf16.msra.mxu0 %v4309
    %4333 = vmatprep.subr.bf16.mxu0 %v4308
    %4334 = vmatpush1.bf16.msra.mxu0 %v4307
    %4335 = vmatprep.subr.bf16.mxu0 %v4306
    %4336 = vmatpush1.bf16.msra.mxu0 %v4305
    %4337 = vmatprep.subr.bf16.mxu0 %v4304
    %4338 = vmatpush1.bf16.msra.mxu0 %v4303
    %4339 = vmatprep.subr.bf16.mxu0 %v4302
    %4340 = vmatpush1.bf16.msra.mxu0 %v4301
    %4341 = vmatprep.subr.bf16.mxu0 %v4300
    %4342 = vmatpush1.bf16.msra.mxu0 %v4299
    %4343 = vmatprep.subr.bf16.mxu0 %v4298
    %4344 = vmatpush1.bf16.msra.mxu0 %v4297
    %4345 = vmatprep.subr.bf16.mxu0 0
    %4346 = vmatpush2.bf16.msra.mxu0 0
    %4347 = vmatprep.subr.bf16.mxu0 0
    %4348 = vmatpush2.bf16.msra.mxu0 0
    %4349 = vmatprep.subr.bf16.mxu0 0
    %4350 = vmatpush2.bf16.msra.mxu0 0
    %4351 = vmatprep.subr.bf16.mxu0 0
    %4352 = vmatpush2.bf16.msra.mxu0 0
    %4353 = vmatprep.subr.bf16.mxu0 0
    %4354 = vmatpush2.bf16.msra.mxu0 0
    %4355 = vmatprep.subr.bf16.mxu0 0
    %4356 = vmatpush2.bf16.msra.mxu0 0
    %4357 = vmatprep.subr.bf16.mxu0 0
    %4358 = vmatpush2.bf16.msra.mxu0 0
    %4359 = vmatprep.subr.bf16.mxu0 0
    %4360 = vmatpush2.bf16.msra.mxu0 0
    %4361 = vmatprep.mubr.bf16.mxu0 0
    %4362 = vmatmul.mubr.bf16.gmra.mxu0 %v4232
    %v4363 = vpop.f32.mrf.mxu0
    %v4364 = vadd.f32 0.0, %v4363
    %v4365 = vpop.f32.mrf.mxu0
    %v4366 = vadd.f32 0.0, %v4365
    %v4367 = vpop.f32.mrf.mxu0
    %v4368 = vpop.f32.mrf.mxu0
    %4369 = vdwg.mxu0
    %v4370 = vadd.f32 %v4229, %v4364
    %v4371 = vadd.f32 %v4230, %v4366
    %v4372 = vld [vmem:[%s4] sm:$0x3]
    %v4374 = vlaneseq
    %v4375 = vshrl.u32 %v4374, 7
    %v4376 = vsub.s32 0, %v4375
    %v4377 = vrot.slane %v4372, %v4376
    %v4378 = vlaneseq
    %v4379 = vshrl.u32 %v4378, 7
    %v4380 = vsub.s32 1, %v4379
    %v4381 = vrot.slane %v4372, %v4380
    %v4384 = vadd.f32 %v4370, %v4377
    %v4385 = vadd.f32 %v4371, %v4381
    %v4386 = vxor.u32 %v4384, 2147483648
    %v4387 = vxor.u32 %v4385, 2147483648
    %v4388 = vmul.f32 %v4386, 1.442695
    %v4389 = vpow.pop %v4388
    %v4390 = vmul.f32 %v4387, 1.442695
    %v4391 = vpow.pop %v4390
    %v4392 = vadd.f32 %v4389, 1.0
    %v4393 = vadd.f32 %v4391, 1.0
    %v4394 = vrcp.pop %v4392
    %v4395 = vmul.f32 1.0, %v4394
    %v4396 = vrcp.pop %v4393
    %v4397 = vmul.f32 1.0, %v4396
    %v4398 = vmul.f32 %v4397, %v4225
    %v4399 = vpack.c.bf16 %v4398, %v4398
    %v4400 = vld [vmem:[#allocation6] sm:$0xf]
    %v4401 = vld [vmem:[#allocation6 + $0x4] sm:$0xf]
    %v4402 = vld [vmem:[#allocation6 + $0x8] sm:$0xf]
    %v4403 = vld [vmem:[#allocation6 + $0xc] sm:$0xf]
    %v4404 = vld [vmem:[#allocation6 + $0x10] sm:$0xf]
    %v4405 = vld [vmem:[#allocation6 + $0x14] sm:$0xf]
    %v4406 = vld [vmem:[#allocation6 + $0x18] sm:$0xf]
    %v4407 = vld [vmem:[#allocation6 + $0x1c] sm:$0xf]
    %v4408 = vld [vmem:[#allocation6 + $0x20] sm:$0xf]
    %v4409 = vld [vmem:[#allocation6 + $0x24] sm:$0xf]
    %v4410 = vld [vmem:[#allocation6 + $0x28] sm:$0xf]
    %v4411 = vld [vmem:[#allocation6 + $0x2c] sm:$0xf]
    %v4412 = vld [vmem:[#allocation6 + $0x30] sm:$0xf]
    %v4413 = vld [vmem:[#allocation6 + $0x34] sm:$0xf]
    %v4414 = vld [vmem:[#allocation6 + $0x38] sm:$0xf]
    %v4415 = vld [vmem:[#allocation6 + $0x3c] sm:$0xf]
    %v4432 = vunpack.c.l.b16 %v4400
    %v4433 = vunpack.c.l.b16 %v4401
    %v4434 = vunpack.c.l.b16 %v4402
    %v4435 = vunpack.c.l.b16 %v4403
    %v4436 = vunpack.c.l.b16 %v4404
    %v4437 = vunpack.c.l.b16 %v4405
    %v4438 = vunpack.c.l.b16 %v4406
    %v4439 = vunpack.c.l.b16 %v4407
    %v4440 = vunpack.c.l.b16 %v4408
    %v4441 = vunpack.c.l.b16 %v4409
    %v4442 = vunpack.c.l.b16 %v4410
    %v4443 = vunpack.c.l.b16 %v4411
    %v4444 = vunpack.c.l.b16 %v4412
    %v4445 = vunpack.c.l.b16 %v4413
    %v4446 = vunpack.c.l.b16 %v4414
    %v4447 = vunpack.c.l.b16 %v4415
    %v4448 = vpack.c.b16 %v4433, %v4432
    %v4449 = vpack.c.b16 %v4435, %v4434
    %v4450 = vpack.c.b16 %v4437, %v4436
    %v4451 = vpack.c.b16 %v4439, %v4438
    %v4452 = vpack.c.b16 %v4441, %v4440
    %v4453 = vpack.c.b16 %v4443, %v4442
    %v4454 = vpack.c.b16 %v4445, %v4444
    %v4455 = vpack.c.b16 %v4447, %v4446
    %4464 = vmatprep.subr.bf16.mxu0 0
    %4465 = vmatpush1.bf16.msra.mxu0 %v4455
    %4466 = vmatprep.subr.bf16.mxu0 0
    %4467 = vmatpush1.bf16.msra.mxu0 %v4454
    %4468 = vmatprep.subr.bf16.mxu0 0
    %4469 = vmatpush1.bf16.msra.mxu0 %v4453
    %4470 = vmatprep.subr.bf16.mxu0 0
    %4471 = vmatpush1.bf16.msra.mxu0 %v4452
    %4472 = vmatprep.subr.bf16.mxu0 0
    %4473 = vmatpush1.bf16.msra.mxu0 %v4451
    %4474 = vmatprep.subr.bf16.mxu0 0
    %4475 = vmatpush1.bf16.msra.mxu0 %v4450
    %4476 = vmatprep.subr.bf16.mxu0 0
    %4477 = vmatpush1.bf16.msra.mxu0 %v4449
    %4478 = vmatprep.subr.bf16.mxu0 0
    %4479 = vmatpush1.bf16.msra.mxu0 %v4448
    %4480 = vmatprep.subr.bf16.mxu0 0
    %4481 = vmatpush2.bf16.msra.mxu0 0
    %4482 = vmatprep.subr.bf16.mxu0 0
    %4483 = vmatpush2.bf16.msra.mxu0 0
    %4484 = vmatprep.subr.bf16.mxu0 0
    %4485 = vmatpush2.bf16.msra.mxu0 0
    %4486 = vmatprep.subr.bf16.mxu0 0
    %4487 = vmatpush2.bf16.msra.mxu0 0
    %4488 = vmatprep.subr.bf16.mxu0 0
    %4489 = vmatpush2.bf16.msra.mxu0 0
    %4490 = vmatprep.subr.bf16.mxu0 0
    %4491 = vmatpush2.bf16.msra.mxu0 0
    %4492 = vmatprep.subr.bf16.mxu0 0
    %4493 = vmatpush2.bf16.msra.mxu0 0
    %4494 = vmatprep.subr.bf16.mxu0 0
    %4495 = vmatpush2.bf16.msra.mxu0 0
    %4496 = vmatprep.mubr.bf16.mxu0 0
    %4497 = vmatmul.mubr.bf16.gmra.mxu0 %v4399
    %v4498 = vpop.f32.mrf.mxu0
    %v4499 = vadd.f32 0.0, %v4498
    %v4500 = vpop.f32.mrf.mxu0
    %v4501 = vpop.f32.mrf.mxu0
    %v4502 = vpop.f32.mrf.mxu0
    %4503 = vdwg.mxu0
    %v4504 = vadd.f32 %v4231, %v4499
    %v4505 = vld [vmem:[%s5] sm:$0x1]
    %v4507 = vlaneseq
    %v4508 = vshrl.u32 %v4507, 7
    %v4509 = vsub.s32 0, %v4508
    %v4510 = vrot.slane %v4505, %v4509
    %v4512 = vadd.f32 %v4504, %v4510
    %v4513 = vtanh.pop %v4512
    %v4514 = vmul.f32 %v4395, %v4225
    %v4515 = vsub.f32 1.0, %v4395
    %v4516 = vmul.f32 %v4515, %v4513
    %v4517 = vadd.f32 %v4514, %v4516
    %4518 = vst [vmem:[#allocation2] sm:$0xff] %v4517
    %v4519 = vld [vmem:[%s389] sm:$0xff]
    %v4520 = vpack.c.bf16 %v4517, %v4517
    %v4521 = vld [vmem:[%s10] sm:$0xff]
    %v4522 = vld [vmem:[%s10 + $0x8] sm:$0xf]
    %v4523 = vld [vmem:[%s10 + $0xc] sm:$0xff]
    %v4524 = vld [vmem:[%s10 + $0x14] sm:$0xf]
    %v4525 = vld [vmem:[%s10 + $0x18] sm:$0xff]
    %v4526 = vld [vmem:[%s10 + $0x20] sm:$0xf]
    %v4527 = vld [vmem:[%s10 + $0x24] sm:$0xff]
    %v4528 = vld [vmem:[%s10 + $0x2c] sm:$0xf]
    %v4529 = vld [vmem:[%s10 + $0x30] sm:$0xff]
    %v4530 = vld [vmem:[%s10 + $0x38] sm:$0xf]
    %v4531 = vld [vmem:[%s10 + $0x3c] sm:$0xff]
    %v4532 = vld [vmem:[%s10 + $0x44] sm:$0xf]
    %v4533 = vld [vmem:[%s10 + $0x48] sm:$0xff]
    %v4534 = vld [vmem:[%s10 + $0x50] sm:$0xf]
    %v4535 = vld [vmem:[%s10 + $0x54] sm:$0xff]
    %v4536 = vld [vmem:[%s10 + $0x5c] sm:$0xf]
    %v4537 = vld [vmem:[%s10 + $0x60] sm:$0xff]
    %v4538 = vld [vmem:[%s10 + $0x68] sm:$0xf]
    %v4539 = vld [vmem:[%s10 + $0x6c] sm:$0xff]
    %v4540 = vld [vmem:[%s10 + $0x74] sm:$0xf]
    %v4541 = vld [vmem:[%s10 + $0x78] sm:$0xff]
    %v4542 = vld [vmem:[%s10 + $0x80] sm:$0xf]
    %v4543 = vld [vmem:[%s10 + $0x84] sm:$0xff]
    %v4544 = vld [vmem:[%s10 + $0x8c] sm:$0xf]
    %v4545 = vld [vmem:[%s10 + $0x90] sm:$0xff]
    %v4546 = vld [vmem:[%s10 + $0x98] sm:$0xf]
    %v4547 = vld [vmem:[%s10 + $0x9c] sm:$0xff]
    %v4548 = vld [vmem:[%s10 + $0xa4] sm:$0xf]
    %v4549 = vld [vmem:[%s10 + $0xa8] sm:$0xff]
    %v4550 = vld [vmem:[%s10 + $0xb0] sm:$0xf]
    %v4551 = vld [vmem:[%s10 + $0xb4] sm:$0xff]
    %v4552 = vld [vmem:[%s10 + $0xbc] sm:$0xf]
    %v4585 = vunpack.c.l.b16 %v4521
    %v4586 = vunpack.c.h.b16 %v4521
    %v4587 = vunpack.c.l.b16 %v4522
    %v4588 = vunpack.c.l.b16 %v4523
    %v4589 = vunpack.c.h.b16 %v4523
    %v4590 = vunpack.c.l.b16 %v4524
    %v4591 = vunpack.c.l.b16 %v4525
    %v4592 = vunpack.c.h.b16 %v4525
    %v4593 = vunpack.c.l.b16 %v4526
    %v4594 = vunpack.c.l.b16 %v4527
    %v4595 = vunpack.c.h.b16 %v4527
    %v4596 = vunpack.c.l.b16 %v4528
    %v4597 = vunpack.c.l.b16 %v4529
    %v4598 = vunpack.c.h.b16 %v4529
    %v4599 = vunpack.c.l.b16 %v4530
    %v4600 = vunpack.c.l.b16 %v4531
    %v4601 = vunpack.c.h.b16 %v4531
    %v4602 = vunpack.c.l.b16 %v4532
    %v4603 = vunpack.c.l.b16 %v4533
    %v4604 = vunpack.c.h.b16 %v4533
    %v4605 = vunpack.c.l.b16 %v4534
    %v4606 = vunpack.c.l.b16 %v4535
    %v4607 = vunpack.c.h.b16 %v4535
    %v4608 = vunpack.c.l.b16 %v4536
    %v4609 = vunpack.c.l.b16 %v4537
    %v4610 = vunpack.c.h.b16 %v4537
    %v4611 = vunpack.c.l.b16 %v4538
    %v4612 = vunpack.c.l.b16 %v4539
    %v4613 = vunpack.c.h.b16 %v4539
    %v4614 = vunpack.c.l.b16 %v4540
    %v4615 = vunpack.c.l.b16 %v4541
    %v4616 = vunpack.c.h.b16 %v4541
    %v4617 = vunpack.c.l.b16 %v4542
    %v4618 = vunpack.c.l.b16 %v4543
    %v4619 = vunpack.c.h.b16 %v4543
    %v4620 = vunpack.c.l.b16 %v4544
    %v4621 = vunpack.c.l.b16 %v4545
    %v4622 = vunpack.c.h.b16 %v4545
    %v4623 = vunpack.c.l.b16 %v4546
    %v4624 = vunpack.c.l.b16 %v4547
    %v4625 = vunpack.c.h.b16 %v4547
    %v4626 = vunpack.c.l.b16 %v4548
    %v4627 = vunpack.c.l.b16 %v4549
    %v4628 = vunpack.c.h.b16 %v4549
    %v4629 = vunpack.c.l.b16 %v4550
    %v4630 = vunpack.c.l.b16 %v4551
    %v4631 = vunpack.c.h.b16 %v4551
    %v4632 = vunpack.c.l.b16 %v4552
    %v4633 = vpack.c.b16 %v4588, %v4585
    %v4634 = vpack.c.b16 %v4589, %v4586
    %v4635 = vpack.c.b16 %v4590, %v4587
    %v4636 = vpack.c.b16 %v4594, %v4591
    %v4637 = vpack.c.b16 %v4595, %v4592
    %v4638 = vpack.c.b16 %v4596, %v4593
    %v4639 = vpack.c.b16 %v4600, %v4597
    %v4640 = vpack.c.b16 %v4601, %v4598
    %v4641 = vpack.c.b16 %v4602, %v4599
    %v4642 = vpack.c.b16 %v4606, %v4603
    %v4643 = vpack.c.b16 %v4607, %v4604
    %v4644 = vpack.c.b16 %v4608, %v4605
    %v4645 = vpack.c.b16 %v4612, %v4609
    %v4646 = vpack.c.b16 %v4613, %v4610
    %v4647 = vpack.c.b16 %v4614, %v4611
    %v4648 = vpack.c.b16 %v4618, %v4615
    %v4649 = vpack.c.b16 %v4619, %v4616
    %v4650 = vpack.c.b16 %v4620, %v4617
    %v4651 = vpack.c.b16 %v4624, %v4621
    %v4652 = vpack.c.b16 %v4625, %v4622
    %v4653 = vpack.c.b16 %v4626, %v4623
    %v4654 = vpack.c.b16 %v4630, %v4627
    %v4655 = vpack.c.b16 %v4631, %v4628
    %v4656 = vpack.c.b16 %v4632, %v4629
    %4681 = vmatprep.subr.bf16.mxu0 %v4655
    %4682 = vmatpush1.bf16.msra.mxu0 %v4654
    %4683 = vmatprep.subr.bf16.mxu0 %v4652
    %4684 = vmatpush1.bf16.msra.mxu0 %v4651
    %4685 = vmatprep.subr.bf16.mxu0 %v4649
    %4686 = vmatpush1.bf16.msra.mxu0 %v4648
    %4687 = vmatprep.subr.bf16.mxu0 %v4646
    %4688 = vmatpush1.bf16.msra.mxu0 %v4645
    %4689 = vmatprep.subr.bf16.mxu0 %v4643
    %4690 = vmatpush1.bf16.msra.mxu0 %v4642
    %4691 = vmatprep.subr.bf16.mxu0 %v4640
    %4692 = vmatpush1.bf16.msra.mxu0 %v4639
    %4693 = vmatprep.subr.bf16.mxu0 %v4637
    %4694 = vmatpush1.bf16.msra.mxu0 %v4636
    %4695 = vmatprep.subr.bf16.mxu0 %v4634
    %4696 = vmatpush1.bf16.msra.mxu0 %v4633
    %4697 = vmatprep.subr.bf16.mxu0 0
    %4698 = vmatpush2.bf16.msra.mxu0 0
    %4699 = vmatprep.subr.bf16.mxu0 0
    %4700 = vmatpush2.bf16.msra.mxu0 0
    %4701 = vmatprep.subr.bf16.mxu0 0
    %4702 = vmatpush2.bf16.msra.mxu0 0
    %4703 = vmatprep.subr.bf16.mxu0 0
    %4704 = vmatpush2.bf16.msra.mxu0 0
    %4705 = vmatprep.subr.bf16.mxu0 0
    %4706 = vmatpush2.bf16.msra.mxu0 0
    %4707 = vmatprep.subr.bf16.mxu0 0
    %4708 = vmatpush2.bf16.msra.mxu0 0
    %4709 = vmatprep.subr.bf16.mxu0 0
    %4710 = vmatpush2.bf16.msra.mxu0 0
    %4711 = vmatprep.subr.bf16.mxu0 0
    %4712 = vmatpush2.bf16.msra.mxu0 0
    %4713 = vmatprep.mubr.bf16.mxu0 0
    %4714 = vmatmul.mubr.bf16.gmra.mxu0 %v4520
    %v4715 = vpop.f32.mrf.mxu0
    %v4716 = vadd.f32 0.0, %v4715
    %v4717 = vpop.f32.mrf.mxu0
    %v4718 = vadd.f32 0.0, %v4717
    %v4719 = vpop.f32.mrf.mxu0
    %v4720 = vpop.f32.mrf.mxu0
    %4721 = vdwg.mxu0
    %4722 = vmatprep.subr.bf16.mxu0 0
    %4723 = vmatpush1.bf16.msra.mxu0 %v4656
    %4724 = vmatprep.subr.bf16.mxu0 0
    %4725 = vmatpush1.bf16.msra.mxu0 %v4653
    %4726 = vmatprep.subr.bf16.mxu0 0
    %4727 = vmatpush1.bf16.msra.mxu0 %v4650
    %4728 = vmatprep.subr.bf16.mxu0 0
    %4729 = vmatpush1.bf16.msra.mxu0 %v4647
    %4730 = vmatprep.subr.bf16.mxu0 0
    %4731 = vmatpush1.bf16.msra.mxu0 %v4644
    %4732 = vmatprep.subr.bf16.mxu0 0
    %4733 = vmatpush1.bf16.msra.mxu0 %v4641
    %4734 = vmatprep.subr.bf16.mxu0 0
    %4735 = vmatpush1.bf16.msra.mxu0 %v4638
    %4736 = vmatprep.subr.bf16.mxu0 0
    %4737 = vmatpush1.bf16.msra.mxu0 %v4635
    %4738 = vmatprep.subr.bf16.mxu0 0
    %4739 = vmatpush2.bf16.msra.mxu0 0
    %4740 = vmatprep.subr.bf16.mxu0 0
    %4741 = vmatpush2.bf16.msra.mxu0 0
    %4742 = vmatprep.subr.bf16.mxu0 0
    %4743 = vmatpush2.bf16.msra.mxu0 0
    %4744 = vmatprep.subr.bf16.mxu0 0
    %4745 = vmatpush2.bf16.msra.mxu0 0
    %4746 = vmatprep.subr.bf16.mxu0 0
    %4747 = vmatpush2.bf16.msra.mxu0 0
    %4748 = vmatprep.subr.bf16.mxu0 0
    %4749 = vmatpush2.bf16.msra.mxu0 0
    %4750 = vmatprep.subr.bf16.mxu0 0
    %4751 = vmatpush2.bf16.msra.mxu0 0
    %4752 = vmatprep.subr.bf16.mxu0 0
    %4753 = vmatpush2.bf16.msra.mxu0 0
    %4754 = vmatprep.mubr.bf16.mxu0 0
    %4755 = vmatmul.mubr.bf16.gmra.mxu0 %v4520
    %v4756 = vpop.f32.mrf.mxu0
    %v4757 = vadd.f32 0.0, %v4756
    %v4758 = vpop.f32.mrf.mxu0
    %v4759 = vpop.f32.mrf.mxu0
    %v4760 = vpop.f32.mrf.mxu0
    %4761 = vdwg.mxu0
    %v4762 = vpack.c.bf16 %v4519, %v4519
    %v4763 = vld [vmem:[%s6] sm:$0xff]
    %v4764 = vld [vmem:[%s6 + $0x8] sm:$0xff]
    %v4765 = vld [vmem:[%s6 + $0x10] sm:$0xff]
    %v4766 = vld [vmem:[%s6 + $0x18] sm:$0xff]
    %v4767 = vld [vmem:[%s6 + $0x20] sm:$0xff]
    %v4768 = vld [vmem:[%s6 + $0x28] sm:$0xff]
    %v4769 = vld [vmem:[%s6 + $0x30] sm:$0xff]
    %v4770 = vld [vmem:[%s6 + $0x38] sm:$0xff]
    %v4771 = vld [vmem:[%s6 + $0x40] sm:$0xff]
    %v4772 = vld [vmem:[%s6 + $0x48] sm:$0xff]
    %v4773 = vld [vmem:[%s6 + $0x50] sm:$0xff]
    %v4774 = vld [vmem:[%s6 + $0x58] sm:$0xff]
    %v4775 = vld [vmem:[%s6 + $0x60] sm:$0xff]
    %v4776 = vld [vmem:[%s6 + $0x68] sm:$0xff]
    %v4777 = vld [vmem:[%s6 + $0x70] sm:$0xff]
    %v4778 = vld [vmem:[%s6 + $0x78] sm:$0xff]
    %v4795 = vunpack.c.l.b16 %v4763
    %v4796 = vunpack.c.h.b16 %v4763
    %v4797 = vunpack.c.l.b16 %v4764
    %v4798 = vunpack.c.h.b16 %v4764
    %v4799 = vunpack.c.l.b16 %v4765
    %v4800 = vunpack.c.h.b16 %v4765
    %v4801 = vunpack.c.l.b16 %v4766
    %v4802 = vunpack.c.h.b16 %v4766
    %v4803 = vunpack.c.l.b16 %v4767
    %v4804 = vunpack.c.h.b16 %v4767
    %v4805 = vunpack.c.l.b16 %v4768
    %v4806 = vunpack.c.h.b16 %v4768
    %v4807 = vunpack.c.l.b16 %v4769
    %v4808 = vunpack.c.h.b16 %v4769
    %v4809 = vunpack.c.l.b16 %v4770
    %v4810 = vunpack.c.h.b16 %v4770
    %v4811 = vunpack.c.l.b16 %v4771
    %v4812 = vunpack.c.h.b16 %v4771
    %v4813 = vunpack.c.l.b16 %v4772
    %v4814 = vunpack.c.h.b16 %v4772
    %v4815 = vunpack.c.l.b16 %v4773
    %v4816 = vunpack.c.h.b16 %v4773
    %v4817 = vunpack.c.l.b16 %v4774
    %v4818 = vunpack.c.h.b16 %v4774
    %v4819 = vunpack.c.l.b16 %v4775
    %v4820 = vunpack.c.h.b16 %v4775
    %v4821 = vunpack.c.l.b16 %v4776
    %v4822 = vunpack.c.h.b16 %v4776
    %v4823 = vunpack.c.l.b16 %v4777
    %v4824 = vunpack.c.h.b16 %v4777
    %v4825 = vunpack.c.l.b16 %v4778
    %v4826 = vunpack.c.h.b16 %v4778
    %v4827 = vpack.c.b16 %v4797, %v4795
    %v4828 = vpack.c.b16 %v4798, %v4796
    %v4829 = vpack.c.b16 %v4801, %v4799
    %v4830 = vpack.c.b16 %v4802, %v4800
    %v4831 = vpack.c.b16 %v4805, %v4803
    %v4832 = vpack.c.b16 %v4806, %v4804
    %v4833 = vpack.c.b16 %v4809, %v4807
    %v4834 = vpack.c.b16 %v4810, %v4808
    %v4835 = vpack.c.b16 %v4813, %v4811
    %v4836 = vpack.c.b16 %v4814, %v4812
    %v4837 = vpack.c.b16 %v4817, %v4815
    %v4838 = vpack.c.b16 %v4818, %v4816
    %v4839 = vpack.c.b16 %v4821, %v4819
    %v4840 = vpack.c.b16 %v4822, %v4820
    %v4841 = vpack.c.b16 %v4825, %v4823
    %v4842 = vpack.c.b16 %v4826, %v4824
    %4859 = vmatprep.subr.bf16.mxu0 %v4842
    %4860 = vmatpush1.bf16.msra.mxu0 %v4841
    %4861 = vmatprep.subr.bf16.mxu0 %v4840
    %4862 = vmatpush1.bf16.msra.mxu0 %v4839
    %4863 = vmatprep.subr.bf16.mxu0 %v4838
    %4864 = vmatpush1.bf16.msra.mxu0 %v4837
    %4865 = vmatprep.subr.bf16.mxu0 %v4836
    %4866 = vmatpush1.bf16.msra.mxu0 %v4835
    %4867 = vmatprep.subr.bf16.mxu0 %v4834
    %4868 = vmatpush1.bf16.msra.mxu0 %v4833
    %4869 = vmatprep.subr.bf16.mxu0 %v4832
    %4870 = vmatpush1.bf16.msra.mxu0 %v4831
    %4871 = vmatprep.subr.bf16.mxu0 %v4830
    %4872 = vmatpush1.bf16.msra.mxu0 %v4829
    %4873 = vmatprep.subr.bf16.mxu0 %v4828
    %4874 = vmatpush1.bf16.msra.mxu0 %v4827
    %4875 = vmatprep.subr.bf16.mxu0 0
    %4876 = vmatpush2.bf16.msra.mxu0 0
    %4877 = vmatprep.subr.bf16.mxu0 0
    %4878 = vmatpush2.bf16.msra.mxu0 0
    %4879 = vmatprep.subr.bf16.mxu0 0
    %4880 = vmatpush2.bf16.msra.mxu0 0
    %4881 = vmatprep.subr.bf16.mxu0 0
    %4882 = vmatpush2.bf16.msra.mxu0 0
    %4883 = vmatprep.subr.bf16.mxu0 0
    %4884 = vmatpush2.bf16.msra.mxu0 0
    %4885 = vmatprep.subr.bf16.mxu0 0
    %4886 = vmatpush2.bf16.msra.mxu0 0
    %4887 = vmatprep.subr.bf16.mxu0 0
    %4888 = vmatpush2.bf16.msra.mxu0 0
    %4889 = vmatprep.subr.bf16.mxu0 0
    %4890 = vmatpush2.bf16.msra.mxu0 0
    %4891 = vmatprep.mubr.bf16.mxu0 0
    %4892 = vmatmul.mubr.bf16.gmra.mxu0 %v4762
    %v4893 = vpop.f32.mrf.mxu0
    %v4894 = vadd.f32 0.0, %v4893
    %v4895 = vpop.f32.mrf.mxu0
    %v4896 = vadd.f32 0.0, %v4895
    %v4897 = vpop.f32.mrf.mxu0
    %v4898 = vpop.f32.mrf.mxu0
    %4899 = vdwg.mxu0
    %v4900 = vadd.f32 %v4716, %v4894
    %v4901 = vadd.f32 %v4718, %v4896
    %v4902 = vld [vmem:[%s8] sm:$0x3]
    %v4904 = vlaneseq
    %v4905 = vshrl.u32 %v4904, 7
    %v4906 = vsub.s32 0, %v4905
    %v4907 = vrot.slane %v4902, %v4906
    %v4908 = vlaneseq
    %v4909 = vshrl.u32 %v4908, 7
    %v4910 = vsub.s32 1, %v4909
    %v4911 = vrot.slane %v4902, %v4910
    %v4914 = vadd.f32 %v4900, %v4907
    %v4915 = vadd.f32 %v4901, %v4911
    %v4916 = vxor.u32 %v4914, 2147483648
    %v4917 = vxor.u32 %v4915, 2147483648
    %v4918 = vmul.f32 %v4916, 1.442695
    %v4919 = vpow.pop %v4918
    %v4920 = vmul.f32 %v4917, 1.442695
    %v4921 = vpow.pop %v4920
    %v4922 = vadd.f32 %v4919, 1.0
    %v4923 = vadd.f32 %v4921, 1.0
    %v4924 = vrcp.pop %v4922
    %v4925 = vmul.f32 1.0, %v4924
    %v4926 = vrcp.pop %v4923
    %v4927 = vmul.f32 1.0, %v4926
    %v4928 = vmul.f32 %v4927, %v4519
    %v4929 = vpack.c.bf16 %v4928, %v4928
    %v4930 = vld [vmem:[#allocation8] sm:$0xf]
    %v4931 = vld [vmem:[#allocation8 + $0x4] sm:$0xf]
    %v4932 = vld [vmem:[#allocation8 + $0x8] sm:$0xf]
    %v4933 = vld [vmem:[#allocation8 + $0xc] sm:$0xf]
    %v4934 = vld [vmem:[#allocation8 + $0x10] sm:$0xf]
    %v4935 = vld [vmem:[#allocation8 + $0x14] sm:$0xf]
    %v4936 = vld [vmem:[#allocation8 + $0x18] sm:$0xf]
    %v4937 = vld [vmem:[#allocation8 + $0x1c] sm:$0xf]
    %v4938 = vld [vmem:[#allocation8 + $0x20] sm:$0xf]
    %v4939 = vld [vmem:[#allocation8 + $0x24] sm:$0xf]
    %v4940 = vld [vmem:[#allocation8 + $0x28] sm:$0xf]
    %v4941 = vld [vmem:[#allocation8 + $0x2c] sm:$0xf]
    %v4942 = vld [vmem:[#allocation8 + $0x30] sm:$0xf]
    %v4943 = vld [vmem:[#allocation8 + $0x34] sm:$0xf]
    %v4944 = vld [vmem:[#allocation8 + $0x38] sm:$0xf]
    %v4945 = vld [vmem:[#allocation8 + $0x3c] sm:$0xf]
    %v4962 = vunpack.c.l.b16 %v4930
    %v4963 = vunpack.c.l.b16 %v4931
    %v4964 = vunpack.c.l.b16 %v4932
    %v4965 = vunpack.c.l.b16 %v4933
    %v4966 = vunpack.c.l.b16 %v4934
    %v4967 = vunpack.c.l.b16 %v4935
    %v4968 = vunpack.c.l.b16 %v4936
    %v4969 = vunpack.c.l.b16 %v4937
    %v4970 = vunpack.c.l.b16 %v4938
    %v4971 = vunpack.c.l.b16 %v4939
    %v4972 = vunpack.c.l.b16 %v4940
    %v4973 = vunpack.c.l.b16 %v4941
    %v4974 = vunpack.c.l.b16 %v4942
    %v4975 = vunpack.c.l.b16 %v4943
    %v4976 = vunpack.c.l.b16 %v4944
    %v4977 = vunpack.c.l.b16 %v4945
    %v4978 = vpack.c.b16 %v4963, %v4962
    %v4979 = vpack.c.b16 %v4965, %v4964
    %v4980 = vpack.c.b16 %v4967, %v4966
    %v4981 = vpack.c.b16 %v4969, %v4968
    %v4982 = vpack.c.b16 %v4971, %v4970
    %v4983 = vpack.c.b16 %v4973, %v4972
    %v4984 = vpack.c.b16 %v4975, %v4974
    %v4985 = vpack.c.b16 %v4977, %v4976
    %4994 = vmatprep.subr.bf16.mxu0 0
    %4995 = vmatpush1.bf16.msra.mxu0 %v4985
    %4996 = vmatprep.subr.bf16.mxu0 0
    %4997 = vmatpush1.bf16.msra.mxu0 %v4984
    %4998 = vmatprep.subr.bf16.mxu0 0
    %4999 = vmatpush1.bf16.msra.mxu0 %v4983
    %5000 = vmatprep.subr.bf16.mxu0 0
    %5001 = vmatpush1.bf16.msra.mxu0 %v4982
    %5002 = vmatprep.subr.bf16.mxu0 0
    %5003 = vmatpush1.bf16.msra.mxu0 %v4981
    %5004 = vmatprep.subr.bf16.mxu0 0
    %5005 = vmatpush1.bf16.msra.mxu0 %v4980
    %5006 = vmatprep.subr.bf16.mxu0 0
    %5007 = vmatpush1.bf16.msra.mxu0 %v4979
    %5008 = vmatprep.subr.bf16.mxu0 0
    %5009 = vmatpush1.bf16.msra.mxu0 %v4978
    %5010 = vmatprep.subr.bf16.mxu0 0
    %5011 = vmatpush2.bf16.msra.mxu0 0
    %5012 = vmatprep.subr.bf16.mxu0 0
    %5013 = vmatpush2.bf16.msra.mxu0 0
    %5014 = vmatprep.subr.bf16.mxu0 0
    %5015 = vmatpush2.bf16.msra.mxu0 0
    %5016 = vmatprep.subr.bf16.mxu0 0
    %5017 = vmatpush2.bf16.msra.mxu0 0
    %5018 = vmatprep.subr.bf16.mxu0 0
    %5019 = vmatpush2.bf16.msra.mxu0 0
    %5020 = vmatprep.subr.bf16.mxu0 0
    %5021 = vmatpush2.bf16.msra.mxu0 0
    %5022 = vmatprep.subr.bf16.mxu0 0
    %5023 = vmatpush2.bf16.msra.mxu0 0
    %5024 = vmatprep.subr.bf16.mxu0 0
    %5025 = vmatpush2.bf16.msra.mxu0 0
    %5026 = vmatprep.mubr.bf16.mxu0 0
    %5027 = vmatmul.mubr.bf16.gmra.mxu0 %v4929
    %v5028 = vpop.f32.mrf.mxu0
    %v5029 = vadd.f32 0.0, %v5028
    %v5030 = vpop.f32.mrf.mxu0
    %v5031 = vpop.f32.mrf.mxu0
    %v5032 = vpop.f32.mrf.mxu0
    %5033 = vdwg.mxu0
    %v5034 = vadd.f32 %v4757, %v5029
    %v5035 = vld [vmem:[%s9] sm:$0x1]
    %v5037 = vlaneseq
    %v5038 = vshrl.u32 %v5037, 7
    %v5039 = vsub.s32 0, %v5038
    %v5040 = vrot.slane %v5035, %v5039
    %v5042 = vadd.f32 %v5034, %v5040
    %v5043 = vtanh.pop %v5042
    %v5044 = vmul.f32 %v4925, %v4519
    %v5045 = vsub.f32 1.0, %v4925
    %v5046 = vmul.f32 %v5045, %v5043
    %v5047 = vadd.f32 %v5044, %v5046
    %5048 = vst [vmem:[%s389] sm:$0xff] %v5047
    %s5049 = scalar_lea.vmem [#allocation3], 40
    %5050 = vst [vmem:[%s5049] sm:$0xff] %v5047
    %v5051 = vld [vmem:[#allocation2] sm:$0xff]
    %s5052 = scalar_lea.vmem %s0, 72
    %v5053 = vld [vmem:[%s5052] sm:$0xff]
    %v5054 = vld [vmem:[%s5052 + $0x8] sm:$0xf]
    %v5055 = vunpack.c.l.bf16 %v5053
    %v5056 = vunpack.c.h.bf16 %v5053
    %v5057 = vunpack.c.l.bf16 %v5054
    %v5058 = vpack.c.bf16 %v5051, %v5051
    %v5059 = vld [vmem:[#allocation4] sm:$0xff]
    %v5060 = vld [vmem:[#allocation4 + $0x8] sm:$0xff]
    %v5061 = vld [vmem:[#allocation4 + $0x10] sm:$0xff]
    %v5062 = vld [vmem:[#allocation4 + $0x18] sm:$0xff]
    %v5063 = vld [vmem:[#allocation4 + $0x20] sm:$0xff]
    %v5064 = vld [vmem:[#allocation4 + $0x28] sm:$0xff]
    %v5065 = vld [vmem:[#allocation4 + $0x30] sm:$0xff]
    %v5066 = vld [vmem:[#allocation4 + $0x38] sm:$0xff]
    %v5067 = vld [vmem:[#allocation4 + $0x40] sm:$0xff]
    %v5068 = vld [vmem:[#allocation4 + $0x48] sm:$0xff]
    %v5069 = vld [vmem:[#allocation4 + $0x50] sm:$0xff]
    %v5070 = vld [vmem:[#allocation4 + $0x58] sm:$0xff]
    %v5071 = vld [vmem:[#allocation4 + $0x60] sm:$0xff]
    %v5072 = vld [vmem:[#allocation4 + $0x68] sm:$0xff]
    %v5073 = vld [vmem:[#allocation4 + $0x70] sm:$0xff]
    %v5074 = vld [vmem:[#allocation4 + $0x78] sm:$0xff]
    %v5091 = vunpack.c.l.b16 %v5059
    %v5092 = vunpack.c.h.b16 %v5059
    %v5093 = vunpack.c.l.b16 %v5060
    %v5094 = vunpack.c.h.b16 %v5060
    %v5095 = vunpack.c.l.b16 %v5061
    %v5096 = vunpack.c.h.b16 %v5061
    %v5097 = vunpack.c.l.b16 %v5062
    %v5098 = vunpack.c.h.b16 %v5062
    %v5099 = vunpack.c.l.b16 %v5063
    %v5100 = vunpack.c.h.b16 %v5063
    %v5101 = vunpack.c.l.b16 %v5064
    %v5102 = vunpack.c.h.b16 %v5064
    %v5103 = vunpack.c.l.b16 %v5065
    %v5104 = vunpack.c.h.b16 %v5065
    %v5105 = vunpack.c.l.b16 %v5066
    %v5106 = vunpack.c.h.b16 %v5066
    %v5107 = vunpack.c.l.b16 %v5067
    %v5108 = vunpack.c.h.b16 %v5067
    %v5109 = vunpack.c.l.b16 %v5068
    %v5110 = vunpack.c.h.b16 %v5068
    %v5111 = vunpack.c.l.b16 %v5069
    %v5112 = vunpack.c.h.b16 %v5069
    %v5113 = vunpack.c.l.b16 %v5070
    %v5114 = vunpack.c.h.b16 %v5070
    %v5115 = vunpack.c.l.b16 %v5071
    %v5116 = vunpack.c.h.b16 %v5071
    %v5117 = vunpack.c.l.b16 %v5072
    %v5118 = vunpack.c.h.b16 %v5072
    %v5119 = vunpack.c.l.b16 %v5073
    %v5120 = vunpack.c.h.b16 %v5073
    %v5121 = vunpack.c.l.b16 %v5074
    %v5122 = vunpack.c.h.b16 %v5074
    %v5123 = vpack.c.b16 %v5093, %v5091
    %v5124 = vpack.c.b16 %v5094, %v5092
    %v5125 = vpack.c.b16 %v5097, %v5095
    %v5126 = vpack.c.b16 %v5098, %v5096
    %v5127 = vpack.c.b16 %v5101, %v5099
    %v5128 = vpack.c.b16 %v5102, %v5100
    %v5129 = vpack.c.b16 %v5105, %v5103
    %v5130 = vpack.c.b16 %v5106, %v5104
    %v5131 = vpack.c.b16 %v5109, %v5107
    %v5132 = vpack.c.b16 %v5110, %v5108
    %v5133 = vpack.c.b16 %v5113, %v5111
    %v5134 = vpack.c.b16 %v5114, %v5112
    %v5135 = vpack.c.b16 %v5117, %v5115
    %v5136 = vpack.c.b16 %v5118, %v5116
    %v5137 = vpack.c.b16 %v5121, %v5119
    %v5138 = vpack.c.b16 %v5122, %v5120
    %5155 = vmatprep.subr.bf16.mxu0 %v5138
    %5156 = vmatpush1.bf16.msra.mxu0 %v5137
    %5157 = vmatprep.subr.bf16.mxu0 %v5136
    %5158 = vmatpush1.bf16.msra.mxu0 %v5135
    %5159 = vmatprep.subr.bf16.mxu0 %v5134
    %5160 = vmatpush1.bf16.msra.mxu0 %v5133
    %5161 = vmatprep.subr.bf16.mxu0 %v5132
    %5162 = vmatpush1.bf16.msra.mxu0 %v5131
    %5163 = vmatprep.subr.bf16.mxu0 %v5130
    %5164 = vmatpush1.bf16.msra.mxu0 %v5129
    %5165 = vmatprep.subr.bf16.mxu0 %v5128
    %5166 = vmatpush1.bf16.msra.mxu0 %v5127
    %5167 = vmatprep.subr.bf16.mxu0 %v5126
    %5168 = vmatpush1.bf16.msra.mxu0 %v5125
    %5169 = vmatprep.subr.bf16.mxu0 %v5124
    %5170 = vmatpush1.bf16.msra.mxu0 %v5123
    %5171 = vmatprep.subr.bf16.mxu0 0
    %5172 = vmatpush2.bf16.msra.mxu0 0
    %5173 = vmatprep.subr.bf16.mxu0 0
    %5174 = vmatpush2.bf16.msra.mxu0 0
    %5175 = vmatprep.subr.bf16.mxu0 0
    %5176 = vmatpush2.bf16.msra.mxu0 0
    %5177 = vmatprep.subr.bf16.mxu0 0
    %5178 = vmatpush2.bf16.msra.mxu0 0
    %5179 = vmatprep.subr.bf16.mxu0 0
    %5180 = vmatpush2.bf16.msra.mxu0 0
    %5181 = vmatprep.subr.bf16.mxu0 0
    %5182 = vmatpush2.bf16.msra.mxu0 0
    %5183 = vmatprep.subr.bf16.mxu0 0
    %5184 = vmatpush2.bf16.msra.mxu0 0
    %5185 = vmatprep.subr.bf16.mxu0 0
    %5186 = vmatpush2.bf16.msra.mxu0 0
    %5187 = vmatprep.mubr.bf16.mxu0 0
    %5188 = vmatmul.mubr.bf16.gmra.mxu0 %v5058
    %v5189 = vpop.f32.mrf.mxu0
    %v5190 = vadd.f32 0.0, %v5189
    %v5191 = vpop.f32.mrf.mxu0
    %v5192 = vadd.f32 0.0, %v5191
    %v5193 = vpop.f32.mrf.mxu0
    %v5194 = vpop.f32.mrf.mxu0
    %5195 = vdwg.mxu0
    %v5196 = vadd.f32 %v5055, %v5190
    %v5197 = vadd.f32 %v5056, %v5192
    %v5198 = vld [vmem:[%s4] sm:$0x3]
    %v5200 = vlaneseq
    %v5201 = vshrl.u32 %v5200, 7
    %v5202 = vsub.s32 0, %v5201
    %v5203 = vrot.slane %v5198, %v5202
    %v5204 = vlaneseq
    %v5205 = vshrl.u32 %v5204, 7
    %v5206 = vsub.s32 1, %v5205
    %v5207 = vrot.slane %v5198, %v5206
    %v5210 = vadd.f32 %v5196, %v5203
    %v5211 = vadd.f32 %v5197, %v5207
    %v5212 = vxor.u32 %v5210, 2147483648
    %v5213 = vxor.u32 %v5211, 2147483648
    %v5214 = vmul.f32 %v5212, 1.442695
    %v5215 = vpow.pop %v5214
    %v5216 = vmul.f32 %v5213, 1.442695
    %v5217 = vpow.pop %v5216
    %v5218 = vadd.f32 %v5215, 1.0
    %v5219 = vadd.f32 %v5217, 1.0
    %v5220 = vrcp.pop %v5218
    %v5221 = vmul.f32 1.0, %v5220
    %v5222 = vrcp.pop %v5219
    %v5223 = vmul.f32 1.0, %v5222
    %v5224 = vmul.f32 %v5223, %v5051
    %v5225 = vpack.c.bf16 %v5224, %v5224
    %v5226 = vld [vmem:[#allocation6] sm:$0xf]
    %v5227 = vld [vmem:[#allocation6 + $0x4] sm:$0xf]
    %v5228 = vld [vmem:[#allocation6 + $0x8] sm:$0xf]
    %v5229 = vld [vmem:[#allocation6 + $0xc] sm:$0xf]
    %v5230 = vld [vmem:[#allocation6 + $0x10] sm:$0xf]
    %v5231 = vld [vmem:[#allocation6 + $0x14] sm:$0xf]
    %v5232 = vld [vmem:[#allocation6 + $0x18] sm:$0xf]
    %v5233 = vld [vmem:[#allocation6 + $0x1c] sm:$0xf]
    %v5234 = vld [vmem:[#allocation6 + $0x20] sm:$0xf]
    %v5235 = vld [vmem:[#allocation6 + $0x24] sm:$0xf]
    %v5236 = vld [vmem:[#allocation6 + $0x28] sm:$0xf]
    %v5237 = vld [vmem:[#allocation6 + $0x2c] sm:$0xf]
    %v5238 = vld [vmem:[#allocation6 + $0x30] sm:$0xf]
    %v5239 = vld [vmem:[#allocation6 + $0x34] sm:$0xf]
    %v5240 = vld [vmem:[#allocation6 + $0x38] sm:$0xf]
    %v5241 = vld [vmem:[#allocation6 + $0x3c] sm:$0xf]
    %v5258 = vunpack.c.l.b16 %v5226
    %v5259 = vunpack.c.l.b16 %v5227
    %v5260 = vunpack.c.l.b16 %v5228
    %v5261 = vunpack.c.l.b16 %v5229
    %v5262 = vunpack.c.l.b16 %v5230
    %v5263 = vunpack.c.l.b16 %v5231
    %v5264 = vunpack.c.l.b16 %v5232
    %v5265 = vunpack.c.l.b16 %v5233
    %v5266 = vunpack.c.l.b16 %v5234
    %v5267 = vunpack.c.l.b16 %v5235
    %v5268 = vunpack.c.l.b16 %v5236
    %v5269 = vunpack.c.l.b16 %v5237
    %v5270 = vunpack.c.l.b16 %v5238
    %v5271 = vunpack.c.l.b16 %v5239
    %v5272 = vunpack.c.l.b16 %v5240
    %v5273 = vunpack.c.l.b16 %v5241
    %v5274 = vpack.c.b16 %v5259, %v5258
    %v5275 = vpack.c.b16 %v5261, %v5260
    %v5276 = vpack.c.b16 %v5263, %v5262
    %v5277 = vpack.c.b16 %v5265, %v5264
    %v5278 = vpack.c.b16 %v5267, %v5266
    %v5279 = vpack.c.b16 %v5269, %v5268
    %v5280 = vpack.c.b16 %v5271, %v5270
    %v5281 = vpack.c.b16 %v5273, %v5272
    %5290 = vmatprep.subr.bf16.mxu0 0
    %5291 = vmatpush1.bf16.msra.mxu0 %v5281
    %5292 = vmatprep.subr.bf16.mxu0 0
    %5293 = vmatpush1.bf16.msra.mxu0 %v5280
    %5294 = vmatprep.subr.bf16.mxu0 0
    %5295 = vmatpush1.bf16.msra.mxu0 %v5279
    %5296 = vmatprep.subr.bf16.mxu0 0
    %5297 = vmatpush1.bf16.msra.mxu0 %v5278
    %5298 = vmatprep.subr.bf16.mxu0 0
    %5299 = vmatpush1.bf16.msra.mxu0 %v5277
    %5300 = vmatprep.subr.bf16.mxu0 0
    %5301 = vmatpush1.bf16.msra.mxu0 %v5276
    %5302 = vmatprep.subr.bf16.mxu0 0
    %5303 = vmatpush1.bf16.msra.mxu0 %v5275
    %5304 = vmatprep.subr.bf16.mxu0 0
    %5305 = vmatpush1.bf16.msra.mxu0 %v5274
    %5306 = vmatprep.subr.bf16.mxu0 0
    %5307 = vmatpush2.bf16.msra.mxu0 0
    %5308 = vmatprep.subr.bf16.mxu0 0
    %5309 = vmatpush2.bf16.msra.mxu0 0
    %5310 = vmatprep.subr.bf16.mxu0 0
    %5311 = vmatpush2.bf16.msra.mxu0 0
    %5312 = vmatprep.subr.bf16.mxu0 0
    %5313 = vmatpush2.bf16.msra.mxu0 0
    %5314 = vmatprep.subr.bf16.mxu0 0
    %5315 = vmatpush2.bf16.msra.mxu0 0
    %5316 = vmatprep.subr.bf16.mxu0 0
    %5317 = vmatpush2.bf16.msra.mxu0 0
    %5318 = vmatprep.subr.bf16.mxu0 0
    %5319 = vmatpush2.bf16.msra.mxu0 0
    %5320 = vmatprep.subr.bf16.mxu0 0
    %5321 = vmatpush2.bf16.msra.mxu0 0
    %5322 = vmatprep.mubr.bf16.mxu0 0
    %5323 = vmatmul.mubr.bf16.gmra.mxu0 %v5225
    %v5324 = vpop.f32.mrf.mxu0
    %v5325 = vadd.f32 0.0, %v5324
    %v5326 = vpop.f32.mrf.mxu0
    %v5327 = vpop.f32.mrf.mxu0
    %v5328 = vpop.f32.mrf.mxu0
    %5329 = vdwg.mxu0
    %v5330 = vadd.f32 %v5057, %v5325
    %v5331 = vld [vmem:[%s5] sm:$0x1]
    %v5333 = vlaneseq
    %v5334 = vshrl.u32 %v5333, 7
    %v5335 = vsub.s32 0, %v5334
    %v5336 = vrot.slane %v5331, %v5335
    %v5338 = vadd.f32 %v5330, %v5336
    %v5339 = vtanh.pop %v5338
    %v5340 = vmul.f32 %v5221, %v5051
    %v5341 = vsub.f32 1.0, %v5221
    %v5342 = vmul.f32 %v5341, %v5339
    %v5343 = vadd.f32 %v5340, %v5342
    %5344 = vst [vmem:[#allocation2] sm:$0xff] %v5343
    %v5345 = vld [vmem:[%s389] sm:$0xff]
    %v5346 = vpack.c.bf16 %v5343, %v5343
    %v5347 = vld [vmem:[%s10] sm:$0xff]
    %v5348 = vld [vmem:[%s10 + $0x8] sm:$0xf]
    %v5349 = vld [vmem:[%s10 + $0xc] sm:$0xff]
    %v5350 = vld [vmem:[%s10 + $0x14] sm:$0xf]
    %v5351 = vld [vmem:[%s10 + $0x18] sm:$0xff]
    %v5352 = vld [vmem:[%s10 + $0x20] sm:$0xf]
    %v5353 = vld [vmem:[%s10 + $0x24] sm:$0xff]
    %v5354 = vld [vmem:[%s10 + $0x2c] sm:$0xf]
    %v5355 = vld [vmem:[%s10 + $0x30] sm:$0xff]
    %v5356 = vld [vmem:[%s10 + $0x38] sm:$0xf]
    %v5357 = vld [vmem:[%s10 + $0x3c] sm:$0xff]
    %v5358 = vld [vmem:[%s10 + $0x44] sm:$0xf]
    %v5359 = vld [vmem:[%s10 + $0x48] sm:$0xff]
    %v5360 = vld [vmem:[%s10 + $0x50] sm:$0xf]
    %v5361 = vld [vmem:[%s10 + $0x54] sm:$0xff]
    %v5362 = vld [vmem:[%s10 + $0x5c] sm:$0xf]
    %v5363 = vld [vmem:[%s10 + $0x60] sm:$0xff]
    %v5364 = vld [vmem:[%s10 + $0x68] sm:$0xf]
    %v5365 = vld [vmem:[%s10 + $0x6c] sm:$0xff]
    %v5366 = vld [vmem:[%s10 + $0x74] sm:$0xf]
    %v5367 = vld [vmem:[%s10 + $0x78] sm:$0xff]
    %v5368 = vld [vmem:[%s10 + $0x80] sm:$0xf]
    %v5369 = vld [vmem:[%s10 + $0x84] sm:$0xff]
    %v5370 = vld [vmem:[%s10 + $0x8c] sm:$0xf]
    %v5371 = vld [vmem:[%s10 + $0x90] sm:$0xff]
    %v5372 = vld [vmem:[%s10 + $0x98] sm:$0xf]
    %v5373 = vld [vmem:[%s10 + $0x9c] sm:$0xff]
    %v5374 = vld [vmem:[%s10 + $0xa4] sm:$0xf]
    %v5375 = vld [vmem:[%s10 + $0xa8] sm:$0xff]
    %v5376 = vld [vmem:[%s10 + $0xb0] sm:$0xf]
    %v5377 = vld [vmem:[%s10 + $0xb4] sm:$0xff]
    %v5378 = vld [vmem:[%s10 + $0xbc] sm:$0xf]
    %v5411 = vunpack.c.l.b16 %v5347
    %v5412 = vunpack.c.h.b16 %v5347
    %v5413 = vunpack.c.l.b16 %v5348
    %v5414 = vunpack.c.l.b16 %v5349
    %v5415 = vunpack.c.h.b16 %v5349
    %v5416 = vunpack.c.l.b16 %v5350
    %v5417 = vunpack.c.l.b16 %v5351
    %v5418 = vunpack.c.h.b16 %v5351
    %v5419 = vunpack.c.l.b16 %v5352
    %v5420 = vunpack.c.l.b16 %v5353
    %v5421 = vunpack.c.h.b16 %v5353
    %v5422 = vunpack.c.l.b16 %v5354
    %v5423 = vunpack.c.l.b16 %v5355
    %v5424 = vunpack.c.h.b16 %v5355
    %v5425 = vunpack.c.l.b16 %v5356
    %v5426 = vunpack.c.l.b16 %v5357
    %v5427 = vunpack.c.h.b16 %v5357
    %v5428 = vunpack.c.l.b16 %v5358
    %v5429 = vunpack.c.l.b16 %v5359
    %v5430 = vunpack.c.h.b16 %v5359
    %v5431 = vunpack.c.l.b16 %v5360
    %v5432 = vunpack.c.l.b16 %v5361
    %v5433 = vunpack.c.h.b16 %v5361
    %v5434 = vunpack.c.l.b16 %v5362
    %v5435 = vunpack.c.l.b16 %v5363
    %v5436 = vunpack.c.h.b16 %v5363
    %v5437 = vunpack.c.l.b16 %v5364
    %v5438 = vunpack.c.l.b16 %v5365
    %v5439 = vunpack.c.h.b16 %v5365
    %v5440 = vunpack.c.l.b16 %v5366
    %v5441 = vunpack.c.l.b16 %v5367
    %v5442 = vunpack.c.h.b16 %v5367
    %v5443 = vunpack.c.l.b16 %v5368
    %v5444 = vunpack.c.l.b16 %v5369
    %v5445 = vunpack.c.h.b16 %v5369
    %v5446 = vunpack.c.l.b16 %v5370
    %v5447 = vunpack.c.l.b16 %v5371
    %v5448 = vunpack.c.h.b16 %v5371
    %v5449 = vunpack.c.l.b16 %v5372
    %v5450 = vunpack.c.l.b16 %v5373
    %v5451 = vunpack.c.h.b16 %v5373
    %v5452 = vunpack.c.l.b16 %v5374
    %v5453 = vunpack.c.l.b16 %v5375
    %v5454 = vunpack.c.h.b16 %v5375
    %v5455 = vunpack.c.l.b16 %v5376
    %v5456 = vunpack.c.l.b16 %v5377
    %v5457 = vunpack.c.h.b16 %v5377
    %v5458 = vunpack.c.l.b16 %v5378
    %v5459 = vpack.c.b16 %v5414, %v5411
    %v5460 = vpack.c.b16 %v5415, %v5412
    %v5461 = vpack.c.b16 %v5416, %v5413
    %v5462 = vpack.c.b16 %v5420, %v5417
    %v5463 = vpack.c.b16 %v5421, %v5418
    %v5464 = vpack.c.b16 %v5422, %v5419
    %v5465 = vpack.c.b16 %v5426, %v5423
    %v5466 = vpack.c.b16 %v5427, %v5424
    %v5467 = vpack.c.b16 %v5428, %v5425
    %v5468 = vpack.c.b16 %v5432, %v5429
    %v5469 = vpack.c.b16 %v5433, %v5430
    %v5470 = vpack.c.b16 %v5434, %v5431
    %v5471 = vpack.c.b16 %v5438, %v5435
    %v5472 = vpack.c.b16 %v5439, %v5436
    %v5473 = vpack.c.b16 %v5440, %v5437
    %v5474 = vpack.c.b16 %v5444, %v5441
    %v5475 = vpack.c.b16 %v5445, %v5442
    %v5476 = vpack.c.b16 %v5446, %v5443
    %v5477 = vpack.c.b16 %v5450, %v5447
    %v5478 = vpack.c.b16 %v5451, %v5448
    %v5479 = vpack.c.b16 %v5452, %v5449
    %v5480 = vpack.c.b16 %v5456, %v5453
    %v5481 = vpack.c.b16 %v5457, %v5454
    %v5482 = vpack.c.b16 %v5458, %v5455
    %5507 = vmatprep.subr.bf16.mxu0 %v5481
    %5508 = vmatpush1.bf16.msra.mxu0 %v5480
    %5509 = vmatprep.subr.bf16.mxu0 %v5478
    %5510 = vmatpush1.bf16.msra.mxu0 %v5477
    %5511 = vmatprep.subr.bf16.mxu0 %v5475
    %5512 = vmatpush1.bf16.msra.mxu0 %v5474
    %5513 = vmatprep.subr.bf16.mxu0 %v5472
    %5514 = vmatpush1.bf16.msra.mxu0 %v5471
    %5515 = vmatprep.subr.bf16.mxu0 %v5469
    %5516 = vmatpush1.bf16.msra.mxu0 %v5468
    %5517 = vmatprep.subr.bf16.mxu0 %v5466
    %5518 = vmatpush1.bf16.msra.mxu0 %v5465
    %5519 = vmatprep.subr.bf16.mxu0 %v5463
    %5520 = vmatpush1.bf16.msra.mxu0 %v5462
    %5521 = vmatprep.subr.bf16.mxu0 %v5460
    %5522 = vmatpush1.bf16.msra.mxu0 %v5459
    %5523 = vmatprep.subr.bf16.mxu0 0
    %5524 = vmatpush2.bf16.msra.mxu0 0
    %5525 = vmatprep.subr.bf16.mxu0 0
    %5526 = vmatpush2.bf16.msra.mxu0 0
    %5527 = vmatprep.subr.bf16.mxu0 0
    %5528 = vmatpush2.bf16.msra.mxu0 0
    %5529 = vmatprep.subr.bf16.mxu0 0
    %5530 = vmatpush2.bf16.msra.mxu0 0
    %5531 = vmatprep.subr.bf16.mxu0 0
    %5532 = vmatpush2.bf16.msra.mxu0 0
    %5533 = vmatprep.subr.bf16.mxu0 0
    %5534 = vmatpush2.bf16.msra.mxu0 0
    %5535 = vmatprep.subr.bf16.mxu0 0
    %5536 = vmatpush2.bf16.msra.mxu0 0
    %5537 = vmatprep.subr.bf16.mxu0 0
    %5538 = vmatpush2.bf16.msra.mxu0 0
    %5539 = vmatprep.mubr.bf16.mxu0 0
    %5540 = vmatmul.mubr.bf16.gmra.mxu0 %v5346
    %v5541 = vpop.f32.mrf.mxu0
    %v5542 = vadd.f32 0.0, %v5541
    %v5543 = vpop.f32.mrf.mxu0
    %v5544 = vadd.f32 0.0, %v5543
    %v5545 = vpop.f32.mrf.mxu0
    %v5546 = vpop.f32.mrf.mxu0
    %5547 = vdwg.mxu0
    %5548 = vmatprep.subr.bf16.mxu0 0
    %5549 = vmatpush1.bf16.msra.mxu0 %v5482
    %5550 = vmatprep.subr.bf16.mxu0 0
    %5551 = vmatpush1.bf16.msra.mxu0 %v5479
    %5552 = vmatprep.subr.bf16.mxu0 0
    %5553 = vmatpush1.bf16.msra.mxu0 %v5476
    %5554 = vmatprep.subr.bf16.mxu0 0
    %5555 = vmatpush1.bf16.msra.mxu0 %v5473
    %5556 = vmatprep.subr.bf16.mxu0 0
    %5557 = vmatpush1.bf16.msra.mxu0 %v5470
    %5558 = vmatprep.subr.bf16.mxu0 0
    %5559 = vmatpush1.bf16.msra.mxu0 %v5467
    %5560 = vmatprep.subr.bf16.mxu0 0
    %5561 = vmatpush1.bf16.msra.mxu0 %v5464
    %5562 = vmatprep.subr.bf16.mxu0 0
    %5563 = vmatpush1.bf16.msra.mxu0 %v5461
    %5564 = vmatprep.subr.bf16.mxu0 0
    %5565 = vmatpush2.bf16.msra.mxu0 0
    %5566 = vmatprep.subr.bf16.mxu0 0
    %5567 = vmatpush2.bf16.msra.mxu0 0
    %5568 = vmatprep.subr.bf16.mxu0 0
    %5569 = vmatpush2.bf16.msra.mxu0 0
    %5570 = vmatprep.subr.bf16.mxu0 0
    %5571 = vmatpush2.bf16.msra.mxu0 0
    %5572 = vmatprep.subr.bf16.mxu0 0
    %5573 = vmatpush2.bf16.msra.mxu0 0
    %5574 = vmatprep.subr.bf16.mxu0 0
    %5575 = vmatpush2.bf16.msra.mxu0 0
    %5576 = vmatprep.subr.bf16.mxu0 0
    %5577 = vmatpush2.bf16.msra.mxu0 0
    %5578 = vmatprep.subr.bf16.mxu0 0
    %5579 = vmatpush2.bf16.msra.mxu0 0
    %5580 = vmatprep.mubr.bf16.mxu0 0
    %5581 = vmatmul.mubr.bf16.gmra.mxu0 %v5346
    %v5582 = vpop.f32.mrf.mxu0
    %v5583 = vadd.f32 0.0, %v5582
    %v5584 = vpop.f32.mrf.mxu0
    %v5585 = vpop.f32.mrf.mxu0
    %v5586 = vpop.f32.mrf.mxu0
    %5587 = vdwg.mxu0
    %v5588 = vpack.c.bf16 %v5345, %v5345
    %v5589 = vld [vmem:[%s6] sm:$0xff]
    %v5590 = vld [vmem:[%s6 + $0x8] sm:$0xff]
    %v5591 = vld [vmem:[%s6 + $0x10] sm:$0xff]
    %v5592 = vld [vmem:[%s6 + $0x18] sm:$0xff]
    %v5593 = vld [vmem:[%s6 + $0x20] sm:$0xff]
    %v5594 = vld [vmem:[%s6 + $0x28] sm:$0xff]
    %v5595 = vld [vmem:[%s6 + $0x30] sm:$0xff]
    %v5596 = vld [vmem:[%s6 + $0x38] sm:$0xff]
    %v5597 = vld [vmem:[%s6 + $0x40] sm:$0xff]
    %v5598 = vld [vmem:[%s6 + $0x48] sm:$0xff]
    %v5599 = vld [vmem:[%s6 + $0x50] sm:$0xff]
    %v5600 = vld [vmem:[%s6 + $0x58] sm:$0xff]
    %v5601 = vld [vmem:[%s6 + $0x60] sm:$0xff]
    %v5602 = vld [vmem:[%s6 + $0x68] sm:$0xff]
    %v5603 = vld [vmem:[%s6 + $0x70] sm:$0xff]
    %v5604 = vld [vmem:[%s6 + $0x78] sm:$0xff]
    %v5621 = vunpack.c.l.b16 %v5589
    %v5622 = vunpack.c.h.b16 %v5589
    %v5623 = vunpack.c.l.b16 %v5590
    %v5624 = vunpack.c.h.b16 %v5590
    %v5625 = vunpack.c.l.b16 %v5591
    %v5626 = vunpack.c.h.b16 %v5591
    %v5627 = vunpack.c.l.b16 %v5592
    %v5628 = vunpack.c.h.b16 %v5592
    %v5629 = vunpack.c.l.b16 %v5593
    %v5630 = vunpack.c.h.b16 %v5593
    %v5631 = vunpack.c.l.b16 %v5594
    %v5632 = vunpack.c.h.b16 %v5594
    %v5633 = vunpack.c.l.b16 %v5595
    %v5634 = vunpack.c.h.b16 %v5595
    %v5635 = vunpack.c.l.b16 %v5596
    %v5636 = vunpack.c.h.b16 %v5596
    %v5637 = vunpack.c.l.b16 %v5597
    %v5638 = vunpack.c.h.b16 %v5597
    %v5639 = vunpack.c.l.b16 %v5598
    %v5640 = vunpack.c.h.b16 %v5598
    %v5641 = vunpack.c.l.b16 %v5599
    %v5642 = vunpack.c.h.b16 %v5599
    %v5643 = vunpack.c.l.b16 %v5600
    %v5644 = vunpack.c.h.b16 %v5600
    %v5645 = vunpack.c.l.b16 %v5601
    %v5646 = vunpack.c.h.b16 %v5601
    %v5647 = vunpack.c.l.b16 %v5602
    %v5648 = vunpack.c.h.b16 %v5602
    %v5649 = vunpack.c.l.b16 %v5603
    %v5650 = vunpack.c.h.b16 %v5603
    %v5651 = vunpack.c.l.b16 %v5604
    %v5652 = vunpack.c.h.b16 %v5604
    %v5653 = vpack.c.b16 %v5623, %v5621
    %v5654 = vpack.c.b16 %v5624, %v5622
    %v5655 = vpack.c.b16 %v5627, %v5625
    %v5656 = vpack.c.b16 %v5628, %v5626
    %v5657 = vpack.c.b16 %v5631, %v5629
    %v5658 = vpack.c.b16 %v5632, %v5630
    %v5659 = vpack.c.b16 %v5635, %v5633
    %v5660 = vpack.c.b16 %v5636, %v5634
    %v5661 = vpack.c.b16 %v5639, %v5637
    %v5662 = vpack.c.b16 %v5640, %v5638
    %v5663 = vpack.c.b16 %v5643, %v5641
    %v5664 = vpack.c.b16 %v5644, %v5642
    %v5665 = vpack.c.b16 %v5647, %v5645
    %v5666 = vpack.c.b16 %v5648, %v5646
    %v5667 = vpack.c.b16 %v5651, %v5649
    %v5668 = vpack.c.b16 %v5652, %v5650
    %5685 = vmatprep.subr.bf16.mxu0 %v5668
    %5686 = vmatpush1.bf16.msra.mxu0 %v5667
    %5687 = vmatprep.subr.bf16.mxu0 %v5666
    %5688 = vmatpush1.bf16.msra.mxu0 %v5665
    %5689 = vmatprep.subr.bf16.mxu0 %v5664
    %5690 = vmatpush1.bf16.msra.mxu0 %v5663
    %5691 = vmatprep.subr.bf16.mxu0 %v5662
    %5692 = vmatpush1.bf16.msra.mxu0 %v5661
    %5693 = vmatprep.subr.bf16.mxu0 %v5660
    %5694 = vmatpush1.bf16.msra.mxu0 %v5659
    %5695 = vmatprep.subr.bf16.mxu0 %v5658
    %5696 = vmatpush1.bf16.msra.mxu0 %v5657
    %5697 = vmatprep.subr.bf16.mxu0 %v5656
    %5698 = vmatpush1.bf16.msra.mxu0 %v5655
    %5699 = vmatprep.subr.bf16.mxu0 %v5654
    %5700 = vmatpush1.bf16.msra.mxu0 %v5653
    %5701 = vmatprep.subr.bf16.mxu0 0
    %5702 = vmatpush2.bf16.msra.mxu0 0
    %5703 = vmatprep.subr.bf16.mxu0 0
    %5704 = vmatpush2.bf16.msra.mxu0 0
    %5705 = vmatprep.subr.bf16.mxu0 0
    %5706 = vmatpush2.bf16.msra.mxu0 0
    %5707 = vmatprep.subr.bf16.mxu0 0
    %5708 = vmatpush2.bf16.msra.mxu0 0
    %5709 = vmatprep.subr.bf16.mxu0 0
    %5710 = vmatpush2.bf16.msra.mxu0 0
    %5711 = vmatprep.subr.bf16.mxu0 0
    %5712 = vmatpush2.bf16.msra.mxu0 0
    %5713 = vmatprep.subr.bf16.mxu0 0
    %5714 = vmatpush2.bf16.msra.mxu0 0
    %5715 = vmatprep.subr.bf16.mxu0 0
    %5716 = vmatpush2.bf16.msra.mxu0 0
    %5717 = vmatprep.mubr.bf16.mxu0 0
    %5718 = vmatmul.mubr.bf16.gmra.mxu0 %v5588
    %v5719 = vpop.f32.mrf.mxu0
    %v5720 = vadd.f32 0.0, %v5719
    %v5721 = vpop.f32.mrf.mxu0
    %v5722 = vadd.f32 0.0, %v5721
    %v5723 = vpop.f32.mrf.mxu0
    %v5724 = vpop.f32.mrf.mxu0
    %5725 = vdwg.mxu0
    %v5726 = vadd.f32 %v5542, %v5720
    %v5727 = vadd.f32 %v5544, %v5722
    %v5728 = vld [vmem:[%s8] sm:$0x3]
    %v5730 = vlaneseq
    %v5731 = vshrl.u32 %v5730, 7
    %v5732 = vsub.s32 0, %v5731
    %v5733 = vrot.slane %v5728, %v5732
    %v5734 = vlaneseq
    %v5735 = vshrl.u32 %v5734, 7
    %v5736 = vsub.s32 1, %v5735
    %v5737 = vrot.slane %v5728, %v5736
    %v5740 = vadd.f32 %v5726, %v5733
    %v5741 = vadd.f32 %v5727, %v5737
    %v5742 = vxor.u32 %v5740, 2147483648
    %v5743 = vxor.u32 %v5741, 2147483648
    %v5744 = vmul.f32 %v5742, 1.442695
    %v5745 = vpow.pop %v5744
    %v5746 = vmul.f32 %v5743, 1.442695
    %v5747 = vpow.pop %v5746
    %v5748 = vadd.f32 %v5745, 1.0
    %v5749 = vadd.f32 %v5747, 1.0
    %v5750 = vrcp.pop %v5748
    %v5751 = vmul.f32 1.0, %v5750
    %v5752 = vrcp.pop %v5749
    %v5753 = vmul.f32 1.0, %v5752
    %v5754 = vmul.f32 %v5753, %v5345
    %v5755 = vpack.c.bf16 %v5754, %v5754
    %v5756 = vld [vmem:[#allocation8] sm:$0xf]
    %v5757 = vld [vmem:[#allocation8 + $0x4] sm:$0xf]
    %v5758 = vld [vmem:[#allocation8 + $0x8] sm:$0xf]
    %v5759 = vld [vmem:[#allocation8 + $0xc] sm:$0xf]
    %v5760 = vld [vmem:[#allocation8 + $0x10] sm:$0xf]
    %v5761 = vld [vmem:[#allocation8 + $0x14] sm:$0xf]
    %v5762 = vld [vmem:[#allocation8 + $0x18] sm:$0xf]
    %v5763 = vld [vmem:[#allocation8 + $0x1c] sm:$0xf]
    %v5764 = vld [vmem:[#allocation8 + $0x20] sm:$0xf]
    %v5765 = vld [vmem:[#allocation8 + $0x24] sm:$0xf]
    %v5766 = vld [vmem:[#allocation8 + $0x28] sm:$0xf]
    %v5767 = vld [vmem:[#allocation8 + $0x2c] sm:$0xf]
    %v5768 = vld [vmem:[#allocation8 + $0x30] sm:$0xf]
    %v5769 = vld [vmem:[#allocation8 + $0x34] sm:$0xf]
    %v5770 = vld [vmem:[#allocation8 + $0x38] sm:$0xf]
    %v5771 = vld [vmem:[#allocation8 + $0x3c] sm:$0xf]
    %v5788 = vunpack.c.l.b16 %v5756
    %v5789 = vunpack.c.l.b16 %v5757
    %v5790 = vunpack.c.l.b16 %v5758
    %v5791 = vunpack.c.l.b16 %v5759
    %v5792 = vunpack.c.l.b16 %v5760
    %v5793 = vunpack.c.l.b16 %v5761
    %v5794 = vunpack.c.l.b16 %v5762
    %v5795 = vunpack.c.l.b16 %v5763
    %v5796 = vunpack.c.l.b16 %v5764
    %v5797 = vunpack.c.l.b16 %v5765
    %v5798 = vunpack.c.l.b16 %v5766
    %v5799 = vunpack.c.l.b16 %v5767
    %v5800 = vunpack.c.l.b16 %v5768
    %v5801 = vunpack.c.l.b16 %v5769
    %v5802 = vunpack.c.l.b16 %v5770
    %v5803 = vunpack.c.l.b16 %v5771
    %v5804 = vpack.c.b16 %v5789, %v5788
    %v5805 = vpack.c.b16 %v5791, %v5790
    %v5806 = vpack.c.b16 %v5793, %v5792
    %v5807 = vpack.c.b16 %v5795, %v5794
    %v5808 = vpack.c.b16 %v5797, %v5796
    %v5809 = vpack.c.b16 %v5799, %v5798
    %v5810 = vpack.c.b16 %v5801, %v5800
    %v5811 = vpack.c.b16 %v5803, %v5802
    %5820 = vmatprep.subr.bf16.mxu0 0
    %5821 = vmatpush1.bf16.msra.mxu0 %v5811
    %5822 = vmatprep.subr.bf16.mxu0 0
    %5823 = vmatpush1.bf16.msra.mxu0 %v5810
    %5824 = vmatprep.subr.bf16.mxu0 0
    %5825 = vmatpush1.bf16.msra.mxu0 %v5809
    %5826 = vmatprep.subr.bf16.mxu0 0
    %5827 = vmatpush1.bf16.msra.mxu0 %v5808
    %5828 = vmatprep.subr.bf16.mxu0 0
    %5829 = vmatpush1.bf16.msra.mxu0 %v5807
    %5830 = vmatprep.subr.bf16.mxu0 0
    %5831 = vmatpush1.bf16.msra.mxu0 %v5806
    %5832 = vmatprep.subr.bf16.mxu0 0
    %5833 = vmatpush1.bf16.msra.mxu0 %v5805
    %5834 = vmatprep.subr.bf16.mxu0 0
    %5835 = vmatpush1.bf16.msra.mxu0 %v5804
    %5836 = vmatprep.subr.bf16.mxu0 0
    %5837 = vmatpush2.bf16.msra.mxu0 0
    %5838 = vmatprep.subr.bf16.mxu0 0
    %5839 = vmatpush2.bf16.msra.mxu0 0
    %5840 = vmatprep.subr.bf16.mxu0 0
    %5841 = vmatpush2.bf16.msra.mxu0 0
    %5842 = vmatprep.subr.bf16.mxu0 0
    %5843 = vmatpush2.bf16.msra.mxu0 0
    %5844 = vmatprep.subr.bf16.mxu0 0
    %5845 = vmatpush2.bf16.msra.mxu0 0
    %5846 = vmatprep.subr.bf16.mxu0 0
    %5847 = vmatpush2.bf16.msra.mxu0 0
    %5848 = vmatprep.subr.bf16.mxu0 0
    %5849 = vmatpush2.bf16.msra.mxu0 0
    %5850 = vmatprep.subr.bf16.mxu0 0
    %5851 = vmatpush2.bf16.msra.mxu0 0
    %5852 = vmatprep.mubr.bf16.mxu0 0
    %5853 = vmatmul.mubr.bf16.gmra.mxu0 %v5755
    %v5854 = vpop.f32.mrf.mxu0
    %v5855 = vadd.f32 0.0, %v5854
    %v5856 = vpop.f32.mrf.mxu0
    %v5857 = vpop.f32.mrf.mxu0
    %v5858 = vpop.f32.mrf.mxu0
    %5859 = vdwg.mxu0
    %v5860 = vadd.f32 %v5583, %v5855
    %v5861 = vld [vmem:[%s9] sm:$0x1]
    %v5863 = vlaneseq
    %v5864 = vshrl.u32 %v5863, 7
    %v5865 = vsub.s32 0, %v5864
    %v5866 = vrot.slane %v5861, %v5865
    %v5868 = vadd.f32 %v5860, %v5866
    %v5869 = vtanh.pop %v5868
    %v5870 = vmul.f32 %v5751, %v5345
    %v5871 = vsub.f32 1.0, %v5751
    %v5872 = vmul.f32 %v5871, %v5869
    %v5873 = vadd.f32 %v5870, %v5872
    %5874 = vst [vmem:[%s389] sm:$0xff] %v5873
    %s5875 = scalar_lea.vmem [#allocation3], 48
    %5876 = vst [vmem:[%s5875] sm:$0xff] %v5873
    %v5877 = vld [vmem:[#allocation2] sm:$0xff]
    %s5878 = scalar_lea.vmem %s0, 84
    %v5879 = vld [vmem:[%s5878] sm:$0xff]
    %v5880 = vld [vmem:[%s5878 + $0x8] sm:$0xf]
    %v5881 = vunpack.c.l.bf16 %v5879
    %v5882 = vunpack.c.h.bf16 %v5879
    %v5883 = vunpack.c.l.bf16 %v5880
    %v5884 = vpack.c.bf16 %v5877, %v5877
    %v5885 = vld [vmem:[#allocation4] sm:$0xff]
    %v5886 = vld [vmem:[#allocation4 + $0x8] sm:$0xff]
    %v5887 = vld [vmem:[#allocation4 + $0x10] sm:$0xff]
    %v5888 = vld [vmem:[#allocation4 + $0x18] sm:$0xff]
    %v5889 = vld [vmem:[#allocation4 + $0x20] sm:$0xff]
    %v5890 = vld [vmem:[#allocation4 + $0x28] sm:$0xff]
    %v5891 = vld [vmem:[#allocation4 + $0x30] sm:$0xff]
    %v5892 = vld [vmem:[#allocation4 + $0x38] sm:$0xff]
    %v5893 = vld [vmem:[#allocation4 + $0x40] sm:$0xff]
    %v5894 = vld [vmem:[#allocation4 + $0x48] sm:$0xff]
    %v5895 = vld [vmem:[#allocation4 + $0x50] sm:$0xff]
    %v5896 = vld [vmem:[#allocation4 + $0x58] sm:$0xff]
    %v5897 = vld [vmem:[#allocation4 + $0x60] sm:$0xff]
    %v5898 = vld [vmem:[#allocation4 + $0x68] sm:$0xff]
    %v5899 = vld [vmem:[#allocation4 + $0x70] sm:$0xff]
    %v5900 = vld [vmem:[#allocation4 + $0x78] sm:$0xff]
    %v5917 = vunpack.c.l.b16 %v5885
    %v5918 = vunpack.c.h.b16 %v5885
    %v5919 = vunpack.c.l.b16 %v5886
    %v5920 = vunpack.c.h.b16 %v5886
    %v5921 = vunpack.c.l.b16 %v5887
    %v5922 = vunpack.c.h.b16 %v5887
    %v5923 = vunpack.c.l.b16 %v5888
    %v5924 = vunpack.c.h.b16 %v5888
    %v5925 = vunpack.c.l.b16 %v5889
    %v5926 = vunpack.c.h.b16 %v5889
    %v5927 = vunpack.c.l.b16 %v5890
    %v5928 = vunpack.c.h.b16 %v5890
    %v5929 = vunpack.c.l.b16 %v5891
    %v5930 = vunpack.c.h.b16 %v5891
    %v5931 = vunpack.c.l.b16 %v5892
    %v5932 = vunpack.c.h.b16 %v5892
    %v5933 = vunpack.c.l.b16 %v5893
    %v5934 = vunpack.c.h.b16 %v5893
    %v5935 = vunpack.c.l.b16 %v5894
    %v5936 = vunpack.c.h.b16 %v5894
    %v5937 = vunpack.c.l.b16 %v5895
    %v5938 = vunpack.c.h.b16 %v5895
    %v5939 = vunpack.c.l.b16 %v5896
    %v5940 = vunpack.c.h.b16 %v5896
    %v5941 = vunpack.c.l.b16 %v5897
    %v5942 = vunpack.c.h.b16 %v5897
    %v5943 = vunpack.c.l.b16 %v5898
    %v5944 = vunpack.c.h.b16 %v5898
    %v5945 = vunpack.c.l.b16 %v5899
    %v5946 = vunpack.c.h.b16 %v5899
    %v5947 = vunpack.c.l.b16 %v5900
    %v5948 = vunpack.c.h.b16 %v5900
    %v5949 = vpack.c.b16 %v5919, %v5917
    %v5950 = vpack.c.b16 %v5920, %v5918
    %v5951 = vpack.c.b16 %v5923, %v5921
    %v5952 = vpack.c.b16 %v5924, %v5922
    %v5953 = vpack.c.b16 %v5927, %v5925
    %v5954 = vpack.c.b16 %v5928, %v5926
    %v5955 = vpack.c.b16 %v5931, %v5929
    %v5956 = vpack.c.b16 %v5932, %v5930
    %v5957 = vpack.c.b16 %v5935, %v5933
    %v5958 = vpack.c.b16 %v5936, %v5934
    %v5959 = vpack.c.b16 %v5939, %v5937
    %v5960 = vpack.c.b16 %v5940, %v5938
    %v5961 = vpack.c.b16 %v5943, %v5941
    %v5962 = vpack.c.b16 %v5944, %v5942
    %v5963 = vpack.c.b16 %v5947, %v5945
    %v5964 = vpack.c.b16 %v5948, %v5946
    %5981 = vmatprep.subr.bf16.mxu0 %v5964
    %5982 = vmatpush1.bf16.msra.mxu0 %v5963
    %5983 = vmatprep.subr.bf16.mxu0 %v5962
    %5984 = vmatpush1.bf16.msra.mxu0 %v5961
    %5985 = vmatprep.subr.bf16.mxu0 %v5960
    %5986 = vmatpush1.bf16.msra.mxu0 %v5959
    %5987 = vmatprep.subr.bf16.mxu0 %v5958
    %5988 = vmatpush1.bf16.msra.mxu0 %v5957
    %5989 = vmatprep.subr.bf16.mxu0 %v5956
    %5990 = vmatpush1.bf16.msra.mxu0 %v5955
    %5991 = vmatprep.subr.bf16.mxu0 %v5954
    %5992 = vmatpush1.bf16.msra.mxu0 %v5953
    %5993 = vmatprep.subr.bf16.mxu0 %v5952
    %5994 = vmatpush1.bf16.msra.mxu0 %v5951
    %5995 = vmatprep.subr.bf16.mxu0 %v5950
    %5996 = vmatpush1.bf16.msra.mxu0 %v5949
    %5997 = vmatprep.subr.bf16.mxu0 0
    %5998 = vmatpush2.bf16.msra.mxu0 0
    %5999 = vmatprep.subr.bf16.mxu0 0
    %6000 = vmatpush2.bf16.msra.mxu0 0
    %6001 = vmatprep.subr.bf16.mxu0 0
    %6002 = vmatpush2.bf16.msra.mxu0 0
    %6003 = vmatprep.subr.bf16.mxu0 0
    %6004 = vmatpush2.bf16.msra.mxu0 0
    %6005 = vmatprep.subr.bf16.mxu0 0
    %6006 = vmatpush2.bf16.msra.mxu0 0
    %6007 = vmatprep.subr.bf16.mxu0 0
    %6008 = vmatpush2.bf16.msra.mxu0 0
    %6009 = vmatprep.subr.bf16.mxu0 0
    %6010 = vmatpush2.bf16.msra.mxu0 0
    %6011 = vmatprep.subr.bf16.mxu0 0
    %6012 = vmatpush2.bf16.msra.mxu0 0
    %6013 = vmatprep.mubr.bf16.mxu0 0
    %6014 = vmatmul.mubr.bf16.gmra.mxu0 %v5884
    %v6015 = vpop.f32.mrf.mxu0
    %v6016 = vadd.f32 0.0, %v6015
    %v6017 = vpop.f32.mrf.mxu0
    %v6018 = vadd.f32 0.0, %v6017
    %v6019 = vpop.f32.mrf.mxu0
    %v6020 = vpop.f32.mrf.mxu0
    %6021 = vdwg.mxu0
    %v6022 = vadd.f32 %v5881, %v6016
    %v6023 = vadd.f32 %v5882, %v6018
    %v6024 = vld [vmem:[%s4] sm:$0x3]
    %v6026 = vlaneseq
    %v6027 = vshrl.u32 %v6026, 7
    %v6028 = vsub.s32 0, %v6027
    %v6029 = vrot.slane %v6024, %v6028
    %v6030 = vlaneseq
    %v6031 = vshrl.u32 %v6030, 7
    %v6032 = vsub.s32 1, %v6031
    %v6033 = vrot.slane %v6024, %v6032
    %v6036 = vadd.f32 %v6022, %v6029
    %v6037 = vadd.f32 %v6023, %v6033
    %v6038 = vxor.u32 %v6036, 2147483648
    %v6039 = vxor.u32 %v6037, 2147483648
    %v6040 = vmul.f32 %v6038, 1.442695
    %v6041 = vpow.pop %v6040
    %v6042 = vmul.f32 %v6039, 1.442695
    %v6043 = vpow.pop %v6042
    %v6044 = vadd.f32 %v6041, 1.0
    %v6045 = vadd.f32 %v6043, 1.0
    %v6046 = vrcp.pop %v6044
    %v6047 = vmul.f32 1.0, %v6046
    %v6048 = vrcp.pop %v6045
    %v6049 = vmul.f32 1.0, %v6048
    %v6050 = vmul.f32 %v6049, %v5877
    %v6051 = vpack.c.bf16 %v6050, %v6050
    %v6052 = vld [vmem:[#allocation6] sm:$0xf]
    %v6053 = vld [vmem:[#allocation6 + $0x4] sm:$0xf]
    %v6054 = vld [vmem:[#allocation6 + $0x8] sm:$0xf]
    %v6055 = vld [vmem:[#allocation6 + $0xc] sm:$0xf]
    %v6056 = vld [vmem:[#allocation6 + $0x10] sm:$0xf]
    %v6057 = vld [vmem:[#allocation6 + $0x14] sm:$0xf]
    %v6058 = vld [vmem:[#allocation6 + $0x18] sm:$0xf]
    %v6059 = vld [vmem:[#allocation6 + $0x1c] sm:$0xf]
    %v6060 = vld [vmem:[#allocation6 + $0x20] sm:$0xf]
    %v6061 = vld [vmem:[#allocation6 + $0x24] sm:$0xf]
    %v6062 = vld [vmem:[#allocation6 + $0x28] sm:$0xf]
    %v6063 = vld [vmem:[#allocation6 + $0x2c] sm:$0xf]
    %v6064 = vld [vmem:[#allocation6 + $0x30] sm:$0xf]
    %v6065 = vld [vmem:[#allocation6 + $0x34] sm:$0xf]
    %v6066 = vld [vmem:[#allocation6 + $0x38] sm:$0xf]
    %v6067 = vld [vmem:[#allocation6 + $0x3c] sm:$0xf]
    %v6084 = vunpack.c.l.b16 %v6052
    %v6085 = vunpack.c.l.b16 %v6053
    %v6086 = vunpack.c.l.b16 %v6054
    %v6087 = vunpack.c.l.b16 %v6055
    %v6088 = vunpack.c.l.b16 %v6056
    %v6089 = vunpack.c.l.b16 %v6057
    %v6090 = vunpack.c.l.b16 %v6058
    %v6091 = vunpack.c.l.b16 %v6059
    %v6092 = vunpack.c.l.b16 %v6060
    %v6093 = vunpack.c.l.b16 %v6061
    %v6094 = vunpack.c.l.b16 %v6062
    %v6095 = vunpack.c.l.b16 %v6063
    %v6096 = vunpack.c.l.b16 %v6064
    %v6097 = vunpack.c.l.b16 %v6065
    %v6098 = vunpack.c.l.b16 %v6066
    %v6099 = vunpack.c.l.b16 %v6067
    %v6100 = vpack.c.b16 %v6085, %v6084
    %v6101 = vpack.c.b16 %v6087, %v6086
    %v6102 = vpack.c.b16 %v6089, %v6088
    %v6103 = vpack.c.b16 %v6091, %v6090
    %v6104 = vpack.c.b16 %v6093, %v6092
    %v6105 = vpack.c.b16 %v6095, %v6094
    %v6106 = vpack.c.b16 %v6097, %v6096
    %v6107 = vpack.c.b16 %v6099, %v6098
    %6116 = vmatprep.subr.bf16.mxu0 0
    %6117 = vmatpush1.bf16.msra.mxu0 %v6107
    %6118 = vmatprep.subr.bf16.mxu0 0
    %6119 = vmatpush1.bf16.msra.mxu0 %v6106
    %6120 = vmatprep.subr.bf16.mxu0 0
    %6121 = vmatpush1.bf16.msra.mxu0 %v6105
    %6122 = vmatprep.subr.bf16.mxu0 0
    %6123 = vmatpush1.bf16.msra.mxu0 %v6104
    %6124 = vmatprep.subr.bf16.mxu0 0
    %6125 = vmatpush1.bf16.msra.mxu0 %v6103
    %6126 = vmatprep.subr.bf16.mxu0 0
    %6127 = vmatpush1.bf16.msra.mxu0 %v6102
    %6128 = vmatprep.subr.bf16.mxu0 0
    %6129 = vmatpush1.bf16.msra.mxu0 %v6101
    %6130 = vmatprep.subr.bf16.mxu0 0
    %6131 = vmatpush1.bf16.msra.mxu0 %v6100
    %6132 = vmatprep.subr.bf16.mxu0 0
    %6133 = vmatpush2.bf16.msra.mxu0 0
    %6134 = vmatprep.subr.bf16.mxu0 0
    %6135 = vmatpush2.bf16.msra.mxu0 0
    %6136 = vmatprep.subr.bf16.mxu0 0
    %6137 = vmatpush2.bf16.msra.mxu0 0
    %6138 = vmatprep.subr.bf16.mxu0 0
    %6139 = vmatpush2.bf16.msra.mxu0 0
    %6140 = vmatprep.subr.bf16.mxu0 0
    %6141 = vmatpush2.bf16.msra.mxu0 0
    %6142 = vmatprep.subr.bf16.mxu0 0
    %6143 = vmatpush2.bf16.msra.mxu0 0
    %6144 = vmatprep.subr.bf16.mxu0 0
    %6145 = vmatpush2.bf16.msra.mxu0 0
    %6146 = vmatprep.subr.bf16.mxu0 0
    %6147 = vmatpush2.bf16.msra.mxu0 0
    %6148 = vmatprep.mubr.bf16.mxu0 0
    %6149 = vmatmul.mubr.bf16.gmra.mxu0 %v6051
    %v6150 = vpop.f32.mrf.mxu0
    %v6151 = vadd.f32 0.0, %v6150
    %v6152 = vpop.f32.mrf.mxu0
    %v6153 = vpop.f32.mrf.mxu0
    %v6154 = vpop.f32.mrf.mxu0
    %6155 = vdwg.mxu0
    %v6156 = vadd.f32 %v5883, %v6151
    %v6157 = vld [vmem:[%s5] sm:$0x1]
    %v6159 = vlaneseq
    %v6160 = vshrl.u32 %v6159, 7
    %v6161 = vsub.s32 0, %v6160
    %v6162 = vrot.slane %v6157, %v6161
    %v6164 = vadd.f32 %v6156, %v6162
    %v6165 = vtanh.pop %v6164
    %v6166 = vmul.f32 %v6047, %v5877
    %v6167 = vsub.f32 1.0, %v6047
    %v6168 = vmul.f32 %v6167, %v6165
    %v6169 = vadd.f32 %v6166, %v6168
    %6170 = vst [vmem:[#allocation2] sm:$0xff] %v6169
    %v6171 = vld [vmem:[%s389] sm:$0xff]
    %v6172 = vpack.c.bf16 %v6169, %v6169
    %v6173 = vld [vmem:[%s10] sm:$0xff]
    %v6174 = vld [vmem:[%s10 + $0x8] sm:$0xf]
    %v6175 = vld [vmem:[%s10 + $0xc] sm:$0xff]
    %v6176 = vld [vmem:[%s10 + $0x14] sm:$0xf]
    %v6177 = vld [vmem:[%s10 + $0x18] sm:$0xff]
    %v6178 = vld [vmem:[%s10 + $0x20] sm:$0xf]
    %v6179 = vld [vmem:[%s10 + $0x24] sm:$0xff]
    %v6180 = vld [vmem:[%s10 + $0x2c] sm:$0xf]
    %v6181 = vld [vmem:[%s10 + $0x30] sm:$0xff]
    %v6182 = vld [vmem:[%s10 + $0x38] sm:$0xf]
    %v6183 = vld [vmem:[%s10 + $0x3c] sm:$0xff]
    %v6184 = vld [vmem:[%s10 + $0x44] sm:$0xf]
    %v6185 = vld [vmem:[%s10 + $0x48] sm:$0xff]
    %v6186 = vld [vmem:[%s10 + $0x50] sm:$0xf]
    %v6187 = vld [vmem:[%s10 + $0x54] sm:$0xff]
    %v6188 = vld [vmem:[%s10 + $0x5c] sm:$0xf]
    %v6189 = vld [vmem:[%s10 + $0x60] sm:$0xff]
    %v6190 = vld [vmem:[%s10 + $0x68] sm:$0xf]
    %v6191 = vld [vmem:[%s10 + $0x6c] sm:$0xff]
    %v6192 = vld [vmem:[%s10 + $0x74] sm:$0xf]
    %v6193 = vld [vmem:[%s10 + $0x78] sm:$0xff]
    %v6194 = vld [vmem:[%s10 + $0x80] sm:$0xf]
    %v6195 = vld [vmem:[%s10 + $0x84] sm:$0xff]
    %v6196 = vld [vmem:[%s10 + $0x8c] sm:$0xf]
    %v6197 = vld [vmem:[%s10 + $0x90] sm:$0xff]
    %v6198 = vld [vmem:[%s10 + $0x98] sm:$0xf]
    %v6199 = vld [vmem:[%s10 + $0x9c] sm:$0xff]
    %v6200 = vld [vmem:[%s10 + $0xa4] sm:$0xf]
    %v6201 = vld [vmem:[%s10 + $0xa8] sm:$0xff]
    %v6202 = vld [vmem:[%s10 + $0xb0] sm:$0xf]
    %v6203 = vld [vmem:[%s10 + $0xb4] sm:$0xff]
    %v6204 = vld [vmem:[%s10 + $0xbc] sm:$0xf]
    %v6237 = vunpack.c.l.b16 %v6173
    %v6238 = vunpack.c.h.b16 %v6173
    %v6239 = vunpack.c.l.b16 %v6174
    %v6240 = vunpack.c.l.b16 %v6175
    %v6241 = vunpack.c.h.b16 %v6175
    %v6242 = vunpack.c.l.b16 %v6176
    %v6243 = vunpack.c.l.b16 %v6177
    %v6244 = vunpack.c.h.b16 %v6177
    %v6245 = vunpack.c.l.b16 %v6178
    %v6246 = vunpack.c.l.b16 %v6179
    %v6247 = vunpack.c.h.b16 %v6179
    %v6248 = vunpack.c.l.b16 %v6180
    %v6249 = vunpack.c.l.b16 %v6181
    %v6250 = vunpack.c.h.b16 %v6181
    %v6251 = vunpack.c.l.b16 %v6182
    %v6252 = vunpack.c.l.b16 %v6183
    %v6253 = vunpack.c.h.b16 %v6183
    %v6254 = vunpack.c.l.b16 %v6184
    %v6255 = vunpack.c.l.b16 %v6185
    %v6256 = vunpack.c.h.b16 %v6185
    %v6257 = vunpack.c.l.b16 %v6186
    %v6258 = vunpack.c.l.b16 %v6187
    %v6259 = vunpack.c.h.b16 %v6187
    %v6260 = vunpack.c.l.b16 %v6188
    %v6261 = vunpack.c.l.b16 %v6189
    %v6262 = vunpack.c.h.b16 %v6189
    %v6263 = vunpack.c.l.b16 %v6190
    %v6264 = vunpack.c.l.b16 %v6191
    %v6265 = vunpack.c.h.b16 %v6191
    %v6266 = vunpack.c.l.b16 %v6192
    %v6267 = vunpack.c.l.b16 %v6193
    %v6268 = vunpack.c.h.b16 %v6193
    %v6269 = vunpack.c.l.b16 %v6194
    %v6270 = vunpack.c.l.b16 %v6195
    %v6271 = vunpack.c.h.b16 %v6195
    %v6272 = vunpack.c.l.b16 %v6196
    %v6273 = vunpack.c.l.b16 %v6197
    %v6274 = vunpack.c.h.b16 %v6197
    %v6275 = vunpack.c.l.b16 %v6198
    %v6276 = vunpack.c.l.b16 %v6199
    %v6277 = vunpack.c.h.b16 %v6199
    %v6278 = vunpack.c.l.b16 %v6200
    %v6279 = vunpack.c.l.b16 %v6201
    %v6280 = vunpack.c.h.b16 %v6201
    %v6281 = vunpack.c.l.b16 %v6202
    %v6282 = vunpack.c.l.b16 %v6203
    %v6283 = vunpack.c.h.b16 %v6203
    %v6284 = vunpack.c.l.b16 %v6204
    %v6285 = vpack.c.b16 %v6240, %v6237
    %v6286 = vpack.c.b16 %v6241, %v6238
    %v6287 = vpack.c.b16 %v6242, %v6239
    %v6288 = vpack.c.b16 %v6246, %v6243
    %v6289 = vpack.c.b16 %v6247, %v6244
    %v6290 = vpack.c.b16 %v6248, %v6245
    %v6291 = vpack.c.b16 %v6252, %v6249
    %v6292 = vpack.c.b16 %v6253, %v6250
    %v6293 = vpack.c.b16 %v6254, %v6251
    %v6294 = vpack.c.b16 %v6258, %v6255
    %v6295 = vpack.c.b16 %v6259, %v6256
    %v6296 = vpack.c.b16 %v6260, %v6257
    %v6297 = vpack.c.b16 %v6264, %v6261
    %v6298 = vpack.c.b16 %v6265, %v6262
    %v6299 = vpack.c.b16 %v6266, %v6263
    %v6300 = vpack.c.b16 %v6270, %v6267
    %v6301 = vpack.c.b16 %v6271, %v6268
    %v6302 = vpack.c.b16 %v6272, %v6269
    %v6303 = vpack.c.b16 %v6276, %v6273
    %v6304 = vpack.c.b16 %v6277, %v6274
    %v6305 = vpack.c.b16 %v6278, %v6275
    %v6306 = vpack.c.b16 %v6282, %v6279
    %v6307 = vpack.c.b16 %v6283, %v6280
    %v6308 = vpack.c.b16 %v6284, %v6281
    %6333 = vmatprep.subr.bf16.mxu0 %v6307
    %6334 = vmatpush1.bf16.msra.mxu0 %v6306
    %6335 = vmatprep.subr.bf16.mxu0 %v6304
    %6336 = vmatpush1.bf16.msra.mxu0 %v6303
    %6337 = vmatprep.subr.bf16.mxu0 %v6301
    %6338 = vmatpush1.bf16.msra.mxu0 %v6300
    %6339 = vmatprep.subr.bf16.mxu0 %v6298
    %6340 = vmatpush1.bf16.msra.mxu0 %v6297
    %6341 = vmatprep.subr.bf16.mxu0 %v6295
    %6342 = vmatpush1.bf16.msra.mxu0 %v6294
    %6343 = vmatprep.subr.bf16.mxu0 %v6292
    %6344 = vmatpush1.bf16.msra.mxu0 %v6291
    %6345 = vmatprep.subr.bf16.mxu0 %v6289
    %6346 = vmatpush1.bf16.msra.mxu0 %v6288
    %6347 = vmatprep.subr.bf16.mxu0 %v6286
    %6348 = vmatpush1.bf16.msra.mxu0 %v6285
    %6349 = vmatprep.subr.bf16.mxu0 0
    %6350 = vmatpush2.bf16.msra.mxu0 0
    %6351 = vmatprep.subr.bf16.mxu0 0
    %6352 = vmatpush2.bf16.msra.mxu0 0
    %6353 = vmatprep.subr.bf16.mxu0 0
    %6354 = vmatpush2.bf16.msra.mxu0 0
    %6355 = vmatprep.subr.bf16.mxu0 0
    %6356 = vmatpush2.bf16.msra.mxu0 0
    %6357 = vmatprep.subr.bf16.mxu0 0
    %6358 = vmatpush2.bf16.msra.mxu0 0
    %6359 = vmatprep.subr.bf16.mxu0 0
    %6360 = vmatpush2.bf16.msra.mxu0 0
    %6361 = vmatprep.subr.bf16.mxu0 0
    %6362 = vmatpush2.bf16.msra.mxu0 0
    %6363 = vmatprep.subr.bf16.mxu0 0
    %6364 = vmatpush2.bf16.msra.mxu0 0
    %6365 = vmatprep.mubr.bf16.mxu0 0
    %6366 = vmatmul.mubr.bf16.gmra.mxu0 %v6172
    %v6367 = vpop.f32.mrf.mxu0
    %v6368 = vadd.f32 0.0, %v6367
    %v6369 = vpop.f32.mrf.mxu0
    %v6370 = vadd.f32 0.0, %v6369
    %v6371 = vpop.f32.mrf.mxu0
    %v6372 = vpop.f32.mrf.mxu0
    %6373 = vdwg.mxu0
    %6374 = vmatprep.subr.bf16.mxu0 0
    %6375 = vmatpush1.bf16.msra.mxu0 %v6308
    %6376 = vmatprep.subr.bf16.mxu0 0
    %6377 = vmatpush1.bf16.msra.mxu0 %v6305
    %6378 = vmatprep.subr.bf16.mxu0 0
    %6379 = vmatpush1.bf16.msra.mxu0 %v6302
    %6380 = vmatprep.subr.bf16.mxu0 0
    %6381 = vmatpush1.bf16.msra.mxu0 %v6299
    %6382 = vmatprep.subr.bf16.mxu0 0
    %6383 = vmatpush1.bf16.msra.mxu0 %v6296
    %6384 = vmatprep.subr.bf16.mxu0 0
    %6385 = vmatpush1.bf16.msra.mxu0 %v6293
    %6386 = vmatprep.subr.bf16.mxu0 0
    %6387 = vmatpush1.bf16.msra.mxu0 %v6290
    %6388 = vmatprep.subr.bf16.mxu0 0
    %6389 = vmatpush1.bf16.msra.mxu0 %v6287
    %6390 = vmatprep.subr.bf16.mxu0 0
    %6391 = vmatpush2.bf16.msra.mxu0 0
    %6392 = vmatprep.subr.bf16.mxu0 0
    %6393 = vmatpush2.bf16.msra.mxu0 0
    %6394 = vmatprep.subr.bf16.mxu0 0
    %6395 = vmatpush2.bf16.msra.mxu0 0
    %6396 = vmatprep.subr.bf16.mxu0 0
    %6397 = vmatpush2.bf16.msra.mxu0 0
    %6398 = vmatprep.subr.bf16.mxu0 0
    %6399 = vmatpush2.bf16.msra.mxu0 0
    %6400 = vmatprep.subr.bf16.mxu0 0
    %6401 = vmatpush2.bf16.msra.mxu0 0
    %6402 = vmatprep.subr.bf16.mxu0 0
    %6403 = vmatpush2.bf16.msra.mxu0 0
    %6404 = vmatprep.subr.bf16.mxu0 0
    %6405 = vmatpush2.bf16.msra.mxu0 0
    %6406 = vmatprep.mubr.bf16.mxu0 0
    %6407 = vmatmul.mubr.bf16.gmra.mxu0 %v6172
    %v6408 = vpop.f32.mrf.mxu0
    %v6409 = vadd.f32 0.0, %v6408
    %v6410 = vpop.f32.mrf.mxu0
    %v6411 = vpop.f32.mrf.mxu0
    %v6412 = vpop.f32.mrf.mxu0
    %6413 = vdwg.mxu0
    %v6414 = vpack.c.bf16 %v6171, %v6171
    %v6415 = vld [vmem:[%s6] sm:$0xff]
    %v6416 = vld [vmem:[%s6 + $0x8] sm:$0xff]
    %v6417 = vld [vmem:[%s6 + $0x10] sm:$0xff]
    %v6418 = vld [vmem:[%s6 + $0x18] sm:$0xff]
    %v6419 = vld [vmem:[%s6 + $0x20] sm:$0xff]
    %v6420 = vld [vmem:[%s6 + $0x28] sm:$0xff]
    %v6421 = vld [vmem:[%s6 + $0x30] sm:$0xff]
    %v6422 = vld [vmem:[%s6 + $0x38] sm:$0xff]
    %v6423 = vld [vmem:[%s6 + $0x40] sm:$0xff]
    %v6424 = vld [vmem:[%s6 + $0x48] sm:$0xff]
    %v6425 = vld [vmem:[%s6 + $0x50] sm:$0xff]
    %v6426 = vld [vmem:[%s6 + $0x58] sm:$0xff]
    %v6427 = vld [vmem:[%s6 + $0x60] sm:$0xff]
    %v6428 = vld [vmem:[%s6 + $0x68] sm:$0xff]
    %v6429 = vld [vmem:[%s6 + $0x70] sm:$0xff]
    %v6430 = vld [vmem:[%s6 + $0x78] sm:$0xff]
    %v6447 = vunpack.c.l.b16 %v6415
    %v6448 = vunpack.c.h.b16 %v6415
    %v6449 = vunpack.c.l.b16 %v6416
    %v6450 = vunpack.c.h.b16 %v6416
    %v6451 = vunpack.c.l.b16 %v6417
    %v6452 = vunpack.c.h.b16 %v6417
    %v6453 = vunpack.c.l.b16 %v6418
    %v6454 = vunpack.c.h.b16 %v6418
    %v6455 = vunpack.c.l.b16 %v6419
    %v6456 = vunpack.c.h.b16 %v6419
    %v6457 = vunpack.c.l.b16 %v6420
    %v6458 = vunpack.c.h.b16 %v6420
    %v6459 = vunpack.c.l.b16 %v6421
    %v6460 = vunpack.c.h.b16 %v6421
    %v6461 = vunpack.c.l.b16 %v6422
    %v6462 = vunpack.c.h.b16 %v6422
    %v6463 = vunpack.c.l.b16 %v6423
    %v6464 = vunpack.c.h.b16 %v6423
    %v6465 = vunpack.c.l.b16 %v6424
    %v6466 = vunpack.c.h.b16 %v6424
    %v6467 = vunpack.c.l.b16 %v6425
    %v6468 = vunpack.c.h.b16 %v6425
    %v6469 = vunpack.c.l.b16 %v6426
    %v6470 = vunpack.c.h.b16 %v6426
    %v6471 = vunpack.c.l.b16 %v6427
    %v6472 = vunpack.c.h.b16 %v6427
    %v6473 = vunpack.c.l.b16 %v6428
    %v6474 = vunpack.c.h.b16 %v6428
    %v6475 = vunpack.c.l.b16 %v6429
    %v6476 = vunpack.c.h.b16 %v6429
    %v6477 = vunpack.c.l.b16 %v6430
    %v6478 = vunpack.c.h.b16 %v6430
    %v6479 = vpack.c.b16 %v6449, %v6447
    %v6480 = vpack.c.b16 %v6450, %v6448
    %v6481 = vpack.c.b16 %v6453, %v6451
    %v6482 = vpack.c.b16 %v6454, %v6452
    %v6483 = vpack.c.b16 %v6457, %v6455
    %v6484 = vpack.c.b16 %v6458, %v6456
    %v6485 = vpack.c.b16 %v6461, %v6459
    %v6486 = vpack.c.b16 %v6462, %v6460
    %v6487 = vpack.c.b16 %v6465, %v6463
    %v6488 = vpack.c.b16 %v6466, %v6464
    %v6489 = vpack.c.b16 %v6469, %v6467
    %v6490 = vpack.c.b16 %v6470, %v6468
    %v6491 = vpack.c.b16 %v6473, %v6471
    %v6492 = vpack.c.b16 %v6474, %v6472
    %v6493 = vpack.c.b16 %v6477, %v6475
    %v6494 = vpack.c.b16 %v6478, %v6476
    %6511 = vmatprep.subr.bf16.mxu0 %v6494
    %6512 = vmatpush1.bf16.msra.mxu0 %v6493
    %6513 = vmatprep.subr.bf16.mxu0 %v6492
    %6514 = vmatpush1.bf16.msra.mxu0 %v6491
    %6515 = vmatprep.subr.bf16.mxu0 %v6490
    %6516 = vmatpush1.bf16.msra.mxu0 %v6489
    %6517 = vmatprep.subr.bf16.mxu0 %v6488
    %6518 = vmatpush1.bf16.msra.mxu0 %v6487
    %6519 = vmatprep.subr.bf16.mxu0 %v6486
    %6520 = vmatpush1.bf16.msra.mxu0 %v6485
    %6521 = vmatprep.subr.bf16.mxu0 %v6484
    %6522 = vmatpush1.bf16.msra.mxu0 %v6483
    %6523 = vmatprep.subr.bf16.mxu0 %v6482
    %6524 = vmatpush1.bf16.msra.mxu0 %v6481
    %6525 = vmatprep.subr.bf16.mxu0 %v6480
    %6526 = vmatpush1.bf16.msra.mxu0 %v6479
    %6527 = vmatprep.subr.bf16.mxu0 0
    %6528 = vmatpush2.bf16.msra.mxu0 0
    %6529 = vmatprep.subr.bf16.mxu0 0
    %6530 = vmatpush2.bf16.msra.mxu0 0
    %6531 = vmatprep.subr.bf16.mxu0 0
    %6532 = vmatpush2.bf16.msra.mxu0 0
    %6533 = vmatprep.subr.bf16.mxu0 0
    %6534 = vmatpush2.bf16.msra.mxu0 0
    %6535 = vmatprep.subr.bf16.mxu0 0
    %6536 = vmatpush2.bf16.msra.mxu0 0
    %6537 = vmatprep.subr.bf16.mxu0 0
    %6538 = vmatpush2.bf16.msra.mxu0 0
    %6539 = vmatprep.subr.bf16.mxu0 0
    %6540 = vmatpush2.bf16.msra.mxu0 0
    %6541 = vmatprep.subr.bf16.mxu0 0
    %6542 = vmatpush2.bf16.msra.mxu0 0
    %6543 = vmatprep.mubr.bf16.mxu0 0
    %6544 = vmatmul.mubr.bf16.gmra.mxu0 %v6414
    %v6545 = vpop.f32.mrf.mxu0
    %v6546 = vadd.f32 0.0, %v6545
    %v6547 = vpop.f32.mrf.mxu0
    %v6548 = vadd.f32 0.0, %v6547
    %v6549 = vpop.f32.mrf.mxu0
    %v6550 = vpop.f32.mrf.mxu0
    %6551 = vdwg.mxu0
    %v6552 = vadd.f32 %v6368, %v6546
    %v6553 = vadd.f32 %v6370, %v6548
    %v6554 = vld [vmem:[%s8] sm:$0x3]
    %v6556 = vlaneseq
    %v6557 = vshrl.u32 %v6556, 7
    %v6558 = vsub.s32 0, %v6557
    %v6559 = vrot.slane %v6554, %v6558
    %v6560 = vlaneseq
    %v6561 = vshrl.u32 %v6560, 7
    %v6562 = vsub.s32 1, %v6561
    %v6563 = vrot.slane %v6554, %v6562
    %v6566 = vadd.f32 %v6552, %v6559
    %v6567 = vadd.f32 %v6553, %v6563
    %v6568 = vxor.u32 %v6566, 2147483648
    %v6569 = vxor.u32 %v6567, 2147483648
    %v6570 = vmul.f32 %v6568, 1.442695
    %v6571 = vpow.pop %v6570
    %v6572 = vmul.f32 %v6569, 1.442695
    %v6573 = vpow.pop %v6572
    %v6574 = vadd.f32 %v6571, 1.0
    %v6575 = vadd.f32 %v6573, 1.0
    %v6576 = vrcp.pop %v6574
    %v6577 = vmul.f32 1.0, %v6576
    %v6578 = vrcp.pop %v6575
    %v6579 = vmul.f32 1.0, %v6578
    %v6580 = vmul.f32 %v6579, %v6171
    %v6581 = vpack.c.bf16 %v6580, %v6580
    %v6582 = vld [vmem:[#allocation8] sm:$0xf]
    %v6583 = vld [vmem:[#allocation8 + $0x4] sm:$0xf]
    %v6584 = vld [vmem:[#allocation8 + $0x8] sm:$0xf]
    %v6585 = vld [vmem:[#allocation8 + $0xc] sm:$0xf]
    %v6586 = vld [vmem:[#allocation8 + $0x10] sm:$0xf]
    %v6587 = vld [vmem:[#allocation8 + $0x14] sm:$0xf]
    %v6588 = vld [vmem:[#allocation8 + $0x18] sm:$0xf]
    %v6589 = vld [vmem:[#allocation8 + $0x1c] sm:$0xf]
    %v6590 = vld [vmem:[#allocation8 + $0x20] sm:$0xf]
    %v6591 = vld [vmem:[#allocation8 + $0x24] sm:$0xf]
    %v6592 = vld [vmem:[#allocation8 + $0x28] sm:$0xf]
    %v6593 = vld [vmem:[#allocation8 + $0x2c] sm:$0xf]
    %v6594 = vld [vmem:[#allocation8 + $0x30] sm:$0xf]
    %v6595 = vld [vmem:[#allocation8 + $0x34] sm:$0xf]
    %v6596 = vld [vmem:[#allocation8 + $0x38] sm:$0xf]
    %v6597 = vld [vmem:[#allocation8 + $0x3c] sm:$0xf]
    %v6614 = vunpack.c.l.b16 %v6582
    %v6615 = vunpack.c.l.b16 %v6583
    %v6616 = vunpack.c.l.b16 %v6584
    %v6617 = vunpack.c.l.b16 %v6585
    %v6618 = vunpack.c.l.b16 %v6586
    %v6619 = vunpack.c.l.b16 %v6587
    %v6620 = vunpack.c.l.b16 %v6588
    %v6621 = vunpack.c.l.b16 %v6589
    %v6622 = vunpack.c.l.b16 %v6590
    %v6623 = vunpack.c.l.b16 %v6591
    %v6624 = vunpack.c.l.b16 %v6592
    %v6625 = vunpack.c.l.b16 %v6593
    %v6626 = vunpack.c.l.b16 %v6594
    %v6627 = vunpack.c.l.b16 %v6595
    %v6628 = vunpack.c.l.b16 %v6596
    %v6629 = vunpack.c.l.b16 %v6597
    %v6630 = vpack.c.b16 %v6615, %v6614
    %v6631 = vpack.c.b16 %v6617, %v6616
    %v6632 = vpack.c.b16 %v6619, %v6618
    %v6633 = vpack.c.b16 %v6621, %v6620
    %v6634 = vpack.c.b16 %v6623, %v6622
    %v6635 = vpack.c.b16 %v6625, %v6624
    %v6636 = vpack.c.b16 %v6627, %v6626
    %v6637 = vpack.c.b16 %v6629, %v6628
    %6646 = vmatprep.subr.bf16.mxu0 0
    %6647 = vmatpush1.bf16.msra.mxu0 %v6637
    %6648 = vmatprep.subr.bf16.mxu0 0
    %6649 = vmatpush1.bf16.msra.mxu0 %v6636
    %6650 = vmatprep.subr.bf16.mxu0 0
    %6651 = vmatpush1.bf16.msra.mxu0 %v6635
    %6652 = vmatprep.subr.bf16.mxu0 0
    %6653 = vmatpush1.bf16.msra.mxu0 %v6634
    %6654 = vmatprep.subr.bf16.mxu0 0
    %6655 = vmatpush1.bf16.msra.mxu0 %v6633
    %6656 = vmatprep.subr.bf16.mxu0 0
    %6657 = vmatpush1.bf16.msra.mxu0 %v6632
    %6658 = vmatprep.subr.bf16.mxu0 0
    %6659 = vmatpush1.bf16.msra.mxu0 %v6631
    %6660 = vmatprep.subr.bf16.mxu0 0
    %6661 = vmatpush1.bf16.msra.mxu0 %v6630
    %6662 = vmatprep.subr.bf16.mxu0 0
    %6663 = vmatpush2.bf16.msra.mxu0 0
    %6664 = vmatprep.subr.bf16.mxu0 0
    %6665 = vmatpush2.bf16.msra.mxu0 0
    %6666 = vmatprep.subr.bf16.mxu0 0
    %6667 = vmatpush2.bf16.msra.mxu0 0
    %6668 = vmatprep.subr.bf16.mxu0 0
    %6669 = vmatpush2.bf16.msra.mxu0 0
    %6670 = vmatprep.subr.bf16.mxu0 0
    %6671 = vmatpush2.bf16.msra.mxu0 0
    %6672 = vmatprep.subr.bf16.mxu0 0
    %6673 = vmatpush2.bf16.msra.mxu0 0
    %6674 = vmatprep.subr.bf16.mxu0 0
    %6675 = vmatpush2.bf16.msra.mxu0 0
    %6676 = vmatprep.subr.bf16.mxu0 0
    %6677 = vmatpush2.bf16.msra.mxu0 0
    %6678 = vmatprep.mubr.bf16.mxu0 0
    %6679 = vmatmul.mubr.bf16.gmra.mxu0 %v6581
    %v6680 = vpop.f32.mrf.mxu0
    %v6681 = vadd.f32 0.0, %v6680
    %v6682 = vpop.f32.mrf.mxu0
    %v6683 = vpop.f32.mrf.mxu0
    %v6684 = vpop.f32.mrf.mxu0
    %6685 = vdwg.mxu0
    %v6686 = vadd.f32 %v6409, %v6681
    %v6687 = vld [vmem:[%s9] sm:$0x1]
    %v6689 = vlaneseq
    %v6690 = vshrl.u32 %v6689, 7
    %v6691 = vsub.s32 0, %v6690
    %v6692 = vrot.slane %v6687, %v6691
    %v6694 = vadd.f32 %v6686, %v6692
    %v6695 = vtanh.pop %v6694
    %v6696 = vmul.f32 %v6577, %v6171
    %v6697 = vsub.f32 1.0, %v6577
    %v6698 = vmul.f32 %v6697, %v6695
    %v6699 = vadd.f32 %v6696, %v6698
    %6700 = vst [vmem:[%s389] sm:$0xff] %v6699
    %s6701 = scalar_lea.vmem [#allocation3], 56
    %6702 = vst [vmem:[%s6701] sm:$0xff] %v6699
    %v6703 = vld [vmem:[#allocation3] sm:$0xff]
    %v6704 = vld [vmem:[#allocation3 + $0x8] sm:$0xff]
    %v6705 = vld [vmem:[#allocation3 + $0x10] sm:$0xff]
    %v6706 = vld [vmem:[#allocation3 + $0x18] sm:$0xff]
    %v6707 = vld [vmem:[#allocation3 + $0x20] sm:$0xff]
    %v6708 = vld [vmem:[#allocation3 + $0x28] sm:$0xff]
    %v6709 = vld [vmem:[#allocation3 + $0x30] sm:$0xff]
    %v6710 = vld [vmem:[#allocation3 + $0x38] sm:$0xff]
    %v6711 = vpack.c.bf16 %v6704, %v6703
    %v6712 = vpack.c.bf16 %v6706, %v6705
    %v6713 = vpack.c.bf16 %v6708, %v6707
    %v6714 = vpack.c.bf16 %v6710, %v6709
    %v6715 = vld [vmem:[%s11] sm:$0xf]
    %v6716 = vld [vmem:[%s11 + $0x4] sm:$0xf]
    %v6717 = vld [vmem:[%s11 + $0x8] sm:$0xf]
    %v6718 = vld [vmem:[%s11 + $0xc] sm:$0xf]
    %v6719 = vld [vmem:[%s11 + $0x10] sm:$0xf]
    %v6720 = vld [vmem:[%s11 + $0x14] sm:$0xf]
    %v6721 = vld [vmem:[%s11 + $0x18] sm:$0xf]
    %v6722 = vld [vmem:[%s11 + $0x1c] sm:$0xf]
    %v6723 = vld [vmem:[%s11 + $0x20] sm:$0xf]
    %v6724 = vld [vmem:[%s11 + $0x24] sm:$0xf]
    %v6725 = vld [vmem:[%s11 + $0x28] sm:$0xf]
    %v6726 = vld [vmem:[%s11 + $0x2c] sm:$0xf]
    %v6727 = vld [vmem:[%s11 + $0x30] sm:$0xf]
    %v6728 = vld [vmem:[%s11 + $0x34] sm:$0xf]
    %v6729 = vld [vmem:[%s11 + $0x38] sm:$0xf]
    %v6730 = vld [vmem:[%s11 + $0x3c] sm:$0xf]
    %v6731 = vld [vmem:[%s12] sm:$0x1]
    %v6733 = vlaneseq
    %v6734 = vshrl.u32 %v6733, 7
    %v6735 = vsub.s32 0, %v6734
    %v6736 = vrot.slane %v6731, %v6735
    %v6754 = vunpack.c.l.b16 %v6715
    %v6755 = vunpack.c.l.b16 %v6716
    %v6756 = vunpack.c.l.b16 %v6717
    %v6757 = vunpack.c.l.b16 %v6718
    %v6758 = vunpack.c.l.b16 %v6719
    %v6759 = vunpack.c.l.b16 %v6720
    %v6760 = vunpack.c.l.b16 %v6721
    %v6761 = vunpack.c.l.b16 %v6722
    %v6762 = vunpack.c.l.b16 %v6723
    %v6763 = vunpack.c.l.b16 %v6724
    %v6764 = vunpack.c.l.b16 %v6725
    %v6765 = vunpack.c.l.b16 %v6726
    %v6766 = vunpack.c.l.b16 %v6727
    %v6767 = vunpack.c.l.b16 %v6728
    %v6768 = vunpack.c.l.b16 %v6729
    %v6769 = vunpack.c.l.b16 %v6730
    %v6770 = vpack.c.b16 %v6755, %v6754
    %v6771 = vpack.c.b16 %v6757, %v6756
    %v6772 = vpack.c.b16 %v6759, %v6758
    %v6773 = vpack.c.b16 %v6761, %v6760
    %v6774 = vpack.c.b16 %v6763, %v6762
    %v6775 = vpack.c.b16 %v6765, %v6764
    %v6776 = vpack.c.b16 %v6767, %v6766
    %v6777 = vpack.c.b16 %v6769, %v6768
    %6786 = vmatprep.subr.bf16.mxu0 0
    %6787 = vmatpush1.bf16.msra.mxu0 %v6777
    %6788 = vmatprep.subr.bf16.mxu0 0
    %6789 = vmatpush1.bf16.msra.mxu0 %v6776
    %6790 = vmatprep.subr.bf16.mxu0 0
    %6791 = vmatpush1.bf16.msra.mxu0 %v6775
    %6792 = vmatprep.subr.bf16.mxu0 0
    %6793 = vmatpush1.bf16.msra.mxu0 %v6774
    %6794 = vmatprep.subr.bf16.mxu0 0
    %6795 = vmatpush1.bf16.msra.mxu0 %v6773
    %6796 = vmatprep.subr.bf16.mxu0 0
    %6797 = vmatpush1.bf16.msra.mxu0 %v6772
    %6798 = vmatprep.subr.bf16.mxu0 0
    %6799 = vmatpush1.bf16.msra.mxu0 %v6771
    %6800 = vmatprep.subr.bf16.mxu0 0
    %6801 = vmatpush1.bf16.msra.mxu0 %v6770
    %6802 = vmatprep.subr.bf16.mxu0 0
    %6803 = vmatpush2.bf16.msra.mxu0 0
    %6804 = vmatprep.subr.bf16.mxu0 0
    %6805 = vmatpush2.bf16.msra.mxu0 0
    %6806 = vmatprep.subr.bf16.mxu0 0
    %6807 = vmatpush2.bf16.msra.mxu0 0
    %6808 = vmatprep.subr.bf16.mxu0 0
    %6809 = vmatpush2.bf16.msra.mxu0 0
    %6810 = vmatprep.subr.bf16.mxu0 0
    %6811 = vmatpush2.bf16.msra.mxu0 0
    %6812 = vmatprep.subr.bf16.mxu0 0
    %6813 = vmatpush2.bf16.msra.mxu0 0
    %6814 = vmatprep.subr.bf16.mxu0 0
    %6815 = vmatpush2.bf16.msra.mxu0 0
    %6816 = vmatprep.subr.bf16.mxu0 0
    %6817 = vmatpush2.bf16.msra.mxu0 0
    %6818 = vmatprep.mubr.bf16.mxu0 0
    %6819 = vmatmul.mubr.bf16.gmra.mxu0 %v6711
    %v6820 = vpop.f32.mrf.mxu0
    %v6821 = vadd.f32 %v6736, %v6820
    %v6822 = vpop.f32.mrf.mxu0
    %v6823 = vpop.f32.mrf.mxu0
    %v6824 = vadd.f32 %v6736, %v6823
    %v6825 = vpop.f32.mrf.mxu0
    %6826 = vmatprep.mubr.bf16.mxu0 0
    %6827 = vmatmul.mubr.bf16.gmra.mxu0 %v6712
    %v6828 = vpop.f32.mrf.mxu0
    %v6829 = vadd.f32 %v6736, %v6828
    %v6830 = vpop.f32.mrf.mxu0
    %v6831 = vpop.f32.mrf.mxu0
    %v6832 = vadd.f32 %v6736, %v6831
    %v6833 = vpop.f32.mrf.mxu0
    %6834 = vmatprep.mubr.bf16.mxu0 0
    %6835 = vmatmul.mubr.bf16.gmra.mxu0 %v6713
    %v6836 = vpop.f32.mrf.mxu0
    %v6837 = vadd.f32 %v6736, %v6836
    %v6838 = vpop.f32.mrf.mxu0
    %v6839 = vpop.f32.mrf.mxu0
    %v6840 = vadd.f32 %v6736, %v6839
    %v6841 = vpop.f32.mrf.mxu0
    %6842 = vmatprep.mubr.bf16.mxu0 0
    %6843 = vmatmul.mubr.bf16.gmra.mxu0 %v6714
    %v6844 = vpop.f32.mrf.mxu0
    %v6845 = vadd.f32 %v6736, %v6844
    %v6846 = vpop.f32.mrf.mxu0
    %v6847 = vpop.f32.mrf.mxu0
    %v6848 = vadd.f32 %v6736, %v6847
    %v6849 = vpop.f32.mrf.mxu0
    %6850 = vdwg.mxu0
    %6851 = vst [vmem:[%s13] sm:$0xff] %v6821
    %6852 = vst [vmem:[%s13 + $0x8] sm:$0xff] %v6824
    %6853 = vst [vmem:[%s13 + $0x10] sm:$0xff] %v6829
    %6854 = vst [vmem:[%s13 + $0x18] sm:$0xff] %v6832
    %6855 = vst [vmem:[%s13 + $0x20] sm:$0xff] %v6837
    %6856 = vst [vmem:[%s13 + $0x28] sm:$0xff] %v6840
    %6857 = vst [vmem:[%s13 + $0x30] sm:$0xff] %v6845
    %6858 = vst [vmem:[%s13 + $0x38] sm:$0xff] %v6848
    // Predicated region
    $region70: #{multilayer_gru_forward.3} parent=1 // pred_check
      %p6859 = pneg %p88
    $region71: #{multilayer_gru_forward.3} parent=1 // pred_check_branch
      %6861 = sbr.rel (%p6859) target = $region73
    $region72: #{multilayer_gru_forward.3} parent=1 // pred_region
      %v6862 = vld [vmem:[#allocation2] sm:$0xff]
      %v6863 = vld [vmem:[#allocation2 + $0x8] sm:$0xff]
      %6864 = vst [vmem:[%s14] sm:$0xff] %v6862
      %6865 = vst [vmem:[%s14 + $0x8] sm:$0xff] %v6863
    $region73: #{multilayer_gru_forward.3} parent=1 // pred_fallthru
      _
    // Predicated region
    $region74: #{multilayer_gru_forward.3} parent=1 // pred_check
      _
    $region75: #{multilayer_gru_forward.3} parent=1 // pred_check_branch
      %6867 = sbr.rel (0) target = $region77
    $region76: #{multilayer_gru_forward.3} parent=1 // pred_region
      _
    $region77: #{multilayer_gru_forward.3} parent=1 // pred_fallthru
      _
    // Predicated region
    $region78: #{multilayer_gru_forward.3} parent=1 // pred_check
      _
    $region79: #{multilayer_gru_forward.3} parent=1 // pred_check_branch
      %6869 = sbr.rel (0) target = $region81
    $region80: #{multilayer_gru_forward.3} parent=1 // pred_region
      _
    $region81: #{multilayer_gru_forward.3} parent=1 // pred_fallthru
      _
    // Predicated region
    $region82: #{multilayer_gru_forward.3} parent=1 // pred_check
      _
    $region83: #{multilayer_gru_forward.3} parent=1 // pred_check_branch
      %6871 = sbr.rel (0) target = $region85
    $region84: #{multilayer_gru_forward.3} parent=1 // pred_region
      _
    $region85: #{multilayer_gru_forward.3} parent=1 // pred_fallthru
      _
    // Predicated region
    $region86: #{multilayer_gru_forward.3} parent=1 // pred_check
      _
    $region87: #{multilayer_gru_forward.3} parent=1 // pred_check_branch
      %6873 = sbr.rel (0) target = $region89
    $region88: #{multilayer_gru_forward.3} parent=1 // pred_region
      _
    $region89: #{multilayer_gru_forward.3} parent=1 // pred_fallthru
      _
    %6874 = vsyncpa [#allocation5], 1
    %6875 = vsyncpa [#allocation7], 1

</llo_original>
